<compile_context>
chip_gen: v6e
topology: v6e:2x2x1
jax: 0.10.0
libtpu: 0.0.40
codegen_flags: <defaults>
</compile_context>

<pallas_src>
import functools

import jax
import jax.numpy as jnp
import numpy as np
from jax.experimental import pallas as pl
from jax.experimental.pallas import tpu as pltpu


def _rup(x, m):
    return ((x + m - 1) // m) * m


# ----------------------------- Pallas kernels ------------------------------

def _conv3x3_relu_kernel(x_ref, w_ref, b_ref, o_ref, *, H, W):
    """3x3 / stride-1 conv fused with bias + ReLU for one batch element.

    x_ref: (H+2, W+2, Cp) bf16  spatially pre-padded input (resident in VMEM)
    w_ref: (9, Cp, Cp)    bf16  per-tap (di*3+dj) weight matrices
    b_ref: (1, Cp)        f32   bias
    o_ref: (H, W, Cp)     bf16
    """
    Cp = w_ref.shape[2]
    acc = jnp.zeros((H * W, Cp), jnp.float32)
    # im2col fused into the kernel: 9 shifted views of the VMEM block,
    # one MXU matmul per tap, f32 accumulation.  No patch matrix in HBM.
    for di in range(3):
        for dj in range(3):
            patch = x_ref[pl.ds(di, H), pl.ds(dj, W), :].reshape(H * W, Cp)
            acc = acc + jnp.dot(patch, w_ref[di * 3 + dj],
                                preferred_element_type=jnp.float32)
    y = jnp.maximum(acc + b_ref[...], 0.0)
    o_ref[...] = y.reshape(H, W, Cp).astype(o_ref.dtype)


def _conv3x3_se_gate_res_kernel(a_ref, res_ref, w_ref, b_ref,
                                w1_ref, b1_ref, w2_ref, b2_ref,
                                o_ref, *, H, W):
    """conv2 + global avg-pool + FC/ReLU/FC/sigmoid gate + gating + residual.

    a_ref:   (H+2, W+2, Cp) bf16  conv1 output, spatially pre-padded
    res_ref: (H, W, Cp)     f32   residual (original block input)
    w_ref:   (9, Cp, Cp)    bf16  conv2 per-tap weights ; b_ref: (1, Cp) f32
    w1_ref:  (Cp, Hr) f32 ; b1_ref: (1, Hr) f32   (Linear C -> C//r)
    w2_ref:  (Hr, Cp) f32 ; b2_ref: (1, Cp) f32   (Linear C//r -> C)
    o_ref:   (H, W, Cp)     f32
    """
    Cp = w_ref.shape[2]
    acc = jnp.zeros((H * W, Cp), jnp.float32)
    for di in range(3):
        for dj in range(3):
            patch = a_ref[pl.ds(di, H), pl.ds(dj, W), :].reshape(H * W, Cp)
            acc = acc + jnp.dot(patch, w_ref[di * 3 + dj],
                                preferred_element_type=jnp.float32)
    y = acc + b_ref[...]                                    # conv2 out (no ReLU)

    # AdaptiveAvgPool2d(1) fused: channel means of the just-computed conv2 out.
    pooled = jnp.sum(y, axis=0, keepdims=True) * (1.0 / float(H * W))   # (1, Cp)

    # Squeeze/excite FC stack (tiny; padded hidden/channel columns are zero).
    z = jnp.dot(pooled, w1_ref[...], preferred_element_type=jnp.float32) + b1_ref[...]
    z = jnp.maximum(z, 0.0)
    logits = jnp.dot(z, w2_ref[...], preferred_element_type=jnp.float32) + b2_ref[...]
    gate = 1.0 / (1.0 + jnp.exp(-logits))                    # sigmoid, (1, Cp)

    # x * y.expand_as(x) + res   (gate broadcasts over H and W).
    out = res_ref[...] + y.reshape(H, W, Cp) * gate
    o_ref[...] = out.astype(o_ref.dtype)


# -------------------------- pallas_call wrappers ----------------------------

def _conv1_call(xp, w, b):
    N, Hp2, Wp2, Cp = xp.shape
    H, W = Hp2 - 2, Wp2 - 2
    return pl.pallas_call(
        functools.partial(_conv3x3_relu_kernel, H=H, W=W),
        out_shape=jax.ShapeDtypeStruct((N, H, W, Cp), jnp.bfloat16),
        grid=(N,),
        in_specs=[
            pl.BlockSpec((None, Hp2, Wp2, Cp), lambda n: (n, 0, 0, 0)),
            pl.BlockSpec((9, Cp, Cp), lambda n: (0, 0, 0)),
            pl.BlockSpec((1, Cp), lambda n: (0, 0)),
        ],
        out_specs=pl.BlockSpec((None, H, W, Cp), lambda n: (n, 0, 0, 0)),
        compiler_params=pltpu.CompilerParams(
            dimension_semantics=("parallel",)),
    )(xp, w, b)


def _conv2_gate_call(ap, res, p):
    N, Hp2, Wp2, Cp = ap.shape
    H, W = Hp2 - 2, Wp2 - 2
    Hr = p["fc1_w"].shape[1]
    return pl.pallas_call(
        functools.partial(_conv3x3_se_gate_res_kernel, H=H, W=W),
        out_shape=jax.ShapeDtypeStruct((N, H, W, Cp), jnp.float32),
        grid=(N,),
        in_specs=[
            pl.BlockSpec((None, Hp2, Wp2, Cp), lambda n: (n, 0, 0, 0)),
            pl.BlockSpec((None, H, W, Cp), lambda n: (n, 0, 0, 0)),
            pl.BlockSpec((9, Cp, Cp), lambda n: (0, 0, 0)),
            pl.BlockSpec((1, Cp), lambda n: (0, 0)),
            pl.BlockSpec((Cp, Hr), lambda n: (0, 0)),
            pl.BlockSpec((1, Hr), lambda n: (0, 0)),
            pl.BlockSpec((Hr, Cp), lambda n: (0, 0)),
            pl.BlockSpec((1, Cp), lambda n: (0, 0)),
        ],
        out_specs=pl.BlockSpec((None, H, W, Cp), lambda n: (n, 0, 0, 0)),
        compiler_params=pltpu.CompilerParams(
            dimension_semantics=("parallel",)),
    )(ap, res, p["conv2_w"], p["conv2_b"],
      p["fc1_w"], p["fc1_b"], p["fc2_w"], p["fc2_b"])


# ------------------------------- parameters --------------------------------

def init_params(key, channels, reduction=16):
    """Deterministic random init; weights stored pre-padded / pre-transposed."""
    hidden = max(channels // reduction, 1)
    Cp = _rup(channels, 128)           # lane-dense channel dim
    Hr = _rup(hidden, 128)             # lane-dense SE hidden dim
    ks = jax.random.split(key, 8)

    def conv_w(k):
        # PyTorch layout (Cout, Cin, 3, 3) -> per-tap (9, Cin_p, Cout_p), bf16.
        std = float(np.sqrt(2.0 / (channels * 9)))
        w = std * jax.random.normal(k, (channels, channels, 3, 3), jnp.float32)
        wt = jnp.transpose(w, (2, 3, 1, 0)).reshape(9, channels, channels)
        wt = jnp.pad(wt, ((0, 0), (0, Cp - channels), (0, Cp - channels)))
        return wt.astype(jnp.bfloat16)

    def bias(k, n, n_pad):
        v = 0.05 * jax.random.normal(k, (n,), jnp.float32)
        return jnp.pad(v, (0, n_pad - n)).reshape(1, n_pad)

    def linear_w(k, nin, nout, nin_p, nout_p):
        # PyTorch Linear stores (nout, nin); we keep the (nin, nout) GEMM layout.
        std = float(np.sqrt(1.0 / nin))
        w = std * jax.random.normal(k, (nin, nout), jnp.float32)
        return jnp.pad(w, ((0, nin_p - nin), (0, nout_p - nout)))

    return {
        "conv1_w": conv_w(ks[0]), "conv1_b": bias(ks[1], channels, Cp),
        "conv2_w": conv_w(ks[2]), "conv2_b": bias(ks[3], channels, Cp),
        "fc1_w": linear_w(ks[4], channels, hidden, Cp, Hr),
        "fc1_b": bias(ks[5], hidden, Hr),
        "fc2_w": linear_w(ks[6], hidden, channels, Hr, Cp),
        "fc2_b": bias(ks[7], channels, Cp),
    }


# -------------------------------- forward ----------------------------------

def rcan_block_forward(x_nchw, params):
    """x_nchw: (N, C, H, W) f32 (PyTorch layout) -> (N, C, H, W) f32."""
    N, C, H, W = x_nchw.shape
    Cp = params["conv1_w"].shape[2]

    # Single layout pass: NCHW -> NHWC, zero-pad channels to lane-dense Cp.
    x = jnp.transpose(x_nchw, (0, 2, 3, 1)).astype(jnp.float32)
    res = jnp.pad(x, ((0, 0), (0, 0), (0, 0), (0, Cp - C)))            # (N,H,W,Cp) f32
    xp = jnp.pad(res, ((0, 0), (1, 1), (1, 1), (0, 0))).astype(jnp.bfloat16)

    a = _conv1_call(xp, params["conv1_w"], params["conv1_b"])          # (N,H,W,Cp) bf16
    ap = jnp.pad(a, ((0, 0), (1, 1), (1, 1), (0, 0)))                  # conv2 halo
    out = _conv2_gate_call(ap, res, params)                            # (N,H,W,Cp) f32

    return jnp.transpose(out[..., :C], (0, 3, 1, 2))


# ---------------------------------- main ------------------------------------

if __name__ == "__main__":
    key = jax.random.PRNGKey(0)
    pkey, xkey = jax.random.split(key)
    channels, reduction = 64, 16                 # fc hidden = 4, as in the module
    params = init_params(pkey, channels, reduction)
    x = jax.random.normal(xkey, (2, channels, 16, 16), dtype=jnp.float32)

    out = jax.jit(rcan_block_forward)(x, params)
    out = jax.block_until_ready(out)

    assert out.shape == (2, channels, 16, 16) and out.dtype == jnp.float32
    assert bool(jnp.all(jnp.isfinite(out)))
    print("KERNEL_OK")
</pallas_src>

<mosaic_0001>
module attributes {stable_mosaic.version = 11 : i64} {
  func.func @_conv3x3_relu_kernel(%arg0: i32, %arg1: memref<1x18x18x128xbf16, #tpu.memory_space<vmem>>, %arg2: memref<9x128x128xbf16, #tpu.memory_space<vmem>>, %arg3: memref<1x128xf32, #tpu.memory_space<vmem>>, %arg4: memref<1x16x16x128xbf16, #tpu.memory_space<vmem>>) attributes {dimension_semantics = [#tpu.dimension_semantics<parallel>], iteration_bounds = array<i64: 2>, scalar_prefetch = 0 : i64, scratch_operands = 0 : i64, tpu.core_type = #tpu.core_type<tc>, window_params = [{transform_indices = @transform_0, window_bounds = array<i64: 1, 18, 18, 128>}, {pipeline_mode = #tpu.pipeline_mode<synchronous>, transform_indices = @transform_1, window_bounds = array<i64: 9, 128, 128>}, {pipeline_mode = #tpu.pipeline_mode<synchronous>, transform_indices = @transform_2, window_bounds = array<i64: 1, 128>}, {transform_indices = @transform_3, window_bounds = array<i64: 1, 16, 16, 128>}]} {
    %cst = arith.constant 0.000000e+00 : f32
    %0 = vector.broadcast %cst : f32 to vector<256x128xf32>
    %c0 = arith.constant 0 : index
    %c0_0 = arith.constant 0 : index
    %c0_1 = arith.constant 0 : index
    %c0_2 = arith.constant 0 : index
    %1 = vector.load %arg1[%c0, %c0_0, %c0_1, %c0_2] : memref<1x18x18x128xbf16, #tpu.memory_space<vmem>>, vector<1x16x16x128xbf16>
    %2 = vector.shape_cast %1 : vector<1x16x16x128xbf16> to vector<16x16x128xbf16>
    %3 = vector.shape_cast %2 : vector<16x16x128xbf16> to vector<256x128xbf16>
    %c0_3 = arith.constant 0 : index
    %c0_4 = arith.constant 0 : index
    %c0_5 = arith.constant 0 : index
    %4 = vector.load %arg2[%c0_3, %c0_4, %c0_5] : memref<9x128x128xbf16, #tpu.memory_space<vmem>>, vector<1x128x128xbf16>
    %5 = vector.shape_cast %4 : vector<1x128x128xbf16> to vector<128x128xbf16>
    %cst_6 = arith.constant dense<0.000000e+00> : vector<256x128xf32>
    %6 = tpu.matmul %3, %5, %cst_6 {dimension_numbers = #tpu.dot_dimension_numbers<[1], [0], [0], [1], [0, 0, 1, 1], [], []>} : vector<256x128xbf16>, vector<128x128xbf16>, vector<256x128xf32> -> vector<256x128xf32>
    %7 = arith.addf %0, %6 : vector<256x128xf32>
    %c0_7 = arith.constant 0 : index
    %c0_8 = arith.constant 0 : index
    %c1 = arith.constant 1 : index
    %c0_9 = arith.constant 0 : index
    %8 = vector.load %arg1[%c0_7, %c0_8, %c1, %c0_9] : memref<1x18x18x128xbf16, #tpu.memory_space<vmem>>, vector<1x16x16x128xbf16>
    %9 = vector.shape_cast %8 : vector<1x16x16x128xbf16> to vector<16x16x128xbf16>
    %10 = vector.shape_cast %9 : vector<16x16x128xbf16> to vector<256x128xbf16>
    %c1_10 = arith.constant 1 : index
    %c0_11 = arith.constant 0 : index
    %c0_12 = arith.constant 0 : index
    %11 = vector.load %arg2[%c1_10, %c0_11, %c0_12] : memref<9x128x128xbf16, #tpu.memory_space<vmem>>, vector<1x128x128xbf16>
    %12 = vector.shape_cast %11 : vector<1x128x128xbf16> to vector<128x128xbf16>
    %cst_13 = arith.constant dense<0.000000e+00> : vector<256x128xf32>
    %13 = tpu.matmul %10, %12, %cst_13 {dimension_numbers = #tpu.dot_dimension_numbers<[1], [0], [0], [1], [0, 0, 1, 1], [], []>} : vector<256x128xbf16>, vector<128x128xbf16>, vector<256x128xf32> -> vector<256x128xf32>
    %14 = arith.addf %7, %13 : vector<256x128xf32>
    %c0_14 = arith.constant 0 : index
    %c0_15 = arith.constant 0 : index
    %c2 = arith.constant 2 : index
    %c0_16 = arith.constant 0 : index
    %15 = vector.load %arg1[%c0_14, %c0_15, %c2, %c0_16] : memref<1x18x18x128xbf16, #tpu.memory_space<vmem>>, vector<1x16x16x128xbf16>
    %16 = vector.shape_cast %15 : vector<1x16x16x128xbf16> to vector<16x16x128xbf16>
    %17 = vector.shape_cast %16 : vector<16x16x128xbf16> to vector<256x128xbf16>
    %c2_17 = arith.constant 2 : index
    %c0_18 = arith.constant 0 : index
    %c0_19 = arith.constant 0 : index
    %18 = vector.load %arg2[%c2_17, %c0_18, %c0_19] : memref<9x128x128xbf16, #tpu.memory_space<vmem>>, vector<1x128x128xbf16>
    %19 = vector.shape_cast %18 : vector<1x128x128xbf16> to vector<128x128xbf16>
    %cst_20 = arith.constant dense<0.000000e+00> : vector<256x128xf32>
    %20 = tpu.matmul %17, %19, %cst_20 {dimension_numbers = #tpu.dot_dimension_numbers<[1], [0], [0], [1], [0, 0, 1, 1], [], []>} : vector<256x128xbf16>, vector<128x128xbf16>, vector<256x128xf32> -> vector<256x128xf32>
    %21 = arith.addf %14, %20 : vector<256x128xf32>
    %c0_21 = arith.constant 0 : index
    %c1_22 = arith.constant 1 : index
    %c0_23 = arith.constant 0 : index
    %c0_24 = arith.constant 0 : index
    %22 = vector.load %arg1[%c0_21, %c1_22, %c0_23, %c0_24] : memref<1x18x18x128xbf16, #tpu.memory_space<vmem>>, vector<1x16x16x128xbf16>
    %23 = vector.shape_cast %22 : vector<1x16x16x128xbf16> to vector<16x16x128xbf16>
    %24 = vector.shape_cast %23 : vector<16x16x128xbf16> to vector<256x128xbf16>
    %c3 = arith.constant 3 : index
    %c0_25 = arith.constant 0 : index
    %c0_26 = arith.constant 0 : index
    %25 = vector.load %arg2[%c3, %c0_25, %c0_26] : memref<9x128x128xbf16, #tpu.memory_space<vmem>>, vector<1x128x128xbf16>
    %26 = vector.shape_cast %25 : vector<1x128x128xbf16> to vector<128x128xbf16>
    %cst_27 = arith.constant dense<0.000000e+00> : vector<256x128xf32>
    %27 = tpu.matmul %24, %26, %cst_27 {dimension_numbers = #tpu.dot_dimension_numbers<[1], [0], [0], [1], [0, 0, 1, 1], [], []>} : vector<256x128xbf16>, vector<128x128xbf16>, vector<256x128xf32> -> vector<256x128xf32>
    %28 = arith.addf %21, %27 : vector<256x128xf32>
    %c0_28 = arith.constant 0 : index
    %c1_29 = arith.constant 1 : index
    %c1_30 = arith.constant 1 : index
    %c0_31 = arith.constant 0 : index
    %29 = vector.load %arg1[%c0_28, %c1_29, %c1_30, %c0_31] : memref<1x18x18x128xbf16, #tpu.memory_space<vmem>>, vector<1x16x16x128xbf16>
    %30 = vector.shape_cast %29 : vector<1x16x16x128xbf16> to vector<16x16x128xbf16>
    %31 = vector.shape_cast %30 : vector<16x16x128xbf16> to vector<256x128xbf16>
    %c4 = arith.constant 4 : index
    %c0_32 = arith.constant 0 : index
    %c0_33 = arith.constant 0 : index
    %32 = vector.load %arg2[%c4, %c0_32, %c0_33] : memref<9x128x128xbf16, #tpu.memory_space<vmem>>, vector<1x128x128xbf16>
    %33 = vector.shape_cast %32 : vector<1x128x128xbf16> to vector<128x128xbf16>
    %cst_34 = arith.constant dense<0.000000e+00> : vector<256x128xf32>
    %34 = tpu.matmul %31, %33, %cst_34 {dimension_numbers = #tpu.dot_dimension_numbers<[1], [0], [0], [1], [0, 0, 1, 1], [], []>} : vector<256x128xbf16>, vector<128x128xbf16>, vector<256x128xf32> -> vector<256x128xf32>
    %35 = arith.addf %28, %34 : vector<256x128xf32>
    %c0_35 = arith.constant 0 : index
    %c1_36 = arith.constant 1 : index
    %c2_37 = arith.constant 2 : index
    %c0_38 = arith.constant 0 : index
    %36 = vector.load %arg1[%c0_35, %c1_36, %c2_37, %c0_38] : memref<1x18x18x128xbf16, #tpu.memory_space<vmem>>, vector<1x16x16x128xbf16>
    %37 = vector.shape_cast %36 : vector<1x16x16x128xbf16> to vector<16x16x128xbf16>
    %38 = vector.shape_cast %37 : vector<16x16x128xbf16> to vector<256x128xbf16>
    %c5 = arith.constant 5 : index
    %c0_39 = arith.constant 0 : index
    %c0_40 = arith.constant 0 : index
    %39 = vector.load %arg2[%c5, %c0_39, %c0_40] : memref<9x128x128xbf16, #tpu.memory_space<vmem>>, vector<1x128x128xbf16>
    %40 = vector.shape_cast %39 : vector<1x128x128xbf16> to vector<128x128xbf16>
    %cst_41 = arith.constant dense<0.000000e+00> : vector<256x128xf32>
    %41 = tpu.matmul %38, %40, %cst_41 {dimension_numbers = #tpu.dot_dimension_numbers<[1], [0], [0], [1], [0, 0, 1, 1], [], []>} : vector<256x128xbf16>, vector<128x128xbf16>, vector<256x128xf32> -> vector<256x128xf32>
    %42 = arith.addf %35, %41 : vector<256x128xf32>
    %c0_42 = arith.constant 0 : index
    %c2_43 = arith.constant 2 : index
    %c0_44 = arith.constant 0 : index
    %c0_45 = arith.constant 0 : index
    %43 = vector.load %arg1[%c0_42, %c2_43, %c0_44, %c0_45] : memref<1x18x18x128xbf16, #tpu.memory_space<vmem>>, vector<1x16x16x128xbf16>
    %44 = vector.shape_cast %43 : vector<1x16x16x128xbf16> to vector<16x16x128xbf16>
    %45 = vector.shape_cast %44 : vector<16x16x128xbf16> to vector<256x128xbf16>
    %c6 = arith.constant 6 : index
    %c0_46 = arith.constant 0 : index
    %c0_47 = arith.constant 0 : index
    %46 = vector.load %arg2[%c6, %c0_46, %c0_47] : memref<9x128x128xbf16, #tpu.memory_space<vmem>>, vector<1x128x128xbf16>
    %47 = vector.shape_cast %46 : vector<1x128x128xbf16> to vector<128x128xbf16>
    %cst_48 = arith.constant dense<0.000000e+00> : vector<256x128xf32>
    %48 = tpu.matmul %45, %47, %cst_48 {dimension_numbers = #tpu.dot_dimension_numbers<[1], [0], [0], [1], [0, 0, 1, 1], [], []>} : vector<256x128xbf16>, vector<128x128xbf16>, vector<256x128xf32> -> vector<256x128xf32>
    %49 = arith.addf %42, %48 : vector<256x128xf32>
    %c0_49 = arith.constant 0 : index
    %c2_50 = arith.constant 2 : index
    %c1_51 = arith.constant 1 : index
    %c0_52 = arith.constant 0 : index
    %50 = vector.load %arg1[%c0_49, %c2_50, %c1_51, %c0_52] : memref<1x18x18x128xbf16, #tpu.memory_space<vmem>>, vector<1x16x16x128xbf16>
    %51 = vector.shape_cast %50 : vector<1x16x16x128xbf16> to vector<16x16x128xbf16>
    %52 = vector.shape_cast %51 : vector<16x16x128xbf16> to vector<256x128xbf16>
    %c7 = arith.constant 7 : index
    %c0_53 = arith.constant 0 : index
    %c0_54 = arith.constant 0 : index
    %53 = vector.load %arg2[%c7, %c0_53, %c0_54] : memref<9x128x128xbf16, #tpu.memory_space<vmem>>, vector<1x128x128xbf16>
    %54 = vector.shape_cast %53 : vector<1x128x128xbf16> to vector<128x128xbf16>
    %cst_55 = arith.constant dense<0.000000e+00> : vector<256x128xf32>
    %55 = tpu.matmul %52, %54, %cst_55 {dimension_numbers = #tpu.dot_dimension_numbers<[1], [0], [0], [1], [0, 0, 1, 1], [], []>} : vector<256x128xbf16>, vector<128x128xbf16>, vector<256x128xf32> -> vector<256x128xf32>
    %56 = arith.addf %49, %55 : vector<256x128xf32>
    %c0_56 = arith.constant 0 : index
    %c2_57 = arith.constant 2 : index
    %c2_58 = arith.constant 2 : index
    %c0_59 = arith.constant 0 : index
    %57 = vector.load %arg1[%c0_56, %c2_57, %c2_58, %c0_59] : memref<1x18x18x128xbf16, #tpu.memory_space<vmem>>, vector<1x16x16x128xbf16>
    %58 = vector.shape_cast %57 : vector<1x16x16x128xbf16> to vector<16x16x128xbf16>
    %59 = vector.shape_cast %58 : vector<16x16x128xbf16> to vector<256x128xbf16>
    %c8 = arith.constant 8 : index
    %c0_60 = arith.constant 0 : index
    %c0_61 = arith.constant 0 : index
    %60 = vector.load %arg2[%c8, %c0_60, %c0_61] : memref<9x128x128xbf16, #tpu.memory_space<vmem>>, vector<1x128x128xbf16>
    %61 = vector.shape_cast %60 : vector<1x128x128xbf16> to vector<128x128xbf16>
    %cst_62 = arith.constant dense<0.000000e+00> : vector<256x128xf32>
    %62 = tpu.matmul %59, %61, %cst_62 {dimension_numbers = #tpu.dot_dimension_numbers<[1], [0], [0], [1], [0, 0, 1, 1], [], []>} : vector<256x128xbf16>, vector<128x128xbf16>, vector<256x128xf32> -> vector<256x128xf32>
    %63 = arith.addf %56, %62 : vector<256x128xf32>
    %c0_63 = arith.constant 0 : index
    %c0_64 = arith.constant 0 : index
    %64 = vector.load %arg3[%c0_63, %c0_64] : memref<1x128xf32, #tpu.memory_space<vmem>>, vector<1x128xf32>
    %65 = vector.broadcast %64 : vector<1x128xf32> to vector<256x128xf32>
    %66 = arith.addf %63, %65 : vector<256x128xf32>
    %cst_65 = arith.constant 0.000000e+00 : f32
    %67 = vector.broadcast %cst_65 : f32 to vector<256x128xf32>
    %68 = arith.maximumf %66, %67 : vector<256x128xf32>
    %69 = vector.shape_cast %68 : vector<256x128xf32> to vector<16x16x128xf32>
    %70 = arith.truncf %69 : vector<16x16x128xf32> to vector<16x16x128xbf16>
    %c0_66 = arith.constant 0 : index
    %c0_67 = arith.constant 0 : index
    %c0_68 = arith.constant 0 : index
    %c0_69 = arith.constant 0 : index
    %71 = vector.load %arg4[%c0_66, %c0_67, %c0_68, %c0_69] : memref<1x16x16x128xbf16, #tpu.memory_space<vmem>>, vector<1x16x16x128xbf16>
    %72 = vector.shape_cast %71 : vector<1x16x16x128xbf16> to vector<16x16x128xbf16>
    %73 = vector.shape_cast %70 : vector<16x16x128xbf16> to vector<1x16x16x128xbf16>
    tpu.vector_store %arg4[%c0_66, %c0_67, %c0_68, %c0_69], %73 {strides = array<i32>} : memref<1x16x16x128xbf16, #tpu.memory_space<vmem>>, vector<1x16x16x128xbf16>,
    return
  }
  func.func @transform_0(%arg0: i32) -> (i32, i32, i32, i32) {
    %c0_i32 = arith.constant 0 : i32
    %c0_i32_0 = arith.constant 0 : i32
    %c0_i32_1 = arith.constant 0 : i32
    %c0_i32_2 = arith.constant 0 : i32
    return %arg0, %c0_i32, %c0_i32_0, %c0_i32_1 : i32, i32, i32, i32
  }
  func.func @transform_1(%arg0: i32) -> (i32, i32, i32) {
    %c0_i32 = arith.constant 0 : i32
    %c0_i32_0 = arith.constant 0 : i32
    %c0_i32_1 = arith.constant 0 : i32
    %c0_i32_2 = arith.constant 0 : i32
    return %c0_i32, %c0_i32_0, %c0_i32_1 : i32, i32, i32
  }
  func.func @transform_2(%arg0: i32) -> (i32, i32) {
    %c0_i32 = arith.constant 0 : i32
    %c0_i32_0 = arith.constant 0 : i32
    %c0_i32_1 = arith.constant 0 : i32
    return %c0_i32, %c0_i32_0 : i32, i32
  }
  func.func @transform_3(%arg0: i32) -> (i32, i32, i32, i32) {
    %c0_i32 = arith.constant 0 : i32
    %c0_i32_0 = arith.constant 0 : i32
    %c0_i32_1 = arith.constant 0 : i32
    %c0_i32_2 = arith.constant 0 : i32
    return %arg0, %c0_i32, %c0_i32_0, %c0_i32_1 : i32, i32, i32, i32
  }
}

module attributes {stable_mosaic.version = 11 : i64} {
  func.func @_conv3x3_se_gate_res_kernel(%arg0: i32, %arg1: memref<1x18x18x128xbf16, #tpu.memory_space<vmem>>, %arg2: memref<1x16x16x128xf32, #tpu.memory_space<vmem>>, %arg3: memref<9x128x128xbf16, #tpu.memory_space<vmem>>, %arg4: memref<1x128xf32, #tpu.memory_space<vmem>>, %arg5: memref<128x128xf32, #tpu.memory_space<vmem>>, %arg6: memref<1x128xf32, #tpu.memory_space<vmem>>, %arg7: memref<128x128xf32, #tpu.memory_space<vmem>>, %arg8: memref<1x128xf32, #tpu.memory_space<vmem>>, %arg9: memref<1x16x16x128xf32, #tpu.memory_space<vmem>>) attributes {dimension_semantics = [#tpu.dimension_semantics<parallel>], iteration_bounds = array<i64: 2>, scalar_prefetch = 0 : i64, scratch_operands = 0 : i64, tpu.core_type = #tpu.core_type<tc>, window_params = [{transform_indices = @transform_0, window_bounds = array<i64: 1, 18, 18, 128>}, {transform_indices = @transform_1, window_bounds = array<i64: 1, 16, 16, 128>}, {pipeline_mode = #tpu.pipeline_mode<synchronous>, transform_indices = @transform_2, window_bounds = array<i64: 9, 128, 128>}, {pipeline_mode = #tpu.pipeline_mode<synchronous>, transform_indices = @transform_3, window_bounds = array<i64: 1, 128>}, {pipeline_mode = #tpu.pipeline_mode<synchronous>, transform_indices = @transform_4, window_bounds = array<i64: 128, 128>}, {pipeline_mode = #tpu.pipeline_mode<synchronous>, transform_indices = @transform_5, window_bounds = array<i64: 1, 128>}, {pipeline_mode = #tpu.pipeline_mode<synchronous>, transform_indices = @transform_6, window_bounds = array<i64: 128, 128>}, {pipeline_mode = #tpu.pipeline_mode<synchronous>, transform_indices = @transform_7, window_bounds = array<i64: 1, 128>}, {transform_indices = @transform_8, window_bounds = array<i64: 1, 16, 16, 128>}]} {
    %cst = arith.constant 0.000000e+00 : f32
    %0 = vector.broadcast %cst : f32 to vector<256x128xf32>
    %c0 = arith.constant 0 : index
    %c0_0 = arith.constant 0 : index
    %c0_1 = arith.constant 0 : index
    %c0_2 = arith.constant 0 : index
    %1 = vector.load %arg1[%c0, %c0_0, %c0_1, %c0_2] : memref<1x18x18x128xbf16, #tpu.memory_space<vmem>>, vector<1x16x16x128xbf16>
    %2 = vector.shape_cast %1 : vector<1x16x16x128xbf16> to vector<16x16x128xbf16>
    %3 = vector.shape_cast %2 : vector<16x16x128xbf16> to vector<256x128xbf16>
    %c0_3 = arith.constant 0 : index
    %c0_4 = arith.constant 0 : index
    %c0_5 = arith.constant 0 : index
    %4 = vector.load %arg3[%c0_3, %c0_4, %c0_5] : memref<9x128x128xbf16, #tpu.memory_space<vmem>>, vector<1x128x128xbf16>
    %5 = vector.shape_cast %4 : vector<1x128x128xbf16> to vector<128x128xbf16>
    %cst_6 = arith.constant dense<0.000000e+00> : vector<256x128xf32>
    %6 = tpu.matmul %3, %5, %cst_6 {dimension_numbers = #tpu.dot_dimension_numbers<[1], [0], [0], [1], [0, 0, 1, 1], [], []>} : vector<256x128xbf16>, vector<128x128xbf16>, vector<256x128xf32> -> vector<256x128xf32>
    %7 = arith.addf %0, %6 : vector<256x128xf32>
    %c0_7 = arith.constant 0 : index
    %c0_8 = arith.constant 0 : index
    %c1 = arith.constant 1 : index
    %c0_9 = arith.constant 0 : index
    %8 = vector.load %arg1[%c0_7, %c0_8, %c1, %c0_9] : memref<1x18x18x128xbf16, #tpu.memory_space<vmem>>, vector<1x16x16x128xbf16>
    %9 = vector.shape_cast %8 : vector<1x16x16x128xbf16> to vector<16x16x128xbf16>
    %10 = vector.shape_cast %9 : vector<16x16x128xbf16> to vector<256x128xbf16>
    %c1_10 = arith.constant 1 : index
    %c0_11 = arith.constant 0 : index
    %c0_12 = arith.constant 0 : index
    %11 = vector.load %arg3[%c1_10, %c0_11, %c0_12] : memref<9x128x128xbf16, #tpu.memory_space<vmem>>, vector<1x128x128xbf16>
    %12 = vector.shape_cast %11 : vector<1x128x128xbf16> to vector<128x128xbf16>
    %cst_13 = arith.constant dense<0.000000e+00> : vector<256x128xf32>
    %13 = tpu.matmul %10, %12, %cst_13 {dimension_numbers = #tpu.dot_dimension_numbers<[1], [0], [0], [1], [0, 0, 1, 1], [], []>} : vector<256x128xbf16>, vector<128x128xbf16>, vector<256x128xf32> -> vector<256x128xf32>
    %14 = arith.addf %7, %13 : vector<256x128xf32>
    %c0_14 = arith.constant 0 : index
    %c0_15 = arith.constant 0 : index
    %c2 = arith.constant 2 : index
    %c0_16 = arith.constant 0 : index
    %15 = vector.load %arg1[%c0_14, %c0_15, %c2, %c0_16] : memref<1x18x18x128xbf16, #tpu.memory_space<vmem>>, vector<1x16x16x128xbf16>
    %16 = vector.shape_cast %15 : vector<1x16x16x128xbf16> to vector<16x16x128xbf16>
    %17 = vector.shape_cast %16 : vector<16x16x128xbf16> to vector<256x128xbf16>
    %c2_17 = arith.constant 2 : index
    %c0_18 = arith.constant 0 : index
    %c0_19 = arith.constant 0 : index
    %18 = vector.load %arg3[%c2_17, %c0_18, %c0_19] : memref<9x128x128xbf16, #tpu.memory_space<vmem>>, vector<1x128x128xbf16>
    %19 = vector.shape_cast %18 : vector<1x128x128xbf16> to vector<128x128xbf16>
    %cst_20 = arith.constant dense<0.000000e+00> : vector<256x128xf32>
    %20 = tpu.matmul %17, %19, %cst_20 {dimension_numbers = #tpu.dot_dimension_numbers<[1], [0], [0], [1], [0, 0, 1, 1], [], []>} : vector<256x128xbf16>, vector<128x128xbf16>, vector<256x128xf32> -> vector<256x128xf32>
    %21 = arith.addf %14, %20 : vector<256x128xf32>
    %c0_21 = arith.constant 0 : index
    %c1_22 = arith.constant 1 : index
    %c0_23 = arith.constant 0 : index
    %c0_24 = arith.constant 0 : index
    %22 = vector.load %arg1[%c0_21, %c1_22, %c0_23, %c0_24] : memref<1x18x18x128xbf16, #tpu.memory_space<vmem>>, vector<1x16x16x128xbf16>
    %23 = vector.shape_cast %22 : vector<1x16x16x128xbf16> to vector<16x16x128xbf16>
    %24 = vector.shape_cast %23 : vector<16x16x128xbf16> to vector<256x128xbf16>
    %c3 = arith.constant 3 : index
    %c0_25 = arith.constant 0 : index
    %c0_26 = arith.constant 0 : index
    %25 = vector.load %arg3[%c3, %c0_25, %c0_26] : memref<9x128x128xbf16, #tpu.memory_space<vmem>>, vector<1x128x128xbf16>
    %26 = vector.shape_cast %25 : vector<1x128x128xbf16> to vector<128x128xbf16>
    %cst_27 = arith.constant dense<0.000000e+00> : vector<256x128xf32>
    %27 = tpu.matmul %24, %26, %cst_27 {dimension_numbers = #tpu.dot_dimension_numbers<[1], [0], [0], [1], [0, 0, 1, 1], [], []>} : vector<256x128xbf16>, vector<128x128xbf16>, vector<256x128xf32> -> vector<256x128xf32>
    %28 = arith.addf %21, %27 : vector<256x128xf32>
    %c0_28 = arith.constant 0 : index
    %c1_29 = arith.constant 1 : index
    %c1_30 = arith.constant 1 : index
    %c0_31 = arith.constant 0 : index
    %29 = vector.load %arg1[%c0_28, %c1_29, %c1_30, %c0_31] : memref<1x18x18x128xbf16, #tpu.memory_space<vmem>>, vector<1x16x16x128xbf16>
    %30 = vector.shape_cast %29 : vector<1x16x16x128xbf16> to vector<16x16x128xbf16>
    %31 = vector.shape_cast %30 : vector<16x16x128xbf16> to vector<256x128xbf16>
    %c4 = arith.constant 4 : index
    %c0_32 = arith.constant 0 : index
    %c0_33 = arith.constant 0 : index
    %32 = vector.load %arg3[%c4, %c0_32, %c0_33] : memref<9x128x128xbf16, #tpu.memory_space<vmem>>, vector<1x128x128xbf16>
    %33 = vector.shape_cast %32 : vector<1x128x128xbf16> to vector<128x128xbf16>
    %cst_34 = arith.constant dense<0.000000e+00> : vector<256x128xf32>
    %34 = tpu.matmul %31, %33, %cst_34 {dimension_numbers = #tpu.dot_dimension_numbers<[1], [0], [0], [1], [0, 0, 1, 1], [], []>} : vector<256x128xbf16>, vector<128x128xbf16>, vector<256x128xf32> -> vector<256x128xf32>
    %35 = arith.addf %28, %34 : vector<256x128xf32>
    %c0_35 = arith.constant 0 : index
    %c1_36 = arith.constant 1 : index
    %c2_37 = arith.constant 2 : index
    %c0_38 = arith.constant 0 : index
    %36 = vector.load %arg1[%c0_35, %c1_36, %c2_37, %c0_38] : memref<1x18x18x128xbf16, #tpu.memory_space<vmem>>, vector<1x16x16x128xbf16>
    %37 = vector.shape_cast %36 : vector<1x16x16x128xbf16> to vector<16x16x128xbf16>
    %38 = vector.shape_cast %37 : vector<16x16x128xbf16> to vector<256x128xbf16>
    %c5 = arith.constant 5 : index
    %c0_39 = arith.constant 0 : index
    %c0_40 = arith.constant 0 : index
    %39 = vector.load %arg3[%c5, %c0_39, %c0_40] : memref<9x128x128xbf16, #tpu.memory_space<vmem>>, vector<1x128x128xbf16>
    %40 = vector.shape_cast %39 : vector<1x128x128xbf16> to vector<128x128xbf16>
    %cst_41 = arith.constant dense<0.000000e+00> : vector<256x128xf32>
    %41 = tpu.matmul %38, %40, %cst_41 {dimension_numbers = #tpu.dot_dimension_numbers<[1], [0], [0], [1], [0, 0, 1, 1], [], []>} : vector<256x128xbf16>, vector<128x128xbf16>, vector<256x128xf32> -> vector<256x128xf32>
    %42 = arith.addf %35, %41 : vector<256x128xf32>
    %c0_42 = arith.constant 0 : index
    %c2_43 = arith.constant 2 : index
    %c0_44 = arith.constant 0 : index
    %c0_45 = arith.constant 0 : index
    %43 = vector.load %arg1[%c0_42, %c2_43, %c0_44, %c0_45] : memref<1x18x18x128xbf16, #tpu.memory_space<vmem>>, vector<1x16x16x128xbf16>
    %44 = vector.shape_cast %43 : vector<1x16x16x128xbf16> to vector<16x16x128xbf16>
    %45 = vector.shape_cast %44 : vector<16x16x128xbf16> to vector<256x128xbf16>
    %c6 = arith.constant 6 : index
    %c0_46 = arith.constant 0 : index
    %c0_47 = arith.constant 0 : index
    %46 = vector.load %arg3[%c6, %c0_46, %c0_47] : memref<9x128x128xbf16, #tpu.memory_space<vmem>>, vector<1x128x128xbf16>
    %47 = vector.shape_cast %46 : vector<1x128x128xbf16> to vector<128x128xbf16>
    %cst_48 = arith.constant dense<0.000000e+00> : vector<256x128xf32>
    %48 = tpu.matmul %45, %47, %cst_48 {dimension_numbers = #tpu.dot_dimension_numbers<[1], [0], [0], [1], [0, 0, 1, 1], [], []>} : vector<256x128xbf16>, vector<128x128xbf16>, vector<256x128xf32> -> vector<256x128xf32>
    %49 = arith.addf %42, %48 : vector<256x128xf32>
    %c0_49 = arith.constant 0 : index
    %c2_50 = arith.constant 2 : index
    %c1_51 = arith.constant 1 : index
    %c0_52 = arith.constant 0 : index
    %50 = vector.load %arg1[%c0_49, %c2_50, %c1_51, %c0_52] : memref<1x18x18x128xbf16, #tpu.memory_space<vmem>>, vector<1x16x16x128xbf16>
    %51 = vector.shape_cast %50 : vector<1x16x16x128xbf16> to vector<16x16x128xbf16>
    %52 = vector.shape_cast %51 : vector<16x16x128xbf16> to vector<256x128xbf16>
    %c7 = arith.constant 7 : index
    %c0_53 = arith.constant 0 : index
    %c0_54 = arith.constant 0 : index
    %53 = vector.load %arg3[%c7, %c0_53, %c0_54] : memref<9x128x128xbf16, #tpu.memory_space<vmem>>, vector<1x128x128xbf16>
    %54 = vector.shape_cast %53 : vector<1x128x128xbf16> to vector<128x128xbf16>
    %cst_55 = arith.constant dense<0.000000e+00> : vector<256x128xf32>
    %55 = tpu.matmul %52, %54, %cst_55 {dimension_numbers = #tpu.dot_dimension_numbers<[1], [0], [0], [1], [0, 0, 1, 1], [], []>} : vector<256x128xbf16>, vector<128x128xbf16>, vector<256x128xf32> -> vector<256x128xf32>
    %56 = arith.addf %49, %55 : vector<256x128xf32>
    %c0_56 = arith.constant 0 : index
    %c2_57 = arith.constant 2 : index
    %c2_58 = arith.constant 2 : index
    %c0_59 = arith.constant 0 : index
    %57 = vector.load %arg1[%c0_56, %c2_57, %c2_58, %c0_59] : memref<1x18x18x128xbf16, #tpu.memory_space<vmem>>, vector<1x16x16x128xbf16>
    %58 = vector.shape_cast %57 : vector<1x16x16x128xbf16> to vector<16x16x128xbf16>
    %59 = vector.shape_cast %58 : vector<16x16x128xbf16> to vector<256x128xbf16>
    %c8 = arith.constant 8 : index
    %c0_60 = arith.constant 0 : index
    %c0_61 = arith.constant 0 : index
    %60 = vector.load %arg3[%c8, %c0_60, %c0_61] : memref<9x128x128xbf16, #tpu.memory_space<vmem>>, vector<1x128x128xbf16>
    %61 = vector.shape_cast %60 : vector<1x128x128xbf16> to vector<128x128xbf16>
    %cst_62 = arith.constant dense<0.000000e+00> : vector<256x128xf32>
    %62 = tpu.matmul %59, %61, %cst_62 {dimension_numbers = #tpu.dot_dimension_numbers<[1], [0], [0], [1], [0, 0, 1, 1], [], []>} : vector<256x128xbf16>, vector<128x128xbf16>, vector<256x128xf32> -> vector<256x128xf32>
    %63 = arith.addf %56, %62 : vector<256x128xf32>
    %c0_63 = arith.constant 0 : index
    %c0_64 = arith.constant 0 : index
    %64 = vector.load %arg4[%c0_63, %c0_64] : memref<1x128xf32, #tpu.memory_space<vmem>>, vector<1x128xf32>
    %65 = vector.broadcast %64 : vector<1x128xf32> to vector<256x128xf32>
    %66 = arith.addf %63, %65 : vector<256x128xf32>
    %cst_65 = arith.constant dense<0.000000e+00> : vector<128xf32>
    %67 = vector.multi_reduction <add>, %66, %cst_65 [0] : vector<256x128xf32> to vector<128xf32>
    %68 = vector.shape_cast %67 : vector<128xf32> to vector<1x128xf32>
    %cst_66 = arith.constant 3.906250e-03 : f32
    %69 = vector.broadcast %cst_66 : f32 to vector<1x128xf32>
    %70 = arith.mulf %68, %69 : vector<1x128xf32>
    %c0_67 = arith.constant 0 : index
    %c0_68 = arith.constant 0 : index
    %71 = vector.load %arg5[%c0_67, %c0_68] : memref<128x128xf32, #tpu.memory_space<vmem>>, vector<128x128xf32>
    %cst_69 = arith.constant dense<0.000000e+00> : vector<1x128xf32>
    %72 = tpu.matmul %70, %71, %cst_69 {dimension_numbers = #tpu.dot_dimension_numbers<[1], [0], [0], [1], [0, 0, 1, 1], [], []>} : vector<1x128xf32>, vector<128x128xf32>, vector<1x128xf32> -> vector<1x128xf32>
    %c0_70 = arith.constant 0 : index
    %c0_71 = arith.constant 0 : index
    %73 = vector.load %arg6[%c0_70, %c0_71] : memref<1x128xf32, #tpu.memory_space<vmem>>, vector<1x128xf32>
    %74 = arith.addf %72, %73 : vector<1x128xf32>
    %cst_72 = arith.constant 0.000000e+00 : f32
    %75 = vector.broadcast %cst_72 : f32 to vector<1x128xf32>
    %76 = arith.maximumf %74, %75 : vector<1x128xf32>
    %c0_73 = arith.constant 0 : index
    %c0_74 = arith.constant 0 : index
    %77 = vector.load %arg7[%c0_73, %c0_74] : memref<128x128xf32, #tpu.memory_space<vmem>>, vector<128x128xf32>
    %cst_75 = arith.constant dense<0.000000e+00> : vector<1x128xf32>
    %78 = tpu.matmul %76, %77, %cst_75 {dimension_numbers = #tpu.dot_dimension_numbers<[1], [0], [0], [1], [0, 0, 1, 1], [], []>} : vector<1x128xf32>, vector<128x128xf32>, vector<1x128xf32> -> vector<1x128xf32>
    %c0_76 = arith.constant 0 : index
    %c0_77 = arith.constant 0 : index
    %79 = vector.load %arg8[%c0_76, %c0_77] : memref<1x128xf32, #tpu.memory_space<vmem>>, vector<1x128xf32>
    %80 = arith.addf %78, %79 : vector<1x128xf32>
    %cst_78 = arith.constant 0.000000e+00 : f32
    %81 = vector.broadcast %cst_78 : f32 to vector<1x128xf32>
    %82 = arith.subf %81, %80 : vector<1x128xf32>
    %83 = math.exp %82 : vector<1x128xf32>
    %cst_79 = arith.constant 1.000000e+00 : f32
    %84 = vector.broadcast %cst_79 : f32 to vector<1x128xf32>
    %85 = arith.addf %84, %83 : vector<1x128xf32>
    %cst_80 = arith.constant 1.000000e+00 : f32
    %86 = vector.broadcast %cst_80 : f32 to vector<1x128xf32>
    %87 = arith.divf %86, %85 : vector<1x128xf32>
    %c0_81 = arith.constant 0 : index
    %c0_82 = arith.constant 0 : index
    %c0_83 = arith.constant 0 : index
    %c0_84 = arith.constant 0 : index
    %88 = vector.load %arg2[%c0_81, %c0_82, %c0_83, %c0_84] : memref<1x16x16x128xf32, #tpu.memory_space<vmem>>, vector<1x16x16x128xf32>
    %89 = vector.shape_cast %88 : vector<1x16x16x128xf32> to vector<16x16x128xf32>
    %90 = vector.shape_cast %66 : vector<256x128xf32> to vector<16x16x128xf32>
    %91 = vector.shape_cast %87 : vector<1x128xf32> to vector<1x1x128xf32>
    %92 = vector.broadcast %91 : vector<1x1x128xf32> to vector<16x16x128xf32>
    %93 = arith.mulf %90, %92 : vector<16x16x128xf32>
    %94 = arith.addf %89, %93 : vector<16x16x128xf32>
    %c0_85 = arith.constant 0 : index
    %c0_86 = arith.constant 0 : index
    %c0_87 = arith.constant 0 : index
    %c0_88 = arith.constant 0 : index
    %95 = vector.load %arg9[%c0_85, %c0_86, %c0_87, %c0_88] : memref<1x16x16x128xf32, #tpu.memory_space<vmem>>, vector<1x16x16x128xf32>
    %96 = vector.shape_cast %95 : vector<1x16x16x128xf32> to vector<16x16x128xf32>
    %97 = vector.shape_cast %94 : vector<16x16x128xf32> to vector<1x16x16x128xf32>
    tpu.vector_store %arg9[%c0_85, %c0_86, %c0_87, %c0_88], %97 {strides = array<i32>} : memref<1x16x16x128xf32, #tpu.memory_space<vmem>>, vector<1x16x16x128xf32>,
    return
  }
  func.func @transform_0(%arg0: i32) -> (i32, i32, i32, i32) {
    %c0_i32 = arith.constant 0 : i32
    %c0_i32_0 = arith.constant 0 : i32
    %c0_i32_1 = arith.constant 0 : i32
    %c0_i32_2 = arith.constant 0 : i32
    return %arg0, %c0_i32, %c0_i32_0, %c0_i32_1 : i32, i32, i32, i32
  }
  func.func @transform_1(%arg0: i32) -> (i32, i32, i32, i32) {
    %c0_i32 = arith.constant 0 : i32
    %c0_i32_0 = arith.constant 0 : i32
    %c0_i32_1 = arith.constant 0 : i32
    %c0_i32_2 = arith.constant 0 : i32
    return %arg0, %c0_i32, %c0_i32_0, %c0_i32_1 : i32, i32, i32, i32
  }
  func.func @transform_2(%arg0: i32) -> (i32, i32, i32) {
    %c0_i32 = arith.constant 0 : i32
    %c0_i32_0 = arith.constant 0 : i32
    %c0_i32_1 = arith.constant 0 : i32
    %c0_i32_2 = arith.constant 0 : i32
    return %c0_i32, %c0_i32_0, %c0_i32_1 : i32, i32, i32
  }
  func.func @transform_3(%arg0: i32) -> (i32, i32) {
    %c0_i32 = arith.constant 0 : i32
    %c0_i32_0 = arith.constant 0 : i32
    %c0_i32_1 = arith.constant 0 : i32
    return %c0_i32, %c0_i32_0 : i32, i32
  }
  func.func @transform_4(%arg0: i32) -> (i32, i32) {
    %c0_i32 = arith.constant 0 : i32
    %c0_i32_0 = arith.constant 0 : i32
    %c0_i32_1 = arith.constant 0 : i32
    return %c0_i32, %c0_i32_0 : i32, i32
  }
  func.func @transform_5(%arg0: i32) -> (i32, i32) {
    %c0_i32 = arith.constant 0 : i32
    %c0_i32_0 = arith.constant 0 : i32
    %c0_i32_1 = arith.constant 0 : i32
    return %c0_i32, %c0_i32_0 : i32, i32
  }
  func.func @transform_6(%arg0: i32) -> (i32, i32) {
    %c0_i32 = arith.constant 0 : i32
    %c0_i32_0 = arith.constant 0 : i32
    %c0_i32_1 = arith.constant 0 : i32
    return %c0_i32, %c0_i32_0 : i32, i32
  }
  func.func @transform_7(%arg0: i32) -> (i32, i32) {
    %c0_i32 = arith.constant 0 : i32
    %c0_i32_0 = arith.constant 0 : i32
    %c0_i32_1 = arith.constant 0 : i32
    return %c0_i32, %c0_i32_0 : i32, i32
  }
  func.func @transform_8(%arg0: i32) -> (i32, i32, i32, i32) {
    %c0_i32 = arith.constant 0 : i32
    %c0_i32_0 = arith.constant 0 : i32
    %c0_i32_1 = arith.constant 0 : i32
    %c0_i32_2 = arith.constant 0 : i32
    return %arg0, %c0_i32, %c0_i32_0, %c0_i32_1 : i32, i32, i32, i32
  }
}

</mosaic_0001>

<llo_original>
// kernel: rcan_block_forward.2
$region0: #{rcan_block_forward.2}
  #allocation0 [shape = 'u32[]', space=smem, size = 0x4, offset = 0x4, fixed_abs, tag = 'smem constant byte address 0x4 - core index']
  #allocation1 [shape = 'u32[144,128]{1,0:T(1,128)}', space=vmem, size = 0x12000, scoped, tag = 'internal scratch']
  %s0 = inlined_call_operand.vmem [shape: bf16[2,18,18,128], index: 0, kind: input, shape index: {}]
  %s1 = inlined_call_operand.vmem [shape: bf16[9,128,128], index: 1, kind: input, shape index: {}]
  %s2 = inlined_call_operand.vmem [shape: f32[1,128], index: 2, kind: input, shape index: {}]
  %s3 = inlined_call_operand.vmem [shape: bf16[2,16,16,128], index: 3, kind: output, shape index: {}]
  %s4 = sld [smem:[#allocation0]]
  $region45: #{rcan_block_forward.2} parent=0
    _
  %s6 = ssub.s32 1, %s4
  %s7 = scalar_select 0, %s6, %s4
  loop: start=0, step=1, limit=4
  $region2: #{rcan_block_forward.2} parent=0 // loop_pre_header
    _
  $region3: #{rcan_block_forward.2} parent=0 // loop_header
    %s9 = sphi 0, %s13
    %p10 = scmp.ge.s32.totalorder %s9, 4
    %s19 = sphi 0, %s21
    %s22 = sphi 0, %s19
    %s23 = sphi 0, %s22
    %s39 = sphi 0, %s23
    %s43 = sphi 0, %s43
    %s45 = sphi 0, %s43
    %s46 = sphi 0, %s45
    %s60 = sphi 0, %s46
    %s64 = sphi 0, %s64
    %s66 = sphi 0, %s64
    %s67 = sphi 0, %s66
    %s81 = sphi 0, %s67
    %s87 = sphi 0, %s89
    %s90 = sphi 0, %s87
    %s91 = sphi 0, %s90
    %s107 = sphi 0, %s91
  $region4: #{rcan_block_forward.2} parent=0 // loop_header_branch
    %12 = sbr.rel (%p10) target = $region8
  $region5: #{rcan_block_forward.2} parent=0 // loop_body
    %s14 = ssub.s32 %s9, 1
    %s15 = ssub.s32 %s9, 2
    %s16 = sadd.s32 %s9, 1
    %s17 = ssub.s32 %s9, %s16
    %p18 = scmp.eq.s32.totalorder %s17, 0
    %s20 = sadd.s32 %s19, 1
    %s21 = scalar_select %p18, %s19, %s20
    %p24 = pneg %p18
    %p25 = scmp.eq.s32.totalorder %s9, 1
    %p26 = por %p24, %p25
    %p27 = scmp.ne.s32.totalorder %s19, %s22
    %p28 = scmp.eq.s32.totalorder %s9, 0
    %p29 = por %p27, %p28
    %p30 = scmp.ne.s32.totalorder %s19, %s22
    %p31 = scmp.eq.s32.totalorder %s14, 1
    %p32 = por %p30, %p31
    %p33 = scmp.ne.s32.totalorder %s22, %s23
    %p34 = scmp.eq.s32.totalorder %s14, 0
    %p35 = por %p33, %p34
    %p36 = scmp.ne.s32.totalorder %s22, %s23
    %p37 = scmp.eq.s32.totalorder %s15, 1
    %p38 = por %p36, %p37
    %p40 = scmp.ne.s32.totalorder %s23, %s39
    %p41 = scmp.eq.s32.totalorder %s15, 0
    %p42 = por %p40, %p41
    %s44 = sadd.s32 %s43, 1
    %p47 = scmp.eq.s32.totalorder %s9, 1
    %p48 = scmp.ne.s32.totalorder %s43, %s45
    %p49 = scmp.eq.s32.totalorder %s9, 0
    %p50 = por %p48, %p49
    %p51 = scmp.ne.s32.totalorder %s43, %s45
    %p52 = scmp.eq.s32.totalorder %s14, 1
    %p53 = por %p51, %p52
    %p54 = scmp.ne.s32.totalorder %s45, %s46
    %p55 = scmp.eq.s32.totalorder %s14, 0
    %p56 = por %p54, %p55
    %p57 = scmp.ne.s32.totalorder %s45, %s46
    %p58 = scmp.eq.s32.totalorder %s15, 1
    %p59 = por %p57, %p58
    %p61 = scmp.ne.s32.totalorder %s46, %s60
    %p62 = scmp.eq.s32.totalorder %s15, 0
    %p63 = por %p61, %p62
    %s65 = sadd.s32 %s64, 1
    %p68 = scmp.eq.s32.totalorder %s9, 1
    %p69 = scmp.ne.s32.totalorder %s64, %s66
    %p70 = scmp.eq.s32.totalorder %s9, 0
    %p71 = por %p69, %p70
    %p72 = scmp.ne.s32.totalorder %s64, %s66
    %p73 = scmp.eq.s32.totalorder %s14, 1
    %p74 = por %p72, %p73
    %p75 = scmp.ne.s32.totalorder %s66, %s67
    %p76 = scmp.eq.s32.totalorder %s14, 0
    %p77 = por %p75, %p76
    %p78 = scmp.ne.s32.totalorder %s66, %s67
    %p79 = scmp.eq.s32.totalorder %s15, 1
    %p80 = por %p78, %p79
    %p82 = scmp.ne.s32.totalorder %s67, %s81
    %p83 = scmp.eq.s32.totalorder %s15, 0
    %p84 = por %p82, %p83
    %s85 = ssub.s32 %s9, %s16
    %p86 = scmp.eq.s32.totalorder %s85, 0
    %s88 = sadd.s32 %s87, 1
    %s89 = scalar_select %p86, %s87, %s88
    %p92 = pneg %p86
    %p93 = scmp.eq.s32.totalorder %s9, 1
    %p94 = por %p92, %p93
    %p95 = scmp.ne.s32.totalorder %s87, %s90
    %p96 = scmp.eq.s32.totalorder %s9, 0
    %p97 = por %p95, %p96
    %p98 = scmp.ne.s32.totalorder %s87, %s90
    %p99 = scmp.eq.s32.totalorder %s14, 1
    %p100 = por %p98, %p99
    %p101 = scmp.ne.s32.totalorder %s90, %s91
    %p102 = scmp.eq.s32.totalorder %s14, 0
    %p103 = por %p101, %p102
    %p104 = scmp.ne.s32.totalorder %s90, %s91
    %p105 = scmp.eq.s32.totalorder %s15, 1
    %p106 = por %p104, %p105
    %p108 = scmp.ne.s32.totalorder %s91, %s107
    %p109 = scmp.eq.s32.totalorder %s15, 0
    %p110 = por %p108, %p109
    %p111 = scmp.le.s32.totalorder 1, %s9
    %p112 = scmp.lt.s32.totalorder %s9, 3
    %p113 = pnand %p111, %p112
    %p114 = pneg %p113
    // Predicated region
    $region9: #{rcan_block_forward.2} parent=5 // pred_check
      _
    $region10: #{rcan_block_forward.2} parent=5 // pred_check_branch
      %116 = sbr.rel (%p113) target = $region12
    $region11: #{rcan_block_forward.2} parent=5 // pred_region
      %s117 = ssub.s32 %s9, 1
      // Predicated region
      $region13: #{rcan_block_forward.2} parent=11 // pred_check
        %p118 = pneg %p56
      $region14: #{rcan_block_forward.2} parent=11 // pred_check_branch
        %120 = sbr.rel (%p118) target = $region16
      $region15: #{rcan_block_forward.2} parent=11 // pred_region
        _
      $region16: #{rcan_block_forward.2} parent=11 // pred_fallthru
        _
      // Predicated region
      $region17: #{rcan_block_forward.2} parent=11 // pred_check
        %p121 = pneg %p77
      $region18: #{rcan_block_forward.2} parent=11 // pred_check_branch
        %123 = sbr.rel (%p121) target = $region20
      $region19: #{rcan_block_forward.2} parent=11 // pred_region
        _
      $region20: #{rcan_block_forward.2} parent=11 // pred_fallthru
        _
    $region12: #{rcan_block_forward.2} parent=5 // pred_fallthru
      _
    %p124 = scmp.lt.s32.totalorder %s9, 2
    // Predicated region
    $region21: #{rcan_block_forward.2} parent=5 // pred_check
      %p125 = pneg %p124
    $region22: #{rcan_block_forward.2} parent=5 // pred_check_branch
      %127 = sbr.rel (%p125) target = $region24
    $region23: #{rcan_block_forward.2} parent=5 // pred_region
      // Predicated region
      $region25: #{rcan_block_forward.2} parent=23 // pred_check
        %p128 = pneg %p29
      $region26: #{rcan_block_forward.2} parent=23 // pred_check_branch
        %130 = sbr.rel (%p128) target = $region28
      $region27: #{rcan_block_forward.2} parent=23 // pred_region
        %p131 = scmp.lt.s32.totalorder %s9, 1
        %s132 = scalar_select %p131, %s9, 1
        %s133 = smul.addr %s132, 54
        %s134 = smul.addr %s133, 4
        %s135 = scalar_lea.vmem %s0, %s134
      $region28: #{rcan_block_forward.2} parent=23 // pred_fallthru
        _
    $region24: #{rcan_block_forward.2} parent=5 // pred_fallthru
      _
    %p136 = scmp.le.s32.totalorder 1, %s9
    %p137 = scmp.lt.s32.totalorder %s9, 3
    %p138 = pnand %p136, %p137
    %p139 = pneg %p138
    // Predicated region
    $region29: #{rcan_block_forward.2} parent=5 // pred_check
      _
    $region30: #{rcan_block_forward.2} parent=5 // pred_check_branch
      %141 = sbr.rel (%p138) target = $region32
    $region31: #{rcan_block_forward.2} parent=5 // pred_region
      %s142 = ssub.s32 %s9, 1
      %p143 = scmp.lt.s32.totalorder %s14, 1
      %s144 = scalar_select %p143, %s14, 1
      %s145 = smul.addr %s144, 54
      %s146 = smul.addr %s145, 4
      %s147 = scalar_lea.vmem %s0, %s146
      %p148 = pneg %p35
      %p149 = pneg %p32
      %p150 = pneg %p56
      %p151 = pneg %p53
      %p152 = pneg %p77
      %p153 = pneg %p74
      %p154 = pneg %p103
      %p155 = pneg %p100
      %p156 = scmp.lt.s32.totalorder %s14, 1
      %s157 = scalar_select %p156, %s14, 1
      %s158 = smul.addr %s157, 32
      %s159 = smul.addr %s158, 4
      %s160 = scalar_lea.vmem %s3, %s159
      %p161 = scmp.lt.s32.totalorder %s14, 1
      %s162 = scalar_select %p161, %s14, 1
      %s163 = smul.addr %s162, 54
      %s164 = smul.addr %s163, 4
      %s165 = scalar_lea.vmem %s0, %s164
      %p166 = scmp.lt.s32.totalorder %s14, 1
      %s167 = scalar_select %p166, %s14, 1
      %s168 = smul.addr %s167, 32
      %s169 = smul.addr %s168, 4
      %s170 = scalar_lea.vmem %s3, %s169
      %v172 = vld [vmem:[%s165] sm:$0xf]
      %v173 = vld [vmem:[%s165 + $0x4] sm:$0xf]
      %v174 = vld [vmem:[%s165 + $0xc] sm:$0xf]
      %v175 = vld [vmem:[%s165 + $0x10] sm:$0xf]
      %v176 = vld [vmem:[%s165 + $0x18] sm:$0xf]
      %v177 = vld [vmem:[%s165 + $0x1c] sm:$0xf]
      %v178 = vld [vmem:[%s165 + $0x24] sm:$0xf]
      %v179 = vld [vmem:[%s165 + $0x28] sm:$0xf]
      %v180 = vld [vmem:[%s165 + $0x30] sm:$0xf]
      %v181 = vld [vmem:[%s165 + $0x34] sm:$0xf]
      %v182 = vld [vmem:[%s165 + $0x3c] sm:$0xf]
      %v183 = vld [vmem:[%s165 + $0x40] sm:$0xf]
      %v184 = vld [vmem:[%s165 + $0x48] sm:$0xf]
      %v185 = vld [vmem:[%s165 + $0x4c] sm:$0xf]
      %v186 = vld [vmem:[%s165 + $0x54] sm:$0xf]
      %v187 = vld [vmem:[%s165 + $0x58] sm:$0xf]
      %v188 = vld [vmem:[%s165 + $0x60] sm:$0xf]
      %v189 = vld [vmem:[%s165 + $0x64] sm:$0xf]
      %v190 = vld [vmem:[%s165 + $0x6c] sm:$0xf]
      %v191 = vld [vmem:[%s165 + $0x70] sm:$0xf]
      %v192 = vld [vmem:[%s165 + $0x78] sm:$0xf]
      %v193 = vld [vmem:[%s165 + $0x7c] sm:$0xf]
      %v194 = vld [vmem:[%s165 + $0x84] sm:$0xf]
      %v195 = vld [vmem:[%s165 + $0x88] sm:$0xf]
      %v196 = vld [vmem:[%s165 + $0x90] sm:$0xf]
      %v197 = vld [vmem:[%s165 + $0x94] sm:$0xf]
      %v198 = vld [vmem:[%s165 + $0x9c] sm:$0xf]
      %v199 = vld [vmem:[%s165 + $0xa0] sm:$0xf]
      %v200 = vld [vmem:[%s165 + $0xa8] sm:$0xf]
      %v201 = vld [vmem:[%s165 + $0xac] sm:$0xf]
      %v202 = vld [vmem:[%s165 + $0xb4] sm:$0xf]
      %v203 = vld [vmem:[%s165 + $0xb8] sm:$0xf]
      %v204 = vld [vmem:[%s1] sm:$0xf]
      %v205 = vld [vmem:[%s1 + $0x4] sm:$0xf]
      %v206 = vld [vmem:[%s1 + $0x8] sm:$0xf]
      %v207 = vld [vmem:[%s1 + $0xc] sm:$0xf]
      %v208 = vld [vmem:[%s1 + $0x10] sm:$0xf]
      %v209 = vld [vmem:[%s1 + $0x14] sm:$0xf]
      %v210 = vld [vmem:[%s1 + $0x18] sm:$0xf]
      %v211 = vld [vmem:[%s1 + $0x1c] sm:$0xf]
      %v212 = vld [vmem:[%s1 + $0x20] sm:$0xf]
      %v213 = vld [vmem:[%s1 + $0x24] sm:$0xf]
      %v214 = vld [vmem:[%s1 + $0x28] sm:$0xf]
      %v215 = vld [vmem:[%s1 + $0x2c] sm:$0xf]
      %v216 = vld [vmem:[%s1 + $0x30] sm:$0xf]
      %v217 = vld [vmem:[%s1 + $0x34] sm:$0xf]
      %v218 = vld [vmem:[%s1 + $0x38] sm:$0xf]
      %v219 = vld [vmem:[%s1 + $0x3c] sm:$0xf]
      %v220 = vld [vmem:[%s165 + $0x8] sm:$0x1]
      %v221 = vld [vmem:[%s165 + $0x14] sm:$0x1]
      %v222 = vld [vmem:[%s165 + $0x20] sm:$0x1]
      %v223 = vld [vmem:[%s165 + $0x2c] sm:$0x1]
      %v224 = vld [vmem:[%s165 + $0x38] sm:$0x1]
      %v225 = vld [vmem:[%s165 + $0x44] sm:$0x1]
      %v226 = vld [vmem:[%s165 + $0x50] sm:$0x1]
      %v227 = vld [vmem:[%s165 + $0x5c] sm:$0x1]
      %v228 = vld [vmem:[%s165 + $0x68] sm:$0x1]
      %v229 = vld [vmem:[%s165 + $0x74] sm:$0x1]
      %v230 = vld [vmem:[%s165 + $0x80] sm:$0x1]
      %v231 = vld [vmem:[%s165 + $0x8c] sm:$0x1]
      %v232 = vld [vmem:[%s165 + $0x98] sm:$0x1]
      %v233 = vld [vmem:[%s165 + $0xa4] sm:$0x1]
      %v234 = vld [vmem:[%s165 + $0xb0] sm:$0x1]
      %v235 = vld [vmem:[%s165 + $0xbc] sm:$0x1]
      %vm236 = vsmask.f32 3328
      %vm237 = vsmask.f32 7440
      %vm238 = vmor %vm236, %vm237
      %v240 = vshrl.u32 %v172, 16
      %v242 = vrot.slane %v240, 4
      %v243 = vshll.u32 %v172, 16
      %v245 = vrot.slane %v243, 5
      %v246 = vor.u32 %v242, %v245
      %v247 = vrot.slane %v246, 4
      %v249 = vshll.u32 %v173, 16
      %v251 = vrot.slane %v249, 5
      %v252 = vsel %vm238, %v247, %v251
      %v253 = vshrl.u32 %v173, 16
      %v255 = vrot.slane %v253, 4
      %v256 = vor.u32 %v255, %v251
      %v257 = vrot.slane %v256, 4
      %v259 = vshll.u32 %v220, 16
      %v261 = vrot.slane %v259, 5
      %v262 = vsel %vm238, %v257, %v261
      %v264 = vshrl.u32 %v174, 16
      %v266 = vrot.slane %v264, 4
      %v267 = vshll.u32 %v174, 16
      %v269 = vrot.slane %v267, 5
      %v270 = vor.u32 %v266, %v269
      %v271 = vrot.slane %v270, 4
      %v273 = vshll.u32 %v175, 16
      %v275 = vrot.slane %v273, 5
      %v276 = vsel %vm238, %v271, %v275
      %v277 = vshrl.u32 %v175, 16
      %v279 = vrot.slane %v277, 4
      %v280 = vor.u32 %v279, %v275
      %v281 = vrot.slane %v280, 4
      %v283 = vshll.u32 %v221, 16
      %v285 = vrot.slane %v283, 5
      %v286 = vsel %vm238, %v281, %v285
      %v288 = vshrl.u32 %v176, 16
      %v290 = vrot.slane %v288, 4
      %v291 = vshll.u32 %v176, 16
      %v293 = vrot.slane %v291, 5
      %v294 = vor.u32 %v290, %v293
      %v295 = vrot.slane %v294, 4
      %v297 = vshll.u32 %v177, 16
      %v299 = vrot.slane %v297, 5
      %v300 = vsel %vm238, %v295, %v299
      %v301 = vshrl.u32 %v177, 16
      %v303 = vrot.slane %v301, 4
      %v304 = vor.u32 %v303, %v299
      %v305 = vrot.slane %v304, 4
      %v307 = vshll.u32 %v222, 16
      %v309 = vrot.slane %v307, 5
      %v310 = vsel %vm238, %v305, %v309
      %v312 = vshrl.u32 %v178, 16
      %v314 = vrot.slane %v312, 4
      %v315 = vshll.u32 %v178, 16
      %v317 = vrot.slane %v315, 5
      %v318 = vor.u32 %v314, %v317
      %v319 = vrot.slane %v318, 4
      %v321 = vshll.u32 %v179, 16
      %v323 = vrot.slane %v321, 5
      %v324 = vsel %vm238, %v319, %v323
      %v325 = vshrl.u32 %v179, 16
      %v327 = vrot.slane %v325, 4
      %v328 = vor.u32 %v327, %v323
      %v329 = vrot.slane %v328, 4
      %v331 = vshll.u32 %v223, 16
      %v333 = vrot.slane %v331, 5
      %v334 = vsel %vm238, %v329, %v333
      %v336 = vshrl.u32 %v180, 16
      %v338 = vrot.slane %v336, 4
      %v339 = vshll.u32 %v180, 16
      %v341 = vrot.slane %v339, 5
      %v342 = vor.u32 %v338, %v341
      %v343 = vrot.slane %v342, 4
      %v345 = vshll.u32 %v181, 16
      %v347 = vrot.slane %v345, 5
      %v348 = vsel %vm238, %v343, %v347
      %v349 = vshrl.u32 %v181, 16
      %v351 = vrot.slane %v349, 4
      %v352 = vor.u32 %v351, %v347
      %v353 = vrot.slane %v352, 4
      %v355 = vshll.u32 %v224, 16
      %v357 = vrot.slane %v355, 5
      %v358 = vsel %vm238, %v353, %v357
      %v360 = vshrl.u32 %v182, 16
      %v362 = vrot.slane %v360, 4
      %v363 = vshll.u32 %v182, 16
      %v365 = vrot.slane %v363, 5
      %v366 = vor.u32 %v362, %v365
      %v367 = vrot.slane %v366, 4
      %v369 = vshll.u32 %v183, 16
      %v371 = vrot.slane %v369, 5
      %v372 = vsel %vm238, %v367, %v371
      %v373 = vshrl.u32 %v183, 16
      %v375 = vrot.slane %v373, 4
      %v376 = vor.u32 %v375, %v371
      %v377 = vrot.slane %v376, 4
      %v379 = vshll.u32 %v225, 16
      %v381 = vrot.slane %v379, 5
      %v382 = vsel %vm238, %v377, %v381
      %v384 = vshrl.u32 %v184, 16
      %v386 = vrot.slane %v384, 4
      %v387 = vshll.u32 %v184, 16
      %v389 = vrot.slane %v387, 5
      %v390 = vor.u32 %v386, %v389
      %v391 = vrot.slane %v390, 4
      %v393 = vshll.u32 %v185, 16
      %v395 = vrot.slane %v393, 5
      %v396 = vsel %vm238, %v391, %v395
      %v397 = vshrl.u32 %v185, 16
      %v399 = vrot.slane %v397, 4
      %v400 = vor.u32 %v399, %v395
      %v401 = vrot.slane %v400, 4
      %v403 = vshll.u32 %v226, 16
      %v405 = vrot.slane %v403, 5
      %v406 = vsel %vm238, %v401, %v405
      %v408 = vshrl.u32 %v186, 16
      %v410 = vrot.slane %v408, 4
      %v411 = vshll.u32 %v186, 16
      %v413 = vrot.slane %v411, 5
      %v414 = vor.u32 %v410, %v413
      %v415 = vrot.slane %v414, 4
      %v417 = vshll.u32 %v187, 16
      %v419 = vrot.slane %v417, 5
      %v420 = vsel %vm238, %v415, %v419
      %v421 = vshrl.u32 %v187, 16
      %v423 = vrot.slane %v421, 4
      %v424 = vor.u32 %v423, %v419
      %v425 = vrot.slane %v424, 4
      %v427 = vshll.u32 %v227, 16
      %v429 = vrot.slane %v427, 5
      %v430 = vsel %vm238, %v425, %v429
      %v432 = vshrl.u32 %v188, 16
      %v434 = vrot.slane %v432, 4
      %v435 = vshll.u32 %v188, 16
      %v437 = vrot.slane %v435, 5
      %v438 = vor.u32 %v434, %v437
      %v439 = vrot.slane %v438, 4
      %v441 = vshll.u32 %v189, 16
      %v443 = vrot.slane %v441, 5
      %v444 = vsel %vm238, %v439, %v443
      %v445 = vshrl.u32 %v189, 16
      %v447 = vrot.slane %v445, 4
      %v448 = vor.u32 %v447, %v443
      %v449 = vrot.slane %v448, 4
      %v451 = vshll.u32 %v228, 16
      %v453 = vrot.slane %v451, 5
      %v454 = vsel %vm238, %v449, %v453
      %v456 = vshrl.u32 %v190, 16
      %v458 = vrot.slane %v456, 4
      %v459 = vshll.u32 %v190, 16
      %v461 = vrot.slane %v459, 5
      %v462 = vor.u32 %v458, %v461
      %v463 = vrot.slane %v462, 4
      %v465 = vshll.u32 %v191, 16
      %v467 = vrot.slane %v465, 5
      %v468 = vsel %vm238, %v463, %v467
      %v469 = vshrl.u32 %v191, 16
      %v471 = vrot.slane %v469, 4
      %v472 = vor.u32 %v471, %v467
      %v473 = vrot.slane %v472, 4
      %v475 = vshll.u32 %v229, 16
      %v477 = vrot.slane %v475, 5
      %v478 = vsel %vm238, %v473, %v477
      %v480 = vshrl.u32 %v192, 16
      %v482 = vrot.slane %v480, 4
      %v483 = vshll.u32 %v192, 16
      %v485 = vrot.slane %v483, 5
      %v486 = vor.u32 %v482, %v485
      %v487 = vrot.slane %v486, 4
      %v489 = vshll.u32 %v193, 16
      %v491 = vrot.slane %v489, 5
      %v492 = vsel %vm238, %v487, %v491
      %v493 = vshrl.u32 %v193, 16
      %v495 = vrot.slane %v493, 4
      %v496 = vor.u32 %v495, %v491
      %v497 = vrot.slane %v496, 4
      %v499 = vshll.u32 %v230, 16
      %v501 = vrot.slane %v499, 5
      %v502 = vsel %vm238, %v497, %v501
      %v504 = vshrl.u32 %v194, 16
      %v506 = vrot.slane %v504, 4
      %v507 = vshll.u32 %v194, 16
      %v509 = vrot.slane %v507, 5
      %v510 = vor.u32 %v506, %v509
      %v511 = vrot.slane %v510, 4
      %v513 = vshll.u32 %v195, 16
      %v515 = vrot.slane %v513, 5
      %v516 = vsel %vm238, %v511, %v515
      %v517 = vshrl.u32 %v195, 16
      %v519 = vrot.slane %v517, 4
      %v520 = vor.u32 %v519, %v515
      %v521 = vrot.slane %v520, 4
      %v523 = vshll.u32 %v231, 16
      %v525 = vrot.slane %v523, 5
      %v526 = vsel %vm238, %v521, %v525
      %v528 = vshrl.u32 %v196, 16
      %v530 = vrot.slane %v528, 4
      %v531 = vshll.u32 %v196, 16
      %v533 = vrot.slane %v531, 5
      %v534 = vor.u32 %v530, %v533
      %v535 = vrot.slane %v534, 4
      %v537 = vshll.u32 %v197, 16
      %v539 = vrot.slane %v537, 5
      %v540 = vsel %vm238, %v535, %v539
      %v541 = vshrl.u32 %v197, 16
      %v543 = vrot.slane %v541, 4
      %v544 = vor.u32 %v543, %v539
      %v545 = vrot.slane %v544, 4
      %v547 = vshll.u32 %v232, 16
      %v549 = vrot.slane %v547, 5
      %v550 = vsel %vm238, %v545, %v549
      %v552 = vshrl.u32 %v198, 16
      %v554 = vrot.slane %v552, 4
      %v555 = vshll.u32 %v198, 16
      %v557 = vrot.slane %v555, 5
      %v558 = vor.u32 %v554, %v557
      %v559 = vrot.slane %v558, 4
      %v561 = vshll.u32 %v199, 16
      %v563 = vrot.slane %v561, 5
      %v564 = vsel %vm238, %v559, %v563
      %v565 = vshrl.u32 %v199, 16
      %v567 = vrot.slane %v565, 4
      %v568 = vor.u32 %v567, %v563
      %v569 = vrot.slane %v568, 4
      %v571 = vshll.u32 %v233, 16
      %v573 = vrot.slane %v571, 5
      %v574 = vsel %vm238, %v569, %v573
      %v576 = vshrl.u32 %v200, 16
      %v578 = vrot.slane %v576, 4
      %v579 = vshll.u32 %v200, 16
      %v581 = vrot.slane %v579, 5
      %v582 = vor.u32 %v578, %v581
      %v583 = vrot.slane %v582, 4
      %v585 = vshll.u32 %v201, 16
      %v587 = vrot.slane %v585, 5
      %v588 = vsel %vm238, %v583, %v587
      %v589 = vshrl.u32 %v201, 16
      %v591 = vrot.slane %v589, 4
      %v592 = vor.u32 %v591, %v587
      %v593 = vrot.slane %v592, 4
      %v595 = vshll.u32 %v234, 16
      %v597 = vrot.slane %v595, 5
      %v598 = vsel %vm238, %v593, %v597
      %v600 = vshrl.u32 %v202, 16
      %v602 = vrot.slane %v600, 4
      %v603 = vshll.u32 %v202, 16
      %v605 = vrot.slane %v603, 5
      %v606 = vor.u32 %v602, %v605
      %v607 = vrot.slane %v606, 4
      %v609 = vshll.u32 %v203, 16
      %v611 = vrot.slane %v609, 5
      %v612 = vsel %vm238, %v607, %v611
      %v613 = vshrl.u32 %v203, 16
      %v615 = vrot.slane %v613, 4
      %v616 = vor.u32 %v615, %v611
      %v617 = vrot.slane %v616, 4
      %v619 = vshll.u32 %v235, 16
      %v621 = vrot.slane %v619, 5
      %v622 = vsel %vm238, %v617, %v621
      %s623 = scalar_lea.vmem %s1, 64
      %v624 = vld [vmem:[%s623] sm:$0xf]
      %v625 = vld [vmem:[%s623 + $0x4] sm:$0xf]
      %v626 = vld [vmem:[%s623 + $0x8] sm:$0xf]
      %v627 = vld [vmem:[%s623 + $0xc] sm:$0xf]
      %v628 = vld [vmem:[%s623 + $0x10] sm:$0xf]
      %v629 = vld [vmem:[%s623 + $0x14] sm:$0xf]
      %v630 = vld [vmem:[%s623 + $0x18] sm:$0xf]
      %v631 = vld [vmem:[%s623 + $0x1c] sm:$0xf]
      %v632 = vld [vmem:[%s623 + $0x20] sm:$0xf]
      %v633 = vld [vmem:[%s623 + $0x24] sm:$0xf]
      %v634 = vld [vmem:[%s623 + $0x28] sm:$0xf]
      %v635 = vld [vmem:[%s623 + $0x2c] sm:$0xf]
      %v636 = vld [vmem:[%s623 + $0x30] sm:$0xf]
      %v637 = vld [vmem:[%s623 + $0x34] sm:$0xf]
      %v638 = vld [vmem:[%s623 + $0x38] sm:$0xf]
      %v639 = vld [vmem:[%s623 + $0x3c] sm:$0xf]
      %v640 = vunpack.c.l.b16 %v252
      %v641 = vunpack.c.l.b16 %v262
      %v642 = vunpack.c.l.b16 %v276
      %v643 = vunpack.c.l.b16 %v286
      %v644 = vunpack.c.l.b16 %v300
      %v645 = vunpack.c.l.b16 %v310
      %v646 = vunpack.c.l.b16 %v324
      %v647 = vunpack.c.l.b16 %v334
      %v648 = vunpack.c.l.b16 %v348
      %v649 = vunpack.c.l.b16 %v358
      %v650 = vunpack.c.l.b16 %v372
      %v651 = vunpack.c.l.b16 %v382
      %v652 = vunpack.c.l.b16 %v396
      %v653 = vunpack.c.l.b16 %v406
      %v654 = vunpack.c.l.b16 %v420
      %v655 = vunpack.c.l.b16 %v430
      %v656 = vunpack.c.l.b16 %v444
      %v657 = vunpack.c.l.b16 %v454
      %v658 = vunpack.c.l.b16 %v468
      %v659 = vunpack.c.l.b16 %v478
      %v660 = vunpack.c.l.b16 %v492
      %v661 = vunpack.c.l.b16 %v502
      %v662 = vunpack.c.l.b16 %v516
      %v663 = vunpack.c.l.b16 %v526
      %v664 = vunpack.c.l.b16 %v540
      %v665 = vunpack.c.l.b16 %v550
      %v666 = vunpack.c.l.b16 %v564
      %v667 = vunpack.c.l.b16 %v574
      %v668 = vunpack.c.l.b16 %v588
      %v669 = vunpack.c.l.b16 %v598
      %v670 = vunpack.c.l.b16 %v612
      %v671 = vunpack.c.l.b16 %v622
      %v672 = vpack.c.b16 %v641, %v640
      %v673 = vpack.c.b16 %v643, %v642
      %v674 = vpack.c.b16 %v645, %v644
      %v675 = vpack.c.b16 %v647, %v646
      %v676 = vpack.c.b16 %v649, %v648
      %v677 = vpack.c.b16 %v651, %v650
      %v678 = vpack.c.b16 %v653, %v652
      %v679 = vpack.c.b16 %v655, %v654
      %v680 = vpack.c.b16 %v657, %v656
      %v681 = vpack.c.b16 %v659, %v658
      %v682 = vpack.c.b16 %v661, %v660
      %v683 = vpack.c.b16 %v663, %v662
      %v684 = vpack.c.b16 %v665, %v664
      %v685 = vpack.c.b16 %v667, %v666
      %v686 = vpack.c.b16 %v669, %v668
      %v687 = vpack.c.b16 %v671, %v670
      %v720 = vunpack.c.l.b16 %v624
      %v721 = vunpack.c.l.b16 %v625
      %v722 = vunpack.c.l.b16 %v626
      %v723 = vunpack.c.l.b16 %v627
      %v724 = vunpack.c.l.b16 %v628
      %v725 = vunpack.c.l.b16 %v629
      %v726 = vunpack.c.l.b16 %v630
      %v727 = vunpack.c.l.b16 %v631
      %v728 = vunpack.c.l.b16 %v632
      %v729 = vunpack.c.l.b16 %v633
      %v730 = vunpack.c.l.b16 %v634
      %v731 = vunpack.c.l.b16 %v635
      %v732 = vunpack.c.l.b16 %v636
      %v733 = vunpack.c.l.b16 %v637
      %v734 = vunpack.c.l.b16 %v638
      %v735 = vunpack.c.l.b16 %v639
      %v736 = vpack.c.b16 %v721, %v720
      %v737 = vpack.c.b16 %v723, %v722
      %v738 = vpack.c.b16 %v725, %v724
      %v739 = vpack.c.b16 %v727, %v726
      %v740 = vpack.c.b16 %v729, %v728
      %v741 = vpack.c.b16 %v731, %v730
      %v742 = vpack.c.b16 %v733, %v732
      %v743 = vpack.c.b16 %v735, %v734
      %752 = vmatprep.subr.bf16.mxu0 0
      %753 = vmatpush1.bf16.msra.mxu0 %v743
      %754 = vmatprep.subr.bf16.mxu0 0
      %755 = vmatpush1.bf16.msra.mxu0 %v742
      %756 = vmatprep.subr.bf16.mxu0 0
      %757 = vmatpush1.bf16.msra.mxu0 %v741
      %758 = vmatprep.subr.bf16.mxu0 0
      %759 = vmatpush1.bf16.msra.mxu0 %v740
      %760 = vmatprep.subr.bf16.mxu0 0
      %761 = vmatpush1.bf16.msra.mxu0 %v739
      %762 = vmatprep.subr.bf16.mxu0 0
      %763 = vmatpush1.bf16.msra.mxu0 %v738
      %764 = vmatprep.subr.bf16.mxu0 0
      %765 = vmatpush1.bf16.msra.mxu0 %v737
      %766 = vmatprep.subr.bf16.mxu0 0
      %767 = vmatpush1.bf16.msra.mxu0 %v736
      %768 = vmatprep.subr.bf16.mxu0 0
      %769 = vmatpush2.bf16.msra.mxu0 0
      %770 = vmatprep.subr.bf16.mxu0 0
      %771 = vmatpush2.bf16.msra.mxu0 0
      %772 = vmatprep.subr.bf16.mxu0 0
      %773 = vmatpush2.bf16.msra.mxu0 0
      %774 = vmatprep.subr.bf16.mxu0 0
      %775 = vmatpush2.bf16.msra.mxu0 0
      %776 = vmatprep.subr.bf16.mxu0 0
      %777 = vmatpush2.bf16.msra.mxu0 0
      %778 = vmatprep.subr.bf16.mxu0 0
      %779 = vmatpush2.bf16.msra.mxu0 0
      %780 = vmatprep.subr.bf16.mxu0 0
      %781 = vmatpush2.bf16.msra.mxu0 0
      %782 = vmatprep.subr.bf16.mxu0 0
      %783 = vmatpush2.bf16.msra.mxu0 0
      %784 = vmatprep.mubr.bf16.mxu0 0
      %785 = vmatmul.mubr.bf16.gmra.mxu0 %v672
      %v786 = vpop.f32.mrf.mxu0
      %v787 = vadd.f32 0.0, %v786
      %v788 = vpop.f32.mrf.mxu0
      %v789 = vpop.f32.mrf.mxu0
      %v790 = vadd.f32 0.0, %v789
      %v791 = vpop.f32.mrf.mxu0
      %792 = vmatprep.mubr.bf16.mxu0 0
      %793 = vmatmul.mubr.bf16.gmra.mxu0 %v673
      %v794 = vpop.f32.mrf.mxu0
      %v795 = vadd.f32 0.0, %v794
      %v796 = vpop.f32.mrf.mxu0
      %v797 = vpop.f32.mrf.mxu0
      %v798 = vadd.f32 0.0, %v797
      %v799 = vpop.f32.mrf.mxu0
      %800 = vmatprep.mubr.bf16.mxu0 0
      %801 = vmatmul.mubr.bf16.gmra.mxu0 %v674
      %v802 = vpop.f32.mrf.mxu0
      %v803 = vadd.f32 0.0, %v802
      %v804 = vpop.f32.mrf.mxu0
      %v805 = vpop.f32.mrf.mxu0
      %v806 = vadd.f32 0.0, %v805
      %v807 = vpop.f32.mrf.mxu0
      %808 = vmatprep.mubr.bf16.mxu0 0
      %809 = vmatmul.mubr.bf16.gmra.mxu0 %v675
      %v810 = vpop.f32.mrf.mxu0
      %v811 = vadd.f32 0.0, %v810
      %v812 = vpop.f32.mrf.mxu0
      %v813 = vpop.f32.mrf.mxu0
      %v814 = vadd.f32 0.0, %v813
      %v815 = vpop.f32.mrf.mxu0
      %816 = vmatprep.mubr.bf16.mxu0 0
      %817 = vmatmul.mubr.bf16.gmra.mxu0 %v676
      %v818 = vpop.f32.mrf.mxu0
      %v819 = vadd.f32 0.0, %v818
      %v820 = vpop.f32.mrf.mxu0
      %v821 = vpop.f32.mrf.mxu0
      %v822 = vadd.f32 0.0, %v821
      %v823 = vpop.f32.mrf.mxu0
      %824 = vmatprep.mubr.bf16.mxu0 0
      %825 = vmatmul.mubr.bf16.gmra.mxu0 %v677
      %v826 = vpop.f32.mrf.mxu0
      %v827 = vadd.f32 0.0, %v826
      %v828 = vpop.f32.mrf.mxu0
      %v829 = vpop.f32.mrf.mxu0
      %v830 = vadd.f32 0.0, %v829
      %v831 = vpop.f32.mrf.mxu0
      %832 = vmatprep.mubr.bf16.mxu0 0
      %833 = vmatmul.mubr.bf16.gmra.mxu0 %v678
      %v834 = vpop.f32.mrf.mxu0
      %v835 = vadd.f32 0.0, %v834
      %v836 = vpop.f32.mrf.mxu0
      %v837 = vpop.f32.mrf.mxu0
      %v838 = vadd.f32 0.0, %v837
      %v839 = vpop.f32.mrf.mxu0
      %840 = vmatprep.mubr.bf16.mxu0 0
      %841 = vmatmul.mubr.bf16.gmra.mxu0 %v679
      %v842 = vpop.f32.mrf.mxu0
      %v843 = vadd.f32 0.0, %v842
      %v844 = vpop.f32.mrf.mxu0
      %v845 = vpop.f32.mrf.mxu0
      %v846 = vadd.f32 0.0, %v845
      %v847 = vpop.f32.mrf.mxu0
      %848 = vmatprep.mubr.bf16.mxu0 0
      %849 = vmatmul.mubr.bf16.gmra.mxu0 %v680
      %v850 = vpop.f32.mrf.mxu0
      %v851 = vadd.f32 0.0, %v850
      %v852 = vpop.f32.mrf.mxu0
      %v853 = vpop.f32.mrf.mxu0
      %v854 = vadd.f32 0.0, %v853
      %v855 = vpop.f32.mrf.mxu0
      %856 = vmatprep.mubr.bf16.mxu0 0
      %857 = vmatmul.mubr.bf16.gmra.mxu0 %v681
      %v858 = vpop.f32.mrf.mxu0
      %v859 = vadd.f32 0.0, %v858
      %v860 = vpop.f32.mrf.mxu0
      %v861 = vpop.f32.mrf.mxu0
      %v862 = vadd.f32 0.0, %v861
      %v863 = vpop.f32.mrf.mxu0
      %864 = vmatprep.mubr.bf16.mxu0 0
      %865 = vmatmul.mubr.bf16.gmra.mxu0 %v682
      %v866 = vpop.f32.mrf.mxu0
      %v867 = vadd.f32 0.0, %v866
      %v868 = vpop.f32.mrf.mxu0
      %v869 = vpop.f32.mrf.mxu0
      %v870 = vadd.f32 0.0, %v869
      %v871 = vpop.f32.mrf.mxu0
      %872 = vmatprep.mubr.bf16.mxu0 0
      %873 = vmatmul.mubr.bf16.gmra.mxu0 %v683
      %v874 = vpop.f32.mrf.mxu0
      %v875 = vadd.f32 0.0, %v874
      %v876 = vpop.f32.mrf.mxu0
      %v877 = vpop.f32.mrf.mxu0
      %v878 = vadd.f32 0.0, %v877
      %v879 = vpop.f32.mrf.mxu0
      %880 = vmatprep.mubr.bf16.mxu0 0
      %881 = vmatmul.mubr.bf16.gmra.mxu0 %v684
      %v882 = vpop.f32.mrf.mxu0
      %v883 = vadd.f32 0.0, %v882
      %v884 = vpop.f32.mrf.mxu0
      %v885 = vpop.f32.mrf.mxu0
      %v886 = vadd.f32 0.0, %v885
      %v887 = vpop.f32.mrf.mxu0
      %888 = vmatprep.mubr.bf16.mxu0 0
      %889 = vmatmul.mubr.bf16.gmra.mxu0 %v685
      %v890 = vpop.f32.mrf.mxu0
      %v891 = vadd.f32 0.0, %v890
      %v892 = vpop.f32.mrf.mxu0
      %v893 = vpop.f32.mrf.mxu0
      %v894 = vadd.f32 0.0, %v893
      %v895 = vpop.f32.mrf.mxu0
      %896 = vmatprep.mubr.bf16.mxu0 0
      %897 = vmatmul.mubr.bf16.gmra.mxu0 %v686
      %v898 = vpop.f32.mrf.mxu0
      %v899 = vadd.f32 0.0, %v898
      %v900 = vpop.f32.mrf.mxu0
      %v901 = vpop.f32.mrf.mxu0
      %v902 = vadd.f32 0.0, %v901
      %v903 = vpop.f32.mrf.mxu0
      %904 = vmatprep.mubr.bf16.mxu0 0
      %905 = vmatmul.mubr.bf16.gmra.mxu0 %v687
      %v906 = vpop.f32.mrf.mxu0
      %v907 = vadd.f32 0.0, %v906
      %v908 = vpop.f32.mrf.mxu0
      %v909 = vpop.f32.mrf.mxu0
      %v910 = vadd.f32 0.0, %v909
      %v911 = vpop.f32.mrf.mxu0
      %912 = vdwg.mxu0
      %v945 = vunpack.c.l.b16 %v172
      %v946 = vunpack.c.l.b16 %v173
      %v947 = vunpack.c.l.b16 %v174
      %v948 = vunpack.c.l.b16 %v175
      %v949 = vunpack.c.l.b16 %v176
      %v950 = vunpack.c.l.b16 %v177
      %v951 = vunpack.c.l.b16 %v178
      %v952 = vunpack.c.l.b16 %v179
      %v953 = vunpack.c.l.b16 %v180
      %v954 = vunpack.c.l.b16 %v181
      %v955 = vunpack.c.l.b16 %v182
      %v956 = vunpack.c.l.b16 %v183
      %v957 = vunpack.c.l.b16 %v184
      %v958 = vunpack.c.l.b16 %v185
      %v959 = vunpack.c.l.b16 %v186
      %v960 = vunpack.c.l.b16 %v187
      %v961 = vunpack.c.l.b16 %v188
      %v962 = vunpack.c.l.b16 %v189
      %v963 = vunpack.c.l.b16 %v190
      %v964 = vunpack.c.l.b16 %v191
      %v965 = vunpack.c.l.b16 %v192
      %v966 = vunpack.c.l.b16 %v193
      %v967 = vunpack.c.l.b16 %v194
      %v968 = vunpack.c.l.b16 %v195
      %v969 = vunpack.c.l.b16 %v196
      %v970 = vunpack.c.l.b16 %v197
      %v971 = vunpack.c.l.b16 %v198
      %v972 = vunpack.c.l.b16 %v199
      %v973 = vunpack.c.l.b16 %v200
      %v974 = vunpack.c.l.b16 %v201
      %v975 = vunpack.c.l.b16 %v202
      %v976 = vunpack.c.l.b16 %v203
      %v977 = vpack.c.b16 %v946, %v945
      %v978 = vpack.c.b16 %v948, %v947
      %v979 = vpack.c.b16 %v950, %v949
      %v980 = vpack.c.b16 %v952, %v951
      %v981 = vpack.c.b16 %v954, %v953
      %v982 = vpack.c.b16 %v956, %v955
      %v983 = vpack.c.b16 %v958, %v957
      %v984 = vpack.c.b16 %v960, %v959
      %v985 = vpack.c.b16 %v962, %v961
      %v986 = vpack.c.b16 %v964, %v963
      %v987 = vpack.c.b16 %v966, %v965
      %v988 = vpack.c.b16 %v968, %v967
      %v989 = vpack.c.b16 %v970, %v969
      %v990 = vpack.c.b16 %v972, %v971
      %v991 = vpack.c.b16 %v974, %v973
      %v992 = vpack.c.b16 %v976, %v975
      %v1025 = vunpack.c.l.b16 %v204
      %v1026 = vunpack.c.l.b16 %v205
      %v1027 = vunpack.c.l.b16 %v206
      %v1028 = vunpack.c.l.b16 %v207
      %v1029 = vunpack.c.l.b16 %v208
      %v1030 = vunpack.c.l.b16 %v209
      %v1031 = vunpack.c.l.b16 %v210
      %v1032 = vunpack.c.l.b16 %v211
      %v1033 = vunpack.c.l.b16 %v212
      %v1034 = vunpack.c.l.b16 %v213
      %v1035 = vunpack.c.l.b16 %v214
      %v1036 = vunpack.c.l.b16 %v215
      %v1037 = vunpack.c.l.b16 %v216
      %v1038 = vunpack.c.l.b16 %v217
      %v1039 = vunpack.c.l.b16 %v218
      %v1040 = vunpack.c.l.b16 %v219
      %v1041 = vpack.c.b16 %v1026, %v1025
      %v1042 = vpack.c.b16 %v1028, %v1027
      %v1043 = vpack.c.b16 %v1030, %v1029
      %v1044 = vpack.c.b16 %v1032, %v1031
      %v1045 = vpack.c.b16 %v1034, %v1033
      %v1046 = vpack.c.b16 %v1036, %v1035
      %v1047 = vpack.c.b16 %v1038, %v1037
      %v1048 = vpack.c.b16 %v1040, %v1039
      %1057 = vmatprep.subr.bf16.mxu0 0
      %1058 = vmatpush1.bf16.msra.mxu0 %v1048
      %1059 = vmatprep.subr.bf16.mxu0 0
      %1060 = vmatpush1.bf16.msra.mxu0 %v1047
      %1061 = vmatprep.subr.bf16.mxu0 0
      %1062 = vmatpush1.bf16.msra.mxu0 %v1046
      %1063 = vmatprep.subr.bf16.mxu0 0
      %1064 = vmatpush1.bf16.msra.mxu0 %v1045
      %1065 = vmatprep.subr.bf16.mxu0 0
      %1066 = vmatpush1.bf16.msra.mxu0 %v1044
      %1067 = vmatprep.subr.bf16.mxu0 0
      %1068 = vmatpush1.bf16.msra.mxu0 %v1043
      %1069 = vmatprep.subr.bf16.mxu0 0
      %1070 = vmatpush1.bf16.msra.mxu0 %v1042
      %1071 = vmatprep.subr.bf16.mxu0 0
      %1072 = vmatpush1.bf16.msra.mxu0 %v1041
      %1073 = vmatprep.subr.bf16.mxu0 0
      %1074 = vmatpush2.bf16.msra.mxu0 0
      %1075 = vmatprep.subr.bf16.mxu0 0
      %1076 = vmatpush2.bf16.msra.mxu0 0
      %1077 = vmatprep.subr.bf16.mxu0 0
      %1078 = vmatpush2.bf16.msra.mxu0 0
      %1079 = vmatprep.subr.bf16.mxu0 0
      %1080 = vmatpush2.bf16.msra.mxu0 0
      %1081 = vmatprep.subr.bf16.mxu0 0
      %1082 = vmatpush2.bf16.msra.mxu0 0
      %1083 = vmatprep.subr.bf16.mxu0 0
      %1084 = vmatpush2.bf16.msra.mxu0 0
      %1085 = vmatprep.subr.bf16.mxu0 0
      %1086 = vmatpush2.bf16.msra.mxu0 0
      %1087 = vmatprep.subr.bf16.mxu0 0
      %1088 = vmatpush2.bf16.msra.mxu0 0
      %1089 = vmatprep.mubr.bf16.mxu0 0
      %1090 = vmatmul.mubr.bf16.gmra.mxu0 %v977
      %v1091 = vpop.f32.mrf.mxu0
      %v1092 = vadd.f32 %v787, %v1091
      %v1093 = vpop.f32.mrf.mxu0
      %v1094 = vpop.f32.mrf.mxu0
      %v1095 = vadd.f32 %v790, %v1094
      %v1096 = vpop.f32.mrf.mxu0
      %1097 = vmatprep.mubr.bf16.mxu0 0
      %1098 = vmatmul.mubr.bf16.gmra.mxu0 %v978
      %v1099 = vpop.f32.mrf.mxu0
      %v1100 = vadd.f32 %v795, %v1099
      %v1101 = vpop.f32.mrf.mxu0
      %v1102 = vpop.f32.mrf.mxu0
      %v1103 = vadd.f32 %v798, %v1102
      %v1104 = vpop.f32.mrf.mxu0
      %1105 = vmatprep.mubr.bf16.mxu0 0
      %1106 = vmatmul.mubr.bf16.gmra.mxu0 %v979
      %v1107 = vpop.f32.mrf.mxu0
      %v1108 = vadd.f32 %v803, %v1107
      %v1109 = vpop.f32.mrf.mxu0
      %v1110 = vpop.f32.mrf.mxu0
      %v1111 = vadd.f32 %v806, %v1110
      %v1112 = vpop.f32.mrf.mxu0
      %1113 = vmatprep.mubr.bf16.mxu0 0
      %1114 = vmatmul.mubr.bf16.gmra.mxu0 %v980
      %v1115 = vpop.f32.mrf.mxu0
      %v1116 = vadd.f32 %v811, %v1115
      %v1117 = vpop.f32.mrf.mxu0
      %v1118 = vpop.f32.mrf.mxu0
      %v1119 = vadd.f32 %v814, %v1118
      %v1120 = vpop.f32.mrf.mxu0
      %1121 = vmatprep.mubr.bf16.mxu0 0
      %1122 = vmatmul.mubr.bf16.gmra.mxu0 %v981
      %v1123 = vpop.f32.mrf.mxu0
      %v1124 = vadd.f32 %v819, %v1123
      %v1125 = vpop.f32.mrf.mxu0
      %v1126 = vpop.f32.mrf.mxu0
      %v1127 = vadd.f32 %v822, %v1126
      %v1128 = vpop.f32.mrf.mxu0
      %1129 = vmatprep.mubr.bf16.mxu0 0
      %1130 = vmatmul.mubr.bf16.gmra.mxu0 %v982
      %v1131 = vpop.f32.mrf.mxu0
      %v1132 = vadd.f32 %v827, %v1131
      %v1133 = vpop.f32.mrf.mxu0
      %v1134 = vpop.f32.mrf.mxu0
      %v1135 = vadd.f32 %v830, %v1134
      %v1136 = vpop.f32.mrf.mxu0
      %1137 = vmatprep.mubr.bf16.mxu0 0
      %1138 = vmatmul.mubr.bf16.gmra.mxu0 %v983
      %v1139 = vpop.f32.mrf.mxu0
      %v1140 = vadd.f32 %v835, %v1139
      %v1141 = vpop.f32.mrf.mxu0
      %v1142 = vpop.f32.mrf.mxu0
      %v1143 = vadd.f32 %v838, %v1142
      %v1144 = vpop.f32.mrf.mxu0
      %1145 = vmatprep.mubr.bf16.mxu0 0
      %1146 = vmatmul.mubr.bf16.gmra.mxu0 %v984
      %v1147 = vpop.f32.mrf.mxu0
      %v1148 = vadd.f32 %v843, %v1147
      %v1149 = vpop.f32.mrf.mxu0
      %v1150 = vpop.f32.mrf.mxu0
      %v1151 = vadd.f32 %v846, %v1150
      %v1152 = vpop.f32.mrf.mxu0
      %1153 = vmatprep.mubr.bf16.mxu0 0
      %1154 = vmatmul.mubr.bf16.gmra.mxu0 %v985
      %v1155 = vpop.f32.mrf.mxu0
      %v1156 = vadd.f32 %v851, %v1155
      %v1157 = vpop.f32.mrf.mxu0
      %v1158 = vpop.f32.mrf.mxu0
      %v1159 = vadd.f32 %v854, %v1158
      %v1160 = vpop.f32.mrf.mxu0
      %1161 = vmatprep.mubr.bf16.mxu0 0
      %1162 = vmatmul.mubr.bf16.gmra.mxu0 %v986
      %v1163 = vpop.f32.mrf.mxu0
      %v1164 = vadd.f32 %v859, %v1163
      %v1165 = vpop.f32.mrf.mxu0
      %v1166 = vpop.f32.mrf.mxu0
      %v1167 = vadd.f32 %v862, %v1166
      %v1168 = vpop.f32.mrf.mxu0
      %1169 = vmatprep.mubr.bf16.mxu0 0
      %1170 = vmatmul.mubr.bf16.gmra.mxu0 %v987
      %v1171 = vpop.f32.mrf.mxu0
      %v1172 = vadd.f32 %v867, %v1171
      %v1173 = vpop.f32.mrf.mxu0
      %v1174 = vpop.f32.mrf.mxu0
      %v1175 = vadd.f32 %v870, %v1174
      %v1176 = vpop.f32.mrf.mxu0
      %1177 = vmatprep.mubr.bf16.mxu0 0
      %1178 = vmatmul.mubr.bf16.gmra.mxu0 %v988
      %v1179 = vpop.f32.mrf.mxu0
      %v1180 = vadd.f32 %v875, %v1179
      %v1181 = vpop.f32.mrf.mxu0
      %v1182 = vpop.f32.mrf.mxu0
      %v1183 = vadd.f32 %v878, %v1182
      %v1184 = vpop.f32.mrf.mxu0
      %1185 = vmatprep.mubr.bf16.mxu0 0
      %1186 = vmatmul.mubr.bf16.gmra.mxu0 %v989
      %v1187 = vpop.f32.mrf.mxu0
      %v1188 = vadd.f32 %v883, %v1187
      %v1189 = vpop.f32.mrf.mxu0
      %v1190 = vpop.f32.mrf.mxu0
      %v1191 = vadd.f32 %v886, %v1190
      %v1192 = vpop.f32.mrf.mxu0
      %1193 = vmatprep.mubr.bf16.mxu0 0
      %1194 = vmatmul.mubr.bf16.gmra.mxu0 %v990
      %v1195 = vpop.f32.mrf.mxu0
      %v1196 = vadd.f32 %v891, %v1195
      %v1197 = vpop.f32.mrf.mxu0
      %v1198 = vpop.f32.mrf.mxu0
      %v1199 = vadd.f32 %v894, %v1198
      %v1200 = vpop.f32.mrf.mxu0
      %1201 = vmatprep.mubr.bf16.mxu0 0
      %1202 = vmatmul.mubr.bf16.gmra.mxu0 %v991
      %v1203 = vpop.f32.mrf.mxu0
      %v1204 = vadd.f32 %v899, %v1203
      %v1205 = vpop.f32.mrf.mxu0
      %v1206 = vpop.f32.mrf.mxu0
      %v1207 = vadd.f32 %v902, %v1206
      %v1208 = vpop.f32.mrf.mxu0
      %1209 = vmatprep.mubr.bf16.mxu0 0
      %1210 = vmatmul.mubr.bf16.gmra.mxu0 %v992
      %v1211 = vpop.f32.mrf.mxu0
      %v1212 = vadd.f32 %v907, %v1211
      %v1213 = vpop.f32.mrf.mxu0
      %v1214 = vpop.f32.mrf.mxu0
      %v1215 = vadd.f32 %v910, %v1214
      %v1216 = vpop.f32.mrf.mxu0
      %1217 = vdwg.mxu0
      %v1218 = vld [vmem:[%s165] sm:$0xe]
      %v1219 = vld [vmem:[%s165 + $0xc] sm:$0xe]
      %v1220 = vld [vmem:[%s165 + $0x18] sm:$0xe]
      %v1221 = vld [vmem:[%s165 + $0x24] sm:$0xe]
      %v1222 = vld [vmem:[%s165 + $0x30] sm:$0xe]
      %v1223 = vld [vmem:[%s165 + $0x3c] sm:$0xe]
      %v1224 = vld [vmem:[%s165 + $0x48] sm:$0xe]
      %v1225 = vld [vmem:[%s165 + $0x54] sm:$0xe]
      %v1226 = vld [vmem:[%s165 + $0x60] sm:$0xe]
      %v1227 = vld [vmem:[%s165 + $0x6c] sm:$0xe]
      %v1228 = vld [vmem:[%s165 + $0x78] sm:$0xe]
      %v1229 = vld [vmem:[%s165 + $0x84] sm:$0xe]
      %v1230 = vld [vmem:[%s165 + $0x90] sm:$0xe]
      %v1231 = vld [vmem:[%s165 + $0x9c] sm:$0xe]
      %v1232 = vld [vmem:[%s165 + $0xa8] sm:$0xe]
      %v1233 = vld [vmem:[%s165 + $0xb4] sm:$0xe]
      %vm1266 = vcmask 1042432
      %vm1267 = vcmask 1046532
      %vm1268 = vmor %vm1266, %vm1267
      %v1269 = vrot.slane %v1218, 5
      %v1270 = vrot.slane %v1269, 4
      %v1271 = vrot.slane %v173, 5
      %v1272 = vsel %vm1268, %v1270, %v1271
      %v1273 = vrot.slane %v1271, 4
      %v1274 = vrot.slane %v220, 5
      %v1275 = vsel %vm1268, %v1273, %v1274
      %v1276 = vrot.slane %v1219, 5
      %v1277 = vrot.slane %v1276, 4
      %v1278 = vrot.slane %v175, 5
      %v1279 = vsel %vm1268, %v1277, %v1278
      %v1280 = vrot.slane %v1278, 4
      %v1281 = vrot.slane %v221, 5
      %v1282 = vsel %vm1268, %v1280, %v1281
      %v1283 = vrot.slane %v1220, 5
      %v1284 = vrot.slane %v1283, 4
      %v1285 = vrot.slane %v177, 5
      %v1286 = vsel %vm1268, %v1284, %v1285
      %v1287 = vrot.slane %v1285, 4
      %v1288 = vrot.slane %v222, 5
      %v1289 = vsel %vm1268, %v1287, %v1288
      %v1290 = vrot.slane %v1221, 5
      %v1291 = vrot.slane %v1290, 4
      %v1292 = vrot.slane %v179, 5
      %v1293 = vsel %vm1268, %v1291, %v1292
      %v1294 = vrot.slane %v1292, 4
      %v1295 = vrot.slane %v223, 5
      %v1296 = vsel %vm1268, %v1294, %v1295
      %v1297 = vrot.slane %v1222, 5
      %v1298 = vrot.slane %v1297, 4
      %v1299 = vrot.slane %v181, 5
      %v1300 = vsel %vm1268, %v1298, %v1299
      %v1301 = vrot.slane %v1299, 4
      %v1302 = vrot.slane %v224, 5
      %v1303 = vsel %vm1268, %v1301, %v1302
      %v1304 = vrot.slane %v1223, 5
      %v1305 = vrot.slane %v1304, 4
      %v1306 = vrot.slane %v183, 5
      %v1307 = vsel %vm1268, %v1305, %v1306
      %v1308 = vrot.slane %v1306, 4
      %v1309 = vrot.slane %v225, 5
      %v1310 = vsel %vm1268, %v1308, %v1309
      %v1311 = vrot.slane %v1224, 5
      %v1312 = vrot.slane %v1311, 4
      %v1313 = vrot.slane %v185, 5
      %v1314 = vsel %vm1268, %v1312, %v1313
      %v1315 = vrot.slane %v1313, 4
      %v1316 = vrot.slane %v226, 5
      %v1317 = vsel %vm1268, %v1315, %v1316
      %v1318 = vrot.slane %v1225, 5
      %v1319 = vrot.slane %v1318, 4
      %v1320 = vrot.slane %v187, 5
      %v1321 = vsel %vm1268, %v1319, %v1320
      %v1322 = vrot.slane %v1320, 4
      %v1323 = vrot.slane %v227, 5
      %v1324 = vsel %vm1268, %v1322, %v1323
      %v1325 = vrot.slane %v1226, 5
      %v1326 = vrot.slane %v1325, 4
      %v1327 = vrot.slane %v189, 5
      %v1328 = vsel %vm1268, %v1326, %v1327
      %v1329 = vrot.slane %v1327, 4
      %v1330 = vrot.slane %v228, 5
      %v1331 = vsel %vm1268, %v1329, %v1330
      %v1332 = vrot.slane %v1227, 5
      %v1333 = vrot.slane %v1332, 4
      %v1334 = vrot.slane %v191, 5
      %v1335 = vsel %vm1268, %v1333, %v1334
      %v1336 = vrot.slane %v1334, 4
      %v1337 = vrot.slane %v229, 5
      %v1338 = vsel %vm1268, %v1336, %v1337
      %v1339 = vrot.slane %v1228, 5
      %v1340 = vrot.slane %v1339, 4
      %v1341 = vrot.slane %v193, 5
      %v1342 = vsel %vm1268, %v1340, %v1341
      %v1343 = vrot.slane %v1341, 4
      %v1344 = vrot.slane %v230, 5
      %v1345 = vsel %vm1268, %v1343, %v1344
      %v1346 = vrot.slane %v1229, 5
      %v1347 = vrot.slane %v1346, 4
      %v1348 = vrot.slane %v195, 5
      %v1349 = vsel %vm1268, %v1347, %v1348
      %v1350 = vrot.slane %v1348, 4
      %v1351 = vrot.slane %v231, 5
      %v1352 = vsel %vm1268, %v1350, %v1351
      %v1353 = vrot.slane %v1230, 5
      %v1354 = vrot.slane %v1353, 4
      %v1355 = vrot.slane %v197, 5
      %v1356 = vsel %vm1268, %v1354, %v1355
      %v1357 = vrot.slane %v1355, 4
      %v1358 = vrot.slane %v232, 5
      %v1359 = vsel %vm1268, %v1357, %v1358
      %v1360 = vrot.slane %v1231, 5
      %v1361 = vrot.slane %v1360, 4
      %v1362 = vrot.slane %v199, 5
      %v1363 = vsel %vm1268, %v1361, %v1362
      %v1364 = vrot.slane %v1362, 4
      %v1365 = vrot.slane %v233, 5
      %v1366 = vsel %vm1268, %v1364, %v1365
      %v1367 = vrot.slane %v1232, 5
      %v1368 = vrot.slane %v1367, 4
      %v1369 = vrot.slane %v201, 5
      %v1370 = vsel %vm1268, %v1368, %v1369
      %v1371 = vrot.slane %v1369, 4
      %v1372 = vrot.slane %v234, 5
      %v1373 = vsel %vm1268, %v1371, %v1372
      %v1374 = vrot.slane %v1233, 5
      %v1375 = vrot.slane %v1374, 4
      %v1376 = vrot.slane %v203, 5
      %v1377 = vsel %vm1268, %v1375, %v1376
      %v1378 = vrot.slane %v1376, 4
      %v1379 = vrot.slane %v235, 5
      %v1380 = vsel %vm1268, %v1378, %v1379
      %s1381 = scalar_lea.vmem %s1, 128
      %v1382 = vld [vmem:[%s1381] sm:$0xf]
      %v1383 = vld [vmem:[%s1381 + $0x4] sm:$0xf]
      %v1384 = vld [vmem:[%s1381 + $0x8] sm:$0xf]
      %v1385 = vld [vmem:[%s1381 + $0xc] sm:$0xf]
      %v1386 = vld [vmem:[%s1381 + $0x10] sm:$0xf]
      %v1387 = vld [vmem:[%s1381 + $0x14] sm:$0xf]
      %v1388 = vld [vmem:[%s1381 + $0x18] sm:$0xf]
      %v1389 = vld [vmem:[%s1381 + $0x1c] sm:$0xf]
      %v1390 = vld [vmem:[%s1381 + $0x20] sm:$0xf]
      %v1391 = vld [vmem:[%s1381 + $0x24] sm:$0xf]
      %v1392 = vld [vmem:[%s1381 + $0x28] sm:$0xf]
      %v1393 = vld [vmem:[%s1381 + $0x2c] sm:$0xf]
      %v1394 = vld [vmem:[%s1381 + $0x30] sm:$0xf]
      %v1395 = vld [vmem:[%s1381 + $0x34] sm:$0xf]
      %v1396 = vld [vmem:[%s1381 + $0x38] sm:$0xf]
      %v1397 = vld [vmem:[%s1381 + $0x3c] sm:$0xf]
      %v1398 = vunpack.c.l.b16 %v1272
      %v1399 = vunpack.c.l.b16 %v1275
      %v1400 = vunpack.c.l.b16 %v1279
      %v1401 = vunpack.c.l.b16 %v1282
      %v1402 = vunpack.c.l.b16 %v1286
      %v1403 = vunpack.c.l.b16 %v1289
      %v1404 = vunpack.c.l.b16 %v1293
      %v1405 = vunpack.c.l.b16 %v1296
      %v1406 = vunpack.c.l.b16 %v1300
      %v1407 = vunpack.c.l.b16 %v1303
      %v1408 = vunpack.c.l.b16 %v1307
      %v1409 = vunpack.c.l.b16 %v1310
      %v1410 = vunpack.c.l.b16 %v1314
      %v1411 = vunpack.c.l.b16 %v1317
      %v1412 = vunpack.c.l.b16 %v1321
      %v1413 = vunpack.c.l.b16 %v1324
      %v1414 = vunpack.c.l.b16 %v1328
      %v1415 = vunpack.c.l.b16 %v1331
      %v1416 = vunpack.c.l.b16 %v1335
      %v1417 = vunpack.c.l.b16 %v1338
      %v1418 = vunpack.c.l.b16 %v1342
      %v1419 = vunpack.c.l.b16 %v1345
      %v1420 = vunpack.c.l.b16 %v1349
      %v1421 = vunpack.c.l.b16 %v1352
      %v1422 = vunpack.c.l.b16 %v1356
      %v1423 = vunpack.c.l.b16 %v1359
      %v1424 = vunpack.c.l.b16 %v1363
      %v1425 = vunpack.c.l.b16 %v1366
      %v1426 = vunpack.c.l.b16 %v1370
      %v1427 = vunpack.c.l.b16 %v1373
      %v1428 = vunpack.c.l.b16 %v1377
      %v1429 = vunpack.c.l.b16 %v1380
      %v1430 = vpack.c.b16 %v1399, %v1398
      %v1431 = vpack.c.b16 %v1401, %v1400
      %v1432 = vpack.c.b16 %v1403, %v1402
      %v1433 = vpack.c.b16 %v1405, %v1404
      %v1434 = vpack.c.b16 %v1407, %v1406
      %v1435 = vpack.c.b16 %v1409, %v1408
      %v1436 = vpack.c.b16 %v1411, %v1410
      %v1437 = vpack.c.b16 %v1413, %v1412
      %v1438 = vpack.c.b16 %v1415, %v1414
      %v1439 = vpack.c.b16 %v1417, %v1416
      %v1440 = vpack.c.b16 %v1419, %v1418
      %v1441 = vpack.c.b16 %v1421, %v1420
      %v1442 = vpack.c.b16 %v1423, %v1422
      %v1443 = vpack.c.b16 %v1425, %v1424
      %v1444 = vpack.c.b16 %v1427, %v1426
      %v1445 = vpack.c.b16 %v1429, %v1428
      %v1478 = vunpack.c.l.b16 %v1382
      %v1479 = vunpack.c.l.b16 %v1383
      %v1480 = vunpack.c.l.b16 %v1384
      %v1481 = vunpack.c.l.b16 %v1385
      %v1482 = vunpack.c.l.b16 %v1386
      %v1483 = vunpack.c.l.b16 %v1387
      %v1484 = vunpack.c.l.b16 %v1388
      %v1485 = vunpack.c.l.b16 %v1389
      %v1486 = vunpack.c.l.b16 %v1390
      %v1487 = vunpack.c.l.b16 %v1391
      %v1488 = vunpack.c.l.b16 %v1392
      %v1489 = vunpack.c.l.b16 %v1393
      %v1490 = vunpack.c.l.b16 %v1394
      %v1491 = vunpack.c.l.b16 %v1395
      %v1492 = vunpack.c.l.b16 %v1396
      %v1493 = vunpack.c.l.b16 %v1397
      %v1494 = vpack.c.b16 %v1479, %v1478
      %v1495 = vpack.c.b16 %v1481, %v1480
      %v1496 = vpack.c.b16 %v1483, %v1482
      %v1497 = vpack.c.b16 %v1485, %v1484
      %v1498 = vpack.c.b16 %v1487, %v1486
      %v1499 = vpack.c.b16 %v1489, %v1488
      %v1500 = vpack.c.b16 %v1491, %v1490
      %v1501 = vpack.c.b16 %v1493, %v1492
      %1510 = vmatprep.subr.bf16.mxu0 0
      %1511 = vmatpush1.bf16.msra.mxu0 %v1501
      %1512 = vmatprep.subr.bf16.mxu0 0
      %1513 = vmatpush1.bf16.msra.mxu0 %v1500
      %1514 = vmatprep.subr.bf16.mxu0 0
      %1515 = vmatpush1.bf16.msra.mxu0 %v1499
      %1516 = vmatprep.subr.bf16.mxu0 0
      %1517 = vmatpush1.bf16.msra.mxu0 %v1498
      %1518 = vmatprep.subr.bf16.mxu0 0
      %1519 = vmatpush1.bf16.msra.mxu0 %v1497
      %1520 = vmatprep.subr.bf16.mxu0 0
      %1521 = vmatpush1.bf16.msra.mxu0 %v1496
      %1522 = vmatprep.subr.bf16.mxu0 0
      %1523 = vmatpush1.bf16.msra.mxu0 %v1495
      %1524 = vmatprep.subr.bf16.mxu0 0
      %1525 = vmatpush1.bf16.msra.mxu0 %v1494
      %1526 = vmatprep.subr.bf16.mxu0 0
      %1527 = vmatpush2.bf16.msra.mxu0 0
      %1528 = vmatprep.subr.bf16.mxu0 0
      %1529 = vmatpush2.bf16.msra.mxu0 0
      %1530 = vmatprep.subr.bf16.mxu0 0
      %1531 = vmatpush2.bf16.msra.mxu0 0
      %1532 = vmatprep.subr.bf16.mxu0 0
      %1533 = vmatpush2.bf16.msra.mxu0 0
      %1534 = vmatprep.subr.bf16.mxu0 0
      %1535 = vmatpush2.bf16.msra.mxu0 0
      %1536 = vmatprep.subr.bf16.mxu0 0
      %1537 = vmatpush2.bf16.msra.mxu0 0
      %1538 = vmatprep.subr.bf16.mxu0 0
      %1539 = vmatpush2.bf16.msra.mxu0 0
      %1540 = vmatprep.subr.bf16.mxu0 0
      %1541 = vmatpush2.bf16.msra.mxu0 0
      %1542 = vmatprep.mubr.bf16.mxu0 0
      %1543 = vmatmul.mubr.bf16.gmra.mxu0 %v1430
      %v1544 = vpop.f32.mrf.mxu0
      %v1545 = vadd.f32 0.0, %v1544
      %v1546 = vpop.f32.mrf.mxu0
      %v1547 = vpop.f32.mrf.mxu0
      %v1548 = vadd.f32 0.0, %v1547
      %v1549 = vpop.f32.mrf.mxu0
      %1550 = vmatprep.mubr.bf16.mxu0 0
      %1551 = vmatmul.mubr.bf16.gmra.mxu0 %v1431
      %v1552 = vpop.f32.mrf.mxu0
      %v1553 = vadd.f32 0.0, %v1552
      %v1554 = vpop.f32.mrf.mxu0
      %v1555 = vpop.f32.mrf.mxu0
      %v1556 = vadd.f32 0.0, %v1555
      %v1557 = vpop.f32.mrf.mxu0
      %1558 = vmatprep.mubr.bf16.mxu0 0
      %1559 = vmatmul.mubr.bf16.gmra.mxu0 %v1432
      %v1560 = vpop.f32.mrf.mxu0
      %v1561 = vadd.f32 0.0, %v1560
      %v1562 = vpop.f32.mrf.mxu0
      %v1563 = vpop.f32.mrf.mxu0
      %v1564 = vadd.f32 0.0, %v1563
      %v1565 = vpop.f32.mrf.mxu0
      %1566 = vmatprep.mubr.bf16.mxu0 0
      %1567 = vmatmul.mubr.bf16.gmra.mxu0 %v1433
      %v1568 = vpop.f32.mrf.mxu0
      %v1569 = vadd.f32 0.0, %v1568
      %v1570 = vpop.f32.mrf.mxu0
      %v1571 = vpop.f32.mrf.mxu0
      %v1572 = vadd.f32 0.0, %v1571
      %v1573 = vpop.f32.mrf.mxu0
      %1574 = vmatprep.mubr.bf16.mxu0 0
      %1575 = vmatmul.mubr.bf16.gmra.mxu0 %v1434
      %v1576 = vpop.f32.mrf.mxu0
      %v1577 = vadd.f32 0.0, %v1576
      %v1578 = vpop.f32.mrf.mxu0
      %v1579 = vpop.f32.mrf.mxu0
      %v1580 = vadd.f32 0.0, %v1579
      %v1581 = vpop.f32.mrf.mxu0
      %1582 = vmatprep.mubr.bf16.mxu0 0
      %1583 = vmatmul.mubr.bf16.gmra.mxu0 %v1435
      %v1584 = vpop.f32.mrf.mxu0
      %v1585 = vadd.f32 0.0, %v1584
      %v1586 = vpop.f32.mrf.mxu0
      %v1587 = vpop.f32.mrf.mxu0
      %v1588 = vadd.f32 0.0, %v1587
      %v1589 = vpop.f32.mrf.mxu0
      %1590 = vmatprep.mubr.bf16.mxu0 0
      %1591 = vmatmul.mubr.bf16.gmra.mxu0 %v1436
      %v1592 = vpop.f32.mrf.mxu0
      %v1593 = vadd.f32 0.0, %v1592
      %v1594 = vpop.f32.mrf.mxu0
      %v1595 = vpop.f32.mrf.mxu0
      %v1596 = vadd.f32 0.0, %v1595
      %v1597 = vpop.f32.mrf.mxu0
      %1598 = vmatprep.mubr.bf16.mxu0 0
      %1599 = vmatmul.mubr.bf16.gmra.mxu0 %v1437
      %v1600 = vpop.f32.mrf.mxu0
      %v1601 = vadd.f32 0.0, %v1600
      %v1602 = vpop.f32.mrf.mxu0
      %v1603 = vpop.f32.mrf.mxu0
      %v1604 = vadd.f32 0.0, %v1603
      %v1605 = vpop.f32.mrf.mxu0
      %1606 = vmatprep.mubr.bf16.mxu0 0
      %1607 = vmatmul.mubr.bf16.gmra.mxu0 %v1438
      %v1608 = vpop.f32.mrf.mxu0
      %v1609 = vadd.f32 0.0, %v1608
      %v1610 = vpop.f32.mrf.mxu0
      %v1611 = vpop.f32.mrf.mxu0
      %v1612 = vadd.f32 0.0, %v1611
      %v1613 = vpop.f32.mrf.mxu0
      %1614 = vmatprep.mubr.bf16.mxu0 0
      %1615 = vmatmul.mubr.bf16.gmra.mxu0 %v1439
      %v1616 = vpop.f32.mrf.mxu0
      %v1617 = vadd.f32 0.0, %v1616
      %v1618 = vpop.f32.mrf.mxu0
      %v1619 = vpop.f32.mrf.mxu0
      %v1620 = vadd.f32 0.0, %v1619
      %v1621 = vpop.f32.mrf.mxu0
      %1622 = vmatprep.mubr.bf16.mxu0 0
      %1623 = vmatmul.mubr.bf16.gmra.mxu0 %v1440
      %v1624 = vpop.f32.mrf.mxu0
      %v1625 = vadd.f32 0.0, %v1624
      %v1626 = vpop.f32.mrf.mxu0
      %v1627 = vpop.f32.mrf.mxu0
      %v1628 = vadd.f32 0.0, %v1627
      %v1629 = vpop.f32.mrf.mxu0
      %1630 = vmatprep.mubr.bf16.mxu0 0
      %1631 = vmatmul.mubr.bf16.gmra.mxu0 %v1441
      %v1632 = vpop.f32.mrf.mxu0
      %v1633 = vadd.f32 0.0, %v1632
      %v1634 = vpop.f32.mrf.mxu0
      %v1635 = vpop.f32.mrf.mxu0
      %v1636 = vadd.f32 0.0, %v1635
      %v1637 = vpop.f32.mrf.mxu0
      %1638 = vmatprep.mubr.bf16.mxu0 0
      %1639 = vmatmul.mubr.bf16.gmra.mxu0 %v1442
      %v1640 = vpop.f32.mrf.mxu0
      %v1641 = vadd.f32 0.0, %v1640
      %v1642 = vpop.f32.mrf.mxu0
      %v1643 = vpop.f32.mrf.mxu0
      %v1644 = vadd.f32 0.0, %v1643
      %v1645 = vpop.f32.mrf.mxu0
      %1646 = vmatprep.mubr.bf16.mxu0 0
      %1647 = vmatmul.mubr.bf16.gmra.mxu0 %v1443
      %v1648 = vpop.f32.mrf.mxu0
      %v1649 = vadd.f32 0.0, %v1648
      %v1650 = vpop.f32.mrf.mxu0
      %v1651 = vpop.f32.mrf.mxu0
      %v1652 = vadd.f32 0.0, %v1651
      %v1653 = vpop.f32.mrf.mxu0
      %1654 = vmatprep.mubr.bf16.mxu0 0
      %1655 = vmatmul.mubr.bf16.gmra.mxu0 %v1444
      %v1656 = vpop.f32.mrf.mxu0
      %v1657 = vadd.f32 0.0, %v1656
      %v1658 = vpop.f32.mrf.mxu0
      %v1659 = vpop.f32.mrf.mxu0
      %v1660 = vadd.f32 0.0, %v1659
      %v1661 = vpop.f32.mrf.mxu0
      %1662 = vmatprep.mubr.bf16.mxu0 0
      %1663 = vmatmul.mubr.bf16.gmra.mxu0 %v1445
      %v1664 = vpop.f32.mrf.mxu0
      %v1665 = vadd.f32 0.0, %v1664
      %v1666 = vpop.f32.mrf.mxu0
      %v1667 = vpop.f32.mrf.mxu0
      %v1668 = vadd.f32 0.0, %v1667
      %v1669 = vpop.f32.mrf.mxu0
      %1670 = vdwg.mxu0
      %v1671 = vadd.f32 %v1092, %v1545
      %v1672 = vadd.f32 %v1095, %v1548
      %v1673 = vadd.f32 %v1100, %v1553
      %v1674 = vadd.f32 %v1103, %v1556
      %v1675 = vadd.f32 %v1108, %v1561
      %v1676 = vadd.f32 %v1111, %v1564
      %v1677 = vadd.f32 %v1116, %v1569
      %v1678 = vadd.f32 %v1119, %v1572
      %v1679 = vadd.f32 %v1124, %v1577
      %v1680 = vadd.f32 %v1127, %v1580
      %v1681 = vadd.f32 %v1132, %v1585
      %v1682 = vadd.f32 %v1135, %v1588
      %v1683 = vadd.f32 %v1140, %v1593
      %v1684 = vadd.f32 %v1143, %v1596
      %v1685 = vadd.f32 %v1148, %v1601
      %v1686 = vadd.f32 %v1151, %v1604
      %v1687 = vadd.f32 %v1156, %v1609
      %v1688 = vadd.f32 %v1159, %v1612
      %v1689 = vadd.f32 %v1164, %v1617
      %v1690 = vadd.f32 %v1167, %v1620
      %v1691 = vadd.f32 %v1172, %v1625
      %v1692 = vadd.f32 %v1175, %v1628
      %v1693 = vadd.f32 %v1180, %v1633
      %v1694 = vadd.f32 %v1183, %v1636
      %v1695 = vadd.f32 %v1188, %v1641
      %v1696 = vadd.f32 %v1191, %v1644
      %v1697 = vadd.f32 %v1196, %v1649
      %v1698 = vadd.f32 %v1199, %v1652
      %v1699 = vadd.f32 %v1204, %v1657
      %v1700 = vadd.f32 %v1207, %v1660
      %v1701 = vadd.f32 %v1212, %v1665
      %v1702 = vadd.f32 %v1215, %v1668
      %s1703 = scalar_lea.vmem %s165, 12
      %v1704 = vld [vmem:[%s1703] sm:$0xf]
      %v1705 = vld [vmem:[%s1703 + $0x4] sm:$0xf]
      %v1706 = vld [vmem:[%s1703 + $0xc] sm:$0xf]
      %v1707 = vld [vmem:[%s1703 + $0x10] sm:$0xf]
      %v1708 = vld [vmem:[%s1703 + $0x18] sm:$0xf]
      %v1709 = vld [vmem:[%s1703 + $0x1c] sm:$0xf]
      %v1710 = vld [vmem:[%s1703 + $0x24] sm:$0xf]
      %v1711 = vld [vmem:[%s1703 + $0x28] sm:$0xf]
      %v1712 = vld [vmem:[%s1703 + $0x30] sm:$0xf]
      %v1713 = vld [vmem:[%s1703 + $0x34] sm:$0xf]
      %v1714 = vld [vmem:[%s1703 + $0x3c] sm:$0xf]
      %v1715 = vld [vmem:[%s1703 + $0x40] sm:$0xf]
      %v1716 = vld [vmem:[%s1703 + $0x48] sm:$0xf]
      %v1717 = vld [vmem:[%s1703 + $0x4c] sm:$0xf]
      %v1718 = vld [vmem:[%s1703 + $0x54] sm:$0xf]
      %v1719 = vld [vmem:[%s1703 + $0x58] sm:$0xf]
      %v1720 = vld [vmem:[%s1703 + $0x60] sm:$0xf]
      %v1721 = vld [vmem:[%s1703 + $0x64] sm:$0xf]
      %v1722 = vld [vmem:[%s1703 + $0x6c] sm:$0xf]
      %v1723 = vld [vmem:[%s1703 + $0x70] sm:$0xf]
      %v1724 = vld [vmem:[%s1703 + $0x78] sm:$0xf]
      %v1725 = vld [vmem:[%s1703 + $0x7c] sm:$0xf]
      %v1726 = vld [vmem:[%s1703 + $0x84] sm:$0xf]
      %v1727 = vld [vmem:[%s1703 + $0x88] sm:$0xf]
      %v1728 = vld [vmem:[%s1703 + $0x90] sm:$0xf]
      %v1729 = vld [vmem:[%s1703 + $0x94] sm:$0xf]
      %v1730 = vld [vmem:[%s1703 + $0x9c] sm:$0xf]
      %v1731 = vld [vmem:[%s1703 + $0xa0] sm:$0xf]
      %v1732 = vld [vmem:[%s1703 + $0xa8] sm:$0xf]
      %v1733 = vld [vmem:[%s1703 + $0xac] sm:$0xf]
      %v1734 = vld [vmem:[%s1703 + $0xb4] sm:$0xf]
      %v1735 = vld [vmem:[%s1703 + $0xb8] sm:$0xf]
      %s1736 = scalar_lea.vmem %s1, 192
      %v1737 = vld [vmem:[%s1736] sm:$0xf]
      %v1738 = vld [vmem:[%s1736 + $0x4] sm:$0xf]
      %v1739 = vld [vmem:[%s1736 + $0x8] sm:$0xf]
      %v1740 = vld [vmem:[%s1736 + $0xc] sm:$0xf]
      %v1741 = vld [vmem:[%s1736 + $0x10] sm:$0xf]
      %v1742 = vld [vmem:[%s1736 + $0x14] sm:$0xf]
      %v1743 = vld [vmem:[%s1736 + $0x18] sm:$0xf]
      %v1744 = vld [vmem:[%s1736 + $0x1c] sm:$0xf]
      %v1745 = vld [vmem:[%s1736 + $0x20] sm:$0xf]
      %v1746 = vld [vmem:[%s1736 + $0x24] sm:$0xf]
      %v1747 = vld [vmem:[%s1736 + $0x28] sm:$0xf]
      %v1748 = vld [vmem:[%s1736 + $0x2c] sm:$0xf]
      %v1749 = vld [vmem:[%s1736 + $0x30] sm:$0xf]
      %v1750 = vld [vmem:[%s1736 + $0x34] sm:$0xf]
      %v1751 = vld [vmem:[%s1736 + $0x38] sm:$0xf]
      %v1752 = vld [vmem:[%s1736 + $0x3c] sm:$0xf]
      %v1785 = vunpack.c.l.b16 %v1704
      %v1786 = vunpack.c.l.b16 %v1705
      %v1787 = vunpack.c.l.b16 %v1706
      %v1788 = vunpack.c.l.b16 %v1707
      %v1789 = vunpack.c.l.b16 %v1708
      %v1790 = vunpack.c.l.b16 %v1709
      %v1791 = vunpack.c.l.b16 %v1710
      %v1792 = vunpack.c.l.b16 %v1711
      %v1793 = vunpack.c.l.b16 %v1712
      %v1794 = vunpack.c.l.b16 %v1713
      %v1795 = vunpack.c.l.b16 %v1714
      %v1796 = vunpack.c.l.b16 %v1715
      %v1797 = vunpack.c.l.b16 %v1716
      %v1798 = vunpack.c.l.b16 %v1717
      %v1799 = vunpack.c.l.b16 %v1718
      %v1800 = vunpack.c.l.b16 %v1719
      %v1801 = vunpack.c.l.b16 %v1720
      %v1802 = vunpack.c.l.b16 %v1721
      %v1803 = vunpack.c.l.b16 %v1722
      %v1804 = vunpack.c.l.b16 %v1723
      %v1805 = vunpack.c.l.b16 %v1724
      %v1806 = vunpack.c.l.b16 %v1725
      %v1807 = vunpack.c.l.b16 %v1726
      %v1808 = vunpack.c.l.b16 %v1727
      %v1809 = vunpack.c.l.b16 %v1728
      %v1810 = vunpack.c.l.b16 %v1729
      %v1811 = vunpack.c.l.b16 %v1730
      %v1812 = vunpack.c.l.b16 %v1731
      %v1813 = vunpack.c.l.b16 %v1732
      %v1814 = vunpack.c.l.b16 %v1733
      %v1815 = vunpack.c.l.b16 %v1734
      %v1816 = vunpack.c.l.b16 %v1735
      %v1817 = vpack.c.b16 %v1786, %v1785
      %v1818 = vpack.c.b16 %v1788, %v1787
      %v1819 = vpack.c.b16 %v1790, %v1789
      %v1820 = vpack.c.b16 %v1792, %v1791
      %v1821 = vpack.c.b16 %v1794, %v1793
      %v1822 = vpack.c.b16 %v1796, %v1795
      %v1823 = vpack.c.b16 %v1798, %v1797
      %v1824 = vpack.c.b16 %v1800, %v1799
      %v1825 = vpack.c.b16 %v1802, %v1801
      %v1826 = vpack.c.b16 %v1804, %v1803
      %v1827 = vpack.c.b16 %v1806, %v1805
      %v1828 = vpack.c.b16 %v1808, %v1807
      %v1829 = vpack.c.b16 %v1810, %v1809
      %v1830 = vpack.c.b16 %v1812, %v1811
      %v1831 = vpack.c.b16 %v1814, %v1813
      %v1832 = vpack.c.b16 %v1816, %v1815
      %v1865 = vunpack.c.l.b16 %v1737
      %v1866 = vunpack.c.l.b16 %v1738
      %v1867 = vunpack.c.l.b16 %v1739
      %v1868 = vunpack.c.l.b16 %v1740
      %v1869 = vunpack.c.l.b16 %v1741
      %v1870 = vunpack.c.l.b16 %v1742
      %v1871 = vunpack.c.l.b16 %v1743
      %v1872 = vunpack.c.l.b16 %v1744
      %v1873 = vunpack.c.l.b16 %v1745
      %v1874 = vunpack.c.l.b16 %v1746
      %v1875 = vunpack.c.l.b16 %v1747
      %v1876 = vunpack.c.l.b16 %v1748
      %v1877 = vunpack.c.l.b16 %v1749
      %v1878 = vunpack.c.l.b16 %v1750
      %v1879 = vunpack.c.l.b16 %v1751
      %v1880 = vunpack.c.l.b16 %v1752
      %v1881 = vpack.c.b16 %v1866, %v1865
      %v1882 = vpack.c.b16 %v1868, %v1867
      %v1883 = vpack.c.b16 %v1870, %v1869
      %v1884 = vpack.c.b16 %v1872, %v1871
      %v1885 = vpack.c.b16 %v1874, %v1873
      %v1886 = vpack.c.b16 %v1876, %v1875
      %v1887 = vpack.c.b16 %v1878, %v1877
      %v1888 = vpack.c.b16 %v1880, %v1879
      %1897 = vmatprep.subr.bf16.mxu0 0
      %1898 = vmatpush1.bf16.msra.mxu0 %v1888
      %1899 = vmatprep.subr.bf16.mxu0 0
      %1900 = vmatpush1.bf16.msra.mxu0 %v1887
      %1901 = vmatprep.subr.bf16.mxu0 0
      %1902 = vmatpush1.bf16.msra.mxu0 %v1886
      %1903 = vmatprep.subr.bf16.mxu0 0
      %1904 = vmatpush1.bf16.msra.mxu0 %v1885
      %1905 = vmatprep.subr.bf16.mxu0 0
      %1906 = vmatpush1.bf16.msra.mxu0 %v1884
      %1907 = vmatprep.subr.bf16.mxu0 0
      %1908 = vmatpush1.bf16.msra.mxu0 %v1883
      %1909 = vmatprep.subr.bf16.mxu0 0
      %1910 = vmatpush1.bf16.msra.mxu0 %v1882
      %1911 = vmatprep.subr.bf16.mxu0 0
      %1912 = vmatpush1.bf16.msra.mxu0 %v1881
      %1913 = vmatprep.subr.bf16.mxu0 0
      %1914 = vmatpush2.bf16.msra.mxu0 0
      %1915 = vmatprep.subr.bf16.mxu0 0
      %1916 = vmatpush2.bf16.msra.mxu0 0
      %1917 = vmatprep.subr.bf16.mxu0 0
      %1918 = vmatpush2.bf16.msra.mxu0 0
      %1919 = vmatprep.subr.bf16.mxu0 0
      %1920 = vmatpush2.bf16.msra.mxu0 0
      %1921 = vmatprep.subr.bf16.mxu0 0
      %1922 = vmatpush2.bf16.msra.mxu0 0
      %1923 = vmatprep.subr.bf16.mxu0 0
      %1924 = vmatpush2.bf16.msra.mxu0 0
      %1925 = vmatprep.subr.bf16.mxu0 0
      %1926 = vmatpush2.bf16.msra.mxu0 0
      %1927 = vmatprep.subr.bf16.mxu0 0
      %1928 = vmatpush2.bf16.msra.mxu0 0
      %1929 = vmatprep.mubr.bf16.mxu0 0
      %1930 = vmatmul.mubr.bf16.gmra.mxu0 %v1817
      %v1931 = vpop.f32.mrf.mxu0
      %v1932 = vadd.f32 0.0, %v1931
      %v1933 = vpop.f32.mrf.mxu0
      %v1934 = vpop.f32.mrf.mxu0
      %v1935 = vadd.f32 0.0, %v1934
      %v1936 = vpop.f32.mrf.mxu0
      %1937 = vmatprep.mubr.bf16.mxu0 0
      %1938 = vmatmul.mubr.bf16.gmra.mxu0 %v1818
      %v1939 = vpop.f32.mrf.mxu0
      %v1940 = vadd.f32 0.0, %v1939
      %v1941 = vpop.f32.mrf.mxu0
      %v1942 = vpop.f32.mrf.mxu0
      %v1943 = vadd.f32 0.0, %v1942
      %v1944 = vpop.f32.mrf.mxu0
      %1945 = vmatprep.mubr.bf16.mxu0 0
      %1946 = vmatmul.mubr.bf16.gmra.mxu0 %v1819
      %v1947 = vpop.f32.mrf.mxu0
      %v1948 = vadd.f32 0.0, %v1947
      %v1949 = vpop.f32.mrf.mxu0
      %v1950 = vpop.f32.mrf.mxu0
      %v1951 = vadd.f32 0.0, %v1950
      %v1952 = vpop.f32.mrf.mxu0
      %1953 = vmatprep.mubr.bf16.mxu0 0
      %1954 = vmatmul.mubr.bf16.gmra.mxu0 %v1820
      %v1955 = vpop.f32.mrf.mxu0
      %v1956 = vadd.f32 0.0, %v1955
      %v1957 = vpop.f32.mrf.mxu0
      %v1958 = vpop.f32.mrf.mxu0
      %v1959 = vadd.f32 0.0, %v1958
      %v1960 = vpop.f32.mrf.mxu0
      %1961 = vmatprep.mubr.bf16.mxu0 0
      %1962 = vmatmul.mubr.bf16.gmra.mxu0 %v1821
      %v1963 = vpop.f32.mrf.mxu0
      %v1964 = vadd.f32 0.0, %v1963
      %v1965 = vpop.f32.mrf.mxu0
      %v1966 = vpop.f32.mrf.mxu0
      %v1967 = vadd.f32 0.0, %v1966
      %v1968 = vpop.f32.mrf.mxu0
      %1969 = vmatprep.mubr.bf16.mxu0 0
      %1970 = vmatmul.mubr.bf16.gmra.mxu0 %v1822
      %v1971 = vpop.f32.mrf.mxu0
      %v1972 = vadd.f32 0.0, %v1971
      %v1973 = vpop.f32.mrf.mxu0
      %v1974 = vpop.f32.mrf.mxu0
      %v1975 = vadd.f32 0.0, %v1974
      %v1976 = vpop.f32.mrf.mxu0
      %1977 = vmatprep.mubr.bf16.mxu0 0
      %1978 = vmatmul.mubr.bf16.gmra.mxu0 %v1823
      %v1979 = vpop.f32.mrf.mxu0
      %v1980 = vadd.f32 0.0, %v1979
      %v1981 = vpop.f32.mrf.mxu0
      %v1982 = vpop.f32.mrf.mxu0
      %v1983 = vadd.f32 0.0, %v1982
      %v1984 = vpop.f32.mrf.mxu0
      %1985 = vmatprep.mubr.bf16.mxu0 0
      %1986 = vmatmul.mubr.bf16.gmra.mxu0 %v1824
      %v1987 = vpop.f32.mrf.mxu0
      %v1988 = vadd.f32 0.0, %v1987
      %v1989 = vpop.f32.mrf.mxu0
      %v1990 = vpop.f32.mrf.mxu0
      %v1991 = vadd.f32 0.0, %v1990
      %v1992 = vpop.f32.mrf.mxu0
      %1993 = vmatprep.mubr.bf16.mxu0 0
      %1994 = vmatmul.mubr.bf16.gmra.mxu0 %v1825
      %v1995 = vpop.f32.mrf.mxu0
      %v1996 = vadd.f32 0.0, %v1995
      %v1997 = vpop.f32.mrf.mxu0
      %v1998 = vpop.f32.mrf.mxu0
      %v1999 = vadd.f32 0.0, %v1998
      %v2000 = vpop.f32.mrf.mxu0
      %2001 = vmatprep.mubr.bf16.mxu0 0
      %2002 = vmatmul.mubr.bf16.gmra.mxu0 %v1826
      %v2003 = vpop.f32.mrf.mxu0
      %v2004 = vadd.f32 0.0, %v2003
      %v2005 = vpop.f32.mrf.mxu0
      %v2006 = vpop.f32.mrf.mxu0
      %v2007 = vadd.f32 0.0, %v2006
      %v2008 = vpop.f32.mrf.mxu0
      %2009 = vmatprep.mubr.bf16.mxu0 0
      %2010 = vmatmul.mubr.bf16.gmra.mxu0 %v1827
      %v2011 = vpop.f32.mrf.mxu0
      %v2012 = vadd.f32 0.0, %v2011
      %v2013 = vpop.f32.mrf.mxu0
      %v2014 = vpop.f32.mrf.mxu0
      %v2015 = vadd.f32 0.0, %v2014
      %v2016 = vpop.f32.mrf.mxu0
      %2017 = vmatprep.mubr.bf16.mxu0 0
      %2018 = vmatmul.mubr.bf16.gmra.mxu0 %v1828
      %v2019 = vpop.f32.mrf.mxu0
      %v2020 = vadd.f32 0.0, %v2019
      %v2021 = vpop.f32.mrf.mxu0
      %v2022 = vpop.f32.mrf.mxu0
      %v2023 = vadd.f32 0.0, %v2022
      %v2024 = vpop.f32.mrf.mxu0
      %2025 = vmatprep.mubr.bf16.mxu0 0
      %2026 = vmatmul.mubr.bf16.gmra.mxu0 %v1829
      %v2027 = vpop.f32.mrf.mxu0
      %v2028 = vadd.f32 0.0, %v2027
      %v2029 = vpop.f32.mrf.mxu0
      %v2030 = vpop.f32.mrf.mxu0
      %v2031 = vadd.f32 0.0, %v2030
      %v2032 = vpop.f32.mrf.mxu0
      %2033 = vmatprep.mubr.bf16.mxu0 0
      %2034 = vmatmul.mubr.bf16.gmra.mxu0 %v1830
      %v2035 = vpop.f32.mrf.mxu0
      %v2036 = vadd.f32 0.0, %v2035
      %v2037 = vpop.f32.mrf.mxu0
      %v2038 = vpop.f32.mrf.mxu0
      %v2039 = vadd.f32 0.0, %v2038
      %v2040 = vpop.f32.mrf.mxu0
      %2041 = vmatprep.mubr.bf16.mxu0 0
      %2042 = vmatmul.mubr.bf16.gmra.mxu0 %v1831
      %v2043 = vpop.f32.mrf.mxu0
      %v2044 = vadd.f32 0.0, %v2043
      %v2045 = vpop.f32.mrf.mxu0
      %v2046 = vpop.f32.mrf.mxu0
      %v2047 = vadd.f32 0.0, %v2046
      %v2048 = vpop.f32.mrf.mxu0
      %2049 = vmatprep.mubr.bf16.mxu0 0
      %2050 = vmatmul.mubr.bf16.gmra.mxu0 %v1832
      %v2051 = vpop.f32.mrf.mxu0
      %v2052 = vadd.f32 0.0, %v2051
      %v2053 = vpop.f32.mrf.mxu0
      %v2054 = vpop.f32.mrf.mxu0
      %v2055 = vadd.f32 0.0, %v2054
      %v2056 = vpop.f32.mrf.mxu0
      %2057 = vdwg.mxu0
      %v2058 = vadd.f32 %v1671, %v1932
      %v2059 = vadd.f32 %v1672, %v1935
      %v2060 = vadd.f32 %v1673, %v1940
      %v2061 = vadd.f32 %v1674, %v1943
      %v2062 = vadd.f32 %v1675, %v1948
      %v2063 = vadd.f32 %v1676, %v1951
      %v2064 = vadd.f32 %v1677, %v1956
      %v2065 = vadd.f32 %v1678, %v1959
      %v2066 = vadd.f32 %v1679, %v1964
      %v2067 = vadd.f32 %v1680, %v1967
      %v2068 = vadd.f32 %v1681, %v1972
      %v2069 = vadd.f32 %v1682, %v1975
      %v2070 = vadd.f32 %v1683, %v1980
      %v2071 = vadd.f32 %v1684, %v1983
      %v2072 = vadd.f32 %v1685, %v1988
      %v2073 = vadd.f32 %v1686, %v1991
      %v2074 = vadd.f32 %v1687, %v1996
      %v2075 = vadd.f32 %v1688, %v1999
      %v2076 = vadd.f32 %v1689, %v2004
      %v2077 = vadd.f32 %v1690, %v2007
      %v2078 = vadd.f32 %v1691, %v2012
      %v2079 = vadd.f32 %v1692, %v2015
      %v2080 = vadd.f32 %v1693, %v2020
      %v2081 = vadd.f32 %v1694, %v2023
      %v2082 = vadd.f32 %v1695, %v2028
      %v2083 = vadd.f32 %v1696, %v2031
      %v2084 = vadd.f32 %v1697, %v2036
      %v2085 = vadd.f32 %v1698, %v2039
      %v2086 = vadd.f32 %v1699, %v2044
      %v2087 = vadd.f32 %v1700, %v2047
      %v2088 = vadd.f32 %v1701, %v2052
      %v2089 = vadd.f32 %v1702, %v2055
      %v2090 = vld [vmem:[%s1703] sm:$0xf]
      %v2091 = vld [vmem:[%s1703 + $0x4] sm:$0xf]
      %v2092 = vld [vmem:[%s1703 + $0x8] sm:$0x1]
      %v2093 = vld [vmem:[%s1703 + $0xc] sm:$0xf]
      %v2094 = vld [vmem:[%s1703 + $0x10] sm:$0xf]
      %v2095 = vld [vmem:[%s1703 + $0x14] sm:$0x1]
      %v2096 = vld [vmem:[%s1703 + $0x18] sm:$0xf]
      %v2097 = vld [vmem:[%s1703 + $0x1c] sm:$0xf]
      %v2098 = vld [vmem:[%s1703 + $0x20] sm:$0x1]
      %v2099 = vld [vmem:[%s1703 + $0x24] sm:$0xf]
      %v2100 = vld [vmem:[%s1703 + $0x28] sm:$0xf]
      %v2101 = vld [vmem:[%s1703 + $0x2c] sm:$0x1]
      %v2102 = vld [vmem:[%s1703 + $0x30] sm:$0xf]
      %v2103 = vld [vmem:[%s1703 + $0x34] sm:$0xf]
      %v2104 = vld [vmem:[%s1703 + $0x38] sm:$0x1]
      %v2105 = vld [vmem:[%s1703 + $0x3c] sm:$0xf]
      %v2106 = vld [vmem:[%s1703 + $0x40] sm:$0xf]
      %v2107 = vld [vmem:[%s1703 + $0x44] sm:$0x1]
      %v2108 = vld [vmem:[%s1703 + $0x48] sm:$0xf]
      %v2109 = vld [vmem:[%s1703 + $0x4c] sm:$0xf]
      %v2110 = vld [vmem:[%s1703 + $0x50] sm:$0x1]
      %v2111 = vld [vmem:[%s1703 + $0x54] sm:$0xf]
      %v2112 = vld [vmem:[%s1703 + $0x58] sm:$0xf]
      %v2113 = vld [vmem:[%s1703 + $0x5c] sm:$0x1]
      %v2114 = vld [vmem:[%s1703 + $0x60] sm:$0xf]
      %v2115 = vld [vmem:[%s1703 + $0x64] sm:$0xf]
      %v2116 = vld [vmem:[%s1703 + $0x68] sm:$0x1]
      %v2117 = vld [vmem:[%s1703 + $0x6c] sm:$0xf]
      %v2118 = vld [vmem:[%s1703 + $0x70] sm:$0xf]
      %v2119 = vld [vmem:[%s1703 + $0x74] sm:$0x1]
      %v2120 = vld [vmem:[%s1703 + $0x78] sm:$0xf]
      %v2121 = vld [vmem:[%s1703 + $0x7c] sm:$0xf]
      %v2122 = vld [vmem:[%s1703 + $0x80] sm:$0x1]
      %v2123 = vld [vmem:[%s1703 + $0x84] sm:$0xf]
      %v2124 = vld [vmem:[%s1703 + $0x88] sm:$0xf]
      %v2125 = vld [vmem:[%s1703 + $0x8c] sm:$0x1]
      %v2126 = vld [vmem:[%s1703 + $0x90] sm:$0xf]
      %v2127 = vld [vmem:[%s1703 + $0x94] sm:$0xf]
      %v2128 = vld [vmem:[%s1703 + $0x98] sm:$0x1]
      %v2129 = vld [vmem:[%s1703 + $0x9c] sm:$0xf]
      %v2130 = vld [vmem:[%s1703 + $0xa0] sm:$0xf]
      %v2131 = vld [vmem:[%s1703 + $0xa4] sm:$0x1]
      %v2132 = vld [vmem:[%s1703 + $0xa8] sm:$0xf]
      %v2133 = vld [vmem:[%s1703 + $0xac] sm:$0xf]
      %v2134 = vld [vmem:[%s1703 + $0xb0] sm:$0x1]
      %v2135 = vld [vmem:[%s1703 + $0xb4] sm:$0xf]
      %v2136 = vld [vmem:[%s1703 + $0xb8] sm:$0xf]
      %v2137 = vld [vmem:[%s1703 + $0xbc] sm:$0x1]
      %v2139 = vshrl.u32 %v2090, 16
      %v2141 = vrot.slane %v2139, 4
      %v2142 = vshll.u32 %v2090, 16
      %v2144 = vrot.slane %v2142, 5
      %v2145 = vor.u32 %v2141, %v2144
      %v2146 = vrot.slane %v2145, 4
      %v2148 = vshll.u32 %v2091, 16
      %v2150 = vrot.slane %v2148, 5
      %v2151 = vsel %vm238, %v2146, %v2150
      %v2152 = vshrl.u32 %v2091, 16
      %v2154 = vrot.slane %v2152, 4
      %v2155 = vor.u32 %v2154, %v2150
      %v2156 = vrot.slane %v2155, 4
      %v2158 = vshll.u32 %v2092, 16
      %v2160 = vrot.slane %v2158, 5
      %v2161 = vsel %vm238, %v2156, %v2160
      %v2163 = vshrl.u32 %v2093, 16
      %v2165 = vrot.slane %v2163, 4
      %v2166 = vshll.u32 %v2093, 16
      %v2168 = vrot.slane %v2166, 5
      %v2169 = vor.u32 %v2165, %v2168
      %v2170 = vrot.slane %v2169, 4
      %v2172 = vshll.u32 %v2094, 16
      %v2174 = vrot.slane %v2172, 5
      %v2175 = vsel %vm238, %v2170, %v2174
      %v2176 = vshrl.u32 %v2094, 16
      %v2178 = vrot.slane %v2176, 4
      %v2179 = vor.u32 %v2178, %v2174
      %v2180 = vrot.slane %v2179, 4
      %v2182 = vshll.u32 %v2095, 16
      %v2184 = vrot.slane %v2182, 5
      %v2185 = vsel %vm238, %v2180, %v2184
      %v2187 = vshrl.u32 %v2096, 16
      %v2189 = vrot.slane %v2187, 4
      %v2190 = vshll.u32 %v2096, 16
      %v2192 = vrot.slane %v2190, 5
      %v2193 = vor.u32 %v2189, %v2192
      %v2194 = vrot.slane %v2193, 4
      %v2196 = vshll.u32 %v2097, 16
      %v2198 = vrot.slane %v2196, 5
      %v2199 = vsel %vm238, %v2194, %v2198
      %v2200 = vshrl.u32 %v2097, 16
      %v2202 = vrot.slane %v2200, 4
      %v2203 = vor.u32 %v2202, %v2198
      %v2204 = vrot.slane %v2203, 4
      %v2206 = vshll.u32 %v2098, 16
      %v2208 = vrot.slane %v2206, 5
      %v2209 = vsel %vm238, %v2204, %v2208
      %v2211 = vshrl.u32 %v2099, 16
      %v2213 = vrot.slane %v2211, 4
      %v2214 = vshll.u32 %v2099, 16
      %v2216 = vrot.slane %v2214, 5
      %v2217 = vor.u32 %v2213, %v2216
      %v2218 = vrot.slane %v2217, 4
      %v2220 = vshll.u32 %v2100, 16
      %v2222 = vrot.slane %v2220, 5
      %v2223 = vsel %vm238, %v2218, %v2222
      %v2224 = vshrl.u32 %v2100, 16
      %v2226 = vrot.slane %v2224, 4
      %v2227 = vor.u32 %v2226, %v2222
      %v2228 = vrot.slane %v2227, 4
      %v2230 = vshll.u32 %v2101, 16
      %v2232 = vrot.slane %v2230, 5
      %v2233 = vsel %vm238, %v2228, %v2232
      %v2235 = vshrl.u32 %v2102, 16
      %v2237 = vrot.slane %v2235, 4
      %v2238 = vshll.u32 %v2102, 16
      %v2240 = vrot.slane %v2238, 5
      %v2241 = vor.u32 %v2237, %v2240
      %v2242 = vrot.slane %v2241, 4
      %v2244 = vshll.u32 %v2103, 16
      %v2246 = vrot.slane %v2244, 5
      %v2247 = vsel %vm238, %v2242, %v2246
      %v2248 = vshrl.u32 %v2103, 16
      %v2250 = vrot.slane %v2248, 4
      %v2251 = vor.u32 %v2250, %v2246
      %v2252 = vrot.slane %v2251, 4
      %v2254 = vshll.u32 %v2104, 16
      %v2256 = vrot.slane %v2254, 5
      %v2257 = vsel %vm238, %v2252, %v2256
      %v2259 = vshrl.u32 %v2105, 16
      %v2261 = vrot.slane %v2259, 4
      %v2262 = vshll.u32 %v2105, 16
      %v2264 = vrot.slane %v2262, 5
      %v2265 = vor.u32 %v2261, %v2264
      %v2266 = vrot.slane %v2265, 4
      %v2268 = vshll.u32 %v2106, 16
      %v2270 = vrot.slane %v2268, 5
      %v2271 = vsel %vm238, %v2266, %v2270
      %v2272 = vshrl.u32 %v2106, 16
      %v2274 = vrot.slane %v2272, 4
      %v2275 = vor.u32 %v2274, %v2270
      %v2276 = vrot.slane %v2275, 4
      %v2278 = vshll.u32 %v2107, 16
      %v2280 = vrot.slane %v2278, 5
      %v2281 = vsel %vm238, %v2276, %v2280
      %v2283 = vshrl.u32 %v2108, 16
      %v2285 = vrot.slane %v2283, 4
      %v2286 = vshll.u32 %v2108, 16
      %v2288 = vrot.slane %v2286, 5
      %v2289 = vor.u32 %v2285, %v2288
      %v2290 = vrot.slane %v2289, 4
      %v2292 = vshll.u32 %v2109, 16
      %v2294 = vrot.slane %v2292, 5
      %v2295 = vsel %vm238, %v2290, %v2294
      %v2296 = vshrl.u32 %v2109, 16
      %v2298 = vrot.slane %v2296, 4
      %v2299 = vor.u32 %v2298, %v2294
      %v2300 = vrot.slane %v2299, 4
      %v2302 = vshll.u32 %v2110, 16
      %v2304 = vrot.slane %v2302, 5
      %v2305 = vsel %vm238, %v2300, %v2304
      %v2307 = vshrl.u32 %v2111, 16
      %v2309 = vrot.slane %v2307, 4
      %v2310 = vshll.u32 %v2111, 16
      %v2312 = vrot.slane %v2310, 5
      %v2313 = vor.u32 %v2309, %v2312
      %v2314 = vrot.slane %v2313, 4
      %v2316 = vshll.u32 %v2112, 16
      %v2318 = vrot.slane %v2316, 5
      %v2319 = vsel %vm238, %v2314, %v2318
      %v2320 = vshrl.u32 %v2112, 16
      %v2322 = vrot.slane %v2320, 4
      %v2323 = vor.u32 %v2322, %v2318
      %v2324 = vrot.slane %v2323, 4
      %v2326 = vshll.u32 %v2113, 16
      %v2328 = vrot.slane %v2326, 5
      %v2329 = vsel %vm238, %v2324, %v2328
      %v2331 = vshrl.u32 %v2114, 16
      %v2333 = vrot.slane %v2331, 4
      %v2334 = vshll.u32 %v2114, 16
      %v2336 = vrot.slane %v2334, 5
      %v2337 = vor.u32 %v2333, %v2336
      %v2338 = vrot.slane %v2337, 4
      %v2340 = vshll.u32 %v2115, 16
      %v2342 = vrot.slane %v2340, 5
      %v2343 = vsel %vm238, %v2338, %v2342
      %v2344 = vshrl.u32 %v2115, 16
      %v2346 = vrot.slane %v2344, 4
      %v2347 = vor.u32 %v2346, %v2342
      %v2348 = vrot.slane %v2347, 4
      %v2350 = vshll.u32 %v2116, 16
      %v2352 = vrot.slane %v2350, 5
      %v2353 = vsel %vm238, %v2348, %v2352
      %v2355 = vshrl.u32 %v2117, 16
      %v2357 = vrot.slane %v2355, 4
      %v2358 = vshll.u32 %v2117, 16
      %v2360 = vrot.slane %v2358, 5
      %v2361 = vor.u32 %v2357, %v2360
      %v2362 = vrot.slane %v2361, 4
      %v2364 = vshll.u32 %v2118, 16
      %v2366 = vrot.slane %v2364, 5
      %v2367 = vsel %vm238, %v2362, %v2366
      %v2368 = vshrl.u32 %v2118, 16
      %v2370 = vrot.slane %v2368, 4
      %v2371 = vor.u32 %v2370, %v2366
      %v2372 = vrot.slane %v2371, 4
      %v2374 = vshll.u32 %v2119, 16
      %v2376 = vrot.slane %v2374, 5
      %v2377 = vsel %vm238, %v2372, %v2376
      %v2379 = vshrl.u32 %v2120, 16
      %v2381 = vrot.slane %v2379, 4
      %v2382 = vshll.u32 %v2120, 16
      %v2384 = vrot.slane %v2382, 5
      %v2385 = vor.u32 %v2381, %v2384
      %v2386 = vrot.slane %v2385, 4
      %v2388 = vshll.u32 %v2121, 16
      %v2390 = vrot.slane %v2388, 5
      %v2391 = vsel %vm238, %v2386, %v2390
      %v2392 = vshrl.u32 %v2121, 16
      %v2394 = vrot.slane %v2392, 4
      %v2395 = vor.u32 %v2394, %v2390
      %v2396 = vrot.slane %v2395, 4
      %v2398 = vshll.u32 %v2122, 16
      %v2400 = vrot.slane %v2398, 5
      %v2401 = vsel %vm238, %v2396, %v2400
      %v2403 = vshrl.u32 %v2123, 16
      %v2405 = vrot.slane %v2403, 4
      %v2406 = vshll.u32 %v2123, 16
      %v2408 = vrot.slane %v2406, 5
      %v2409 = vor.u32 %v2405, %v2408
      %v2410 = vrot.slane %v2409, 4
      %v2412 = vshll.u32 %v2124, 16
      %v2414 = vrot.slane %v2412, 5
      %v2415 = vsel %vm238, %v2410, %v2414
      %v2416 = vshrl.u32 %v2124, 16
      %v2418 = vrot.slane %v2416, 4
      %v2419 = vor.u32 %v2418, %v2414
      %v2420 = vrot.slane %v2419, 4
      %v2422 = vshll.u32 %v2125, 16
      %v2424 = vrot.slane %v2422, 5
      %v2425 = vsel %vm238, %v2420, %v2424
      %v2427 = vshrl.u32 %v2126, 16
      %v2429 = vrot.slane %v2427, 4
      %v2430 = vshll.u32 %v2126, 16
      %v2432 = vrot.slane %v2430, 5
      %v2433 = vor.u32 %v2429, %v2432
      %v2434 = vrot.slane %v2433, 4
      %v2436 = vshll.u32 %v2127, 16
      %v2438 = vrot.slane %v2436, 5
      %v2439 = vsel %vm238, %v2434, %v2438
      %v2440 = vshrl.u32 %v2127, 16
      %v2442 = vrot.slane %v2440, 4
      %v2443 = vor.u32 %v2442, %v2438
      %v2444 = vrot.slane %v2443, 4
      %v2446 = vshll.u32 %v2128, 16
      %v2448 = vrot.slane %v2446, 5
      %v2449 = vsel %vm238, %v2444, %v2448
      %v2451 = vshrl.u32 %v2129, 16
      %v2453 = vrot.slane %v2451, 4
      %v2454 = vshll.u32 %v2129, 16
      %v2456 = vrot.slane %v2454, 5
      %v2457 = vor.u32 %v2453, %v2456
      %v2458 = vrot.slane %v2457, 4
      %v2460 = vshll.u32 %v2130, 16
      %v2462 = vrot.slane %v2460, 5
      %v2463 = vsel %vm238, %v2458, %v2462
      %v2464 = vshrl.u32 %v2130, 16
      %v2466 = vrot.slane %v2464, 4
      %v2467 = vor.u32 %v2466, %v2462
      %v2468 = vrot.slane %v2467, 4
      %v2470 = vshll.u32 %v2131, 16
      %v2472 = vrot.slane %v2470, 5
      %v2473 = vsel %vm238, %v2468, %v2472
      %v2475 = vshrl.u32 %v2132, 16
      %v2477 = vrot.slane %v2475, 4
      %v2478 = vshll.u32 %v2132, 16
      %v2480 = vrot.slane %v2478, 5
      %v2481 = vor.u32 %v2477, %v2480
      %v2482 = vrot.slane %v2481, 4
      %v2484 = vshll.u32 %v2133, 16
      %v2486 = vrot.slane %v2484, 5
      %v2487 = vsel %vm238, %v2482, %v2486
      %v2488 = vshrl.u32 %v2133, 16
      %v2490 = vrot.slane %v2488, 4
      %v2491 = vor.u32 %v2490, %v2486
      %v2492 = vrot.slane %v2491, 4
      %v2494 = vshll.u32 %v2134, 16
      %v2496 = vrot.slane %v2494, 5
      %v2497 = vsel %vm238, %v2492, %v2496
      %v2499 = vshrl.u32 %v2135, 16
      %v2501 = vrot.slane %v2499, 4
      %v2502 = vshll.u32 %v2135, 16
      %v2504 = vrot.slane %v2502, 5
      %v2505 = vor.u32 %v2501, %v2504
      %v2506 = vrot.slane %v2505, 4
      %v2508 = vshll.u32 %v2136, 16
      %v2510 = vrot.slane %v2508, 5
      %v2511 = vsel %vm238, %v2506, %v2510
      %v2512 = vshrl.u32 %v2136, 16
      %v2514 = vrot.slane %v2512, 4
      %v2515 = vor.u32 %v2514, %v2510
      %v2516 = vrot.slane %v2515, 4
      %v2518 = vshll.u32 %v2137, 16
      %v2520 = vrot.slane %v2518, 5
      %v2521 = vsel %vm238, %v2516, %v2520
      %s2522 = scalar_lea.vmem %s1, 256
      %v2523 = vld [vmem:[%s2522] sm:$0xf]
      %v2524 = vld [vmem:[%s2522 + $0x4] sm:$0xf]
      %v2525 = vld [vmem:[%s2522 + $0x8] sm:$0xf]
      %v2526 = vld [vmem:[%s2522 + $0xc] sm:$0xf]
      %v2527 = vld [vmem:[%s2522 + $0x10] sm:$0xf]
      %v2528 = vld [vmem:[%s2522 + $0x14] sm:$0xf]
      %v2529 = vld [vmem:[%s2522 + $0x18] sm:$0xf]
      %v2530 = vld [vmem:[%s2522 + $0x1c] sm:$0xf]
      %v2531 = vld [vmem:[%s2522 + $0x20] sm:$0xf]
      %v2532 = vld [vmem:[%s2522 + $0x24] sm:$0xf]
      %v2533 = vld [vmem:[%s2522 + $0x28] sm:$0xf]
      %v2534 = vld [vmem:[%s2522 + $0x2c] sm:$0xf]
      %v2535 = vld [vmem:[%s2522 + $0x30] sm:$0xf]
      %v2536 = vld [vmem:[%s2522 + $0x34] sm:$0xf]
      %v2537 = vld [vmem:[%s2522 + $0x38] sm:$0xf]
      %v2538 = vld [vmem:[%s2522 + $0x3c] sm:$0xf]
      %v2539 = vunpack.c.l.b16 %v2151
      %v2540 = vunpack.c.l.b16 %v2161
      %v2541 = vunpack.c.l.b16 %v2175
      %v2542 = vunpack.c.l.b16 %v2185
      %v2543 = vunpack.c.l.b16 %v2199
      %v2544 = vunpack.c.l.b16 %v2209
      %v2545 = vunpack.c.l.b16 %v2223
      %v2546 = vunpack.c.l.b16 %v2233
      %v2547 = vunpack.c.l.b16 %v2247
      %v2548 = vunpack.c.l.b16 %v2257
      %v2549 = vunpack.c.l.b16 %v2271
      %v2550 = vunpack.c.l.b16 %v2281
      %v2551 = vunpack.c.l.b16 %v2295
      %v2552 = vunpack.c.l.b16 %v2305
      %v2553 = vunpack.c.l.b16 %v2319
      %v2554 = vunpack.c.l.b16 %v2329
      %v2555 = vunpack.c.l.b16 %v2343
      %v2556 = vunpack.c.l.b16 %v2353
      %v2557 = vunpack.c.l.b16 %v2367
      %v2558 = vunpack.c.l.b16 %v2377
      %v2559 = vunpack.c.l.b16 %v2391
      %v2560 = vunpack.c.l.b16 %v2401
      %v2561 = vunpack.c.l.b16 %v2415
      %v2562 = vunpack.c.l.b16 %v2425
      %v2563 = vunpack.c.l.b16 %v2439
      %v2564 = vunpack.c.l.b16 %v2449
      %v2565 = vunpack.c.l.b16 %v2463
      %v2566 = vunpack.c.l.b16 %v2473
      %v2567 = vunpack.c.l.b16 %v2487
      %v2568 = vunpack.c.l.b16 %v2497
      %v2569 = vunpack.c.l.b16 %v2511
      %v2570 = vunpack.c.l.b16 %v2521
      %v2571 = vpack.c.b16 %v2540, %v2539
      %v2572 = vpack.c.b16 %v2542, %v2541
      %v2573 = vpack.c.b16 %v2544, %v2543
      %v2574 = vpack.c.b16 %v2546, %v2545
      %v2575 = vpack.c.b16 %v2548, %v2547
      %v2576 = vpack.c.b16 %v2550, %v2549
      %v2577 = vpack.c.b16 %v2552, %v2551
      %v2578 = vpack.c.b16 %v2554, %v2553
      %v2579 = vpack.c.b16 %v2556, %v2555
      %v2580 = vpack.c.b16 %v2558, %v2557
      %v2581 = vpack.c.b16 %v2560, %v2559
      %v2582 = vpack.c.b16 %v2562, %v2561
      %v2583 = vpack.c.b16 %v2564, %v2563
      %v2584 = vpack.c.b16 %v2566, %v2565
      %v2585 = vpack.c.b16 %v2568, %v2567
      %v2586 = vpack.c.b16 %v2570, %v2569
      %v2619 = vunpack.c.l.b16 %v2523
      %v2620 = vunpack.c.l.b16 %v2524
      %v2621 = vunpack.c.l.b16 %v2525
      %v2622 = vunpack.c.l.b16 %v2526
      %v2623 = vunpack.c.l.b16 %v2527
      %v2624 = vunpack.c.l.b16 %v2528
      %v2625 = vunpack.c.l.b16 %v2529
      %v2626 = vunpack.c.l.b16 %v2530
      %v2627 = vunpack.c.l.b16 %v2531
      %v2628 = vunpack.c.l.b16 %v2532
      %v2629 = vunpack.c.l.b16 %v2533
      %v2630 = vunpack.c.l.b16 %v2534
      %v2631 = vunpack.c.l.b16 %v2535
      %v2632 = vunpack.c.l.b16 %v2536
      %v2633 = vunpack.c.l.b16 %v2537
      %v2634 = vunpack.c.l.b16 %v2538
      %v2635 = vpack.c.b16 %v2620, %v2619
      %v2636 = vpack.c.b16 %v2622, %v2621
      %v2637 = vpack.c.b16 %v2624, %v2623
      %v2638 = vpack.c.b16 %v2626, %v2625
      %v2639 = vpack.c.b16 %v2628, %v2627
      %v2640 = vpack.c.b16 %v2630, %v2629
      %v2641 = vpack.c.b16 %v2632, %v2631
      %v2642 = vpack.c.b16 %v2634, %v2633
      %2651 = vmatprep.subr.bf16.mxu0 0
      %2652 = vmatpush1.bf16.msra.mxu0 %v2642
      %2653 = vmatprep.subr.bf16.mxu0 0
      %2654 = vmatpush1.bf16.msra.mxu0 %v2641
      %2655 = vmatprep.subr.bf16.mxu0 0
      %2656 = vmatpush1.bf16.msra.mxu0 %v2640
      %2657 = vmatprep.subr.bf16.mxu0 0
      %2658 = vmatpush1.bf16.msra.mxu0 %v2639
      %2659 = vmatprep.subr.bf16.mxu0 0
      %2660 = vmatpush1.bf16.msra.mxu0 %v2638
      %2661 = vmatprep.subr.bf16.mxu0 0
      %2662 = vmatpush1.bf16.msra.mxu0 %v2637
      %2663 = vmatprep.subr.bf16.mxu0 0
      %2664 = vmatpush1.bf16.msra.mxu0 %v2636
      %2665 = vmatprep.subr.bf16.mxu0 0
      %2666 = vmatpush1.bf16.msra.mxu0 %v2635
      %2667 = vmatprep.subr.bf16.mxu0 0
      %2668 = vmatpush2.bf16.msra.mxu0 0
      %2669 = vmatprep.subr.bf16.mxu0 0
      %2670 = vmatpush2.bf16.msra.mxu0 0
      %2671 = vmatprep.subr.bf16.mxu0 0
      %2672 = vmatpush2.bf16.msra.mxu0 0
      %2673 = vmatprep.subr.bf16.mxu0 0
      %2674 = vmatpush2.bf16.msra.mxu0 0
      %2675 = vmatprep.subr.bf16.mxu0 0
      %2676 = vmatpush2.bf16.msra.mxu0 0
      %2677 = vmatprep.subr.bf16.mxu0 0
      %2678 = vmatpush2.bf16.msra.mxu0 0
      %2679 = vmatprep.subr.bf16.mxu0 0
      %2680 = vmatpush2.bf16.msra.mxu0 0
      %2681 = vmatprep.subr.bf16.mxu0 0
      %2682 = vmatpush2.bf16.msra.mxu0 0
      %2683 = vmatprep.mubr.bf16.mxu0 0
      %2684 = vmatmul.mubr.bf16.gmra.mxu0 %v2571
      %v2685 = vpop.f32.mrf.mxu0
      %v2686 = vadd.f32 0.0, %v2685
      %v2687 = vpop.f32.mrf.mxu0
      %v2688 = vpop.f32.mrf.mxu0
      %v2689 = vadd.f32 0.0, %v2688
      %v2690 = vpop.f32.mrf.mxu0
      %2691 = vmatprep.mubr.bf16.mxu0 0
      %2692 = vmatmul.mubr.bf16.gmra.mxu0 %v2572
      %v2693 = vpop.f32.mrf.mxu0
      %v2694 = vadd.f32 0.0, %v2693
      %v2695 = vpop.f32.mrf.mxu0
      %v2696 = vpop.f32.mrf.mxu0
      %v2697 = vadd.f32 0.0, %v2696
      %v2698 = vpop.f32.mrf.mxu0
      %2699 = vmatprep.mubr.bf16.mxu0 0
      %2700 = vmatmul.mubr.bf16.gmra.mxu0 %v2573
      %v2701 = vpop.f32.mrf.mxu0
      %v2702 = vadd.f32 0.0, %v2701
      %v2703 = vpop.f32.mrf.mxu0
      %v2704 = vpop.f32.mrf.mxu0
      %v2705 = vadd.f32 0.0, %v2704
      %v2706 = vpop.f32.mrf.mxu0
      %2707 = vmatprep.mubr.bf16.mxu0 0
      %2708 = vmatmul.mubr.bf16.gmra.mxu0 %v2574
      %v2709 = vpop.f32.mrf.mxu0
      %v2710 = vadd.f32 0.0, %v2709
      %v2711 = vpop.f32.mrf.mxu0
      %v2712 = vpop.f32.mrf.mxu0
      %v2713 = vadd.f32 0.0, %v2712
      %v2714 = vpop.f32.mrf.mxu0
      %2715 = vmatprep.mubr.bf16.mxu0 0
      %2716 = vmatmul.mubr.bf16.gmra.mxu0 %v2575
      %v2717 = vpop.f32.mrf.mxu0
      %v2718 = vadd.f32 0.0, %v2717
      %v2719 = vpop.f32.mrf.mxu0
      %v2720 = vpop.f32.mrf.mxu0
      %v2721 = vadd.f32 0.0, %v2720
      %v2722 = vpop.f32.mrf.mxu0
      %2723 = vmatprep.mubr.bf16.mxu0 0
      %2724 = vmatmul.mubr.bf16.gmra.mxu0 %v2576
      %v2725 = vpop.f32.mrf.mxu0
      %v2726 = vadd.f32 0.0, %v2725
      %v2727 = vpop.f32.mrf.mxu0
      %v2728 = vpop.f32.mrf.mxu0
      %v2729 = vadd.f32 0.0, %v2728
      %v2730 = vpop.f32.mrf.mxu0
      %2731 = vmatprep.mubr.bf16.mxu0 0
      %2732 = vmatmul.mubr.bf16.gmra.mxu0 %v2577
      %v2733 = vpop.f32.mrf.mxu0
      %v2734 = vadd.f32 0.0, %v2733
      %v2735 = vpop.f32.mrf.mxu0
      %v2736 = vpop.f32.mrf.mxu0
      %v2737 = vadd.f32 0.0, %v2736
      %v2738 = vpop.f32.mrf.mxu0
      %2739 = vmatprep.mubr.bf16.mxu0 0
      %2740 = vmatmul.mubr.bf16.gmra.mxu0 %v2578
      %v2741 = vpop.f32.mrf.mxu0
      %v2742 = vadd.f32 0.0, %v2741
      %v2743 = vpop.f32.mrf.mxu0
      %v2744 = vpop.f32.mrf.mxu0
      %v2745 = vadd.f32 0.0, %v2744
      %v2746 = vpop.f32.mrf.mxu0
      %2747 = vmatprep.mubr.bf16.mxu0 0
      %2748 = vmatmul.mubr.bf16.gmra.mxu0 %v2579
      %v2749 = vpop.f32.mrf.mxu0
      %v2750 = vadd.f32 0.0, %v2749
      %v2751 = vpop.f32.mrf.mxu0
      %v2752 = vpop.f32.mrf.mxu0
      %v2753 = vadd.f32 0.0, %v2752
      %v2754 = vpop.f32.mrf.mxu0
      %2755 = vmatprep.mubr.bf16.mxu0 0
      %2756 = vmatmul.mubr.bf16.gmra.mxu0 %v2580
      %v2757 = vpop.f32.mrf.mxu0
      %v2758 = vadd.f32 0.0, %v2757
      %v2759 = vpop.f32.mrf.mxu0
      %v2760 = vpop.f32.mrf.mxu0
      %v2761 = vadd.f32 0.0, %v2760
      %v2762 = vpop.f32.mrf.mxu0
      %2763 = vmatprep.mubr.bf16.mxu0 0
      %2764 = vmatmul.mubr.bf16.gmra.mxu0 %v2581
      %v2765 = vpop.f32.mrf.mxu0
      %v2766 = vadd.f32 0.0, %v2765
      %v2767 = vpop.f32.mrf.mxu0
      %v2768 = vpop.f32.mrf.mxu0
      %v2769 = vadd.f32 0.0, %v2768
      %v2770 = vpop.f32.mrf.mxu0
      %2771 = vmatprep.mubr.bf16.mxu0 0
      %2772 = vmatmul.mubr.bf16.gmra.mxu0 %v2582
      %v2773 = vpop.f32.mrf.mxu0
      %v2774 = vadd.f32 0.0, %v2773
      %v2775 = vpop.f32.mrf.mxu0
      %v2776 = vpop.f32.mrf.mxu0
      %v2777 = vadd.f32 0.0, %v2776
      %v2778 = vpop.f32.mrf.mxu0
      %2779 = vmatprep.mubr.bf16.mxu0 0
      %2780 = vmatmul.mubr.bf16.gmra.mxu0 %v2583
      %v2781 = vpop.f32.mrf.mxu0
      %v2782 = vadd.f32 0.0, %v2781
      %v2783 = vpop.f32.mrf.mxu0
      %v2784 = vpop.f32.mrf.mxu0
      %v2785 = vadd.f32 0.0, %v2784
      %v2786 = vpop.f32.mrf.mxu0
      %2787 = vmatprep.mubr.bf16.mxu0 0
      %2788 = vmatmul.mubr.bf16.gmra.mxu0 %v2584
      %v2789 = vpop.f32.mrf.mxu0
      %v2790 = vadd.f32 0.0, %v2789
      %v2791 = vpop.f32.mrf.mxu0
      %v2792 = vpop.f32.mrf.mxu0
      %v2793 = vadd.f32 0.0, %v2792
      %v2794 = vpop.f32.mrf.mxu0
      %2795 = vmatprep.mubr.bf16.mxu0 0
      %2796 = vmatmul.mubr.bf16.gmra.mxu0 %v2585
      %v2797 = vpop.f32.mrf.mxu0
      %v2798 = vadd.f32 0.0, %v2797
      %v2799 = vpop.f32.mrf.mxu0
      %v2800 = vpop.f32.mrf.mxu0
      %v2801 = vadd.f32 0.0, %v2800
      %v2802 = vpop.f32.mrf.mxu0
      %2803 = vmatprep.mubr.bf16.mxu0 0
      %2804 = vmatmul.mubr.bf16.gmra.mxu0 %v2586
      %v2805 = vpop.f32.mrf.mxu0
      %v2806 = vadd.f32 0.0, %v2805
      %v2807 = vpop.f32.mrf.mxu0
      %v2808 = vpop.f32.mrf.mxu0
      %v2809 = vadd.f32 0.0, %v2808
      %v2810 = vpop.f32.mrf.mxu0
      %2811 = vdwg.mxu0
      %v2812 = vadd.f32 %v2058, %v2686
      %v2813 = vadd.f32 %v2059, %v2689
      %v2814 = vadd.f32 %v2060, %v2694
      %v2815 = vadd.f32 %v2061, %v2697
      %v2816 = vadd.f32 %v2062, %v2702
      %v2817 = vadd.f32 %v2063, %v2705
      %v2818 = vadd.f32 %v2064, %v2710
      %v2819 = vadd.f32 %v2065, %v2713
      %v2820 = vadd.f32 %v2066, %v2718
      %v2821 = vadd.f32 %v2067, %v2721
      %v2822 = vadd.f32 %v2068, %v2726
      %v2823 = vadd.f32 %v2069, %v2729
      %v2824 = vadd.f32 %v2070, %v2734
      %v2825 = vadd.f32 %v2071, %v2737
      %v2826 = vadd.f32 %v2072, %v2742
      %v2827 = vadd.f32 %v2073, %v2745
      %v2828 = vadd.f32 %v2074, %v2750
      %v2829 = vadd.f32 %v2075, %v2753
      %v2830 = vadd.f32 %v2076, %v2758
      %v2831 = vadd.f32 %v2077, %v2761
      %v2832 = vadd.f32 %v2078, %v2766
      %v2833 = vadd.f32 %v2079, %v2769
      %v2834 = vadd.f32 %v2080, %v2774
      %v2835 = vadd.f32 %v2081, %v2777
      %v2836 = vadd.f32 %v2082, %v2782
      %v2837 = vadd.f32 %v2083, %v2785
      %v2838 = vadd.f32 %v2084, %v2790
      %v2839 = vadd.f32 %v2085, %v2793
      %v2840 = vadd.f32 %v2086, %v2798
      %v2841 = vadd.f32 %v2087, %v2801
      %v2842 = vadd.f32 %v2088, %v2806
      %v2843 = vadd.f32 %v2089, %v2809
      %v2844 = vld [vmem:[%s1703] sm:$0xe]
      %v2845 = vld [vmem:[%s1703 + $0xc] sm:$0xe]
      %v2846 = vld [vmem:[%s1703 + $0x18] sm:$0xe]
      %v2847 = vld [vmem:[%s1703 + $0x24] sm:$0xe]
      %v2848 = vld [vmem:[%s1703 + $0x30] sm:$0xe]
      %v2849 = vld [vmem:[%s1703 + $0x3c] sm:$0xe]
      %v2850 = vld [vmem:[%s1703 + $0x48] sm:$0xe]
      %v2851 = vld [vmem:[%s1703 + $0x54] sm:$0xe]
      %v2852 = vld [vmem:[%s1703 + $0x60] sm:$0xe]
      %v2853 = vld [vmem:[%s1703 + $0x6c] sm:$0xe]
      %v2854 = vld [vmem:[%s1703 + $0x78] sm:$0xe]
      %v2855 = vld [vmem:[%s1703 + $0x84] sm:$0xe]
      %v2856 = vld [vmem:[%s1703 + $0x90] sm:$0xe]
      %v2857 = vld [vmem:[%s1703 + $0x9c] sm:$0xe]
      %v2858 = vld [vmem:[%s1703 + $0xa8] sm:$0xe]
      %v2859 = vld [vmem:[%s1703 + $0xb4] sm:$0xe]
      %v2908 = vrot.slane %v2844, 5
      %v2909 = vrot.slane %v2908, 4
      %v2910 = vrot.slane %v2091, 5
      %v2911 = vsel %vm1268, %v2909, %v2910
      %v2912 = vrot.slane %v2910, 4
      %v2913 = vrot.slane %v2092, 5
      %v2914 = vsel %vm1268, %v2912, %v2913
      %v2915 = vrot.slane %v2845, 5
      %v2916 = vrot.slane %v2915, 4
      %v2917 = vrot.slane %v2094, 5
      %v2918 = vsel %vm1268, %v2916, %v2917
      %v2919 = vrot.slane %v2917, 4
      %v2920 = vrot.slane %v2095, 5
      %v2921 = vsel %vm1268, %v2919, %v2920
      %v2922 = vrot.slane %v2846, 5
      %v2923 = vrot.slane %v2922, 4
      %v2924 = vrot.slane %v2097, 5
      %v2925 = vsel %vm1268, %v2923, %v2924
      %v2926 = vrot.slane %v2924, 4
      %v2927 = vrot.slane %v2098, 5
      %v2928 = vsel %vm1268, %v2926, %v2927
      %v2929 = vrot.slane %v2847, 5
      %v2930 = vrot.slane %v2929, 4
      %v2931 = vrot.slane %v2100, 5
      %v2932 = vsel %vm1268, %v2930, %v2931
      %v2933 = vrot.slane %v2931, 4
      %v2934 = vrot.slane %v2101, 5
      %v2935 = vsel %vm1268, %v2933, %v2934
      %v2936 = vrot.slane %v2848, 5
      %v2937 = vrot.slane %v2936, 4
      %v2938 = vrot.slane %v2103, 5
      %v2939 = vsel %vm1268, %v2937, %v2938
      %v2940 = vrot.slane %v2938, 4
      %v2941 = vrot.slane %v2104, 5
      %v2942 = vsel %vm1268, %v2940, %v2941
      %v2943 = vrot.slane %v2849, 5
      %v2944 = vrot.slane %v2943, 4
      %v2945 = vrot.slane %v2106, 5
      %v2946 = vsel %vm1268, %v2944, %v2945
      %v2947 = vrot.slane %v2945, 4
      %v2948 = vrot.slane %v2107, 5
      %v2949 = vsel %vm1268, %v2947, %v2948
      %v2950 = vrot.slane %v2850, 5
      %v2951 = vrot.slane %v2950, 4
      %v2952 = vrot.slane %v2109, 5
      %v2953 = vsel %vm1268, %v2951, %v2952
      %v2954 = vrot.slane %v2952, 4
      %v2955 = vrot.slane %v2110, 5
      %v2956 = vsel %vm1268, %v2954, %v2955
      %v2957 = vrot.slane %v2851, 5
      %v2958 = vrot.slane %v2957, 4
      %v2959 = vrot.slane %v2112, 5
      %v2960 = vsel %vm1268, %v2958, %v2959
      %v2961 = vrot.slane %v2959, 4
      %v2962 = vrot.slane %v2113, 5
      %v2963 = vsel %vm1268, %v2961, %v2962
      %v2964 = vrot.slane %v2852, 5
      %v2965 = vrot.slane %v2964, 4
      %v2966 = vrot.slane %v2115, 5
      %v2967 = vsel %vm1268, %v2965, %v2966
      %v2968 = vrot.slane %v2966, 4
      %v2969 = vrot.slane %v2116, 5
      %v2970 = vsel %vm1268, %v2968, %v2969
      %v2971 = vrot.slane %v2853, 5
      %v2972 = vrot.slane %v2971, 4
      %v2973 = vrot.slane %v2118, 5
      %v2974 = vsel %vm1268, %v2972, %v2973
      %v2975 = vrot.slane %v2973, 4
      %v2976 = vrot.slane %v2119, 5
      %v2977 = vsel %vm1268, %v2975, %v2976
      %v2978 = vrot.slane %v2854, 5
      %v2979 = vrot.slane %v2978, 4
      %v2980 = vrot.slane %v2121, 5
      %v2981 = vsel %vm1268, %v2979, %v2980
      %v2982 = vrot.slane %v2980, 4
      %v2983 = vrot.slane %v2122, 5
      %v2984 = vsel %vm1268, %v2982, %v2983
      %v2985 = vrot.slane %v2855, 5
      %v2986 = vrot.slane %v2985, 4
      %v2987 = vrot.slane %v2124, 5
      %v2988 = vsel %vm1268, %v2986, %v2987
      %v2989 = vrot.slane %v2987, 4
      %v2990 = vrot.slane %v2125, 5
      %v2991 = vsel %vm1268, %v2989, %v2990
      %v2992 = vrot.slane %v2856, 5
      %v2993 = vrot.slane %v2992, 4
      %v2994 = vrot.slane %v2127, 5
      %v2995 = vsel %vm1268, %v2993, %v2994
      %v2996 = vrot.slane %v2994, 4
      %v2997 = vrot.slane %v2128, 5
      %v2998 = vsel %vm1268, %v2996, %v2997
      %v2999 = vrot.slane %v2857, 5
      %v3000 = vrot.slane %v2999, 4
      %v3001 = vrot.slane %v2130, 5
      %v3002 = vsel %vm1268, %v3000, %v3001
      %v3003 = vrot.slane %v3001, 4
      %v3004 = vrot.slane %v2131, 5
      %v3005 = vsel %vm1268, %v3003, %v3004
      %v3006 = vrot.slane %v2858, 5
      %v3007 = vrot.slane %v3006, 4
      %v3008 = vrot.slane %v2133, 5
      %v3009 = vsel %vm1268, %v3007, %v3008
      %v3010 = vrot.slane %v3008, 4
      %v3011 = vrot.slane %v2134, 5
      %v3012 = vsel %vm1268, %v3010, %v3011
      %v3013 = vrot.slane %v2859, 5
      %v3014 = vrot.slane %v3013, 4
      %v3015 = vrot.slane %v2136, 5
      %v3016 = vsel %vm1268, %v3014, %v3015
      %v3017 = vrot.slane %v3015, 4
      %v3018 = vrot.slane %v2137, 5
      %v3019 = vsel %vm1268, %v3017, %v3018
      %s3020 = scalar_lea.vmem %s1, 320
      %v3021 = vld [vmem:[%s3020] sm:$0xf]
      %v3022 = vld [vmem:[%s3020 + $0x4] sm:$0xf]
      %v3023 = vld [vmem:[%s3020 + $0x8] sm:$0xf]
      %v3024 = vld [vmem:[%s3020 + $0xc] sm:$0xf]
      %v3025 = vld [vmem:[%s3020 + $0x10] sm:$0xf]
      %v3026 = vld [vmem:[%s3020 + $0x14] sm:$0xf]
      %v3027 = vld [vmem:[%s3020 + $0x18] sm:$0xf]
      %v3028 = vld [vmem:[%s3020 + $0x1c] sm:$0xf]
      %v3029 = vld [vmem:[%s3020 + $0x20] sm:$0xf]
      %v3030 = vld [vmem:[%s3020 + $0x24] sm:$0xf]
      %v3031 = vld [vmem:[%s3020 + $0x28] sm:$0xf]
      %v3032 = vld [vmem:[%s3020 + $0x2c] sm:$0xf]
      %v3033 = vld [vmem:[%s3020 + $0x30] sm:$0xf]
      %v3034 = vld [vmem:[%s3020 + $0x34] sm:$0xf]
      %v3035 = vld [vmem:[%s3020 + $0x38] sm:$0xf]
      %v3036 = vld [vmem:[%s3020 + $0x3c] sm:$0xf]
      %v3037 = vunpack.c.l.b16 %v2911
      %v3038 = vunpack.c.l.b16 %v2914
      %v3039 = vunpack.c.l.b16 %v2918
      %v3040 = vunpack.c.l.b16 %v2921
      %v3041 = vunpack.c.l.b16 %v2925
      %v3042 = vunpack.c.l.b16 %v2928
      %v3043 = vunpack.c.l.b16 %v2932
      %v3044 = vunpack.c.l.b16 %v2935
      %v3045 = vunpack.c.l.b16 %v2939
      %v3046 = vunpack.c.l.b16 %v2942
      %v3047 = vunpack.c.l.b16 %v2946
      %v3048 = vunpack.c.l.b16 %v2949
      %v3049 = vunpack.c.l.b16 %v2953
      %v3050 = vunpack.c.l.b16 %v2956
      %v3051 = vunpack.c.l.b16 %v2960
      %v3052 = vunpack.c.l.b16 %v2963
      %v3053 = vunpack.c.l.b16 %v2967
      %v3054 = vunpack.c.l.b16 %v2970
      %v3055 = vunpack.c.l.b16 %v2974
      %v3056 = vunpack.c.l.b16 %v2977
      %v3057 = vunpack.c.l.b16 %v2981
      %v3058 = vunpack.c.l.b16 %v2984
      %v3059 = vunpack.c.l.b16 %v2988
      %v3060 = vunpack.c.l.b16 %v2991
      %v3061 = vunpack.c.l.b16 %v2995
      %v3062 = vunpack.c.l.b16 %v2998
      %v3063 = vunpack.c.l.b16 %v3002
      %v3064 = vunpack.c.l.b16 %v3005
      %v3065 = vunpack.c.l.b16 %v3009
      %v3066 = vunpack.c.l.b16 %v3012
      %v3067 = vunpack.c.l.b16 %v3016
      %v3068 = vunpack.c.l.b16 %v3019
      %v3069 = vpack.c.b16 %v3038, %v3037
      %v3070 = vpack.c.b16 %v3040, %v3039
      %v3071 = vpack.c.b16 %v3042, %v3041
      %v3072 = vpack.c.b16 %v3044, %v3043
      %v3073 = vpack.c.b16 %v3046, %v3045
      %v3074 = vpack.c.b16 %v3048, %v3047
      %v3075 = vpack.c.b16 %v3050, %v3049
      %v3076 = vpack.c.b16 %v3052, %v3051
      %v3077 = vpack.c.b16 %v3054, %v3053
      %v3078 = vpack.c.b16 %v3056, %v3055
      %v3079 = vpack.c.b16 %v3058, %v3057
      %v3080 = vpack.c.b16 %v3060, %v3059
      %v3081 = vpack.c.b16 %v3062, %v3061
      %v3082 = vpack.c.b16 %v3064, %v3063
      %v3083 = vpack.c.b16 %v3066, %v3065
      %v3084 = vpack.c.b16 %v3068, %v3067
      %v3117 = vunpack.c.l.b16 %v3021
      %v3118 = vunpack.c.l.b16 %v3022
      %v3119 = vunpack.c.l.b16 %v3023
      %v3120 = vunpack.c.l.b16 %v3024
      %v3121 = vunpack.c.l.b16 %v3025
      %v3122 = vunpack.c.l.b16 %v3026
      %v3123 = vunpack.c.l.b16 %v3027
      %v3124 = vunpack.c.l.b16 %v3028
      %v3125 = vunpack.c.l.b16 %v3029
      %v3126 = vunpack.c.l.b16 %v3030
      %v3127 = vunpack.c.l.b16 %v3031
      %v3128 = vunpack.c.l.b16 %v3032
      %v3129 = vunpack.c.l.b16 %v3033
      %v3130 = vunpack.c.l.b16 %v3034
      %v3131 = vunpack.c.l.b16 %v3035
      %v3132 = vunpack.c.l.b16 %v3036
      %v3133 = vpack.c.b16 %v3118, %v3117
      %v3134 = vpack.c.b16 %v3120, %v3119
      %v3135 = vpack.c.b16 %v3122, %v3121
      %v3136 = vpack.c.b16 %v3124, %v3123
      %v3137 = vpack.c.b16 %v3126, %v3125
      %v3138 = vpack.c.b16 %v3128, %v3127
      %v3139 = vpack.c.b16 %v3130, %v3129
      %v3140 = vpack.c.b16 %v3132, %v3131
      %3149 = vmatprep.subr.bf16.mxu0 0
      %3150 = vmatpush1.bf16.msra.mxu0 %v3140
      %3151 = vmatprep.subr.bf16.mxu0 0
      %3152 = vmatpush1.bf16.msra.mxu0 %v3139
      %3153 = vmatprep.subr.bf16.mxu0 0
      %3154 = vmatpush1.bf16.msra.mxu0 %v3138
      %3155 = vmatprep.subr.bf16.mxu0 0
      %3156 = vmatpush1.bf16.msra.mxu0 %v3137
      %3157 = vmatprep.subr.bf16.mxu0 0
      %3158 = vmatpush1.bf16.msra.mxu0 %v3136
      %3159 = vmatprep.subr.bf16.mxu0 0
      %3160 = vmatpush1.bf16.msra.mxu0 %v3135
      %3161 = vmatprep.subr.bf16.mxu0 0
      %3162 = vmatpush1.bf16.msra.mxu0 %v3134
      %3163 = vmatprep.subr.bf16.mxu0 0
      %3164 = vmatpush1.bf16.msra.mxu0 %v3133
      %3165 = vmatprep.subr.bf16.mxu0 0
      %3166 = vmatpush2.bf16.msra.mxu0 0
      %3167 = vmatprep.subr.bf16.mxu0 0
      %3168 = vmatpush2.bf16.msra.mxu0 0
      %3169 = vmatprep.subr.bf16.mxu0 0
      %3170 = vmatpush2.bf16.msra.mxu0 0
      %3171 = vmatprep.subr.bf16.mxu0 0
      %3172 = vmatpush2.bf16.msra.mxu0 0
      %3173 = vmatprep.subr.bf16.mxu0 0
      %3174 = vmatpush2.bf16.msra.mxu0 0
      %3175 = vmatprep.subr.bf16.mxu0 0
      %3176 = vmatpush2.bf16.msra.mxu0 0
      %3177 = vmatprep.subr.bf16.mxu0 0
      %3178 = vmatpush2.bf16.msra.mxu0 0
      %3179 = vmatprep.subr.bf16.mxu0 0
      %3180 = vmatpush2.bf16.msra.mxu0 0
      %3181 = vmatprep.mubr.bf16.mxu0 0
      %3182 = vmatmul.mubr.bf16.gmra.mxu0 %v3069
      %v3183 = vpop.f32.mrf.mxu0
      %v3184 = vadd.f32 0.0, %v3183
      %v3185 = vpop.f32.mrf.mxu0
      %v3186 = vpop.f32.mrf.mxu0
      %v3187 = vadd.f32 0.0, %v3186
      %v3188 = vpop.f32.mrf.mxu0
      %3189 = vmatprep.mubr.bf16.mxu0 0
      %3190 = vmatmul.mubr.bf16.gmra.mxu0 %v3070
      %v3191 = vpop.f32.mrf.mxu0
      %v3192 = vadd.f32 0.0, %v3191
      %v3193 = vpop.f32.mrf.mxu0
      %v3194 = vpop.f32.mrf.mxu0
      %v3195 = vadd.f32 0.0, %v3194
      %v3196 = vpop.f32.mrf.mxu0
      %3197 = vmatprep.mubr.bf16.mxu0 0
      %3198 = vmatmul.mubr.bf16.gmra.mxu0 %v3071
      %v3199 = vpop.f32.mrf.mxu0
      %v3200 = vadd.f32 0.0, %v3199
      %v3201 = vpop.f32.mrf.mxu0
      %v3202 = vpop.f32.mrf.mxu0
      %v3203 = vadd.f32 0.0, %v3202
      %v3204 = vpop.f32.mrf.mxu0
      %3205 = vmatprep.mubr.bf16.mxu0 0
      %3206 = vmatmul.mubr.bf16.gmra.mxu0 %v3072
      %v3207 = vpop.f32.mrf.mxu0
      %v3208 = vadd.f32 0.0, %v3207
      %v3209 = vpop.f32.mrf.mxu0
      %v3210 = vpop.f32.mrf.mxu0
      %v3211 = vadd.f32 0.0, %v3210
      %v3212 = vpop.f32.mrf.mxu0
      %3213 = vmatprep.mubr.bf16.mxu0 0
      %3214 = vmatmul.mubr.bf16.gmra.mxu0 %v3073
      %v3215 = vpop.f32.mrf.mxu0
      %v3216 = vadd.f32 0.0, %v3215
      %v3217 = vpop.f32.mrf.mxu0
      %v3218 = vpop.f32.mrf.mxu0
      %v3219 = vadd.f32 0.0, %v3218
      %v3220 = vpop.f32.mrf.mxu0
      %3221 = vmatprep.mubr.bf16.mxu0 0
      %3222 = vmatmul.mubr.bf16.gmra.mxu0 %v3074
      %v3223 = vpop.f32.mrf.mxu0
      %v3224 = vadd.f32 0.0, %v3223
      %v3225 = vpop.f32.mrf.mxu0
      %v3226 = vpop.f32.mrf.mxu0
      %v3227 = vadd.f32 0.0, %v3226
      %v3228 = vpop.f32.mrf.mxu0
      %3229 = vmatprep.mubr.bf16.mxu0 0
      %3230 = vmatmul.mubr.bf16.gmra.mxu0 %v3075
      %v3231 = vpop.f32.mrf.mxu0
      %v3232 = vadd.f32 0.0, %v3231
      %v3233 = vpop.f32.mrf.mxu0
      %v3234 = vpop.f32.mrf.mxu0
      %v3235 = vadd.f32 0.0, %v3234
      %v3236 = vpop.f32.mrf.mxu0
      %3237 = vmatprep.mubr.bf16.mxu0 0
      %3238 = vmatmul.mubr.bf16.gmra.mxu0 %v3076
      %v3239 = vpop.f32.mrf.mxu0
      %v3240 = vadd.f32 0.0, %v3239
      %v3241 = vpop.f32.mrf.mxu0
      %v3242 = vpop.f32.mrf.mxu0
      %v3243 = vadd.f32 0.0, %v3242
      %v3244 = vpop.f32.mrf.mxu0
      %3245 = vmatprep.mubr.bf16.mxu0 0
      %3246 = vmatmul.mubr.bf16.gmra.mxu0 %v3077
      %v3247 = vpop.f32.mrf.mxu0
      %v3248 = vadd.f32 0.0, %v3247
      %v3249 = vpop.f32.mrf.mxu0
      %v3250 = vpop.f32.mrf.mxu0
      %v3251 = vadd.f32 0.0, %v3250
      %v3252 = vpop.f32.mrf.mxu0
      %3253 = vmatprep.mubr.bf16.mxu0 0
      %3254 = vmatmul.mubr.bf16.gmra.mxu0 %v3078
      %v3255 = vpop.f32.mrf.mxu0
      %v3256 = vadd.f32 0.0, %v3255
      %v3257 = vpop.f32.mrf.mxu0
      %v3258 = vpop.f32.mrf.mxu0
      %v3259 = vadd.f32 0.0, %v3258
      %v3260 = vpop.f32.mrf.mxu0
      %3261 = vmatprep.mubr.bf16.mxu0 0
      %3262 = vmatmul.mubr.bf16.gmra.mxu0 %v3079
      %v3263 = vpop.f32.mrf.mxu0
      %v3264 = vadd.f32 0.0, %v3263
      %v3265 = vpop.f32.mrf.mxu0
      %v3266 = vpop.f32.mrf.mxu0
      %v3267 = vadd.f32 0.0, %v3266
      %v3268 = vpop.f32.mrf.mxu0
      %3269 = vmatprep.mubr.bf16.mxu0 0
      %3270 = vmatmul.mubr.bf16.gmra.mxu0 %v3080
      %v3271 = vpop.f32.mrf.mxu0
      %v3272 = vadd.f32 0.0, %v3271
      %v3273 = vpop.f32.mrf.mxu0
      %v3274 = vpop.f32.mrf.mxu0
      %v3275 = vadd.f32 0.0, %v3274
      %v3276 = vpop.f32.mrf.mxu0
      %3277 = vmatprep.mubr.bf16.mxu0 0
      %3278 = vmatmul.mubr.bf16.gmra.mxu0 %v3081
      %v3279 = vpop.f32.mrf.mxu0
      %v3280 = vadd.f32 0.0, %v3279
      %v3281 = vpop.f32.mrf.mxu0
      %v3282 = vpop.f32.mrf.mxu0
      %v3283 = vadd.f32 0.0, %v3282
      %v3284 = vpop.f32.mrf.mxu0
      %3285 = vmatprep.mubr.bf16.mxu0 0
      %3286 = vmatmul.mubr.bf16.gmra.mxu0 %v3082
      %v3287 = vpop.f32.mrf.mxu0
      %v3288 = vadd.f32 0.0, %v3287
      %v3289 = vpop.f32.mrf.mxu0
      %v3290 = vpop.f32.mrf.mxu0
      %v3291 = vadd.f32 0.0, %v3290
      %v3292 = vpop.f32.mrf.mxu0
      %3293 = vmatprep.mubr.bf16.mxu0 0
      %3294 = vmatmul.mubr.bf16.gmra.mxu0 %v3083
      %v3295 = vpop.f32.mrf.mxu0
      %v3296 = vadd.f32 0.0, %v3295
      %v3297 = vpop.f32.mrf.mxu0
      %v3298 = vpop.f32.mrf.mxu0
      %v3299 = vadd.f32 0.0, %v3298
      %v3300 = vpop.f32.mrf.mxu0
      %3301 = vmatprep.mubr.bf16.mxu0 0
      %3302 = vmatmul.mubr.bf16.gmra.mxu0 %v3084
      %v3303 = vpop.f32.mrf.mxu0
      %v3304 = vadd.f32 0.0, %v3303
      %v3305 = vpop.f32.mrf.mxu0
      %v3306 = vpop.f32.mrf.mxu0
      %v3307 = vadd.f32 0.0, %v3306
      %v3308 = vpop.f32.mrf.mxu0
      %3309 = vdwg.mxu0
      %v3310 = vadd.f32 %v2812, %v3184
      %v3311 = vadd.f32 %v2813, %v3187
      %v3312 = vadd.f32 %v2814, %v3192
      %v3313 = vadd.f32 %v2815, %v3195
      %v3314 = vadd.f32 %v2816, %v3200
      %v3315 = vadd.f32 %v2817, %v3203
      %v3316 = vadd.f32 %v2818, %v3208
      %v3317 = vadd.f32 %v2819, %v3211
      %v3318 = vadd.f32 %v2820, %v3216
      %v3319 = vadd.f32 %v2821, %v3219
      %v3320 = vadd.f32 %v2822, %v3224
      %v3321 = vadd.f32 %v2823, %v3227
      %v3322 = vadd.f32 %v2824, %v3232
      %v3323 = vadd.f32 %v2825, %v3235
      %v3324 = vadd.f32 %v2826, %v3240
      %v3325 = vadd.f32 %v2827, %v3243
      %v3326 = vadd.f32 %v2828, %v3248
      %v3327 = vadd.f32 %v2829, %v3251
      %v3328 = vadd.f32 %v2830, %v3256
      %v3329 = vadd.f32 %v2831, %v3259
      %v3330 = vadd.f32 %v2832, %v3264
      %v3331 = vadd.f32 %v2833, %v3267
      %v3332 = vadd.f32 %v2834, %v3272
      %v3333 = vadd.f32 %v2835, %v3275
      %v3334 = vadd.f32 %v2836, %v3280
      %v3335 = vadd.f32 %v2837, %v3283
      %v3336 = vadd.f32 %v2838, %v3288
      %v3337 = vadd.f32 %v2839, %v3291
      %v3338 = vadd.f32 %v2840, %v3296
      %v3339 = vadd.f32 %v2841, %v3299
      %v3340 = vadd.f32 %v2842, %v3304
      %v3341 = vadd.f32 %v2843, %v3307
      %s3342 = scalar_lea.vmem %s165, 24
      %v3343 = vld [vmem:[%s3342] sm:$0xf]
      %v3344 = vld [vmem:[%s3342 + $0x4] sm:$0xf]
      %v3345 = vld [vmem:[%s3342 + $0xc] sm:$0xf]
      %v3346 = vld [vmem:[%s3342 + $0x10] sm:$0xf]
      %v3347 = vld [vmem:[%s3342 + $0x18] sm:$0xf]
      %v3348 = vld [vmem:[%s3342 + $0x1c] sm:$0xf]
      %v3349 = vld [vmem:[%s3342 + $0x24] sm:$0xf]
      %v3350 = vld [vmem:[%s3342 + $0x28] sm:$0xf]
      %v3351 = vld [vmem:[%s3342 + $0x30] sm:$0xf]
      %v3352 = vld [vmem:[%s3342 + $0x34] sm:$0xf]
      %v3353 = vld [vmem:[%s3342 + $0x3c] sm:$0xf]
      %v3354 = vld [vmem:[%s3342 + $0x40] sm:$0xf]
      %v3355 = vld [vmem:[%s3342 + $0x48] sm:$0xf]
      %v3356 = vld [vmem:[%s3342 + $0x4c] sm:$0xf]
      %v3357 = vld [vmem:[%s3342 + $0x54] sm:$0xf]
      %v3358 = vld [vmem:[%s3342 + $0x58] sm:$0xf]
      %v3359 = vld [vmem:[%s3342 + $0x60] sm:$0xf]
      %v3360 = vld [vmem:[%s3342 + $0x64] sm:$0xf]
      %v3361 = vld [vmem:[%s3342 + $0x6c] sm:$0xf]
      %v3362 = vld [vmem:[%s3342 + $0x70] sm:$0xf]
      %v3363 = vld [vmem:[%s3342 + $0x78] sm:$0xf]
      %v3364 = vld [vmem:[%s3342 + $0x7c] sm:$0xf]
      %v3365 = vld [vmem:[%s3342 + $0x84] sm:$0xf]
      %v3366 = vld [vmem:[%s3342 + $0x88] sm:$0xf]
      %v3367 = vld [vmem:[%s3342 + $0x90] sm:$0xf]
      %v3368 = vld [vmem:[%s3342 + $0x94] sm:$0xf]
      %v3369 = vld [vmem:[%s3342 + $0x9c] sm:$0xf]
      %v3370 = vld [vmem:[%s3342 + $0xa0] sm:$0xf]
      %v3371 = vld [vmem:[%s3342 + $0xa8] sm:$0xf]
      %v3372 = vld [vmem:[%s3342 + $0xac] sm:$0xf]
      %v3373 = vld [vmem:[%s3342 + $0xb4] sm:$0xf]
      %v3374 = vld [vmem:[%s3342 + $0xb8] sm:$0xf]
      %s3375 = scalar_lea.vmem %s1, 384
      %v3376 = vld [vmem:[%s3375] sm:$0xf]
      %v3377 = vld [vmem:[%s3375 + $0x4] sm:$0xf]
      %v3378 = vld [vmem:[%s3375 + $0x8] sm:$0xf]
      %v3379 = vld [vmem:[%s3375 + $0xc] sm:$0xf]
      %v3380 = vld [vmem:[%s3375 + $0x10] sm:$0xf]
      %v3381 = vld [vmem:[%s3375 + $0x14] sm:$0xf]
      %v3382 = vld [vmem:[%s3375 + $0x18] sm:$0xf]
      %v3383 = vld [vmem:[%s3375 + $0x1c] sm:$0xf]
      %v3384 = vld [vmem:[%s3375 + $0x20] sm:$0xf]
      %v3385 = vld [vmem:[%s3375 + $0x24] sm:$0xf]
      %v3386 = vld [vmem:[%s3375 + $0x28] sm:$0xf]
      %v3387 = vld [vmem:[%s3375 + $0x2c] sm:$0xf]
      %v3388 = vld [vmem:[%s3375 + $0x30] sm:$0xf]
      %v3389 = vld [vmem:[%s3375 + $0x34] sm:$0xf]
      %v3390 = vld [vmem:[%s3375 + $0x38] sm:$0xf]
      %v3391 = vld [vmem:[%s3375 + $0x3c] sm:$0xf]
      %v3424 = vunpack.c.l.b16 %v3343
      %v3425 = vunpack.c.l.b16 %v3344
      %v3426 = vunpack.c.l.b16 %v3345
      %v3427 = vunpack.c.l.b16 %v3346
      %v3428 = vunpack.c.l.b16 %v3347
      %v3429 = vunpack.c.l.b16 %v3348
      %v3430 = vunpack.c.l.b16 %v3349
      %v3431 = vunpack.c.l.b16 %v3350
      %v3432 = vunpack.c.l.b16 %v3351
      %v3433 = vunpack.c.l.b16 %v3352
      %v3434 = vunpack.c.l.b16 %v3353
      %v3435 = vunpack.c.l.b16 %v3354
      %v3436 = vunpack.c.l.b16 %v3355
      %v3437 = vunpack.c.l.b16 %v3356
      %v3438 = vunpack.c.l.b16 %v3357
      %v3439 = vunpack.c.l.b16 %v3358
      %v3440 = vunpack.c.l.b16 %v3359
      %v3441 = vunpack.c.l.b16 %v3360
      %v3442 = vunpack.c.l.b16 %v3361
      %v3443 = vunpack.c.l.b16 %v3362
      %v3444 = vunpack.c.l.b16 %v3363
      %v3445 = vunpack.c.l.b16 %v3364
      %v3446 = vunpack.c.l.b16 %v3365
      %v3447 = vunpack.c.l.b16 %v3366
      %v3448 = vunpack.c.l.b16 %v3367
      %v3449 = vunpack.c.l.b16 %v3368
      %v3450 = vunpack.c.l.b16 %v3369
      %v3451 = vunpack.c.l.b16 %v3370
      %v3452 = vunpack.c.l.b16 %v3371
      %v3453 = vunpack.c.l.b16 %v3372
      %v3454 = vunpack.c.l.b16 %v3373
      %v3455 = vunpack.c.l.b16 %v3374
      %v3456 = vpack.c.b16 %v3425, %v3424
      %v3457 = vpack.c.b16 %v3427, %v3426
      %v3458 = vpack.c.b16 %v3429, %v3428
      %v3459 = vpack.c.b16 %v3431, %v3430
      %v3460 = vpack.c.b16 %v3433, %v3432
      %v3461 = vpack.c.b16 %v3435, %v3434
      %v3462 = vpack.c.b16 %v3437, %v3436
      %v3463 = vpack.c.b16 %v3439, %v3438
      %v3464 = vpack.c.b16 %v3441, %v3440
      %v3465 = vpack.c.b16 %v3443, %v3442
      %v3466 = vpack.c.b16 %v3445, %v3444
      %v3467 = vpack.c.b16 %v3447, %v3446
      %v3468 = vpack.c.b16 %v3449, %v3448
      %v3469 = vpack.c.b16 %v3451, %v3450
      %v3470 = vpack.c.b16 %v3453, %v3452
      %v3471 = vpack.c.b16 %v3455, %v3454
      %v3504 = vunpack.c.l.b16 %v3376
      %v3505 = vunpack.c.l.b16 %v3377
      %v3506 = vunpack.c.l.b16 %v3378
      %v3507 = vunpack.c.l.b16 %v3379
      %v3508 = vunpack.c.l.b16 %v3380
      %v3509 = vunpack.c.l.b16 %v3381
      %v3510 = vunpack.c.l.b16 %v3382
      %v3511 = vunpack.c.l.b16 %v3383
      %v3512 = vunpack.c.l.b16 %v3384
      %v3513 = vunpack.c.l.b16 %v3385
      %v3514 = vunpack.c.l.b16 %v3386
      %v3515 = vunpack.c.l.b16 %v3387
      %v3516 = vunpack.c.l.b16 %v3388
      %v3517 = vunpack.c.l.b16 %v3389
      %v3518 = vunpack.c.l.b16 %v3390
      %v3519 = vunpack.c.l.b16 %v3391
      %v3520 = vpack.c.b16 %v3505, %v3504
      %v3521 = vpack.c.b16 %v3507, %v3506
      %v3522 = vpack.c.b16 %v3509, %v3508
      %v3523 = vpack.c.b16 %v3511, %v3510
      %v3524 = vpack.c.b16 %v3513, %v3512
      %v3525 = vpack.c.b16 %v3515, %v3514
      %v3526 = vpack.c.b16 %v3517, %v3516
      %v3527 = vpack.c.b16 %v3519, %v3518
      %3536 = vmatprep.subr.bf16.mxu0 0
      %3537 = vmatpush1.bf16.msra.mxu0 %v3527
      %3538 = vmatprep.subr.bf16.mxu0 0
      %3539 = vmatpush1.bf16.msra.mxu0 %v3526
      %3540 = vmatprep.subr.bf16.mxu0 0
      %3541 = vmatpush1.bf16.msra.mxu0 %v3525
      %3542 = vmatprep.subr.bf16.mxu0 0
      %3543 = vmatpush1.bf16.msra.mxu0 %v3524
      %3544 = vmatprep.subr.bf16.mxu0 0
      %3545 = vmatpush1.bf16.msra.mxu0 %v3523
      %3546 = vmatprep.subr.bf16.mxu0 0
      %3547 = vmatpush1.bf16.msra.mxu0 %v3522
      %3548 = vmatprep.subr.bf16.mxu0 0
      %3549 = vmatpush1.bf16.msra.mxu0 %v3521
      %3550 = vmatprep.subr.bf16.mxu0 0
      %3551 = vmatpush1.bf16.msra.mxu0 %v3520
      %3552 = vmatprep.subr.bf16.mxu0 0
      %3553 = vmatpush2.bf16.msra.mxu0 0
      %3554 = vmatprep.subr.bf16.mxu0 0
      %3555 = vmatpush2.bf16.msra.mxu0 0
      %3556 = vmatprep.subr.bf16.mxu0 0
      %3557 = vmatpush2.bf16.msra.mxu0 0
      %3558 = vmatprep.subr.bf16.mxu0 0
      %3559 = vmatpush2.bf16.msra.mxu0 0
      %3560 = vmatprep.subr.bf16.mxu0 0
      %3561 = vmatpush2.bf16.msra.mxu0 0
      %3562 = vmatprep.subr.bf16.mxu0 0
      %3563 = vmatpush2.bf16.msra.mxu0 0
      %3564 = vmatprep.subr.bf16.mxu0 0
      %3565 = vmatpush2.bf16.msra.mxu0 0
      %3566 = vmatprep.subr.bf16.mxu0 0
      %3567 = vmatpush2.bf16.msra.mxu0 0
      %3568 = vmatprep.mubr.bf16.mxu0 0
      %3569 = vmatmul.mubr.bf16.gmra.mxu0 %v3456
      %v3570 = vpop.f32.mrf.mxu0
      %v3571 = vadd.f32 0.0, %v3570
      %v3572 = vpop.f32.mrf.mxu0
      %v3573 = vpop.f32.mrf.mxu0
      %v3574 = vadd.f32 0.0, %v3573
      %v3575 = vpop.f32.mrf.mxu0
      %3576 = vmatprep.mubr.bf16.mxu0 0
      %3577 = vmatmul.mubr.bf16.gmra.mxu0 %v3457
      %v3578 = vpop.f32.mrf.mxu0
      %v3579 = vadd.f32 0.0, %v3578
      %v3580 = vpop.f32.mrf.mxu0
      %v3581 = vpop.f32.mrf.mxu0
      %v3582 = vadd.f32 0.0, %v3581
      %v3583 = vpop.f32.mrf.mxu0
      %3584 = vmatprep.mubr.bf16.mxu0 0
      %3585 = vmatmul.mubr.bf16.gmra.mxu0 %v3458
      %v3586 = vpop.f32.mrf.mxu0
      %v3587 = vadd.f32 0.0, %v3586
      %v3588 = vpop.f32.mrf.mxu0
      %v3589 = vpop.f32.mrf.mxu0
      %v3590 = vadd.f32 0.0, %v3589
      %v3591 = vpop.f32.mrf.mxu0
      %3592 = vmatprep.mubr.bf16.mxu0 0
      %3593 = vmatmul.mubr.bf16.gmra.mxu0 %v3459
      %v3594 = vpop.f32.mrf.mxu0
      %v3595 = vadd.f32 0.0, %v3594
      %v3596 = vpop.f32.mrf.mxu0
      %v3597 = vpop.f32.mrf.mxu0
      %v3598 = vadd.f32 0.0, %v3597
      %v3599 = vpop.f32.mrf.mxu0
      %3600 = vmatprep.mubr.bf16.mxu0 0
      %3601 = vmatmul.mubr.bf16.gmra.mxu0 %v3460
      %v3602 = vpop.f32.mrf.mxu0
      %v3603 = vadd.f32 0.0, %v3602
      %v3604 = vpop.f32.mrf.mxu0
      %v3605 = vpop.f32.mrf.mxu0
      %v3606 = vadd.f32 0.0, %v3605
      %v3607 = vpop.f32.mrf.mxu0
      %3608 = vmatprep.mubr.bf16.mxu0 0
      %3609 = vmatmul.mubr.bf16.gmra.mxu0 %v3461
      %v3610 = vpop.f32.mrf.mxu0
      %v3611 = vadd.f32 0.0, %v3610
      %v3612 = vpop.f32.mrf.mxu0
      %v3613 = vpop.f32.mrf.mxu0
      %v3614 = vadd.f32 0.0, %v3613
      %v3615 = vpop.f32.mrf.mxu0
      %3616 = vmatprep.mubr.bf16.mxu0 0
      %3617 = vmatmul.mubr.bf16.gmra.mxu0 %v3462
      %v3618 = vpop.f32.mrf.mxu0
      %v3619 = vadd.f32 0.0, %v3618
      %v3620 = vpop.f32.mrf.mxu0
      %v3621 = vpop.f32.mrf.mxu0
      %v3622 = vadd.f32 0.0, %v3621
      %v3623 = vpop.f32.mrf.mxu0
      %3624 = vmatprep.mubr.bf16.mxu0 0
      %3625 = vmatmul.mubr.bf16.gmra.mxu0 %v3463
      %v3626 = vpop.f32.mrf.mxu0
      %v3627 = vadd.f32 0.0, %v3626
      %v3628 = vpop.f32.mrf.mxu0
      %v3629 = vpop.f32.mrf.mxu0
      %v3630 = vadd.f32 0.0, %v3629
      %v3631 = vpop.f32.mrf.mxu0
      %3632 = vmatprep.mubr.bf16.mxu0 0
      %3633 = vmatmul.mubr.bf16.gmra.mxu0 %v3464
      %v3634 = vpop.f32.mrf.mxu0
      %v3635 = vadd.f32 0.0, %v3634
      %v3636 = vpop.f32.mrf.mxu0
      %v3637 = vpop.f32.mrf.mxu0
      %v3638 = vadd.f32 0.0, %v3637
      %v3639 = vpop.f32.mrf.mxu0
      %3640 = vmatprep.mubr.bf16.mxu0 0
      %3641 = vmatmul.mubr.bf16.gmra.mxu0 %v3465
      %v3642 = vpop.f32.mrf.mxu0
      %v3643 = vadd.f32 0.0, %v3642
      %v3644 = vpop.f32.mrf.mxu0
      %v3645 = vpop.f32.mrf.mxu0
      %v3646 = vadd.f32 0.0, %v3645
      %v3647 = vpop.f32.mrf.mxu0
      %3648 = vmatprep.mubr.bf16.mxu0 0
      %3649 = vmatmul.mubr.bf16.gmra.mxu0 %v3466
      %v3650 = vpop.f32.mrf.mxu0
      %v3651 = vadd.f32 0.0, %v3650
      %v3652 = vpop.f32.mrf.mxu0
      %v3653 = vpop.f32.mrf.mxu0
      %v3654 = vadd.f32 0.0, %v3653
      %v3655 = vpop.f32.mrf.mxu0
      %3656 = vmatprep.mubr.bf16.mxu0 0
      %3657 = vmatmul.mubr.bf16.gmra.mxu0 %v3467
      %v3658 = vpop.f32.mrf.mxu0
      %v3659 = vadd.f32 0.0, %v3658
      %v3660 = vpop.f32.mrf.mxu0
      %v3661 = vpop.f32.mrf.mxu0
      %v3662 = vadd.f32 0.0, %v3661
      %v3663 = vpop.f32.mrf.mxu0
      %3664 = vmatprep.mubr.bf16.mxu0 0
      %3665 = vmatmul.mubr.bf16.gmra.mxu0 %v3468
      %v3666 = vpop.f32.mrf.mxu0
      %v3667 = vadd.f32 0.0, %v3666
      %v3668 = vpop.f32.mrf.mxu0
      %v3669 = vpop.f32.mrf.mxu0
      %v3670 = vadd.f32 0.0, %v3669
      %v3671 = vpop.f32.mrf.mxu0
      %3672 = vmatprep.mubr.bf16.mxu0 0
      %3673 = vmatmul.mubr.bf16.gmra.mxu0 %v3469
      %v3674 = vpop.f32.mrf.mxu0
      %v3675 = vadd.f32 0.0, %v3674
      %v3676 = vpop.f32.mrf.mxu0
      %v3677 = vpop.f32.mrf.mxu0
      %v3678 = vadd.f32 0.0, %v3677
      %v3679 = vpop.f32.mrf.mxu0
      %3680 = vmatprep.mubr.bf16.mxu0 0
      %3681 = vmatmul.mubr.bf16.gmra.mxu0 %v3470
      %v3682 = vpop.f32.mrf.mxu0
      %v3683 = vadd.f32 0.0, %v3682
      %v3684 = vpop.f32.mrf.mxu0
      %v3685 = vpop.f32.mrf.mxu0
      %v3686 = vadd.f32 0.0, %v3685
      %v3687 = vpop.f32.mrf.mxu0
      %3688 = vmatprep.mubr.bf16.mxu0 0
      %3689 = vmatmul.mubr.bf16.gmra.mxu0 %v3471
      %v3690 = vpop.f32.mrf.mxu0
      %v3691 = vadd.f32 0.0, %v3690
      %v3692 = vpop.f32.mrf.mxu0
      %v3693 = vpop.f32.mrf.mxu0
      %v3694 = vadd.f32 0.0, %v3693
      %v3695 = vpop.f32.mrf.mxu0
      %3696 = vdwg.mxu0
      %v3697 = vadd.f32 %v3310, %v3571
      %v3698 = vadd.f32 %v3311, %v3574
      %v3699 = vadd.f32 %v3312, %v3579
      %v3700 = vadd.f32 %v3313, %v3582
      %v3701 = vadd.f32 %v3314, %v3587
      %v3702 = vadd.f32 %v3315, %v3590
      %v3703 = vadd.f32 %v3316, %v3595
      %v3704 = vadd.f32 %v3317, %v3598
      %v3705 = vadd.f32 %v3318, %v3603
      %v3706 = vadd.f32 %v3319, %v3606
      %v3707 = vadd.f32 %v3320, %v3611
      %v3708 = vadd.f32 %v3321, %v3614
      %v3709 = vadd.f32 %v3322, %v3619
      %v3710 = vadd.f32 %v3323, %v3622
      %v3711 = vadd.f32 %v3324, %v3627
      %v3712 = vadd.f32 %v3325, %v3630
      %v3713 = vadd.f32 %v3326, %v3635
      %v3714 = vadd.f32 %v3327, %v3638
      %v3715 = vadd.f32 %v3328, %v3643
      %v3716 = vadd.f32 %v3329, %v3646
      %v3717 = vadd.f32 %v3330, %v3651
      %v3718 = vadd.f32 %v3331, %v3654
      %v3719 = vadd.f32 %v3332, %v3659
      %v3720 = vadd.f32 %v3333, %v3662
      %v3721 = vadd.f32 %v3334, %v3667
      %v3722 = vadd.f32 %v3335, %v3670
      %v3723 = vadd.f32 %v3336, %v3675
      %v3724 = vadd.f32 %v3337, %v3678
      %v3725 = vadd.f32 %v3338, %v3683
      %v3726 = vadd.f32 %v3339, %v3686
      %v3727 = vadd.f32 %v3340, %v3691
      %v3728 = vadd.f32 %v3341, %v3694
      %v3729 = vld [vmem:[%s3342] sm:$0xf]
      %v3730 = vld [vmem:[%s3342 + $0x4] sm:$0xf]
      %v3731 = vld [vmem:[%s3342 + $0x8] sm:$0x1]
      %v3732 = vld [vmem:[%s3342 + $0xc] sm:$0xf]
      %v3733 = vld [vmem:[%s3342 + $0x10] sm:$0xf]
      %v3734 = vld [vmem:[%s3342 + $0x14] sm:$0x1]
      %v3735 = vld [vmem:[%s3342 + $0x18] sm:$0xf]
      %v3736 = vld [vmem:[%s3342 + $0x1c] sm:$0xf]
      %v3737 = vld [vmem:[%s3342 + $0x20] sm:$0x1]
      %v3738 = vld [vmem:[%s3342 + $0x24] sm:$0xf]
      %v3739 = vld [vmem:[%s3342 + $0x28] sm:$0xf]
      %v3740 = vld [vmem:[%s3342 + $0x2c] sm:$0x1]
      %v3741 = vld [vmem:[%s3342 + $0x30] sm:$0xf]
      %v3742 = vld [vmem:[%s3342 + $0x34] sm:$0xf]
      %v3743 = vld [vmem:[%s3342 + $0x38] sm:$0x1]
      %v3744 = vld [vmem:[%s3342 + $0x3c] sm:$0xf]
      %v3745 = vld [vmem:[%s3342 + $0x40] sm:$0xf]
      %v3746 = vld [vmem:[%s3342 + $0x44] sm:$0x1]
      %v3747 = vld [vmem:[%s3342 + $0x48] sm:$0xf]
      %v3748 = vld [vmem:[%s3342 + $0x4c] sm:$0xf]
      %v3749 = vld [vmem:[%s3342 + $0x50] sm:$0x1]
      %v3750 = vld [vmem:[%s3342 + $0x54] sm:$0xf]
      %v3751 = vld [vmem:[%s3342 + $0x58] sm:$0xf]
      %v3752 = vld [vmem:[%s3342 + $0x5c] sm:$0x1]
      %v3753 = vld [vmem:[%s3342 + $0x60] sm:$0xf]
      %v3754 = vld [vmem:[%s3342 + $0x64] sm:$0xf]
      %v3755 = vld [vmem:[%s3342 + $0x68] sm:$0x1]
      %v3756 = vld [vmem:[%s3342 + $0x6c] sm:$0xf]
      %v3757 = vld [vmem:[%s3342 + $0x70] sm:$0xf]
      %v3758 = vld [vmem:[%s3342 + $0x74] sm:$0x1]
      %v3759 = vld [vmem:[%s3342 + $0x78] sm:$0xf]
      %v3760 = vld [vmem:[%s3342 + $0x7c] sm:$0xf]
      %v3761 = vld [vmem:[%s3342 + $0x80] sm:$0x1]
      %v3762 = vld [vmem:[%s3342 + $0x84] sm:$0xf]
      %v3763 = vld [vmem:[%s3342 + $0x88] sm:$0xf]
      %v3764 = vld [vmem:[%s3342 + $0x8c] sm:$0x1]
      %v3765 = vld [vmem:[%s3342 + $0x90] sm:$0xf]
      %v3766 = vld [vmem:[%s3342 + $0x94] sm:$0xf]
      %v3767 = vld [vmem:[%s3342 + $0x98] sm:$0x1]
      %v3768 = vld [vmem:[%s3342 + $0x9c] sm:$0xf]
      %v3769 = vld [vmem:[%s3342 + $0xa0] sm:$0xf]
      %v3770 = vld [vmem:[%s3342 + $0xa4] sm:$0x1]
      %v3771 = vld [vmem:[%s3342 + $0xa8] sm:$0xf]
      %v3772 = vld [vmem:[%s3342 + $0xac] sm:$0xf]
      %v3773 = vld [vmem:[%s3342 + $0xb0] sm:$0x1]
      %v3774 = vld [vmem:[%s3342 + $0xb4] sm:$0xf]
      %v3775 = vld [vmem:[%s3342 + $0xb8] sm:$0xf]
      %v3776 = vld [vmem:[%s3342 + $0xbc] sm:$0x1]
      %v3778 = vshrl.u32 %v3729, 16
      %v3780 = vrot.slane %v3778, 4
      %v3781 = vshll.u32 %v3729, 16
      %v3783 = vrot.slane %v3781, 5
      %v3784 = vor.u32 %v3780, %v3783
      %v3785 = vrot.slane %v3784, 4
      %v3787 = vshll.u32 %v3730, 16
      %v3789 = vrot.slane %v3787, 5
      %v3790 = vsel %vm238, %v3785, %v3789
      %v3791 = vshrl.u32 %v3730, 16
      %v3793 = vrot.slane %v3791, 4
      %v3794 = vor.u32 %v3793, %v3789
      %v3795 = vrot.slane %v3794, 4
      %v3797 = vshll.u32 %v3731, 16
      %v3799 = vrot.slane %v3797, 5
      %v3800 = vsel %vm238, %v3795, %v3799
      %v3802 = vshrl.u32 %v3732, 16
      %v3804 = vrot.slane %v3802, 4
      %v3805 = vshll.u32 %v3732, 16
      %v3807 = vrot.slane %v3805, 5
      %v3808 = vor.u32 %v3804, %v3807
      %v3809 = vrot.slane %v3808, 4
      %v3811 = vshll.u32 %v3733, 16
      %v3813 = vrot.slane %v3811, 5
      %v3814 = vsel %vm238, %v3809, %v3813
      %v3815 = vshrl.u32 %v3733, 16
      %v3817 = vrot.slane %v3815, 4
      %v3818 = vor.u32 %v3817, %v3813
      %v3819 = vrot.slane %v3818, 4
      %v3821 = vshll.u32 %v3734, 16
      %v3823 = vrot.slane %v3821, 5
      %v3824 = vsel %vm238, %v3819, %v3823
      %v3826 = vshrl.u32 %v3735, 16
      %v3828 = vrot.slane %v3826, 4
      %v3829 = vshll.u32 %v3735, 16
      %v3831 = vrot.slane %v3829, 5
      %v3832 = vor.u32 %v3828, %v3831
      %v3833 = vrot.slane %v3832, 4
      %v3835 = vshll.u32 %v3736, 16
      %v3837 = vrot.slane %v3835, 5
      %v3838 = vsel %vm238, %v3833, %v3837
      %v3839 = vshrl.u32 %v3736, 16
      %v3841 = vrot.slane %v3839, 4
      %v3842 = vor.u32 %v3841, %v3837
      %v3843 = vrot.slane %v3842, 4
      %v3845 = vshll.u32 %v3737, 16
      %v3847 = vrot.slane %v3845, 5
      %v3848 = vsel %vm238, %v3843, %v3847
      %v3850 = vshrl.u32 %v3738, 16
      %v3852 = vrot.slane %v3850, 4
      %v3853 = vshll.u32 %v3738, 16
      %v3855 = vrot.slane %v3853, 5
      %v3856 = vor.u32 %v3852, %v3855
      %v3857 = vrot.slane %v3856, 4
      %v3859 = vshll.u32 %v3739, 16
      %v3861 = vrot.slane %v3859, 5
      %v3862 = vsel %vm238, %v3857, %v3861
      %v3863 = vshrl.u32 %v3739, 16
      %v3865 = vrot.slane %v3863, 4
      %v3866 = vor.u32 %v3865, %v3861
      %v3867 = vrot.slane %v3866, 4
      %v3869 = vshll.u32 %v3740, 16
      %v3871 = vrot.slane %v3869, 5
      %v3872 = vsel %vm238, %v3867, %v3871
      %v3874 = vshrl.u32 %v3741, 16
      %v3876 = vrot.slane %v3874, 4
      %v3877 = vshll.u32 %v3741, 16
      %v3879 = vrot.slane %v3877, 5
      %v3880 = vor.u32 %v3876, %v3879
      %v3881 = vrot.slane %v3880, 4
      %v3883 = vshll.u32 %v3742, 16
      %v3885 = vrot.slane %v3883, 5
      %v3886 = vsel %vm238, %v3881, %v3885
      %v3887 = vshrl.u32 %v3742, 16
      %v3889 = vrot.slane %v3887, 4
      %v3890 = vor.u32 %v3889, %v3885
      %v3891 = vrot.slane %v3890, 4
      %v3893 = vshll.u32 %v3743, 16
      %v3895 = vrot.slane %v3893, 5
      %v3896 = vsel %vm238, %v3891, %v3895
      %v3898 = vshrl.u32 %v3744, 16
      %v3900 = vrot.slane %v3898, 4
      %v3901 = vshll.u32 %v3744, 16
      %v3903 = vrot.slane %v3901, 5
      %v3904 = vor.u32 %v3900, %v3903
      %v3905 = vrot.slane %v3904, 4
      %v3907 = vshll.u32 %v3745, 16
      %v3909 = vrot.slane %v3907, 5
      %v3910 = vsel %vm238, %v3905, %v3909
      %v3911 = vshrl.u32 %v3745, 16
      %v3913 = vrot.slane %v3911, 4
      %v3914 = vor.u32 %v3913, %v3909
      %v3915 = vrot.slane %v3914, 4
      %v3917 = vshll.u32 %v3746, 16
      %v3919 = vrot.slane %v3917, 5
      %v3920 = vsel %vm238, %v3915, %v3919
      %v3922 = vshrl.u32 %v3747, 16
      %v3924 = vrot.slane %v3922, 4
      %v3925 = vshll.u32 %v3747, 16
      %v3927 = vrot.slane %v3925, 5
      %v3928 = vor.u32 %v3924, %v3927
      %v3929 = vrot.slane %v3928, 4
      %v3931 = vshll.u32 %v3748, 16
      %v3933 = vrot.slane %v3931, 5
      %v3934 = vsel %vm238, %v3929, %v3933
      %v3935 = vshrl.u32 %v3748, 16
      %v3937 = vrot.slane %v3935, 4
      %v3938 = vor.u32 %v3937, %v3933
      %v3939 = vrot.slane %v3938, 4
      %v3941 = vshll.u32 %v3749, 16
      %v3943 = vrot.slane %v3941, 5
      %v3944 = vsel %vm238, %v3939, %v3943
      %v3946 = vshrl.u32 %v3750, 16
      %v3948 = vrot.slane %v3946, 4
      %v3949 = vshll.u32 %v3750, 16
      %v3951 = vrot.slane %v3949, 5
      %v3952 = vor.u32 %v3948, %v3951
      %v3953 = vrot.slane %v3952, 4
      %v3955 = vshll.u32 %v3751, 16
      %v3957 = vrot.slane %v3955, 5
      %v3958 = vsel %vm238, %v3953, %v3957
      %v3959 = vshrl.u32 %v3751, 16
      %v3961 = vrot.slane %v3959, 4
      %v3962 = vor.u32 %v3961, %v3957
      %v3963 = vrot.slane %v3962, 4
      %v3965 = vshll.u32 %v3752, 16
      %v3967 = vrot.slane %v3965, 5
      %v3968 = vsel %vm238, %v3963, %v3967
      %v3970 = vshrl.u32 %v3753, 16
      %v3972 = vrot.slane %v3970, 4
      %v3973 = vshll.u32 %v3753, 16
      %v3975 = vrot.slane %v3973, 5
      %v3976 = vor.u32 %v3972, %v3975
      %v3977 = vrot.slane %v3976, 4
      %v3979 = vshll.u32 %v3754, 16
      %v3981 = vrot.slane %v3979, 5
      %v3982 = vsel %vm238, %v3977, %v3981
      %v3983 = vshrl.u32 %v3754, 16
      %v3985 = vrot.slane %v3983, 4
      %v3986 = vor.u32 %v3985, %v3981
      %v3987 = vrot.slane %v3986, 4
      %v3989 = vshll.u32 %v3755, 16
      %v3991 = vrot.slane %v3989, 5
      %v3992 = vsel %vm238, %v3987, %v3991
      %v3994 = vshrl.u32 %v3756, 16
      %v3996 = vrot.slane %v3994, 4
      %v3997 = vshll.u32 %v3756, 16
      %v3999 = vrot.slane %v3997, 5
      %v4000 = vor.u32 %v3996, %v3999
      %v4001 = vrot.slane %v4000, 4
      %v4003 = vshll.u32 %v3757, 16
      %v4005 = vrot.slane %v4003, 5
      %v4006 = vsel %vm238, %v4001, %v4005
      %v4007 = vshrl.u32 %v3757, 16
      %v4009 = vrot.slane %v4007, 4
      %v4010 = vor.u32 %v4009, %v4005
      %v4011 = vrot.slane %v4010, 4
      %v4013 = vshll.u32 %v3758, 16
      %v4015 = vrot.slane %v4013, 5
      %v4016 = vsel %vm238, %v4011, %v4015
      %v4018 = vshrl.u32 %v3759, 16
      %v4020 = vrot.slane %v4018, 4
      %v4021 = vshll.u32 %v3759, 16
      %v4023 = vrot.slane %v4021, 5
      %v4024 = vor.u32 %v4020, %v4023
      %v4025 = vrot.slane %v4024, 4
      %v4027 = vshll.u32 %v3760, 16
      %v4029 = vrot.slane %v4027, 5
      %v4030 = vsel %vm238, %v4025, %v4029
      %v4031 = vshrl.u32 %v3760, 16
      %v4033 = vrot.slane %v4031, 4
      %v4034 = vor.u32 %v4033, %v4029
      %v4035 = vrot.slane %v4034, 4
      %v4037 = vshll.u32 %v3761, 16
      %v4039 = vrot.slane %v4037, 5
      %v4040 = vsel %vm238, %v4035, %v4039
      %v4042 = vshrl.u32 %v3762, 16
      %v4044 = vrot.slane %v4042, 4
      %v4045 = vshll.u32 %v3762, 16
      %v4047 = vrot.slane %v4045, 5
      %v4048 = vor.u32 %v4044, %v4047
      %v4049 = vrot.slane %v4048, 4
      %v4051 = vshll.u32 %v3763, 16
      %v4053 = vrot.slane %v4051, 5
      %v4054 = vsel %vm238, %v4049, %v4053
      %v4055 = vshrl.u32 %v3763, 16
      %v4057 = vrot.slane %v4055, 4
      %v4058 = vor.u32 %v4057, %v4053
      %v4059 = vrot.slane %v4058, 4
      %v4061 = vshll.u32 %v3764, 16
      %v4063 = vrot.slane %v4061, 5
      %v4064 = vsel %vm238, %v4059, %v4063
      %v4066 = vshrl.u32 %v3765, 16
      %v4068 = vrot.slane %v4066, 4
      %v4069 = vshll.u32 %v3765, 16
      %v4071 = vrot.slane %v4069, 5
      %v4072 = vor.u32 %v4068, %v4071
      %v4073 = vrot.slane %v4072, 4
      %v4075 = vshll.u32 %v3766, 16
      %v4077 = vrot.slane %v4075, 5
      %v4078 = vsel %vm238, %v4073, %v4077
      %v4079 = vshrl.u32 %v3766, 16
      %v4081 = vrot.slane %v4079, 4
      %v4082 = vor.u32 %v4081, %v4077
      %v4083 = vrot.slane %v4082, 4
      %v4085 = vshll.u32 %v3767, 16
      %v4087 = vrot.slane %v4085, 5
      %v4088 = vsel %vm238, %v4083, %v4087
      %v4090 = vshrl.u32 %v3768, 16
      %v4092 = vrot.slane %v4090, 4
      %v4093 = vshll.u32 %v3768, 16
      %v4095 = vrot.slane %v4093, 5
      %v4096 = vor.u32 %v4092, %v4095
      %v4097 = vrot.slane %v4096, 4
      %v4099 = vshll.u32 %v3769, 16
      %v4101 = vrot.slane %v4099, 5
      %v4102 = vsel %vm238, %v4097, %v4101
      %v4103 = vshrl.u32 %v3769, 16
      %v4105 = vrot.slane %v4103, 4
      %v4106 = vor.u32 %v4105, %v4101
      %v4107 = vrot.slane %v4106, 4
      %v4109 = vshll.u32 %v3770, 16
      %v4111 = vrot.slane %v4109, 5
      %v4112 = vsel %vm238, %v4107, %v4111
      %v4114 = vshrl.u32 %v3771, 16
      %v4116 = vrot.slane %v4114, 4
      %v4117 = vshll.u32 %v3771, 16
      %v4119 = vrot.slane %v4117, 5
      %v4120 = vor.u32 %v4116, %v4119
      %v4121 = vrot.slane %v4120, 4
      %v4123 = vshll.u32 %v3772, 16
      %v4125 = vrot.slane %v4123, 5
      %v4126 = vsel %vm238, %v4121, %v4125
      %v4127 = vshrl.u32 %v3772, 16
      %v4129 = vrot.slane %v4127, 4
      %v4130 = vor.u32 %v4129, %v4125
      %v4131 = vrot.slane %v4130, 4
      %v4133 = vshll.u32 %v3773, 16
      %v4135 = vrot.slane %v4133, 5
      %v4136 = vsel %vm238, %v4131, %v4135
      %v4138 = vshrl.u32 %v3774, 16
      %v4140 = vrot.slane %v4138, 4
      %v4141 = vshll.u32 %v3774, 16
      %v4143 = vrot.slane %v4141, 5
      %v4144 = vor.u32 %v4140, %v4143
      %v4145 = vrot.slane %v4144, 4
      %v4147 = vshll.u32 %v3775, 16
      %v4149 = vrot.slane %v4147, 5
      %v4150 = vsel %vm238, %v4145, %v4149
      %v4151 = vshrl.u32 %v3775, 16
      %v4153 = vrot.slane %v4151, 4
      %v4154 = vor.u32 %v4153, %v4149
      %v4155 = vrot.slane %v4154, 4
      %v4157 = vshll.u32 %v3776, 16
      %v4159 = vrot.slane %v4157, 5
      %v4160 = vsel %vm238, %v4155, %v4159
      %s4161 = scalar_lea.vmem %s1, 448
      %v4162 = vld [vmem:[%s4161] sm:$0xf]
      %v4163 = vld [vmem:[%s4161 + $0x4] sm:$0xf]
      %v4164 = vld [vmem:[%s4161 + $0x8] sm:$0xf]
      %v4165 = vld [vmem:[%s4161 + $0xc] sm:$0xf]
      %v4166 = vld [vmem:[%s4161 + $0x10] sm:$0xf]
      %v4167 = vld [vmem:[%s4161 + $0x14] sm:$0xf]
      %v4168 = vld [vmem:[%s4161 + $0x18] sm:$0xf]
      %v4169 = vld [vmem:[%s4161 + $0x1c] sm:$0xf]
      %v4170 = vld [vmem:[%s4161 + $0x20] sm:$0xf]
      %v4171 = vld [vmem:[%s4161 + $0x24] sm:$0xf]
      %v4172 = vld [vmem:[%s4161 + $0x28] sm:$0xf]
      %v4173 = vld [vmem:[%s4161 + $0x2c] sm:$0xf]
      %v4174 = vld [vmem:[%s4161 + $0x30] sm:$0xf]
      %v4175 = vld [vmem:[%s4161 + $0x34] sm:$0xf]
      %v4176 = vld [vmem:[%s4161 + $0x38] sm:$0xf]
      %v4177 = vld [vmem:[%s4161 + $0x3c] sm:$0xf]
      %v4178 = vunpack.c.l.b16 %v3790
      %v4179 = vunpack.c.l.b16 %v3800
      %v4180 = vunpack.c.l.b16 %v3814
      %v4181 = vunpack.c.l.b16 %v3824
      %v4182 = vunpack.c.l.b16 %v3838
      %v4183 = vunpack.c.l.b16 %v3848
      %v4184 = vunpack.c.l.b16 %v3862
      %v4185 = vunpack.c.l.b16 %v3872
      %v4186 = vunpack.c.l.b16 %v3886
      %v4187 = vunpack.c.l.b16 %v3896
      %v4188 = vunpack.c.l.b16 %v3910
      %v4189 = vunpack.c.l.b16 %v3920
      %v4190 = vunpack.c.l.b16 %v3934
      %v4191 = vunpack.c.l.b16 %v3944
      %v4192 = vunpack.c.l.b16 %v3958
      %v4193 = vunpack.c.l.b16 %v3968
      %v4194 = vunpack.c.l.b16 %v3982
      %v4195 = vunpack.c.l.b16 %v3992
      %v4196 = vunpack.c.l.b16 %v4006
      %v4197 = vunpack.c.l.b16 %v4016
      %v4198 = vunpack.c.l.b16 %v4030
      %v4199 = vunpack.c.l.b16 %v4040
      %v4200 = vunpack.c.l.b16 %v4054
      %v4201 = vunpack.c.l.b16 %v4064
      %v4202 = vunpack.c.l.b16 %v4078
      %v4203 = vunpack.c.l.b16 %v4088
      %v4204 = vunpack.c.l.b16 %v4102
      %v4205 = vunpack.c.l.b16 %v4112
      %v4206 = vunpack.c.l.b16 %v4126
      %v4207 = vunpack.c.l.b16 %v4136
      %v4208 = vunpack.c.l.b16 %v4150
      %v4209 = vunpack.c.l.b16 %v4160
      %v4210 = vpack.c.b16 %v4179, %v4178
      %v4211 = vpack.c.b16 %v4181, %v4180
      %v4212 = vpack.c.b16 %v4183, %v4182
      %v4213 = vpack.c.b16 %v4185, %v4184
      %v4214 = vpack.c.b16 %v4187, %v4186
      %v4215 = vpack.c.b16 %v4189, %v4188
      %v4216 = vpack.c.b16 %v4191, %v4190
      %v4217 = vpack.c.b16 %v4193, %v4192
      %v4218 = vpack.c.b16 %v4195, %v4194
      %v4219 = vpack.c.b16 %v4197, %v4196
      %v4220 = vpack.c.b16 %v4199, %v4198
      %v4221 = vpack.c.b16 %v4201, %v4200
      %v4222 = vpack.c.b16 %v4203, %v4202
      %v4223 = vpack.c.b16 %v4205, %v4204
      %v4224 = vpack.c.b16 %v4207, %v4206
      %v4225 = vpack.c.b16 %v4209, %v4208
      %v4258 = vunpack.c.l.b16 %v4162
      %v4259 = vunpack.c.l.b16 %v4163
      %v4260 = vunpack.c.l.b16 %v4164
      %v4261 = vunpack.c.l.b16 %v4165
      %v4262 = vunpack.c.l.b16 %v4166
      %v4263 = vunpack.c.l.b16 %v4167
      %v4264 = vunpack.c.l.b16 %v4168
      %v4265 = vunpack.c.l.b16 %v4169
      %v4266 = vunpack.c.l.b16 %v4170
      %v4267 = vunpack.c.l.b16 %v4171
      %v4268 = vunpack.c.l.b16 %v4172
      %v4269 = vunpack.c.l.b16 %v4173
      %v4270 = vunpack.c.l.b16 %v4174
      %v4271 = vunpack.c.l.b16 %v4175
      %v4272 = vunpack.c.l.b16 %v4176
      %v4273 = vunpack.c.l.b16 %v4177
      %v4274 = vpack.c.b16 %v4259, %v4258
      %v4275 = vpack.c.b16 %v4261, %v4260
      %v4276 = vpack.c.b16 %v4263, %v4262
      %v4277 = vpack.c.b16 %v4265, %v4264
      %v4278 = vpack.c.b16 %v4267, %v4266
      %v4279 = vpack.c.b16 %v4269, %v4268
      %v4280 = vpack.c.b16 %v4271, %v4270
      %v4281 = vpack.c.b16 %v4273, %v4272
      %4290 = vmatprep.subr.bf16.mxu0 0
      %4291 = vmatpush1.bf16.msra.mxu0 %v4281
      %4292 = vmatprep.subr.bf16.mxu0 0
      %4293 = vmatpush1.bf16.msra.mxu0 %v4280
      %4294 = vmatprep.subr.bf16.mxu0 0
      %4295 = vmatpush1.bf16.msra.mxu0 %v4279
      %4296 = vmatprep.subr.bf16.mxu0 0
      %4297 = vmatpush1.bf16.msra.mxu0 %v4278
      %4298 = vmatprep.subr.bf16.mxu0 0
      %4299 = vmatpush1.bf16.msra.mxu0 %v4277
      %4300 = vmatprep.subr.bf16.mxu0 0
      %4301 = vmatpush1.bf16.msra.mxu0 %v4276
      %4302 = vmatprep.subr.bf16.mxu0 0
      %4303 = vmatpush1.bf16.msra.mxu0 %v4275
      %4304 = vmatprep.subr.bf16.mxu0 0
      %4305 = vmatpush1.bf16.msra.mxu0 %v4274
      %4306 = vmatprep.subr.bf16.mxu0 0
      %4307 = vmatpush2.bf16.msra.mxu0 0
      %4308 = vmatprep.subr.bf16.mxu0 0
      %4309 = vmatpush2.bf16.msra.mxu0 0
      %4310 = vmatprep.subr.bf16.mxu0 0
      %4311 = vmatpush2.bf16.msra.mxu0 0
      %4312 = vmatprep.subr.bf16.mxu0 0
      %4313 = vmatpush2.bf16.msra.mxu0 0
      %4314 = vmatprep.subr.bf16.mxu0 0
      %4315 = vmatpush2.bf16.msra.mxu0 0
      %4316 = vmatprep.subr.bf16.mxu0 0
      %4317 = vmatpush2.bf16.msra.mxu0 0
      %4318 = vmatprep.subr.bf16.mxu0 0
      %4319 = vmatpush2.bf16.msra.mxu0 0
      %4320 = vmatprep.subr.bf16.mxu0 0
      %4321 = vmatpush2.bf16.msra.mxu0 0
      %4322 = vmatprep.mubr.bf16.mxu0 0
      %4323 = vmatmul.mubr.bf16.gmra.mxu0 %v4210
      %v4324 = vpop.f32.mrf.mxu0
      %v4325 = vadd.f32 0.0, %v4324
      %v4326 = vpop.f32.mrf.mxu0
      %v4327 = vpop.f32.mrf.mxu0
      %v4328 = vadd.f32 0.0, %v4327
      %v4329 = vpop.f32.mrf.mxu0
      %4330 = vmatprep.mubr.bf16.mxu0 0
      %4331 = vmatmul.mubr.bf16.gmra.mxu0 %v4211
      %v4332 = vpop.f32.mrf.mxu0
      %v4333 = vadd.f32 0.0, %v4332
      %v4334 = vpop.f32.mrf.mxu0
      %v4335 = vpop.f32.mrf.mxu0
      %v4336 = vadd.f32 0.0, %v4335
      %v4337 = vpop.f32.mrf.mxu0
      %4338 = vmatprep.mubr.bf16.mxu0 0
      %4339 = vmatmul.mubr.bf16.gmra.mxu0 %v4212
      %v4340 = vpop.f32.mrf.mxu0
      %v4341 = vadd.f32 0.0, %v4340
      %v4342 = vpop.f32.mrf.mxu0
      %v4343 = vpop.f32.mrf.mxu0
      %v4344 = vadd.f32 0.0, %v4343
      %v4345 = vpop.f32.mrf.mxu0
      %4346 = vmatprep.mubr.bf16.mxu0 0
      %4347 = vmatmul.mubr.bf16.gmra.mxu0 %v4213
      %v4348 = vpop.f32.mrf.mxu0
      %v4349 = vadd.f32 0.0, %v4348
      %v4350 = vpop.f32.mrf.mxu0
      %v4351 = vpop.f32.mrf.mxu0
      %v4352 = vadd.f32 0.0, %v4351
      %v4353 = vpop.f32.mrf.mxu0
      %4354 = vmatprep.mubr.bf16.mxu0 0
      %4355 = vmatmul.mubr.bf16.gmra.mxu0 %v4214
      %v4356 = vpop.f32.mrf.mxu0
      %v4357 = vadd.f32 0.0, %v4356
      %v4358 = vpop.f32.mrf.mxu0
      %v4359 = vpop.f32.mrf.mxu0
      %v4360 = vadd.f32 0.0, %v4359
      %v4361 = vpop.f32.mrf.mxu0
      %4362 = vmatprep.mubr.bf16.mxu0 0
      %4363 = vmatmul.mubr.bf16.gmra.mxu0 %v4215
      %v4364 = vpop.f32.mrf.mxu0
      %v4365 = vadd.f32 0.0, %v4364
      %v4366 = vpop.f32.mrf.mxu0
      %v4367 = vpop.f32.mrf.mxu0
      %v4368 = vadd.f32 0.0, %v4367
      %v4369 = vpop.f32.mrf.mxu0
      %4370 = vmatprep.mubr.bf16.mxu0 0
      %4371 = vmatmul.mubr.bf16.gmra.mxu0 %v4216
      %v4372 = vpop.f32.mrf.mxu0
      %v4373 = vadd.f32 0.0, %v4372
      %v4374 = vpop.f32.mrf.mxu0
      %v4375 = vpop.f32.mrf.mxu0
      %v4376 = vadd.f32 0.0, %v4375
      %v4377 = vpop.f32.mrf.mxu0
      %4378 = vmatprep.mubr.bf16.mxu0 0
      %4379 = vmatmul.mubr.bf16.gmra.mxu0 %v4217
      %v4380 = vpop.f32.mrf.mxu0
      %v4381 = vadd.f32 0.0, %v4380
      %v4382 = vpop.f32.mrf.mxu0
      %v4383 = vpop.f32.mrf.mxu0
      %v4384 = vadd.f32 0.0, %v4383
      %v4385 = vpop.f32.mrf.mxu0
      %4386 = vmatprep.mubr.bf16.mxu0 0
      %4387 = vmatmul.mubr.bf16.gmra.mxu0 %v4218
      %v4388 = vpop.f32.mrf.mxu0
      %v4389 = vadd.f32 0.0, %v4388
      %v4390 = vpop.f32.mrf.mxu0
      %v4391 = vpop.f32.mrf.mxu0
      %v4392 = vadd.f32 0.0, %v4391
      %v4393 = vpop.f32.mrf.mxu0
      %4394 = vmatprep.mubr.bf16.mxu0 0
      %4395 = vmatmul.mubr.bf16.gmra.mxu0 %v4219
      %v4396 = vpop.f32.mrf.mxu0
      %v4397 = vadd.f32 0.0, %v4396
      %v4398 = vpop.f32.mrf.mxu0
      %v4399 = vpop.f32.mrf.mxu0
      %v4400 = vadd.f32 0.0, %v4399
      %v4401 = vpop.f32.mrf.mxu0
      %4402 = vmatprep.mubr.bf16.mxu0 0
      %4403 = vmatmul.mubr.bf16.gmra.mxu0 %v4220
      %v4404 = vpop.f32.mrf.mxu0
      %v4405 = vadd.f32 0.0, %v4404
      %v4406 = vpop.f32.mrf.mxu0
      %v4407 = vpop.f32.mrf.mxu0
      %v4408 = vadd.f32 0.0, %v4407
      %v4409 = vpop.f32.mrf.mxu0
      %4410 = vmatprep.mubr.bf16.mxu0 0
      %4411 = vmatmul.mubr.bf16.gmra.mxu0 %v4221
      %v4412 = vpop.f32.mrf.mxu0
      %v4413 = vadd.f32 0.0, %v4412
      %v4414 = vpop.f32.mrf.mxu0
      %v4415 = vpop.f32.mrf.mxu0
      %v4416 = vadd.f32 0.0, %v4415
      %v4417 = vpop.f32.mrf.mxu0
      %4418 = vmatprep.mubr.bf16.mxu0 0
      %4419 = vmatmul.mubr.bf16.gmra.mxu0 %v4222
      %v4420 = vpop.f32.mrf.mxu0
      %v4421 = vadd.f32 0.0, %v4420
      %v4422 = vpop.f32.mrf.mxu0
      %v4423 = vpop.f32.mrf.mxu0
      %v4424 = vadd.f32 0.0, %v4423
      %v4425 = vpop.f32.mrf.mxu0
      %4426 = vmatprep.mubr.bf16.mxu0 0
      %4427 = vmatmul.mubr.bf16.gmra.mxu0 %v4223
      %v4428 = vpop.f32.mrf.mxu0
      %v4429 = vadd.f32 0.0, %v4428
      %v4430 = vpop.f32.mrf.mxu0
      %v4431 = vpop.f32.mrf.mxu0
      %v4432 = vadd.f32 0.0, %v4431
      %v4433 = vpop.f32.mrf.mxu0
      %4434 = vmatprep.mubr.bf16.mxu0 0
      %4435 = vmatmul.mubr.bf16.gmra.mxu0 %v4224
      %v4436 = vpop.f32.mrf.mxu0
      %v4437 = vadd.f32 0.0, %v4436
      %v4438 = vpop.f32.mrf.mxu0
      %v4439 = vpop.f32.mrf.mxu0
      %v4440 = vadd.f32 0.0, %v4439
      %v4441 = vpop.f32.mrf.mxu0
      %4442 = vmatprep.mubr.bf16.mxu0 0
      %4443 = vmatmul.mubr.bf16.gmra.mxu0 %v4225
      %v4444 = vpop.f32.mrf.mxu0
      %v4445 = vadd.f32 0.0, %v4444
      %v4446 = vpop.f32.mrf.mxu0
      %v4447 = vpop.f32.mrf.mxu0
      %v4448 = vadd.f32 0.0, %v4447
      %v4449 = vpop.f32.mrf.mxu0
      %4450 = vdwg.mxu0
      %v4451 = vadd.f32 %v3697, %v4325
      %v4452 = vadd.f32 %v3698, %v4328
      %v4453 = vadd.f32 %v3699, %v4333
      %v4454 = vadd.f32 %v3700, %v4336
      %v4455 = vadd.f32 %v3701, %v4341
      %v4456 = vadd.f32 %v3702, %v4344
      %v4457 = vadd.f32 %v3703, %v4349
      %v4458 = vadd.f32 %v3704, %v4352
      %v4459 = vadd.f32 %v3705, %v4357
      %v4460 = vadd.f32 %v3706, %v4360
      %v4461 = vadd.f32 %v3707, %v4365
      %v4462 = vadd.f32 %v3708, %v4368
      %v4463 = vadd.f32 %v3709, %v4373
      %v4464 = vadd.f32 %v3710, %v4376
      %v4465 = vadd.f32 %v3711, %v4381
      %v4466 = vadd.f32 %v3712, %v4384
      %v4467 = vadd.f32 %v3713, %v4389
      %v4468 = vadd.f32 %v3714, %v4392
      %v4469 = vadd.f32 %v3715, %v4397
      %v4470 = vadd.f32 %v3716, %v4400
      %v4471 = vadd.f32 %v3717, %v4405
      %v4472 = vadd.f32 %v3718, %v4408
      %v4473 = vadd.f32 %v3719, %v4413
      %v4474 = vadd.f32 %v3720, %v4416
      %v4475 = vadd.f32 %v3721, %v4421
      %v4476 = vadd.f32 %v3722, %v4424
      %v4477 = vadd.f32 %v3723, %v4429
      %v4478 = vadd.f32 %v3724, %v4432
      %v4479 = vadd.f32 %v3725, %v4437
      %v4480 = vadd.f32 %v3726, %v4440
      %v4481 = vadd.f32 %v3727, %v4445
      %v4482 = vadd.f32 %v3728, %v4448
      %v4483 = vld [vmem:[%s3342] sm:$0xe]
      %v4484 = vld [vmem:[%s3342 + $0xc] sm:$0xe]
      %v4485 = vld [vmem:[%s3342 + $0x18] sm:$0xe]
      %v4486 = vld [vmem:[%s3342 + $0x24] sm:$0xe]
      %v4487 = vld [vmem:[%s3342 + $0x30] sm:$0xe]
      %v4488 = vld [vmem:[%s3342 + $0x3c] sm:$0xe]
      %v4489 = vld [vmem:[%s3342 + $0x48] sm:$0xe]
      %v4490 = vld [vmem:[%s3342 + $0x54] sm:$0xe]
      %v4491 = vld [vmem:[%s3342 + $0x60] sm:$0xe]
      %v4492 = vld [vmem:[%s3342 + $0x6c] sm:$0xe]
      %v4493 = vld [vmem:[%s3342 + $0x78] sm:$0xe]
      %v4494 = vld [vmem:[%s3342 + $0x84] sm:$0xe]
      %v4495 = vld [vmem:[%s3342 + $0x90] sm:$0xe]
      %v4496 = vld [vmem:[%s3342 + $0x9c] sm:$0xe]
      %v4497 = vld [vmem:[%s3342 + $0xa8] sm:$0xe]
      %v4498 = vld [vmem:[%s3342 + $0xb4] sm:$0xe]
      %v4547 = vrot.slane %v4483, 5
      %v4548 = vrot.slane %v4547, 4
      %v4549 = vrot.slane %v3730, 5
      %v4550 = vsel %vm1268, %v4548, %v4549
      %v4551 = vrot.slane %v4549, 4
      %v4552 = vrot.slane %v3731, 5
      %v4553 = vsel %vm1268, %v4551, %v4552
      %v4554 = vrot.slane %v4484, 5
      %v4555 = vrot.slane %v4554, 4
      %v4556 = vrot.slane %v3733, 5
      %v4557 = vsel %vm1268, %v4555, %v4556
      %v4558 = vrot.slane %v4556, 4
      %v4559 = vrot.slane %v3734, 5
      %v4560 = vsel %vm1268, %v4558, %v4559
      %v4561 = vrot.slane %v4485, 5
      %v4562 = vrot.slane %v4561, 4
      %v4563 = vrot.slane %v3736, 5
      %v4564 = vsel %vm1268, %v4562, %v4563
      %v4565 = vrot.slane %v4563, 4
      %v4566 = vrot.slane %v3737, 5
      %v4567 = vsel %vm1268, %v4565, %v4566
      %v4568 = vrot.slane %v4486, 5
      %v4569 = vrot.slane %v4568, 4
      %v4570 = vrot.slane %v3739, 5
      %v4571 = vsel %vm1268, %v4569, %v4570
      %v4572 = vrot.slane %v4570, 4
      %v4573 = vrot.slane %v3740, 5
      %v4574 = vsel %vm1268, %v4572, %v4573
      %v4575 = vrot.slane %v4487, 5
      %v4576 = vrot.slane %v4575, 4
      %v4577 = vrot.slane %v3742, 5
      %v4578 = vsel %vm1268, %v4576, %v4577
      %v4579 = vrot.slane %v4577, 4
      %v4580 = vrot.slane %v3743, 5
      %v4581 = vsel %vm1268, %v4579, %v4580
      %v4582 = vrot.slane %v4488, 5
      %v4583 = vrot.slane %v4582, 4
      %v4584 = vrot.slane %v3745, 5
      %v4585 = vsel %vm1268, %v4583, %v4584
      %v4586 = vrot.slane %v4584, 4
      %v4587 = vrot.slane %v3746, 5
      %v4588 = vsel %vm1268, %v4586, %v4587
      %v4589 = vrot.slane %v4489, 5
      %v4590 = vrot.slane %v4589, 4
      %v4591 = vrot.slane %v3748, 5
      %v4592 = vsel %vm1268, %v4590, %v4591
      %v4593 = vrot.slane %v4591, 4
      %v4594 = vrot.slane %v3749, 5
      %v4595 = vsel %vm1268, %v4593, %v4594
      %v4596 = vrot.slane %v4490, 5
      %v4597 = vrot.slane %v4596, 4
      %v4598 = vrot.slane %v3751, 5
      %v4599 = vsel %vm1268, %v4597, %v4598
      %v4600 = vrot.slane %v4598, 4
      %v4601 = vrot.slane %v3752, 5
      %v4602 = vsel %vm1268, %v4600, %v4601
      %v4603 = vrot.slane %v4491, 5
      %v4604 = vrot.slane %v4603, 4
      %v4605 = vrot.slane %v3754, 5
      %v4606 = vsel %vm1268, %v4604, %v4605
      %v4607 = vrot.slane %v4605, 4
      %v4608 = vrot.slane %v3755, 5
      %v4609 = vsel %vm1268, %v4607, %v4608
      %v4610 = vrot.slane %v4492, 5
      %v4611 = vrot.slane %v4610, 4
      %v4612 = vrot.slane %v3757, 5
      %v4613 = vsel %vm1268, %v4611, %v4612
      %v4614 = vrot.slane %v4612, 4
      %v4615 = vrot.slane %v3758, 5
      %v4616 = vsel %vm1268, %v4614, %v4615
      %v4617 = vrot.slane %v4493, 5
      %v4618 = vrot.slane %v4617, 4
      %v4619 = vrot.slane %v3760, 5
      %v4620 = vsel %vm1268, %v4618, %v4619
      %v4621 = vrot.slane %v4619, 4
      %v4622 = vrot.slane %v3761, 5
      %v4623 = vsel %vm1268, %v4621, %v4622
      %v4624 = vrot.slane %v4494, 5
      %v4625 = vrot.slane %v4624, 4
      %v4626 = vrot.slane %v3763, 5
      %v4627 = vsel %vm1268, %v4625, %v4626
      %v4628 = vrot.slane %v4626, 4
      %v4629 = vrot.slane %v3764, 5
      %v4630 = vsel %vm1268, %v4628, %v4629
      %v4631 = vrot.slane %v4495, 5
      %v4632 = vrot.slane %v4631, 4
      %v4633 = vrot.slane %v3766, 5
      %v4634 = vsel %vm1268, %v4632, %v4633
      %v4635 = vrot.slane %v4633, 4
      %v4636 = vrot.slane %v3767, 5
      %v4637 = vsel %vm1268, %v4635, %v4636
      %v4638 = vrot.slane %v4496, 5
      %v4639 = vrot.slane %v4638, 4
      %v4640 = vrot.slane %v3769, 5
      %v4641 = vsel %vm1268, %v4639, %v4640
      %v4642 = vrot.slane %v4640, 4
      %v4643 = vrot.slane %v3770, 5
      %v4644 = vsel %vm1268, %v4642, %v4643
      %v4645 = vrot.slane %v4497, 5
      %v4646 = vrot.slane %v4645, 4
      %v4647 = vrot.slane %v3772, 5
      %v4648 = vsel %vm1268, %v4646, %v4647
      %v4649 = vrot.slane %v4647, 4
      %v4650 = vrot.slane %v3773, 5
      %v4651 = vsel %vm1268, %v4649, %v4650
      %v4652 = vrot.slane %v4498, 5
      %v4653 = vrot.slane %v4652, 4
      %v4654 = vrot.slane %v3775, 5
      %v4655 = vsel %vm1268, %v4653, %v4654
      %v4656 = vrot.slane %v4654, 4
      %v4657 = vrot.slane %v3776, 5
      %v4658 = vsel %vm1268, %v4656, %v4657
      %s4659 = scalar_lea.vmem %s1, 512
      %v4660 = vld [vmem:[%s4659] sm:$0xf]
      %v4661 = vld [vmem:[%s4659 + $0x4] sm:$0xf]
      %v4662 = vld [vmem:[%s4659 + $0x8] sm:$0xf]
      %v4663 = vld [vmem:[%s4659 + $0xc] sm:$0xf]
      %v4664 = vld [vmem:[%s4659 + $0x10] sm:$0xf]
      %v4665 = vld [vmem:[%s4659 + $0x14] sm:$0xf]
      %v4666 = vld [vmem:[%s4659 + $0x18] sm:$0xf]
      %v4667 = vld [vmem:[%s4659 + $0x1c] sm:$0xf]
      %v4668 = vld [vmem:[%s4659 + $0x20] sm:$0xf]
      %v4669 = vld [vmem:[%s4659 + $0x24] sm:$0xf]
      %v4670 = vld [vmem:[%s4659 + $0x28] sm:$0xf]
      %v4671 = vld [vmem:[%s4659 + $0x2c] sm:$0xf]
      %v4672 = vld [vmem:[%s4659 + $0x30] sm:$0xf]
      %v4673 = vld [vmem:[%s4659 + $0x34] sm:$0xf]
      %v4674 = vld [vmem:[%s4659 + $0x38] sm:$0xf]
      %v4675 = vld [vmem:[%s4659 + $0x3c] sm:$0xf]
      %v4676 = vunpack.c.l.b16 %v4550
      %v4677 = vunpack.c.l.b16 %v4553
      %v4678 = vunpack.c.l.b16 %v4557
      %v4679 = vunpack.c.l.b16 %v4560
      %v4680 = vunpack.c.l.b16 %v4564
      %v4681 = vunpack.c.l.b16 %v4567
      %v4682 = vunpack.c.l.b16 %v4571
      %v4683 = vunpack.c.l.b16 %v4574
      %v4684 = vunpack.c.l.b16 %v4578
      %v4685 = vunpack.c.l.b16 %v4581
      %v4686 = vunpack.c.l.b16 %v4585
      %v4687 = vunpack.c.l.b16 %v4588
      %v4688 = vunpack.c.l.b16 %v4592
      %v4689 = vunpack.c.l.b16 %v4595
      %v4690 = vunpack.c.l.b16 %v4599
      %v4691 = vunpack.c.l.b16 %v4602
      %v4692 = vunpack.c.l.b16 %v4606
      %v4693 = vunpack.c.l.b16 %v4609
      %v4694 = vunpack.c.l.b16 %v4613
      %v4695 = vunpack.c.l.b16 %v4616
      %v4696 = vunpack.c.l.b16 %v4620
      %v4697 = vunpack.c.l.b16 %v4623
      %v4698 = vunpack.c.l.b16 %v4627
      %v4699 = vunpack.c.l.b16 %v4630
      %v4700 = vunpack.c.l.b16 %v4634
      %v4701 = vunpack.c.l.b16 %v4637
      %v4702 = vunpack.c.l.b16 %v4641
      %v4703 = vunpack.c.l.b16 %v4644
      %v4704 = vunpack.c.l.b16 %v4648
      %v4705 = vunpack.c.l.b16 %v4651
      %v4706 = vunpack.c.l.b16 %v4655
      %v4707 = vunpack.c.l.b16 %v4658
      %v4708 = vpack.c.b16 %v4677, %v4676
      %v4709 = vpack.c.b16 %v4679, %v4678
      %v4710 = vpack.c.b16 %v4681, %v4680
      %v4711 = vpack.c.b16 %v4683, %v4682
      %v4712 = vpack.c.b16 %v4685, %v4684
      %v4713 = vpack.c.b16 %v4687, %v4686
      %v4714 = vpack.c.b16 %v4689, %v4688
      %v4715 = vpack.c.b16 %v4691, %v4690
      %v4716 = vpack.c.b16 %v4693, %v4692
      %v4717 = vpack.c.b16 %v4695, %v4694
      %v4718 = vpack.c.b16 %v4697, %v4696
      %v4719 = vpack.c.b16 %v4699, %v4698
      %v4720 = vpack.c.b16 %v4701, %v4700
      %v4721 = vpack.c.b16 %v4703, %v4702
      %v4722 = vpack.c.b16 %v4705, %v4704
      %v4723 = vpack.c.b16 %v4707, %v4706
      %v4756 = vunpack.c.l.b16 %v4660
      %v4757 = vunpack.c.l.b16 %v4661
      %v4758 = vunpack.c.l.b16 %v4662
      %v4759 = vunpack.c.l.b16 %v4663
      %v4760 = vunpack.c.l.b16 %v4664
      %v4761 = vunpack.c.l.b16 %v4665
      %v4762 = vunpack.c.l.b16 %v4666
      %v4763 = vunpack.c.l.b16 %v4667
      %v4764 = vunpack.c.l.b16 %v4668
      %v4765 = vunpack.c.l.b16 %v4669
      %v4766 = vunpack.c.l.b16 %v4670
      %v4767 = vunpack.c.l.b16 %v4671
      %v4768 = vunpack.c.l.b16 %v4672
      %v4769 = vunpack.c.l.b16 %v4673
      %v4770 = vunpack.c.l.b16 %v4674
      %v4771 = vunpack.c.l.b16 %v4675
      %v4772 = vpack.c.b16 %v4757, %v4756
      %v4773 = vpack.c.b16 %v4759, %v4758
      %v4774 = vpack.c.b16 %v4761, %v4760
      %v4775 = vpack.c.b16 %v4763, %v4762
      %v4776 = vpack.c.b16 %v4765, %v4764
      %v4777 = vpack.c.b16 %v4767, %v4766
      %v4778 = vpack.c.b16 %v4769, %v4768
      %v4779 = vpack.c.b16 %v4771, %v4770
      %4788 = vmatprep.subr.bf16.mxu0 0
      %4789 = vmatpush1.bf16.msra.mxu0 %v4779
      %4790 = vmatprep.subr.bf16.mxu0 0
      %4791 = vmatpush1.bf16.msra.mxu0 %v4778
      %4792 = vmatprep.subr.bf16.mxu0 0
      %4793 = vmatpush1.bf16.msra.mxu0 %v4777
      %4794 = vmatprep.subr.bf16.mxu0 0
      %4795 = vmatpush1.bf16.msra.mxu0 %v4776
      %4796 = vmatprep.subr.bf16.mxu0 0
      %4797 = vmatpush1.bf16.msra.mxu0 %v4775
      %4798 = vmatprep.subr.bf16.mxu0 0
      %4799 = vmatpush1.bf16.msra.mxu0 %v4774
      %4800 = vmatprep.subr.bf16.mxu0 0
      %4801 = vmatpush1.bf16.msra.mxu0 %v4773
      %4802 = vmatprep.subr.bf16.mxu0 0
      %4803 = vmatpush1.bf16.msra.mxu0 %v4772
      %4804 = vmatprep.subr.bf16.mxu0 0
      %4805 = vmatpush2.bf16.msra.mxu0 0
      %4806 = vmatprep.subr.bf16.mxu0 0
      %4807 = vmatpush2.bf16.msra.mxu0 0
      %4808 = vmatprep.subr.bf16.mxu0 0
      %4809 = vmatpush2.bf16.msra.mxu0 0
      %4810 = vmatprep.subr.bf16.mxu0 0
      %4811 = vmatpush2.bf16.msra.mxu0 0
      %4812 = vmatprep.subr.bf16.mxu0 0
      %4813 = vmatpush2.bf16.msra.mxu0 0
      %4814 = vmatprep.subr.bf16.mxu0 0
      %4815 = vmatpush2.bf16.msra.mxu0 0
      %4816 = vmatprep.subr.bf16.mxu0 0
      %4817 = vmatpush2.bf16.msra.mxu0 0
      %4818 = vmatprep.subr.bf16.mxu0 0
      %4819 = vmatpush2.bf16.msra.mxu0 0
      %4820 = vmatprep.mubr.bf16.mxu0 0
      %4821 = vmatmul.mubr.bf16.gmra.mxu0 %v4708
      %v4822 = vpop.f32.mrf.mxu0
      %v4823 = vadd.f32 0.0, %v4822
      %v4824 = vpop.f32.mrf.mxu0
      %v4825 = vpop.f32.mrf.mxu0
      %v4826 = vadd.f32 0.0, %v4825
      %v4827 = vpop.f32.mrf.mxu0
      %4828 = vmatprep.mubr.bf16.mxu0 0
      %4829 = vmatmul.mubr.bf16.gmra.mxu0 %v4709
      %v4830 = vpop.f32.mrf.mxu0
      %v4831 = vadd.f32 0.0, %v4830
      %v4832 = vpop.f32.mrf.mxu0
      %v4833 = vpop.f32.mrf.mxu0
      %v4834 = vadd.f32 0.0, %v4833
      %v4835 = vpop.f32.mrf.mxu0
      %4836 = vmatprep.mubr.bf16.mxu0 0
      %4837 = vmatmul.mubr.bf16.gmra.mxu0 %v4710
      %v4838 = vpop.f32.mrf.mxu0
      %v4839 = vadd.f32 0.0, %v4838
      %v4840 = vpop.f32.mrf.mxu0
      %v4841 = vpop.f32.mrf.mxu0
      %v4842 = vadd.f32 0.0, %v4841
      %v4843 = vpop.f32.mrf.mxu0
      %4844 = vmatprep.mubr.bf16.mxu0 0
      %4845 = vmatmul.mubr.bf16.gmra.mxu0 %v4711
      %v4846 = vpop.f32.mrf.mxu0
      %v4847 = vadd.f32 0.0, %v4846
      %v4848 = vpop.f32.mrf.mxu0
      %v4849 = vpop.f32.mrf.mxu0
      %v4850 = vadd.f32 0.0, %v4849
      %v4851 = vpop.f32.mrf.mxu0
      %4852 = vmatprep.mubr.bf16.mxu0 0
      %4853 = vmatmul.mubr.bf16.gmra.mxu0 %v4712
      %v4854 = vpop.f32.mrf.mxu0
      %v4855 = vadd.f32 0.0, %v4854
      %v4856 = vpop.f32.mrf.mxu0
      %v4857 = vpop.f32.mrf.mxu0
      %v4858 = vadd.f32 0.0, %v4857
      %v4859 = vpop.f32.mrf.mxu0
      %4860 = vmatprep.mubr.bf16.mxu0 0
      %4861 = vmatmul.mubr.bf16.gmra.mxu0 %v4713
      %v4862 = vpop.f32.mrf.mxu0
      %v4863 = vadd.f32 0.0, %v4862
      %v4864 = vpop.f32.mrf.mxu0
      %v4865 = vpop.f32.mrf.mxu0
      %v4866 = vadd.f32 0.0, %v4865
      %v4867 = vpop.f32.mrf.mxu0
      %4868 = vmatprep.mubr.bf16.mxu0 0
      %4869 = vmatmul.mubr.bf16.gmra.mxu0 %v4714
      %v4870 = vpop.f32.mrf.mxu0
      %v4871 = vadd.f32 0.0, %v4870
      %v4872 = vpop.f32.mrf.mxu0
      %v4873 = vpop.f32.mrf.mxu0
      %v4874 = vadd.f32 0.0, %v4873
      %v4875 = vpop.f32.mrf.mxu0
      %4876 = vmatprep.mubr.bf16.mxu0 0
      %4877 = vmatmul.mubr.bf16.gmra.mxu0 %v4715
      %v4878 = vpop.f32.mrf.mxu0
      %v4879 = vadd.f32 0.0, %v4878
      %v4880 = vpop.f32.mrf.mxu0
      %v4881 = vpop.f32.mrf.mxu0
      %v4882 = vadd.f32 0.0, %v4881
      %v4883 = vpop.f32.mrf.mxu0
      %4884 = vmatprep.mubr.bf16.mxu0 0
      %4885 = vmatmul.mubr.bf16.gmra.mxu0 %v4716
      %v4886 = vpop.f32.mrf.mxu0
      %v4887 = vadd.f32 0.0, %v4886
      %v4888 = vpop.f32.mrf.mxu0
      %v4889 = vpop.f32.mrf.mxu0
      %v4890 = vadd.f32 0.0, %v4889
      %v4891 = vpop.f32.mrf.mxu0
      %4892 = vmatprep.mubr.bf16.mxu0 0
      %4893 = vmatmul.mubr.bf16.gmra.mxu0 %v4717
      %v4894 = vpop.f32.mrf.mxu0
      %v4895 = vadd.f32 0.0, %v4894
      %v4896 = vpop.f32.mrf.mxu0
      %v4897 = vpop.f32.mrf.mxu0
      %v4898 = vadd.f32 0.0, %v4897
      %v4899 = vpop.f32.mrf.mxu0
      %4900 = vmatprep.mubr.bf16.mxu0 0
      %4901 = vmatmul.mubr.bf16.gmra.mxu0 %v4718
      %v4902 = vpop.f32.mrf.mxu0
      %v4903 = vadd.f32 0.0, %v4902
      %v4904 = vpop.f32.mrf.mxu0
      %v4905 = vpop.f32.mrf.mxu0
      %v4906 = vadd.f32 0.0, %v4905
      %v4907 = vpop.f32.mrf.mxu0
      %4908 = vmatprep.mubr.bf16.mxu0 0
      %4909 = vmatmul.mubr.bf16.gmra.mxu0 %v4719
      %v4910 = vpop.f32.mrf.mxu0
      %v4911 = vadd.f32 0.0, %v4910
      %v4912 = vpop.f32.mrf.mxu0
      %v4913 = vpop.f32.mrf.mxu0
      %v4914 = vadd.f32 0.0, %v4913
      %v4915 = vpop.f32.mrf.mxu0
      %4916 = vmatprep.mubr.bf16.mxu0 0
      %4917 = vmatmul.mubr.bf16.gmra.mxu0 %v4720
      %v4918 = vpop.f32.mrf.mxu0
      %v4919 = vadd.f32 0.0, %v4918
      %v4920 = vpop.f32.mrf.mxu0
      %v4921 = vpop.f32.mrf.mxu0
      %v4922 = vadd.f32 0.0, %v4921
      %v4923 = vpop.f32.mrf.mxu0
      %4924 = vmatprep.mubr.bf16.mxu0 0
      %4925 = vmatmul.mubr.bf16.gmra.mxu0 %v4721
      %v4926 = vpop.f32.mrf.mxu0
      %v4927 = vadd.f32 0.0, %v4926
      %v4928 = vpop.f32.mrf.mxu0
      %v4929 = vpop.f32.mrf.mxu0
      %v4930 = vadd.f32 0.0, %v4929
      %v4931 = vpop.f32.mrf.mxu0
      %4932 = vmatprep.mubr.bf16.mxu0 0
      %4933 = vmatmul.mubr.bf16.gmra.mxu0 %v4722
      %v4934 = vpop.f32.mrf.mxu0
      %v4935 = vadd.f32 0.0, %v4934
      %v4936 = vpop.f32.mrf.mxu0
      %v4937 = vpop.f32.mrf.mxu0
      %v4938 = vadd.f32 0.0, %v4937
      %v4939 = vpop.f32.mrf.mxu0
      %4940 = vmatprep.mubr.bf16.mxu0 0
      %4941 = vmatmul.mubr.bf16.gmra.mxu0 %v4723
      %v4942 = vpop.f32.mrf.mxu0
      %v4943 = vadd.f32 0.0, %v4942
      %v4944 = vpop.f32.mrf.mxu0
      %v4945 = vpop.f32.mrf.mxu0
      %v4946 = vadd.f32 0.0, %v4945
      %v4947 = vpop.f32.mrf.mxu0
      %4948 = vdwg.mxu0
      %v4949 = vadd.f32 %v4451, %v4823
      %v4950 = vadd.f32 %v4452, %v4826
      %v4951 = vadd.f32 %v4453, %v4831
      %v4952 = vadd.f32 %v4454, %v4834
      %v4953 = vadd.f32 %v4455, %v4839
      %v4954 = vadd.f32 %v4456, %v4842
      %v4955 = vadd.f32 %v4457, %v4847
      %v4956 = vadd.f32 %v4458, %v4850
      %v4957 = vadd.f32 %v4459, %v4855
      %v4958 = vadd.f32 %v4460, %v4858
      %v4959 = vadd.f32 %v4461, %v4863
      %v4960 = vadd.f32 %v4462, %v4866
      %v4961 = vadd.f32 %v4463, %v4871
      %v4962 = vadd.f32 %v4464, %v4874
      %v4963 = vadd.f32 %v4465, %v4879
      %v4964 = vadd.f32 %v4466, %v4882
      %v4965 = vadd.f32 %v4467, %v4887
      %v4966 = vadd.f32 %v4468, %v4890
      %v4967 = vadd.f32 %v4469, %v4895
      %v4968 = vadd.f32 %v4470, %v4898
      %v4969 = vadd.f32 %v4471, %v4903
      %v4970 = vadd.f32 %v4472, %v4906
      %v4971 = vadd.f32 %v4473, %v4911
      %v4972 = vadd.f32 %v4474, %v4914
      %v4973 = vadd.f32 %v4475, %v4919
      %v4974 = vadd.f32 %v4476, %v4922
      %v4975 = vadd.f32 %v4477, %v4927
      %v4976 = vadd.f32 %v4478, %v4930
      %v4977 = vadd.f32 %v4479, %v4935
      %v4978 = vadd.f32 %v4480, %v4938
      %v4979 = vadd.f32 %v4481, %v4943
      %v4980 = vadd.f32 %v4482, %v4946
      %v4981 = vld [vmem:[%s2] sm:$0x1]
      %v4983 = vlaneseq
      %v4984 = vshrl.u32 %v4983, 7
      %v4985 = vsub.s32 0, %v4984
      %v4986 = vrot.slane %v4981, %v4985
      %v4988 = vadd.f32 %v4949, %v4986
      %v4989 = vadd.f32 %v4950, %v4986
      %v4990 = vadd.f32 %v4951, %v4986
      %v4991 = vadd.f32 %v4952, %v4986
      %v4992 = vadd.f32 %v4953, %v4986
      %v4993 = vadd.f32 %v4954, %v4986
      %v4994 = vadd.f32 %v4955, %v4986
      %v4995 = vadd.f32 %v4956, %v4986
      %v4996 = vadd.f32 %v4957, %v4986
      %v4997 = vadd.f32 %v4958, %v4986
      %v4998 = vadd.f32 %v4959, %v4986
      %v4999 = vadd.f32 %v4960, %v4986
      %v5000 = vadd.f32 %v4961, %v4986
      %v5001 = vadd.f32 %v4962, %v4986
      %v5002 = vadd.f32 %v4963, %v4986
      %v5003 = vadd.f32 %v4964, %v4986
      %v5004 = vadd.f32 %v4965, %v4986
      %v5005 = vadd.f32 %v4966, %v4986
      %v5006 = vadd.f32 %v4967, %v4986
      %v5007 = vadd.f32 %v4968, %v4986
      %v5008 = vadd.f32 %v4969, %v4986
      %v5009 = vadd.f32 %v4970, %v4986
      %v5010 = vadd.f32 %v4971, %v4986
      %v5011 = vadd.f32 %v4972, %v4986
      %v5012 = vadd.f32 %v4973, %v4986
      %v5013 = vadd.f32 %v4974, %v4986
      %v5014 = vadd.f32 %v4975, %v4986
      %v5015 = vadd.f32 %v4976, %v4986
      %v5016 = vadd.f32 %v4977, %v4986
      %v5017 = vadd.f32 %v4978, %v4986
      %v5018 = vadd.f32 %v4979, %v4986
      %v5019 = vadd.f32 %v4980, %v4986
      %v5020 = vmax.f32 %v4988, 0.0
      %v5021 = vmax.f32 %v4989, 0.0
      %v5022 = vmax.f32 %v4990, 0.0
      %v5023 = vmax.f32 %v4991, 0.0
      %v5024 = vmax.f32 %v4992, 0.0
      %v5025 = vmax.f32 %v4993, 0.0
      %v5026 = vmax.f32 %v4994, 0.0
      %v5027 = vmax.f32 %v4995, 0.0
      %v5028 = vmax.f32 %v4996, 0.0
      %v5029 = vmax.f32 %v4997, 0.0
      %v5030 = vmax.f32 %v4998, 0.0
      %v5031 = vmax.f32 %v4999, 0.0
      %v5032 = vmax.f32 %v5000, 0.0
      %v5033 = vmax.f32 %v5001, 0.0
      %v5034 = vmax.f32 %v5002, 0.0
      %v5035 = vmax.f32 %v5003, 0.0
      %v5036 = vmax.f32 %v5004, 0.0
      %v5037 = vmax.f32 %v5005, 0.0
      %v5038 = vmax.f32 %v5006, 0.0
      %v5039 = vmax.f32 %v5007, 0.0
      %v5040 = vmax.f32 %v5008, 0.0
      %v5041 = vmax.f32 %v5009, 0.0
      %v5042 = vmax.f32 %v5010, 0.0
      %v5043 = vmax.f32 %v5011, 0.0
      %v5044 = vmax.f32 %v5012, 0.0
      %v5045 = vmax.f32 %v5013, 0.0
      %v5046 = vmax.f32 %v5014, 0.0
      %v5047 = vmax.f32 %v5015, 0.0
      %v5048 = vmax.f32 %v5016, 0.0
      %v5049 = vmax.f32 %v5017, 0.0
      %v5050 = vmax.f32 %v5018, 0.0
      %v5051 = vmax.f32 %v5019, 0.0
      %v5052 = vpack.c.bf16 %v5021, %v5020
      %v5053 = vpack.c.bf16 %v5023, %v5022
      %v5054 = vpack.c.bf16 %v5025, %v5024
      %v5055 = vpack.c.bf16 %v5027, %v5026
      %v5056 = vpack.c.bf16 %v5029, %v5028
      %v5057 = vpack.c.bf16 %v5031, %v5030
      %v5058 = vpack.c.bf16 %v5033, %v5032
      %v5059 = vpack.c.bf16 %v5035, %v5034
      %v5060 = vpack.c.bf16 %v5037, %v5036
      %v5061 = vpack.c.bf16 %v5039, %v5038
      %v5062 = vpack.c.bf16 %v5041, %v5040
      %v5063 = vpack.c.bf16 %v5043, %v5042
      %v5064 = vpack.c.bf16 %v5045, %v5044
      %v5065 = vpack.c.bf16 %v5047, %v5046
      %v5066 = vpack.c.bf16 %v5049, %v5048
      %v5067 = vpack.c.bf16 %v5051, %v5050
      %v5084 = vunpack.c.l.b16 %v5052
      %v5085 = vunpack.c.h.b16 %v5052
      %v5086 = vunpack.c.l.b16 %v5053
      %v5087 = vunpack.c.h.b16 %v5053
      %v5088 = vunpack.c.l.b16 %v5054
      %v5089 = vunpack.c.h.b16 %v5054
      %v5090 = vunpack.c.l.b16 %v5055
      %v5091 = vunpack.c.h.b16 %v5055
      %v5092 = vunpack.c.l.b16 %v5056
      %v5093 = vunpack.c.h.b16 %v5056
      %v5094 = vunpack.c.l.b16 %v5057
      %v5095 = vunpack.c.h.b16 %v5057
      %v5096 = vunpack.c.l.b16 %v5058
      %v5097 = vunpack.c.h.b16 %v5058
      %v5098 = vunpack.c.l.b16 %v5059
      %v5099 = vunpack.c.h.b16 %v5059
      %v5100 = vunpack.c.l.b16 %v5060
      %v5101 = vunpack.c.h.b16 %v5060
      %v5102 = vunpack.c.l.b16 %v5061
      %v5103 = vunpack.c.h.b16 %v5061
      %v5104 = vunpack.c.l.b16 %v5062
      %v5105 = vunpack.c.h.b16 %v5062
      %v5106 = vunpack.c.l.b16 %v5063
      %v5107 = vunpack.c.h.b16 %v5063
      %v5108 = vunpack.c.l.b16 %v5064
      %v5109 = vunpack.c.h.b16 %v5064
      %v5110 = vunpack.c.l.b16 %v5065
      %v5111 = vunpack.c.h.b16 %v5065
      %v5112 = vunpack.c.l.b16 %v5066
      %v5113 = vunpack.c.h.b16 %v5066
      %v5114 = vunpack.c.l.b16 %v5067
      %v5115 = vunpack.c.h.b16 %v5067
      %v5116 = vpack.c.b16 %v5084, %v5084
      %v5117 = vpack.c.b16 %v5085, %v5085
      %v5118 = vpack.c.b16 %v5086, %v5086
      %v5119 = vpack.c.b16 %v5087, %v5087
      %v5120 = vpack.c.b16 %v5088, %v5088
      %v5121 = vpack.c.b16 %v5089, %v5089
      %v5122 = vpack.c.b16 %v5090, %v5090
      %v5123 = vpack.c.b16 %v5091, %v5091
      %v5124 = vpack.c.b16 %v5092, %v5092
      %v5125 = vpack.c.b16 %v5093, %v5093
      %v5126 = vpack.c.b16 %v5094, %v5094
      %v5127 = vpack.c.b16 %v5095, %v5095
      %v5128 = vpack.c.b16 %v5096, %v5096
      %v5129 = vpack.c.b16 %v5097, %v5097
      %v5130 = vpack.c.b16 %v5098, %v5098
      %v5131 = vpack.c.b16 %v5099, %v5099
      %v5132 = vpack.c.b16 %v5100, %v5100
      %v5133 = vpack.c.b16 %v5101, %v5101
      %v5134 = vpack.c.b16 %v5102, %v5102
      %v5135 = vpack.c.b16 %v5103, %v5103
      %v5136 = vpack.c.b16 %v5104, %v5104
      %v5137 = vpack.c.b16 %v5105, %v5105
      %v5138 = vpack.c.b16 %v5106, %v5106
      %v5139 = vpack.c.b16 %v5107, %v5107
      %v5140 = vpack.c.b16 %v5108, %v5108
      %v5141 = vpack.c.b16 %v5109, %v5109
      %v5142 = vpack.c.b16 %v5110, %v5110
      %v5143 = vpack.c.b16 %v5111, %v5111
      %v5144 = vpack.c.b16 %v5112, %v5112
      %v5145 = vpack.c.b16 %v5113, %v5113
      %v5146 = vpack.c.b16 %v5114, %v5114
      %v5147 = vpack.c.b16 %v5115, %v5115
      %5180 = vst [vmem:[%s170] sm:$0xf] %v5116
      %5181 = vst [vmem:[%s170 + $0x4] sm:$0xf] %v5117
      %5182 = vst [vmem:[%s170 + $0x8] sm:$0xf] %v5118
      %5183 = vst [vmem:[%s170 + $0xc] sm:$0xf] %v5119
      %5184 = vst [vmem:[%s170 + $0x10] sm:$0xf] %v5120
      %5185 = vst [vmem:[%s170 + $0x14] sm:$0xf] %v5121
      %5186 = vst [vmem:[%s170 + $0x18] sm:$0xf] %v5122
      %5187 = vst [vmem:[%s170 + $0x1c] sm:$0xf] %v5123
      %5188 = vst [vmem:[%s170 + $0x20] sm:$0xf] %v5124
      %5189 = vst [vmem:[%s170 + $0x24] sm:$0xf] %v5125
      %5190 = vst [vmem:[%s170 + $0x28] sm:$0xf] %v5126
      %5191 = vst [vmem:[%s170 + $0x2c] sm:$0xf] %v5127
      %5192 = vst [vmem:[%s170 + $0x30] sm:$0xf] %v5128
      %5193 = vst [vmem:[%s170 + $0x34] sm:$0xf] %v5129
      %5194 = vst [vmem:[%s170 + $0x38] sm:$0xf] %v5130
      %5195 = vst [vmem:[%s170 + $0x3c] sm:$0xf] %v5131
      %5196 = vst [vmem:[%s170 + $0x40] sm:$0xf] %v5132
      %5197 = vst [vmem:[%s170 + $0x44] sm:$0xf] %v5133
      %5198 = vst [vmem:[%s170 + $0x48] sm:$0xf] %v5134
      %5199 = vst [vmem:[%s170 + $0x4c] sm:$0xf] %v5135
      %5200 = vst [vmem:[%s170 + $0x50] sm:$0xf] %v5136
      %5201 = vst [vmem:[%s170 + $0x54] sm:$0xf] %v5137
      %5202 = vst [vmem:[%s170 + $0x58] sm:$0xf] %v5138
      %5203 = vst [vmem:[%s170 + $0x5c] sm:$0xf] %v5139
      %5204 = vst [vmem:[%s170 + $0x60] sm:$0xf] %v5140
      %5205 = vst [vmem:[%s170 + $0x64] sm:$0xf] %v5141
      %5206 = vst [vmem:[%s170 + $0x68] sm:$0xf] %v5142
      %5207 = vst [vmem:[%s170 + $0x6c] sm:$0xf] %v5143
      %5208 = vst [vmem:[%s170 + $0x70] sm:$0xf] %v5144
      %5209 = vst [vmem:[%s170 + $0x74] sm:$0xf] %v5145
      %5210 = vst [vmem:[%s170 + $0x78] sm:$0xf] %v5146
      %5211 = vst [vmem:[%s170 + $0x7c] sm:$0xf] %v5147
      %p5212 = scmp.lt.s32.totalorder %s14, 1
      %s5213 = scalar_select %p5212, %s14, 1
      %s5214 = smul.addr %s5213, 32
      %s5215 = smul.addr %s5214, 4
      %s5216 = scalar_lea.vmem %s3, %s5215
      // Predicated region
      $region33: #{rcan_block_forward.2} parent=31 // pred_check
        %p5217 = pneg %p100
      $region34: #{rcan_block_forward.2} parent=31 // pred_check_branch
        %5219 = sbr.rel (%p5217) target = $region36
      $region35: #{rcan_block_forward.2} parent=31 // pred_region
        _
      $region36: #{rcan_block_forward.2} parent=31 // pred_fallthru
        _
    $region32: #{rcan_block_forward.2} parent=5 // pred_fallthru
      _
    %p5220 = scmp.le.s32.totalorder 2, %s9
    // Predicated region
    $region37: #{rcan_block_forward.2} parent=5 // pred_check
      %p5221 = pneg %p5220
    $region38: #{rcan_block_forward.2} parent=5 // pred_check_branch
      %5223 = sbr.rel (%p5221) target = $region40
    $region39: #{rcan_block_forward.2} parent=5 // pred_region
      %s5224 = ssub.s32 %s9, 2
      // Predicated region
      $region41: #{rcan_block_forward.2} parent=39 // pred_check
        %p5225 = pneg %p106
      $region42: #{rcan_block_forward.2} parent=39 // pred_check_branch
        %5227 = sbr.rel (%p5225) target = $region44
      $region43: #{rcan_block_forward.2} parent=39 // pred_region
        %p5228 = scmp.lt.s32.totalorder %s15, 1
        %s5229 = scalar_select %p5228, %s15, 1
        %s5230 = smul.addr %s5229, 32
        %s5231 = smul.addr %s5230, 4
        %s5232 = scalar_lea.vmem %s3, %s5231
      $region44: #{rcan_block_forward.2} parent=39 // pred_fallthru
        _
    $region40: #{rcan_block_forward.2} parent=5 // pred_fallthru
      _
  $region6: #{rcan_block_forward.2} parent=0 // loop_footer
    %s13 = sadd.s32 1, %s9
  $region7: #{rcan_block_forward.2} parent=0 // loop_footer_branch
    %8 = sbr.rel target = $region3
  $region8: #{rcan_block_forward.2} parent=0 // loop_exit
    _

// kernel: rcan_block_forward.3
$region0: #{rcan_block_forward.3}
  #allocation0 [shape = 'u32[]', space=smem, size = 0x4, offset = 0x4, fixed_abs, tag = 'smem constant byte address 0x4 - core index']
  #allocation1 [shape = 'u32[144,128]{1,0:T(1,128)}', space=vmem, size = 0x12000, scoped, tag = 'internal scratch']
  %s0 = inlined_call_operand.vmem [shape: bf16[2,18,18,128], index: 0, kind: input, shape index: {}]
  %s1 = inlined_call_operand.vmem [shape: f32[2,16,16,128], index: 1, kind: input, shape index: {}]
  %s2 = inlined_call_operand.vmem [shape: bf16[9,128,128], index: 2, kind: input, shape index: {}]
  %s3 = inlined_call_operand.vmem [shape: f32[1,128], index: 3, kind: input, shape index: {}]
  %s4 = inlined_call_operand.vmem [shape: f32[128,128], index: 4, kind: input, shape index: {}]
  %s5 = inlined_call_operand.vmem [shape: f32[1,128], index: 5, kind: input, shape index: {}]
  %s6 = inlined_call_operand.vmem [shape: f32[128,128], index: 6, kind: input, shape index: {}]
  %s7 = inlined_call_operand.vmem [shape: f32[1,128], index: 7, kind: input, shape index: {}]
  %s8 = inlined_call_operand.vmem [shape: f32[2,16,16,128], index: 8, kind: output, shape index: {}]
  %s9 = sld [smem:[#allocation0]]
  $region65: #{rcan_block_forward.3} parent=0
    _
  %s11 = ssub.s32 1, %s9
  %s12 = scalar_select 0, %s11, %s9
  loop: start=0, step=1, limit=4
  $region2: #{rcan_block_forward.3} parent=0 // loop_pre_header
    _
  $region3: #{rcan_block_forward.3} parent=0 // loop_header
    %s14 = sphi 0, %s18
    %p15 = scmp.ge.s32.totalorder %s14, 4
    %s24 = sphi 0, %s26
    %s27 = sphi 0, %s24
    %s28 = sphi 0, %s27
    %s44 = sphi 0, %s28
    %s50 = sphi 0, %s52
    %s53 = sphi 0, %s50
    %s54 = sphi 0, %s53
    %s70 = sphi 0, %s54
    %s74 = sphi 0, %s74
    %s76 = sphi 0, %s74
    %s77 = sphi 0, %s76
    %s91 = sphi 0, %s77
    %s95 = sphi 0, %s95
    %s97 = sphi 0, %s95
    %s98 = sphi 0, %s97
    %s112 = sphi 0, %s98
    %s116 = sphi 0, %s116
    %s118 = sphi 0, %s116
    %s119 = sphi 0, %s118
    %s133 = sphi 0, %s119
    %s137 = sphi 0, %s137
    %s139 = sphi 0, %s137
    %s140 = sphi 0, %s139
    %s154 = sphi 0, %s140
    %s158 = sphi 0, %s158
    %s160 = sphi 0, %s158
    %s161 = sphi 0, %s160
    %s175 = sphi 0, %s161
    %s179 = sphi 0, %s179
    %s181 = sphi 0, %s179
    %s182 = sphi 0, %s181
    %s196 = sphi 0, %s182
    %s202 = sphi 0, %s204
    %s205 = sphi 0, %s202
    %s206 = sphi 0, %s205
    %s222 = sphi 0, %s206
  $region4: #{rcan_block_forward.3} parent=0 // loop_header_branch
    %17 = sbr.rel (%p15) target = $region8
  $region5: #{rcan_block_forward.3} parent=0 // loop_body
    %s19 = ssub.s32 %s14, 1
    %s20 = ssub.s32 %s14, 2
    %s21 = sadd.s32 %s14, 1
    %s22 = ssub.s32 %s14, %s21
    %p23 = scmp.eq.s32.totalorder %s22, 0
    %s25 = sadd.s32 %s24, 1
    %s26 = scalar_select %p23, %s24, %s25
    %p29 = pneg %p23
    %p30 = scmp.eq.s32.totalorder %s14, 1
    %p31 = por %p29, %p30
    %p32 = scmp.ne.s32.totalorder %s24, %s27
    %p33 = scmp.eq.s32.totalorder %s14, 0
    %p34 = por %p32, %p33
    %p35 = scmp.ne.s32.totalorder %s24, %s27
    %p36 = scmp.eq.s32.totalorder %s19, 1
    %p37 = por %p35, %p36
    %p38 = scmp.ne.s32.totalorder %s27, %s28
    %p39 = scmp.eq.s32.totalorder %s19, 0
    %p40 = por %p38, %p39
    %p41 = scmp.ne.s32.totalorder %s27, %s28
    %p42 = scmp.eq.s32.totalorder %s20, 1
    %p43 = por %p41, %p42
    %p45 = scmp.ne.s32.totalorder %s28, %s44
    %p46 = scmp.eq.s32.totalorder %s20, 0
    %p47 = por %p45, %p46
    %s48 = ssub.s32 %s14, %s21
    %p49 = scmp.eq.s32.totalorder %s48, 0
    %s51 = sadd.s32 %s50, 1
    %s52 = scalar_select %p49, %s50, %s51
    %p55 = pneg %p49
    %p56 = scmp.eq.s32.totalorder %s14, 1
    %p57 = por %p55, %p56
    %p58 = scmp.ne.s32.totalorder %s50, %s53
    %p59 = scmp.eq.s32.totalorder %s14, 0
    %p60 = por %p58, %p59
    %p61 = scmp.ne.s32.totalorder %s50, %s53
    %p62 = scmp.eq.s32.totalorder %s19, 1
    %p63 = por %p61, %p62
    %p64 = scmp.ne.s32.totalorder %s53, %s54
    %p65 = scmp.eq.s32.totalorder %s19, 0
    %p66 = por %p64, %p65
    %p67 = scmp.ne.s32.totalorder %s53, %s54
    %p68 = scmp.eq.s32.totalorder %s20, 1
    %p69 = por %p67, %p68
    %p71 = scmp.ne.s32.totalorder %s54, %s70
    %p72 = scmp.eq.s32.totalorder %s20, 0
    %p73 = por %p71, %p72
    %s75 = sadd.s32 %s74, 1
    %p78 = scmp.eq.s32.totalorder %s14, 1
    %p79 = scmp.ne.s32.totalorder %s74, %s76
    %p80 = scmp.eq.s32.totalorder %s14, 0
    %p81 = por %p79, %p80
    %p82 = scmp.ne.s32.totalorder %s74, %s76
    %p83 = scmp.eq.s32.totalorder %s19, 1
    %p84 = por %p82, %p83
    %p85 = scmp.ne.s32.totalorder %s76, %s77
    %p86 = scmp.eq.s32.totalorder %s19, 0
    %p87 = por %p85, %p86
    %p88 = scmp.ne.s32.totalorder %s76, %s77
    %p89 = scmp.eq.s32.totalorder %s20, 1
    %p90 = por %p88, %p89
    %p92 = scmp.ne.s32.totalorder %s77, %s91
    %p93 = scmp.eq.s32.totalorder %s20, 0
    %p94 = por %p92, %p93
    %s96 = sadd.s32 %s95, 1
    %p99 = scmp.eq.s32.totalorder %s14, 1
    %p100 = scmp.ne.s32.totalorder %s95, %s97
    %p101 = scmp.eq.s32.totalorder %s14, 0
    %p102 = por %p100, %p101
    %p103 = scmp.ne.s32.totalorder %s95, %s97
    %p104 = scmp.eq.s32.totalorder %s19, 1
    %p105 = por %p103, %p104
    %p106 = scmp.ne.s32.totalorder %s97, %s98
    %p107 = scmp.eq.s32.totalorder %s19, 0
    %p108 = por %p106, %p107
    %p109 = scmp.ne.s32.totalorder %s97, %s98
    %p110 = scmp.eq.s32.totalorder %s20, 1
    %p111 = por %p109, %p110
    %p113 = scmp.ne.s32.totalorder %s98, %s112
    %p114 = scmp.eq.s32.totalorder %s20, 0
    %p115 = por %p113, %p114
    %s117 = sadd.s32 %s116, 1
    %p120 = scmp.eq.s32.totalorder %s14, 1
    %p121 = scmp.ne.s32.totalorder %s116, %s118
    %p122 = scmp.eq.s32.totalorder %s14, 0
    %p123 = por %p121, %p122
    %p124 = scmp.ne.s32.totalorder %s116, %s118
    %p125 = scmp.eq.s32.totalorder %s19, 1
    %p126 = por %p124, %p125
    %p127 = scmp.ne.s32.totalorder %s118, %s119
    %p128 = scmp.eq.s32.totalorder %s19, 0
    %p129 = por %p127, %p128
    %p130 = scmp.ne.s32.totalorder %s118, %s119
    %p131 = scmp.eq.s32.totalorder %s20, 1
    %p132 = por %p130, %p131
    %p134 = scmp.ne.s32.totalorder %s119, %s133
    %p135 = scmp.eq.s32.totalorder %s20, 0
    %p136 = por %p134, %p135
    %s138 = sadd.s32 %s137, 1
    %p141 = scmp.eq.s32.totalorder %s14, 1
    %p142 = scmp.ne.s32.totalorder %s137, %s139
    %p143 = scmp.eq.s32.totalorder %s14, 0
    %p144 = por %p142, %p143
    %p145 = scmp.ne.s32.totalorder %s137, %s139
    %p146 = scmp.eq.s32.totalorder %s19, 1
    %p147 = por %p145, %p146
    %p148 = scmp.ne.s32.totalorder %s139, %s140
    %p149 = scmp.eq.s32.totalorder %s19, 0
    %p150 = por %p148, %p149
    %p151 = scmp.ne.s32.totalorder %s139, %s140
    %p152 = scmp.eq.s32.totalorder %s20, 1
    %p153 = por %p151, %p152
    %p155 = scmp.ne.s32.totalorder %s140, %s154
    %p156 = scmp.eq.s32.totalorder %s20, 0
    %p157 = por %p155, %p156
    %s159 = sadd.s32 %s158, 1
    %p162 = scmp.eq.s32.totalorder %s14, 1
    %p163 = scmp.ne.s32.totalorder %s158, %s160
    %p164 = scmp.eq.s32.totalorder %s14, 0
    %p165 = por %p163, %p164
    %p166 = scmp.ne.s32.totalorder %s158, %s160
    %p167 = scmp.eq.s32.totalorder %s19, 1
    %p168 = por %p166, %p167
    %p169 = scmp.ne.s32.totalorder %s160, %s161
    %p170 = scmp.eq.s32.totalorder %s19, 0
    %p171 = por %p169, %p170
    %p172 = scmp.ne.s32.totalorder %s160, %s161
    %p173 = scmp.eq.s32.totalorder %s20, 1
    %p174 = por %p172, %p173
    %p176 = scmp.ne.s32.totalorder %s161, %s175
    %p177 = scmp.eq.s32.totalorder %s20, 0
    %p178 = por %p176, %p177
    %s180 = sadd.s32 %s179, 1
    %p183 = scmp.eq.s32.totalorder %s14, 1
    %p184 = scmp.ne.s32.totalorder %s179, %s181
    %p185 = scmp.eq.s32.totalorder %s14, 0
    %p186 = por %p184, %p185
    %p187 = scmp.ne.s32.totalorder %s179, %s181
    %p188 = scmp.eq.s32.totalorder %s19, 1
    %p189 = por %p187, %p188
    %p190 = scmp.ne.s32.totalorder %s181, %s182
    %p191 = scmp.eq.s32.totalorder %s19, 0
    %p192 = por %p190, %p191
    %p193 = scmp.ne.s32.totalorder %s181, %s182
    %p194 = scmp.eq.s32.totalorder %s20, 1
    %p195 = por %p193, %p194
    %p197 = scmp.ne.s32.totalorder %s182, %s196
    %p198 = scmp.eq.s32.totalorder %s20, 0
    %p199 = por %p197, %p198
    %s200 = ssub.s32 %s14, %s21
    %p201 = scmp.eq.s32.totalorder %s200, 0
    %s203 = sadd.s32 %s202, 1
    %s204 = scalar_select %p201, %s202, %s203
    %p207 = pneg %p201
    %p208 = scmp.eq.s32.totalorder %s14, 1
    %p209 = por %p207, %p208
    %p210 = scmp.ne.s32.totalorder %s202, %s205
    %p211 = scmp.eq.s32.totalorder %s14, 0
    %p212 = por %p210, %p211
    %p213 = scmp.ne.s32.totalorder %s202, %s205
    %p214 = scmp.eq.s32.totalorder %s19, 1
    %p215 = por %p213, %p214
    %p216 = scmp.ne.s32.totalorder %s205, %s206
    %p217 = scmp.eq.s32.totalorder %s19, 0
    %p218 = por %p216, %p217
    %p219 = scmp.ne.s32.totalorder %s205, %s206
    %p220 = scmp.eq.s32.totalorder %s20, 1
    %p221 = por %p219, %p220
    %p223 = scmp.ne.s32.totalorder %s206, %s222
    %p224 = scmp.eq.s32.totalorder %s20, 0
    %p225 = por %p223, %p224
    %p226 = scmp.le.s32.totalorder 1, %s14
    %p227 = scmp.lt.s32.totalorder %s14, 3
    %p228 = pnand %p226, %p227
    %p229 = pneg %p228
    // Predicated region
    $region9: #{rcan_block_forward.3} parent=5 // pred_check
      _
    $region10: #{rcan_block_forward.3} parent=5 // pred_check_branch
      %231 = sbr.rel (%p228) target = $region12
    $region11: #{rcan_block_forward.3} parent=5 // pred_region
      %s232 = ssub.s32 %s14, 1
      // Predicated region
      $region13: #{rcan_block_forward.3} parent=11 // pred_check
        %p233 = pneg %p87
      $region14: #{rcan_block_forward.3} parent=11 // pred_check_branch
        %235 = sbr.rel (%p233) target = $region16
      $region15: #{rcan_block_forward.3} parent=11 // pred_region
        _
      $region16: #{rcan_block_forward.3} parent=11 // pred_fallthru
        _
      // Predicated region
      $region17: #{rcan_block_forward.3} parent=11 // pred_check
        %p236 = pneg %p108
      $region18: #{rcan_block_forward.3} parent=11 // pred_check_branch
        %238 = sbr.rel (%p236) target = $region20
      $region19: #{rcan_block_forward.3} parent=11 // pred_region
        _
      $region20: #{rcan_block_forward.3} parent=11 // pred_fallthru
        _
      // Predicated region
      $region21: #{rcan_block_forward.3} parent=11 // pred_check
        %p239 = pneg %p129
      $region22: #{rcan_block_forward.3} parent=11 // pred_check_branch
        %241 = sbr.rel (%p239) target = $region24
      $region23: #{rcan_block_forward.3} parent=11 // pred_region
        _
      $region24: #{rcan_block_forward.3} parent=11 // pred_fallthru
        _
      // Predicated region
      $region25: #{rcan_block_forward.3} parent=11 // pred_check
        %p242 = pneg %p150
      $region26: #{rcan_block_forward.3} parent=11 // pred_check_branch
        %244 = sbr.rel (%p242) target = $region28
      $region27: #{rcan_block_forward.3} parent=11 // pred_region
        _
      $region28: #{rcan_block_forward.3} parent=11 // pred_fallthru
        _
      // Predicated region
      $region29: #{rcan_block_forward.3} parent=11 // pred_check
        %p245 = pneg %p171
      $region30: #{rcan_block_forward.3} parent=11 // pred_check_branch
        %247 = sbr.rel (%p245) target = $region32
      $region31: #{rcan_block_forward.3} parent=11 // pred_region
        _
      $region32: #{rcan_block_forward.3} parent=11 // pred_fallthru
        _
      // Predicated region
      $region33: #{rcan_block_forward.3} parent=11 // pred_check
        %p248 = pneg %p192
      $region34: #{rcan_block_forward.3} parent=11 // pred_check_branch
        %250 = sbr.rel (%p248) target = $region36
      $region35: #{rcan_block_forward.3} parent=11 // pred_region
        _
      $region36: #{rcan_block_forward.3} parent=11 // pred_fallthru
        _
    $region12: #{rcan_block_forward.3} parent=5 // pred_fallthru
      _
    %p251 = scmp.lt.s32.totalorder %s14, 2
    // Predicated region
    $region37: #{rcan_block_forward.3} parent=5 // pred_check
      %p252 = pneg %p251
    $region38: #{rcan_block_forward.3} parent=5 // pred_check_branch
      %254 = sbr.rel (%p252) target = $region40
    $region39: #{rcan_block_forward.3} parent=5 // pred_region
      // Predicated region
      $region41: #{rcan_block_forward.3} parent=39 // pred_check
        %p255 = pneg %p34
      $region42: #{rcan_block_forward.3} parent=39 // pred_check_branch
        %257 = sbr.rel (%p255) target = $region44
      $region43: #{rcan_block_forward.3} parent=39 // pred_region
        %p258 = scmp.lt.s32.totalorder %s14, 1
        %s259 = scalar_select %p258, %s14, 1
        %s260 = smul.addr %s259, 54
        %s261 = smul.addr %s260, 4
        %s262 = scalar_lea.vmem %s0, %s261
      $region44: #{rcan_block_forward.3} parent=39 // pred_fallthru
        _
      // Predicated region
      $region45: #{rcan_block_forward.3} parent=39 // pred_check
        %p263 = pneg %p60
      $region46: #{rcan_block_forward.3} parent=39 // pred_check_branch
        %265 = sbr.rel (%p263) target = $region48
      $region47: #{rcan_block_forward.3} parent=39 // pred_region
        %p266 = scmp.lt.s32.totalorder %s14, 1
        %s267 = scalar_select %p266, %s14, 1
        %s268 = smul.addr %s267, 32
        %s269 = smul.addr %s268, 8
        %s270 = scalar_lea.vmem %s1, %s269
      $region48: #{rcan_block_forward.3} parent=39 // pred_fallthru
        _
    $region40: #{rcan_block_forward.3} parent=5 // pred_fallthru
      _
    %p271 = scmp.le.s32.totalorder 1, %s14
    %p272 = scmp.lt.s32.totalorder %s14, 3
    %p273 = pnand %p271, %p272
    %p274 = pneg %p273
    // Predicated region
    $region49: #{rcan_block_forward.3} parent=5 // pred_check
      _
    $region50: #{rcan_block_forward.3} parent=5 // pred_check_branch
      %276 = sbr.rel (%p273) target = $region52
    $region51: #{rcan_block_forward.3} parent=5 // pred_region
      %s277 = ssub.s32 %s14, 1
      %p278 = scmp.lt.s32.totalorder %s19, 1
      %s279 = scalar_select %p278, %s19, 1
      %s280 = smul.addr %s279, 54
      %s281 = smul.addr %s280, 4
      %s282 = scalar_lea.vmem %s0, %s281
      %p283 = pneg %p40
      %p284 = pneg %p37
      %p285 = scmp.lt.s32.totalorder %s19, 1
      %s286 = scalar_select %p285, %s19, 1
      %s287 = smul.addr %s286, 32
      %s288 = smul.addr %s287, 8
      %s289 = scalar_lea.vmem %s1, %s288
      %p290 = pneg %p66
      %p291 = pneg %p63
      %p292 = pneg %p87
      %p293 = pneg %p84
      %p294 = pneg %p108
      %p295 = pneg %p105
      %p296 = pneg %p129
      %p297 = pneg %p126
      %p298 = pneg %p150
      %p299 = pneg %p147
      %p300 = pneg %p171
      %p301 = pneg %p168
      %p302 = pneg %p192
      %p303 = pneg %p189
      %p304 = pneg %p218
      %p305 = pneg %p215
      %p306 = scmp.lt.s32.totalorder %s19, 1
      %s307 = scalar_select %p306, %s19, 1
      %s308 = smul.addr %s307, 32
      %s309 = smul.addr %s308, 8
      %s310 = scalar_lea.vmem %s8, %s309
      %p311 = scmp.lt.s32.totalorder %s19, 1
      %s312 = scalar_select %p311, %s19, 1
      %s313 = smul.addr %s312, 54
      %s314 = smul.addr %s313, 4
      %s315 = scalar_lea.vmem %s0, %s314
      %p316 = scmp.lt.s32.totalorder %s19, 1
      %s317 = scalar_select %p316, %s19, 1
      %s318 = smul.addr %s317, 32
      %s319 = smul.addr %s318, 8
      %s320 = scalar_lea.vmem %s1, %s319
      %p321 = scmp.lt.s32.totalorder %s19, 1
      %s322 = scalar_select %p321, %s19, 1
      %s323 = smul.addr %s322, 32
      %s324 = smul.addr %s323, 8
      %s325 = scalar_lea.vmem %s8, %s324
      %v327 = vld [vmem:[%s315] sm:$0xf]
      %v328 = vld [vmem:[%s315 + $0x4] sm:$0xf]
      %v329 = vld [vmem:[%s315 + $0xc] sm:$0xf]
      %v330 = vld [vmem:[%s315 + $0x10] sm:$0xf]
      %v331 = vld [vmem:[%s315 + $0x18] sm:$0xf]
      %v332 = vld [vmem:[%s315 + $0x1c] sm:$0xf]
      %v333 = vld [vmem:[%s315 + $0x24] sm:$0xf]
      %v334 = vld [vmem:[%s315 + $0x28] sm:$0xf]
      %v335 = vld [vmem:[%s315 + $0x30] sm:$0xf]
      %v336 = vld [vmem:[%s315 + $0x34] sm:$0xf]
      %v337 = vld [vmem:[%s315 + $0x3c] sm:$0xf]
      %v338 = vld [vmem:[%s315 + $0x40] sm:$0xf]
      %v339 = vld [vmem:[%s315 + $0x48] sm:$0xf]
      %v340 = vld [vmem:[%s315 + $0x4c] sm:$0xf]
      %v341 = vld [vmem:[%s315 + $0x54] sm:$0xf]
      %v342 = vld [vmem:[%s315 + $0x58] sm:$0xf]
      %v343 = vld [vmem:[%s315 + $0x60] sm:$0xf]
      %v344 = vld [vmem:[%s315 + $0x64] sm:$0xf]
      %v345 = vld [vmem:[%s315 + $0x6c] sm:$0xf]
      %v346 = vld [vmem:[%s315 + $0x70] sm:$0xf]
      %v347 = vld [vmem:[%s315 + $0x78] sm:$0xf]
      %v348 = vld [vmem:[%s315 + $0x7c] sm:$0xf]
      %v349 = vld [vmem:[%s315 + $0x84] sm:$0xf]
      %v350 = vld [vmem:[%s315 + $0x88] sm:$0xf]
      %v351 = vld [vmem:[%s315 + $0x90] sm:$0xf]
      %v352 = vld [vmem:[%s315 + $0x94] sm:$0xf]
      %v353 = vld [vmem:[%s315 + $0x9c] sm:$0xf]
      %v354 = vld [vmem:[%s315 + $0xa0] sm:$0xf]
      %v355 = vld [vmem:[%s315 + $0xa8] sm:$0xf]
      %v356 = vld [vmem:[%s315 + $0xac] sm:$0xf]
      %v357 = vld [vmem:[%s315 + $0xb4] sm:$0xf]
      %v358 = vld [vmem:[%s315 + $0xb8] sm:$0xf]
      %v359 = vld [vmem:[%s2] sm:$0xf]
      %v360 = vld [vmem:[%s2 + $0x4] sm:$0xf]
      %v361 = vld [vmem:[%s2 + $0x8] sm:$0xf]
      %v362 = vld [vmem:[%s2 + $0xc] sm:$0xf]
      %v363 = vld [vmem:[%s2 + $0x10] sm:$0xf]
      %v364 = vld [vmem:[%s2 + $0x14] sm:$0xf]
      %v365 = vld [vmem:[%s2 + $0x18] sm:$0xf]
      %v366 = vld [vmem:[%s2 + $0x1c] sm:$0xf]
      %v367 = vld [vmem:[%s2 + $0x20] sm:$0xf]
      %v368 = vld [vmem:[%s2 + $0x24] sm:$0xf]
      %v369 = vld [vmem:[%s2 + $0x28] sm:$0xf]
      %v370 = vld [vmem:[%s2 + $0x2c] sm:$0xf]
      %v371 = vld [vmem:[%s2 + $0x30] sm:$0xf]
      %v372 = vld [vmem:[%s2 + $0x34] sm:$0xf]
      %v373 = vld [vmem:[%s2 + $0x38] sm:$0xf]
      %v374 = vld [vmem:[%s2 + $0x3c] sm:$0xf]
      %v375 = vld [vmem:[%s315 + $0x8] sm:$0x1]
      %v376 = vld [vmem:[%s315 + $0x14] sm:$0x1]
      %v377 = vld [vmem:[%s315 + $0x20] sm:$0x1]
      %v378 = vld [vmem:[%s315 + $0x2c] sm:$0x1]
      %v379 = vld [vmem:[%s315 + $0x38] sm:$0x1]
      %v380 = vld [vmem:[%s315 + $0x44] sm:$0x1]
      %v381 = vld [vmem:[%s315 + $0x50] sm:$0x1]
      %v382 = vld [vmem:[%s315 + $0x5c] sm:$0x1]
      %v383 = vld [vmem:[%s315 + $0x68] sm:$0x1]
      %v384 = vld [vmem:[%s315 + $0x74] sm:$0x1]
      %v385 = vld [vmem:[%s315 + $0x80] sm:$0x1]
      %v386 = vld [vmem:[%s315 + $0x8c] sm:$0x1]
      %v387 = vld [vmem:[%s315 + $0x98] sm:$0x1]
      %v388 = vld [vmem:[%s315 + $0xa4] sm:$0x1]
      %v389 = vld [vmem:[%s315 + $0xb0] sm:$0x1]
      %v390 = vld [vmem:[%s315 + $0xbc] sm:$0x1]
      %vm391 = vsmask.f32 3328
      %vm392 = vsmask.f32 7440
      %vm393 = vmor %vm391, %vm392
      %v395 = vshrl.u32 %v327, 16
      %v397 = vrot.slane %v395, 4
      %v398 = vshll.u32 %v327, 16
      %v400 = vrot.slane %v398, 5
      %v401 = vor.u32 %v397, %v400
      %v402 = vrot.slane %v401, 4
      %v404 = vshll.u32 %v328, 16
      %v406 = vrot.slane %v404, 5
      %v407 = vsel %vm393, %v402, %v406
      %v408 = vshrl.u32 %v328, 16
      %v410 = vrot.slane %v408, 4
      %v411 = vor.u32 %v410, %v406
      %v412 = vrot.slane %v411, 4
      %v414 = vshll.u32 %v375, 16
      %v416 = vrot.slane %v414, 5
      %v417 = vsel %vm393, %v412, %v416
      %v419 = vshrl.u32 %v329, 16
      %v421 = vrot.slane %v419, 4
      %v422 = vshll.u32 %v329, 16
      %v424 = vrot.slane %v422, 5
      %v425 = vor.u32 %v421, %v424
      %v426 = vrot.slane %v425, 4
      %v428 = vshll.u32 %v330, 16
      %v430 = vrot.slane %v428, 5
      %v431 = vsel %vm393, %v426, %v430
      %v432 = vshrl.u32 %v330, 16
      %v434 = vrot.slane %v432, 4
      %v435 = vor.u32 %v434, %v430
      %v436 = vrot.slane %v435, 4
      %v438 = vshll.u32 %v376, 16
      %v440 = vrot.slane %v438, 5
      %v441 = vsel %vm393, %v436, %v440
      %v443 = vshrl.u32 %v331, 16
      %v445 = vrot.slane %v443, 4
      %v446 = vshll.u32 %v331, 16
      %v448 = vrot.slane %v446, 5
      %v449 = vor.u32 %v445, %v448
      %v450 = vrot.slane %v449, 4
      %v452 = vshll.u32 %v332, 16
      %v454 = vrot.slane %v452, 5
      %v455 = vsel %vm393, %v450, %v454
      %v456 = vshrl.u32 %v332, 16
      %v458 = vrot.slane %v456, 4
      %v459 = vor.u32 %v458, %v454
      %v460 = vrot.slane %v459, 4
      %v462 = vshll.u32 %v377, 16
      %v464 = vrot.slane %v462, 5
      %v465 = vsel %vm393, %v460, %v464
      %v467 = vshrl.u32 %v333, 16
      %v469 = vrot.slane %v467, 4
      %v470 = vshll.u32 %v333, 16
      %v472 = vrot.slane %v470, 5
      %v473 = vor.u32 %v469, %v472
      %v474 = vrot.slane %v473, 4
      %v476 = vshll.u32 %v334, 16
      %v478 = vrot.slane %v476, 5
      %v479 = vsel %vm393, %v474, %v478
      %v480 = vshrl.u32 %v334, 16
      %v482 = vrot.slane %v480, 4
      %v483 = vor.u32 %v482, %v478
      %v484 = vrot.slane %v483, 4
      %v486 = vshll.u32 %v378, 16
      %v488 = vrot.slane %v486, 5
      %v489 = vsel %vm393, %v484, %v488
      %v491 = vshrl.u32 %v335, 16
      %v493 = vrot.slane %v491, 4
      %v494 = vshll.u32 %v335, 16
      %v496 = vrot.slane %v494, 5
      %v497 = vor.u32 %v493, %v496
      %v498 = vrot.slane %v497, 4
      %v500 = vshll.u32 %v336, 16
      %v502 = vrot.slane %v500, 5
      %v503 = vsel %vm393, %v498, %v502
      %v504 = vshrl.u32 %v336, 16
      %v506 = vrot.slane %v504, 4
      %v507 = vor.u32 %v506, %v502
      %v508 = vrot.slane %v507, 4
      %v510 = vshll.u32 %v379, 16
      %v512 = vrot.slane %v510, 5
      %v513 = vsel %vm393, %v508, %v512
      %v515 = vshrl.u32 %v337, 16
      %v517 = vrot.slane %v515, 4
      %v518 = vshll.u32 %v337, 16
      %v520 = vrot.slane %v518, 5
      %v521 = vor.u32 %v517, %v520
      %v522 = vrot.slane %v521, 4
      %v524 = vshll.u32 %v338, 16
      %v526 = vrot.slane %v524, 5
      %v527 = vsel %vm393, %v522, %v526
      %v528 = vshrl.u32 %v338, 16
      %v530 = vrot.slane %v528, 4
      %v531 = vor.u32 %v530, %v526
      %v532 = vrot.slane %v531, 4
      %v534 = vshll.u32 %v380, 16
      %v536 = vrot.slane %v534, 5
      %v537 = vsel %vm393, %v532, %v536
      %v539 = vshrl.u32 %v339, 16
      %v541 = vrot.slane %v539, 4
      %v542 = vshll.u32 %v339, 16
      %v544 = vrot.slane %v542, 5
      %v545 = vor.u32 %v541, %v544
      %v546 = vrot.slane %v545, 4
      %v548 = vshll.u32 %v340, 16
      %v550 = vrot.slane %v548, 5
      %v551 = vsel %vm393, %v546, %v550
      %v552 = vshrl.u32 %v340, 16
      %v554 = vrot.slane %v552, 4
      %v555 = vor.u32 %v554, %v550
      %v556 = vrot.slane %v555, 4
      %v558 = vshll.u32 %v381, 16
      %v560 = vrot.slane %v558, 5
      %v561 = vsel %vm393, %v556, %v560
      %v563 = vshrl.u32 %v341, 16
      %v565 = vrot.slane %v563, 4
      %v566 = vshll.u32 %v341, 16
      %v568 = vrot.slane %v566, 5
      %v569 = vor.u32 %v565, %v568
      %v570 = vrot.slane %v569, 4
      %v572 = vshll.u32 %v342, 16
      %v574 = vrot.slane %v572, 5
      %v575 = vsel %vm393, %v570, %v574
      %v576 = vshrl.u32 %v342, 16
      %v578 = vrot.slane %v576, 4
      %v579 = vor.u32 %v578, %v574
      %v580 = vrot.slane %v579, 4
      %v582 = vshll.u32 %v382, 16
      %v584 = vrot.slane %v582, 5
      %v585 = vsel %vm393, %v580, %v584
      %v587 = vshrl.u32 %v343, 16
      %v589 = vrot.slane %v587, 4
      %v590 = vshll.u32 %v343, 16
      %v592 = vrot.slane %v590, 5
      %v593 = vor.u32 %v589, %v592
      %v594 = vrot.slane %v593, 4
      %v596 = vshll.u32 %v344, 16
      %v598 = vrot.slane %v596, 5
      %v599 = vsel %vm393, %v594, %v598
      %v600 = vshrl.u32 %v344, 16
      %v602 = vrot.slane %v600, 4
      %v603 = vor.u32 %v602, %v598
      %v604 = vrot.slane %v603, 4
      %v606 = vshll.u32 %v383, 16
      %v608 = vrot.slane %v606, 5
      %v609 = vsel %vm393, %v604, %v608
      %v611 = vshrl.u32 %v345, 16
      %v613 = vrot.slane %v611, 4
      %v614 = vshll.u32 %v345, 16
      %v616 = vrot.slane %v614, 5
      %v617 = vor.u32 %v613, %v616
      %v618 = vrot.slane %v617, 4
      %v620 = vshll.u32 %v346, 16
      %v622 = vrot.slane %v620, 5
      %v623 = vsel %vm393, %v618, %v622
      %v624 = vshrl.u32 %v346, 16
      %v626 = vrot.slane %v624, 4
      %v627 = vor.u32 %v626, %v622
      %v628 = vrot.slane %v627, 4
      %v630 = vshll.u32 %v384, 16
      %v632 = vrot.slane %v630, 5
      %v633 = vsel %vm393, %v628, %v632
      %v635 = vshrl.u32 %v347, 16
      %v637 = vrot.slane %v635, 4
      %v638 = vshll.u32 %v347, 16
      %v640 = vrot.slane %v638, 5
      %v641 = vor.u32 %v637, %v640
      %v642 = vrot.slane %v641, 4
      %v644 = vshll.u32 %v348, 16
      %v646 = vrot.slane %v644, 5
      %v647 = vsel %vm393, %v642, %v646
      %v648 = vshrl.u32 %v348, 16
      %v650 = vrot.slane %v648, 4
      %v651 = vor.u32 %v650, %v646
      %v652 = vrot.slane %v651, 4
      %v654 = vshll.u32 %v385, 16
      %v656 = vrot.slane %v654, 5
      %v657 = vsel %vm393, %v652, %v656
      %v659 = vshrl.u32 %v349, 16
      %v661 = vrot.slane %v659, 4
      %v662 = vshll.u32 %v349, 16
      %v664 = vrot.slane %v662, 5
      %v665 = vor.u32 %v661, %v664
      %v666 = vrot.slane %v665, 4
      %v668 = vshll.u32 %v350, 16
      %v670 = vrot.slane %v668, 5
      %v671 = vsel %vm393, %v666, %v670
      %v672 = vshrl.u32 %v350, 16
      %v674 = vrot.slane %v672, 4
      %v675 = vor.u32 %v674, %v670
      %v676 = vrot.slane %v675, 4
      %v678 = vshll.u32 %v386, 16
      %v680 = vrot.slane %v678, 5
      %v681 = vsel %vm393, %v676, %v680
      %v683 = vshrl.u32 %v351, 16
      %v685 = vrot.slane %v683, 4
      %v686 = vshll.u32 %v351, 16
      %v688 = vrot.slane %v686, 5
      %v689 = vor.u32 %v685, %v688
      %v690 = vrot.slane %v689, 4
      %v692 = vshll.u32 %v352, 16
      %v694 = vrot.slane %v692, 5
      %v695 = vsel %vm393, %v690, %v694
      %v696 = vshrl.u32 %v352, 16
      %v698 = vrot.slane %v696, 4
      %v699 = vor.u32 %v698, %v694
      %v700 = vrot.slane %v699, 4
      %v702 = vshll.u32 %v387, 16
      %v704 = vrot.slane %v702, 5
      %v705 = vsel %vm393, %v700, %v704
      %v707 = vshrl.u32 %v353, 16
      %v709 = vrot.slane %v707, 4
      %v710 = vshll.u32 %v353, 16
      %v712 = vrot.slane %v710, 5
      %v713 = vor.u32 %v709, %v712
      %v714 = vrot.slane %v713, 4
      %v716 = vshll.u32 %v354, 16
      %v718 = vrot.slane %v716, 5
      %v719 = vsel %vm393, %v714, %v718
      %v720 = vshrl.u32 %v354, 16
      %v722 = vrot.slane %v720, 4
      %v723 = vor.u32 %v722, %v718
      %v724 = vrot.slane %v723, 4
      %v726 = vshll.u32 %v388, 16
      %v728 = vrot.slane %v726, 5
      %v729 = vsel %vm393, %v724, %v728
      %v731 = vshrl.u32 %v355, 16
      %v733 = vrot.slane %v731, 4
      %v734 = vshll.u32 %v355, 16
      %v736 = vrot.slane %v734, 5
      %v737 = vor.u32 %v733, %v736
      %v738 = vrot.slane %v737, 4
      %v740 = vshll.u32 %v356, 16
      %v742 = vrot.slane %v740, 5
      %v743 = vsel %vm393, %v738, %v742
      %v744 = vshrl.u32 %v356, 16
      %v746 = vrot.slane %v744, 4
      %v747 = vor.u32 %v746, %v742
      %v748 = vrot.slane %v747, 4
      %v750 = vshll.u32 %v389, 16
      %v752 = vrot.slane %v750, 5
      %v753 = vsel %vm393, %v748, %v752
      %v755 = vshrl.u32 %v357, 16
      %v757 = vrot.slane %v755, 4
      %v758 = vshll.u32 %v357, 16
      %v760 = vrot.slane %v758, 5
      %v761 = vor.u32 %v757, %v760
      %v762 = vrot.slane %v761, 4
      %v764 = vshll.u32 %v358, 16
      %v766 = vrot.slane %v764, 5
      %v767 = vsel %vm393, %v762, %v766
      %v768 = vshrl.u32 %v358, 16
      %v770 = vrot.slane %v768, 4
      %v771 = vor.u32 %v770, %v766
      %v772 = vrot.slane %v771, 4
      %v774 = vshll.u32 %v390, 16
      %v776 = vrot.slane %v774, 5
      %v777 = vsel %vm393, %v772, %v776
      %s778 = scalar_lea.vmem %s2, 64
      %v779 = vld [vmem:[%s778] sm:$0xf]
      %v780 = vld [vmem:[%s778 + $0x4] sm:$0xf]
      %v781 = vld [vmem:[%s778 + $0x8] sm:$0xf]
      %v782 = vld [vmem:[%s778 + $0xc] sm:$0xf]
      %v783 = vld [vmem:[%s778 + $0x10] sm:$0xf]
      %v784 = vld [vmem:[%s778 + $0x14] sm:$0xf]
      %v785 = vld [vmem:[%s778 + $0x18] sm:$0xf]
      %v786 = vld [vmem:[%s778 + $0x1c] sm:$0xf]
      %v787 = vld [vmem:[%s778 + $0x20] sm:$0xf]
      %v788 = vld [vmem:[%s778 + $0x24] sm:$0xf]
      %v789 = vld [vmem:[%s778 + $0x28] sm:$0xf]
      %v790 = vld [vmem:[%s778 + $0x2c] sm:$0xf]
      %v791 = vld [vmem:[%s778 + $0x30] sm:$0xf]
      %v792 = vld [vmem:[%s778 + $0x34] sm:$0xf]
      %v793 = vld [vmem:[%s778 + $0x38] sm:$0xf]
      %v794 = vld [vmem:[%s778 + $0x3c] sm:$0xf]
      %v795 = vunpack.c.l.b16 %v407
      %v796 = vunpack.c.l.b16 %v417
      %v797 = vunpack.c.l.b16 %v431
      %v798 = vunpack.c.l.b16 %v441
      %v799 = vunpack.c.l.b16 %v455
      %v800 = vunpack.c.l.b16 %v465
      %v801 = vunpack.c.l.b16 %v479
      %v802 = vunpack.c.l.b16 %v489
      %v803 = vunpack.c.l.b16 %v503
      %v804 = vunpack.c.l.b16 %v513
      %v805 = vunpack.c.l.b16 %v527
      %v806 = vunpack.c.l.b16 %v537
      %v807 = vunpack.c.l.b16 %v551
      %v808 = vunpack.c.l.b16 %v561
      %v809 = vunpack.c.l.b16 %v575
      %v810 = vunpack.c.l.b16 %v585
      %v811 = vunpack.c.l.b16 %v599
      %v812 = vunpack.c.l.b16 %v609
      %v813 = vunpack.c.l.b16 %v623
      %v814 = vunpack.c.l.b16 %v633
      %v815 = vunpack.c.l.b16 %v647
      %v816 = vunpack.c.l.b16 %v657
      %v817 = vunpack.c.l.b16 %v671
      %v818 = vunpack.c.l.b16 %v681
      %v819 = vunpack.c.l.b16 %v695
      %v820 = vunpack.c.l.b16 %v705
      %v821 = vunpack.c.l.b16 %v719
      %v822 = vunpack.c.l.b16 %v729
      %v823 = vunpack.c.l.b16 %v743
      %v824 = vunpack.c.l.b16 %v753
      %v825 = vunpack.c.l.b16 %v767
      %v826 = vunpack.c.l.b16 %v777
      %v827 = vpack.c.b16 %v796, %v795
      %v828 = vpack.c.b16 %v798, %v797
      %v829 = vpack.c.b16 %v800, %v799
      %v830 = vpack.c.b16 %v802, %v801
      %v831 = vpack.c.b16 %v804, %v803
      %v832 = vpack.c.b16 %v806, %v805
      %v833 = vpack.c.b16 %v808, %v807
      %v834 = vpack.c.b16 %v810, %v809
      %v835 = vpack.c.b16 %v812, %v811
      %v836 = vpack.c.b16 %v814, %v813
      %v837 = vpack.c.b16 %v816, %v815
      %v838 = vpack.c.b16 %v818, %v817
      %v839 = vpack.c.b16 %v820, %v819
      %v840 = vpack.c.b16 %v822, %v821
      %v841 = vpack.c.b16 %v824, %v823
      %v842 = vpack.c.b16 %v826, %v825
      %v875 = vunpack.c.l.b16 %v779
      %v876 = vunpack.c.l.b16 %v780
      %v877 = vunpack.c.l.b16 %v781
      %v878 = vunpack.c.l.b16 %v782
      %v879 = vunpack.c.l.b16 %v783
      %v880 = vunpack.c.l.b16 %v784
      %v881 = vunpack.c.l.b16 %v785
      %v882 = vunpack.c.l.b16 %v786
      %v883 = vunpack.c.l.b16 %v787
      %v884 = vunpack.c.l.b16 %v788
      %v885 = vunpack.c.l.b16 %v789
      %v886 = vunpack.c.l.b16 %v790
      %v887 = vunpack.c.l.b16 %v791
      %v888 = vunpack.c.l.b16 %v792
      %v889 = vunpack.c.l.b16 %v793
      %v890 = vunpack.c.l.b16 %v794
      %v891 = vpack.c.b16 %v876, %v875
      %v892 = vpack.c.b16 %v878, %v877
      %v893 = vpack.c.b16 %v880, %v879
      %v894 = vpack.c.b16 %v882, %v881
      %v895 = vpack.c.b16 %v884, %v883
      %v896 = vpack.c.b16 %v886, %v885
      %v897 = vpack.c.b16 %v888, %v887
      %v898 = vpack.c.b16 %v890, %v889
      %907 = vmatprep.subr.bf16.mxu0 0
      %908 = vmatpush1.bf16.msra.mxu0 %v898
      %909 = vmatprep.subr.bf16.mxu0 0
      %910 = vmatpush1.bf16.msra.mxu0 %v897
      %911 = vmatprep.subr.bf16.mxu0 0
      %912 = vmatpush1.bf16.msra.mxu0 %v896
      %913 = vmatprep.subr.bf16.mxu0 0
      %914 = vmatpush1.bf16.msra.mxu0 %v895
      %915 = vmatprep.subr.bf16.mxu0 0
      %916 = vmatpush1.bf16.msra.mxu0 %v894
      %917 = vmatprep.subr.bf16.mxu0 0
      %918 = vmatpush1.bf16.msra.mxu0 %v893
      %919 = vmatprep.subr.bf16.mxu0 0
      %920 = vmatpush1.bf16.msra.mxu0 %v892
      %921 = vmatprep.subr.bf16.mxu0 0
      %922 = vmatpush1.bf16.msra.mxu0 %v891
      %923 = vmatprep.subr.bf16.mxu0 0
      %924 = vmatpush2.bf16.msra.mxu0 0
      %925 = vmatprep.subr.bf16.mxu0 0
      %926 = vmatpush2.bf16.msra.mxu0 0
      %927 = vmatprep.subr.bf16.mxu0 0
      %928 = vmatpush2.bf16.msra.mxu0 0
      %929 = vmatprep.subr.bf16.mxu0 0
      %930 = vmatpush2.bf16.msra.mxu0 0
      %931 = vmatprep.subr.bf16.mxu0 0
      %932 = vmatpush2.bf16.msra.mxu0 0
      %933 = vmatprep.subr.bf16.mxu0 0
      %934 = vmatpush2.bf16.msra.mxu0 0
      %935 = vmatprep.subr.bf16.mxu0 0
      %936 = vmatpush2.bf16.msra.mxu0 0
      %937 = vmatprep.subr.bf16.mxu0 0
      %938 = vmatpush2.bf16.msra.mxu0 0
      %939 = vmatprep.mubr.bf16.mxu0 0
      %940 = vmatmul.mubr.bf16.gmra.mxu0 %v827
      %v941 = vpop.f32.mrf.mxu0
      %v942 = vadd.f32 0.0, %v941
      %v943 = vpop.f32.mrf.mxu0
      %v944 = vpop.f32.mrf.mxu0
      %v945 = vadd.f32 0.0, %v944
      %v946 = vpop.f32.mrf.mxu0
      %947 = vmatprep.mubr.bf16.mxu0 0
      %948 = vmatmul.mubr.bf16.gmra.mxu0 %v828
      %v949 = vpop.f32.mrf.mxu0
      %v950 = vadd.f32 0.0, %v949
      %v951 = vpop.f32.mrf.mxu0
      %v952 = vpop.f32.mrf.mxu0
      %v953 = vadd.f32 0.0, %v952
      %v954 = vpop.f32.mrf.mxu0
      %955 = vmatprep.mubr.bf16.mxu0 0
      %956 = vmatmul.mubr.bf16.gmra.mxu0 %v829
      %v957 = vpop.f32.mrf.mxu0
      %v958 = vadd.f32 0.0, %v957
      %v959 = vpop.f32.mrf.mxu0
      %v960 = vpop.f32.mrf.mxu0
      %v961 = vadd.f32 0.0, %v960
      %v962 = vpop.f32.mrf.mxu0
      %963 = vmatprep.mubr.bf16.mxu0 0
      %964 = vmatmul.mubr.bf16.gmra.mxu0 %v830
      %v965 = vpop.f32.mrf.mxu0
      %v966 = vadd.f32 0.0, %v965
      %v967 = vpop.f32.mrf.mxu0
      %v968 = vpop.f32.mrf.mxu0
      %v969 = vadd.f32 0.0, %v968
      %v970 = vpop.f32.mrf.mxu0
      %971 = vmatprep.mubr.bf16.mxu0 0
      %972 = vmatmul.mubr.bf16.gmra.mxu0 %v831
      %v973 = vpop.f32.mrf.mxu0
      %v974 = vadd.f32 0.0, %v973
      %v975 = vpop.f32.mrf.mxu0
      %v976 = vpop.f32.mrf.mxu0
      %v977 = vadd.f32 0.0, %v976
      %v978 = vpop.f32.mrf.mxu0
      %979 = vmatprep.mubr.bf16.mxu0 0
      %980 = vmatmul.mubr.bf16.gmra.mxu0 %v832
      %v981 = vpop.f32.mrf.mxu0
      %v982 = vadd.f32 0.0, %v981
      %v983 = vpop.f32.mrf.mxu0
      %v984 = vpop.f32.mrf.mxu0
      %v985 = vadd.f32 0.0, %v984
      %v986 = vpop.f32.mrf.mxu0
      %987 = vmatprep.mubr.bf16.mxu0 0
      %988 = vmatmul.mubr.bf16.gmra.mxu0 %v833
      %v989 = vpop.f32.mrf.mxu0
      %v990 = vadd.f32 0.0, %v989
      %v991 = vpop.f32.mrf.mxu0
      %v992 = vpop.f32.mrf.mxu0
      %v993 = vadd.f32 0.0, %v992
      %v994 = vpop.f32.mrf.mxu0
      %995 = vmatprep.mubr.bf16.mxu0 0
      %996 = vmatmul.mubr.bf16.gmra.mxu0 %v834
      %v997 = vpop.f32.mrf.mxu0
      %v998 = vadd.f32 0.0, %v997
      %v999 = vpop.f32.mrf.mxu0
      %v1000 = vpop.f32.mrf.mxu0
      %v1001 = vadd.f32 0.0, %v1000
      %v1002 = vpop.f32.mrf.mxu0
      %1003 = vmatprep.mubr.bf16.mxu0 0
      %1004 = vmatmul.mubr.bf16.gmra.mxu0 %v835
      %v1005 = vpop.f32.mrf.mxu0
      %v1006 = vadd.f32 0.0, %v1005
      %v1007 = vpop.f32.mrf.mxu0
      %v1008 = vpop.f32.mrf.mxu0
      %v1009 = vadd.f32 0.0, %v1008
      %v1010 = vpop.f32.mrf.mxu0
      %1011 = vmatprep.mubr.bf16.mxu0 0
      %1012 = vmatmul.mubr.bf16.gmra.mxu0 %v836
      %v1013 = vpop.f32.mrf.mxu0
      %v1014 = vadd.f32 0.0, %v1013
      %v1015 = vpop.f32.mrf.mxu0
      %v1016 = vpop.f32.mrf.mxu0
      %v1017 = vadd.f32 0.0, %v1016
      %v1018 = vpop.f32.mrf.mxu0
      %1019 = vmatprep.mubr.bf16.mxu0 0
      %1020 = vmatmul.mubr.bf16.gmra.mxu0 %v837
      %v1021 = vpop.f32.mrf.mxu0
      %v1022 = vadd.f32 0.0, %v1021
      %v1023 = vpop.f32.mrf.mxu0
      %v1024 = vpop.f32.mrf.mxu0
      %v1025 = vadd.f32 0.0, %v1024
      %v1026 = vpop.f32.mrf.mxu0
      %1027 = vmatprep.mubr.bf16.mxu0 0
      %1028 = vmatmul.mubr.bf16.gmra.mxu0 %v838
      %v1029 = vpop.f32.mrf.mxu0
      %v1030 = vadd.f32 0.0, %v1029
      %v1031 = vpop.f32.mrf.mxu0
      %v1032 = vpop.f32.mrf.mxu0
      %v1033 = vadd.f32 0.0, %v1032
      %v1034 = vpop.f32.mrf.mxu0
      %1035 = vmatprep.mubr.bf16.mxu0 0
      %1036 = vmatmul.mubr.bf16.gmra.mxu0 %v839
      %v1037 = vpop.f32.mrf.mxu0
      %v1038 = vadd.f32 0.0, %v1037
      %v1039 = vpop.f32.mrf.mxu0
      %v1040 = vpop.f32.mrf.mxu0
      %v1041 = vadd.f32 0.0, %v1040
      %v1042 = vpop.f32.mrf.mxu0
      %1043 = vmatprep.mubr.bf16.mxu0 0
      %1044 = vmatmul.mubr.bf16.gmra.mxu0 %v840
      %v1045 = vpop.f32.mrf.mxu0
      %v1046 = vadd.f32 0.0, %v1045
      %v1047 = vpop.f32.mrf.mxu0
      %v1048 = vpop.f32.mrf.mxu0
      %v1049 = vadd.f32 0.0, %v1048
      %v1050 = vpop.f32.mrf.mxu0
      %1051 = vmatprep.mubr.bf16.mxu0 0
      %1052 = vmatmul.mubr.bf16.gmra.mxu0 %v841
      %v1053 = vpop.f32.mrf.mxu0
      %v1054 = vadd.f32 0.0, %v1053
      %v1055 = vpop.f32.mrf.mxu0
      %v1056 = vpop.f32.mrf.mxu0
      %v1057 = vadd.f32 0.0, %v1056
      %v1058 = vpop.f32.mrf.mxu0
      %1059 = vmatprep.mubr.bf16.mxu0 0
      %1060 = vmatmul.mubr.bf16.gmra.mxu0 %v842
      %v1061 = vpop.f32.mrf.mxu0
      %v1062 = vadd.f32 0.0, %v1061
      %v1063 = vpop.f32.mrf.mxu0
      %v1064 = vpop.f32.mrf.mxu0
      %v1065 = vadd.f32 0.0, %v1064
      %v1066 = vpop.f32.mrf.mxu0
      %1067 = vdwg.mxu0
      %v1100 = vunpack.c.l.b16 %v327
      %v1101 = vunpack.c.l.b16 %v328
      %v1102 = vunpack.c.l.b16 %v329
      %v1103 = vunpack.c.l.b16 %v330
      %v1104 = vunpack.c.l.b16 %v331
      %v1105 = vunpack.c.l.b16 %v332
      %v1106 = vunpack.c.l.b16 %v333
      %v1107 = vunpack.c.l.b16 %v334
      %v1108 = vunpack.c.l.b16 %v335
      %v1109 = vunpack.c.l.b16 %v336
      %v1110 = vunpack.c.l.b16 %v337
      %v1111 = vunpack.c.l.b16 %v338
      %v1112 = vunpack.c.l.b16 %v339
      %v1113 = vunpack.c.l.b16 %v340
      %v1114 = vunpack.c.l.b16 %v341
      %v1115 = vunpack.c.l.b16 %v342
      %v1116 = vunpack.c.l.b16 %v343
      %v1117 = vunpack.c.l.b16 %v344
      %v1118 = vunpack.c.l.b16 %v345
      %v1119 = vunpack.c.l.b16 %v346
      %v1120 = vunpack.c.l.b16 %v347
      %v1121 = vunpack.c.l.b16 %v348
      %v1122 = vunpack.c.l.b16 %v349
      %v1123 = vunpack.c.l.b16 %v350
      %v1124 = vunpack.c.l.b16 %v351
      %v1125 = vunpack.c.l.b16 %v352
      %v1126 = vunpack.c.l.b16 %v353
      %v1127 = vunpack.c.l.b16 %v354
      %v1128 = vunpack.c.l.b16 %v355
      %v1129 = vunpack.c.l.b16 %v356
      %v1130 = vunpack.c.l.b16 %v357
      %v1131 = vunpack.c.l.b16 %v358
      %v1132 = vpack.c.b16 %v1101, %v1100
      %v1133 = vpack.c.b16 %v1103, %v1102
      %v1134 = vpack.c.b16 %v1105, %v1104
      %v1135 = vpack.c.b16 %v1107, %v1106
      %v1136 = vpack.c.b16 %v1109, %v1108
      %v1137 = vpack.c.b16 %v1111, %v1110
      %v1138 = vpack.c.b16 %v1113, %v1112
      %v1139 = vpack.c.b16 %v1115, %v1114
      %v1140 = vpack.c.b16 %v1117, %v1116
      %v1141 = vpack.c.b16 %v1119, %v1118
      %v1142 = vpack.c.b16 %v1121, %v1120
      %v1143 = vpack.c.b16 %v1123, %v1122
      %v1144 = vpack.c.b16 %v1125, %v1124
      %v1145 = vpack.c.b16 %v1127, %v1126
      %v1146 = vpack.c.b16 %v1129, %v1128
      %v1147 = vpack.c.b16 %v1131, %v1130
      %v1180 = vunpack.c.l.b16 %v359
      %v1181 = vunpack.c.l.b16 %v360
      %v1182 = vunpack.c.l.b16 %v361
      %v1183 = vunpack.c.l.b16 %v362
      %v1184 = vunpack.c.l.b16 %v363
      %v1185 = vunpack.c.l.b16 %v364
      %v1186 = vunpack.c.l.b16 %v365
      %v1187 = vunpack.c.l.b16 %v366
      %v1188 = vunpack.c.l.b16 %v367
      %v1189 = vunpack.c.l.b16 %v368
      %v1190 = vunpack.c.l.b16 %v369
      %v1191 = vunpack.c.l.b16 %v370
      %v1192 = vunpack.c.l.b16 %v371
      %v1193 = vunpack.c.l.b16 %v372
      %v1194 = vunpack.c.l.b16 %v373
      %v1195 = vunpack.c.l.b16 %v374
      %v1196 = vpack.c.b16 %v1181, %v1180
      %v1197 = vpack.c.b16 %v1183, %v1182
      %v1198 = vpack.c.b16 %v1185, %v1184
      %v1199 = vpack.c.b16 %v1187, %v1186
      %v1200 = vpack.c.b16 %v1189, %v1188
      %v1201 = vpack.c.b16 %v1191, %v1190
      %v1202 = vpack.c.b16 %v1193, %v1192
      %v1203 = vpack.c.b16 %v1195, %v1194
      %1212 = vmatprep.subr.bf16.mxu0 0
      %1213 = vmatpush1.bf16.msra.mxu0 %v1203
      %1214 = vmatprep.subr.bf16.mxu0 0
      %1215 = vmatpush1.bf16.msra.mxu0 %v1202
      %1216 = vmatprep.subr.bf16.mxu0 0
      %1217 = vmatpush1.bf16.msra.mxu0 %v1201
      %1218 = vmatprep.subr.bf16.mxu0 0
      %1219 = vmatpush1.bf16.msra.mxu0 %v1200
      %1220 = vmatprep.subr.bf16.mxu0 0
      %1221 = vmatpush1.bf16.msra.mxu0 %v1199
      %1222 = vmatprep.subr.bf16.mxu0 0
      %1223 = vmatpush1.bf16.msra.mxu0 %v1198
      %1224 = vmatprep.subr.bf16.mxu0 0
      %1225 = vmatpush1.bf16.msra.mxu0 %v1197
      %1226 = vmatprep.subr.bf16.mxu0 0
      %1227 = vmatpush1.bf16.msra.mxu0 %v1196
      %1228 = vmatprep.subr.bf16.mxu0 0
      %1229 = vmatpush2.bf16.msra.mxu0 0
      %1230 = vmatprep.subr.bf16.mxu0 0
      %1231 = vmatpush2.bf16.msra.mxu0 0
      %1232 = vmatprep.subr.bf16.mxu0 0
      %1233 = vmatpush2.bf16.msra.mxu0 0
      %1234 = vmatprep.subr.bf16.mxu0 0
      %1235 = vmatpush2.bf16.msra.mxu0 0
      %1236 = vmatprep.subr.bf16.mxu0 0
      %1237 = vmatpush2.bf16.msra.mxu0 0
      %1238 = vmatprep.subr.bf16.mxu0 0
      %1239 = vmatpush2.bf16.msra.mxu0 0
      %1240 = vmatprep.subr.bf16.mxu0 0
      %1241 = vmatpush2.bf16.msra.mxu0 0
      %1242 = vmatprep.subr.bf16.mxu0 0
      %1243 = vmatpush2.bf16.msra.mxu0 0
      %1244 = vmatprep.mubr.bf16.mxu0 0
      %1245 = vmatmul.mubr.bf16.gmra.mxu0 %v1132
      %v1246 = vpop.f32.mrf.mxu0
      %v1247 = vadd.f32 %v942, %v1246
      %v1248 = vpop.f32.mrf.mxu0
      %v1249 = vpop.f32.mrf.mxu0
      %v1250 = vadd.f32 %v945, %v1249
      %v1251 = vpop.f32.mrf.mxu0
      %1252 = vmatprep.mubr.bf16.mxu0 0
      %1253 = vmatmul.mubr.bf16.gmra.mxu0 %v1133
      %v1254 = vpop.f32.mrf.mxu0
      %v1255 = vadd.f32 %v950, %v1254
      %v1256 = vpop.f32.mrf.mxu0
      %v1257 = vpop.f32.mrf.mxu0
      %v1258 = vadd.f32 %v953, %v1257
      %v1259 = vpop.f32.mrf.mxu0
      %1260 = vmatprep.mubr.bf16.mxu0 0
      %1261 = vmatmul.mubr.bf16.gmra.mxu0 %v1134
      %v1262 = vpop.f32.mrf.mxu0
      %v1263 = vadd.f32 %v958, %v1262
      %v1264 = vpop.f32.mrf.mxu0
      %v1265 = vpop.f32.mrf.mxu0
      %v1266 = vadd.f32 %v961, %v1265
      %v1267 = vpop.f32.mrf.mxu0
      %1268 = vmatprep.mubr.bf16.mxu0 0
      %1269 = vmatmul.mubr.bf16.gmra.mxu0 %v1135
      %v1270 = vpop.f32.mrf.mxu0
      %v1271 = vadd.f32 %v966, %v1270
      %v1272 = vpop.f32.mrf.mxu0
      %v1273 = vpop.f32.mrf.mxu0
      %v1274 = vadd.f32 %v969, %v1273
      %v1275 = vpop.f32.mrf.mxu0
      %1276 = vmatprep.mubr.bf16.mxu0 0
      %1277 = vmatmul.mubr.bf16.gmra.mxu0 %v1136
      %v1278 = vpop.f32.mrf.mxu0
      %v1279 = vadd.f32 %v974, %v1278
      %v1280 = vpop.f32.mrf.mxu0
      %v1281 = vpop.f32.mrf.mxu0
      %v1282 = vadd.f32 %v977, %v1281
      %v1283 = vpop.f32.mrf.mxu0
      %1284 = vmatprep.mubr.bf16.mxu0 0
      %1285 = vmatmul.mubr.bf16.gmra.mxu0 %v1137
      %v1286 = vpop.f32.mrf.mxu0
      %v1287 = vadd.f32 %v982, %v1286
      %v1288 = vpop.f32.mrf.mxu0
      %v1289 = vpop.f32.mrf.mxu0
      %v1290 = vadd.f32 %v985, %v1289
      %v1291 = vpop.f32.mrf.mxu0
      %1292 = vmatprep.mubr.bf16.mxu0 0
      %1293 = vmatmul.mubr.bf16.gmra.mxu0 %v1138
      %v1294 = vpop.f32.mrf.mxu0
      %v1295 = vadd.f32 %v990, %v1294
      %v1296 = vpop.f32.mrf.mxu0
      %v1297 = vpop.f32.mrf.mxu0
      %v1298 = vadd.f32 %v993, %v1297
      %v1299 = vpop.f32.mrf.mxu0
      %1300 = vmatprep.mubr.bf16.mxu0 0
      %1301 = vmatmul.mubr.bf16.gmra.mxu0 %v1139
      %v1302 = vpop.f32.mrf.mxu0
      %v1303 = vadd.f32 %v998, %v1302
      %v1304 = vpop.f32.mrf.mxu0
      %v1305 = vpop.f32.mrf.mxu0
      %v1306 = vadd.f32 %v1001, %v1305
      %v1307 = vpop.f32.mrf.mxu0
      %1308 = vmatprep.mubr.bf16.mxu0 0
      %1309 = vmatmul.mubr.bf16.gmra.mxu0 %v1140
      %v1310 = vpop.f32.mrf.mxu0
      %v1311 = vadd.f32 %v1006, %v1310
      %v1312 = vpop.f32.mrf.mxu0
      %v1313 = vpop.f32.mrf.mxu0
      %v1314 = vadd.f32 %v1009, %v1313
      %v1315 = vpop.f32.mrf.mxu0
      %1316 = vmatprep.mubr.bf16.mxu0 0
      %1317 = vmatmul.mubr.bf16.gmra.mxu0 %v1141
      %v1318 = vpop.f32.mrf.mxu0
      %v1319 = vadd.f32 %v1014, %v1318
      %v1320 = vpop.f32.mrf.mxu0
      %v1321 = vpop.f32.mrf.mxu0
      %v1322 = vadd.f32 %v1017, %v1321
      %v1323 = vpop.f32.mrf.mxu0
      %1324 = vmatprep.mubr.bf16.mxu0 0
      %1325 = vmatmul.mubr.bf16.gmra.mxu0 %v1142
      %v1326 = vpop.f32.mrf.mxu0
      %v1327 = vadd.f32 %v1022, %v1326
      %v1328 = vpop.f32.mrf.mxu0
      %v1329 = vpop.f32.mrf.mxu0
      %v1330 = vadd.f32 %v1025, %v1329
      %v1331 = vpop.f32.mrf.mxu0
      %1332 = vmatprep.mubr.bf16.mxu0 0
      %1333 = vmatmul.mubr.bf16.gmra.mxu0 %v1143
      %v1334 = vpop.f32.mrf.mxu0
      %v1335 = vadd.f32 %v1030, %v1334
      %v1336 = vpop.f32.mrf.mxu0
      %v1337 = vpop.f32.mrf.mxu0
      %v1338 = vadd.f32 %v1033, %v1337
      %v1339 = vpop.f32.mrf.mxu0
      %1340 = vmatprep.mubr.bf16.mxu0 0
      %1341 = vmatmul.mubr.bf16.gmra.mxu0 %v1144
      %v1342 = vpop.f32.mrf.mxu0
      %v1343 = vadd.f32 %v1038, %v1342
      %v1344 = vpop.f32.mrf.mxu0
      %v1345 = vpop.f32.mrf.mxu0
      %v1346 = vadd.f32 %v1041, %v1345
      %v1347 = vpop.f32.mrf.mxu0
      %1348 = vmatprep.mubr.bf16.mxu0 0
      %1349 = vmatmul.mubr.bf16.gmra.mxu0 %v1145
      %v1350 = vpop.f32.mrf.mxu0
      %v1351 = vadd.f32 %v1046, %v1350
      %v1352 = vpop.f32.mrf.mxu0
      %v1353 = vpop.f32.mrf.mxu0
      %v1354 = vadd.f32 %v1049, %v1353
      %v1355 = vpop.f32.mrf.mxu0
      %1356 = vmatprep.mubr.bf16.mxu0 0
      %1357 = vmatmul.mubr.bf16.gmra.mxu0 %v1146
      %v1358 = vpop.f32.mrf.mxu0
      %v1359 = vadd.f32 %v1054, %v1358
      %v1360 = vpop.f32.mrf.mxu0
      %v1361 = vpop.f32.mrf.mxu0
      %v1362 = vadd.f32 %v1057, %v1361
      %v1363 = vpop.f32.mrf.mxu0
      %1364 = vmatprep.mubr.bf16.mxu0 0
      %1365 = vmatmul.mubr.bf16.gmra.mxu0 %v1147
      %v1366 = vpop.f32.mrf.mxu0
      %v1367 = vadd.f32 %v1062, %v1366
      %v1368 = vpop.f32.mrf.mxu0
      %v1369 = vpop.f32.mrf.mxu0
      %v1370 = vadd.f32 %v1065, %v1369
      %v1371 = vpop.f32.mrf.mxu0
      %1372 = vdwg.mxu0
      %v1373 = vld [vmem:[%s315] sm:$0xe]
      %v1374 = vld [vmem:[%s315 + $0xc] sm:$0xe]
      %v1375 = vld [vmem:[%s315 + $0x18] sm:$0xe]
      %v1376 = vld [vmem:[%s315 + $0x24] sm:$0xe]
      %v1377 = vld [vmem:[%s315 + $0x30] sm:$0xe]
      %v1378 = vld [vmem:[%s315 + $0x3c] sm:$0xe]
      %v1379 = vld [vmem:[%s315 + $0x48] sm:$0xe]
      %v1380 = vld [vmem:[%s315 + $0x54] sm:$0xe]
      %v1381 = vld [vmem:[%s315 + $0x60] sm:$0xe]
      %v1382 = vld [vmem:[%s315 + $0x6c] sm:$0xe]
      %v1383 = vld [vmem:[%s315 + $0x78] sm:$0xe]
      %v1384 = vld [vmem:[%s315 + $0x84] sm:$0xe]
      %v1385 = vld [vmem:[%s315 + $0x90] sm:$0xe]
      %v1386 = vld [vmem:[%s315 + $0x9c] sm:$0xe]
      %v1387 = vld [vmem:[%s315 + $0xa8] sm:$0xe]
      %v1388 = vld [vmem:[%s315 + $0xb4] sm:$0xe]
      %vm1421 = vcmask 1042432
      %vm1422 = vcmask 1046532
      %vm1423 = vmor %vm1421, %vm1422
      %v1424 = vrot.slane %v1373, 5
      %v1425 = vrot.slane %v1424, 4
      %v1426 = vrot.slane %v328, 5
      %v1427 = vsel %vm1423, %v1425, %v1426
      %v1428 = vrot.slane %v1426, 4
      %v1429 = vrot.slane %v375, 5
      %v1430 = vsel %vm1423, %v1428, %v1429
      %v1431 = vrot.slane %v1374, 5
      %v1432 = vrot.slane %v1431, 4
      %v1433 = vrot.slane %v330, 5
      %v1434 = vsel %vm1423, %v1432, %v1433
      %v1435 = vrot.slane %v1433, 4
      %v1436 = vrot.slane %v376, 5
      %v1437 = vsel %vm1423, %v1435, %v1436
      %v1438 = vrot.slane %v1375, 5
      %v1439 = vrot.slane %v1438, 4
      %v1440 = vrot.slane %v332, 5
      %v1441 = vsel %vm1423, %v1439, %v1440
      %v1442 = vrot.slane %v1440, 4
      %v1443 = vrot.slane %v377, 5
      %v1444 = vsel %vm1423, %v1442, %v1443
      %v1445 = vrot.slane %v1376, 5
      %v1446 = vrot.slane %v1445, 4
      %v1447 = vrot.slane %v334, 5
      %v1448 = vsel %vm1423, %v1446, %v1447
      %v1449 = vrot.slane %v1447, 4
      %v1450 = vrot.slane %v378, 5
      %v1451 = vsel %vm1423, %v1449, %v1450
      %v1452 = vrot.slane %v1377, 5
      %v1453 = vrot.slane %v1452, 4
      %v1454 = vrot.slane %v336, 5
      %v1455 = vsel %vm1423, %v1453, %v1454
      %v1456 = vrot.slane %v1454, 4
      %v1457 = vrot.slane %v379, 5
      %v1458 = vsel %vm1423, %v1456, %v1457
      %v1459 = vrot.slane %v1378, 5
      %v1460 = vrot.slane %v1459, 4
      %v1461 = vrot.slane %v338, 5
      %v1462 = vsel %vm1423, %v1460, %v1461
      %v1463 = vrot.slane %v1461, 4
      %v1464 = vrot.slane %v380, 5
      %v1465 = vsel %vm1423, %v1463, %v1464
      %v1466 = vrot.slane %v1379, 5
      %v1467 = vrot.slane %v1466, 4
      %v1468 = vrot.slane %v340, 5
      %v1469 = vsel %vm1423, %v1467, %v1468
      %v1470 = vrot.slane %v1468, 4
      %v1471 = vrot.slane %v381, 5
      %v1472 = vsel %vm1423, %v1470, %v1471
      %v1473 = vrot.slane %v1380, 5
      %v1474 = vrot.slane %v1473, 4
      %v1475 = vrot.slane %v342, 5
      %v1476 = vsel %vm1423, %v1474, %v1475
      %v1477 = vrot.slane %v1475, 4
      %v1478 = vrot.slane %v382, 5
      %v1479 = vsel %vm1423, %v1477, %v1478
      %v1480 = vrot.slane %v1381, 5
      %v1481 = vrot.slane %v1480, 4
      %v1482 = vrot.slane %v344, 5
      %v1483 = vsel %vm1423, %v1481, %v1482
      %v1484 = vrot.slane %v1482, 4
      %v1485 = vrot.slane %v383, 5
      %v1486 = vsel %vm1423, %v1484, %v1485
      %v1487 = vrot.slane %v1382, 5
      %v1488 = vrot.slane %v1487, 4
      %v1489 = vrot.slane %v346, 5
      %v1490 = vsel %vm1423, %v1488, %v1489
      %v1491 = vrot.slane %v1489, 4
      %v1492 = vrot.slane %v384, 5
      %v1493 = vsel %vm1423, %v1491, %v1492
      %v1494 = vrot.slane %v1383, 5
      %v1495 = vrot.slane %v1494, 4
      %v1496 = vrot.slane %v348, 5
      %v1497 = vsel %vm1423, %v1495, %v1496
      %v1498 = vrot.slane %v1496, 4
      %v1499 = vrot.slane %v385, 5
      %v1500 = vsel %vm1423, %v1498, %v1499
      %v1501 = vrot.slane %v1384, 5
      %v1502 = vrot.slane %v1501, 4
      %v1503 = vrot.slane %v350, 5
      %v1504 = vsel %vm1423, %v1502, %v1503
      %v1505 = vrot.slane %v1503, 4
      %v1506 = vrot.slane %v386, 5
      %v1507 = vsel %vm1423, %v1505, %v1506
      %v1508 = vrot.slane %v1385, 5
      %v1509 = vrot.slane %v1508, 4
      %v1510 = vrot.slane %v352, 5
      %v1511 = vsel %vm1423, %v1509, %v1510
      %v1512 = vrot.slane %v1510, 4
      %v1513 = vrot.slane %v387, 5
      %v1514 = vsel %vm1423, %v1512, %v1513
      %v1515 = vrot.slane %v1386, 5
      %v1516 = vrot.slane %v1515, 4
      %v1517 = vrot.slane %v354, 5
      %v1518 = vsel %vm1423, %v1516, %v1517
      %v1519 = vrot.slane %v1517, 4
      %v1520 = vrot.slane %v388, 5
      %v1521 = vsel %vm1423, %v1519, %v1520
      %v1522 = vrot.slane %v1387, 5
      %v1523 = vrot.slane %v1522, 4
      %v1524 = vrot.slane %v356, 5
      %v1525 = vsel %vm1423, %v1523, %v1524
      %v1526 = vrot.slane %v1524, 4
      %v1527 = vrot.slane %v389, 5
      %v1528 = vsel %vm1423, %v1526, %v1527
      %v1529 = vrot.slane %v1388, 5
      %v1530 = vrot.slane %v1529, 4
      %v1531 = vrot.slane %v358, 5
      %v1532 = vsel %vm1423, %v1530, %v1531
      %v1533 = vrot.slane %v1531, 4
      %v1534 = vrot.slane %v390, 5
      %v1535 = vsel %vm1423, %v1533, %v1534
      %s1536 = scalar_lea.vmem %s2, 128
      %v1537 = vld [vmem:[%s1536] sm:$0xf]
      %v1538 = vld [vmem:[%s1536 + $0x4] sm:$0xf]
      %v1539 = vld [vmem:[%s1536 + $0x8] sm:$0xf]
      %v1540 = vld [vmem:[%s1536 + $0xc] sm:$0xf]
      %v1541 = vld [vmem:[%s1536 + $0x10] sm:$0xf]
      %v1542 = vld [vmem:[%s1536 + $0x14] sm:$0xf]
      %v1543 = vld [vmem:[%s1536 + $0x18] sm:$0xf]
      %v1544 = vld [vmem:[%s1536 + $0x1c] sm:$0xf]
      %v1545 = vld [vmem:[%s1536 + $0x20] sm:$0xf]
      %v1546 = vld [vmem:[%s1536 + $0x24] sm:$0xf]
      %v1547 = vld [vmem:[%s1536 + $0x28] sm:$0xf]
      %v1548 = vld [vmem:[%s1536 + $0x2c] sm:$0xf]
      %v1549 = vld [vmem:[%s1536 + $0x30] sm:$0xf]
      %v1550 = vld [vmem:[%s1536 + $0x34] sm:$0xf]
      %v1551 = vld [vmem:[%s1536 + $0x38] sm:$0xf]
      %v1552 = vld [vmem:[%s1536 + $0x3c] sm:$0xf]
      %v1553 = vunpack.c.l.b16 %v1427
      %v1554 = vunpack.c.l.b16 %v1430
      %v1555 = vunpack.c.l.b16 %v1434
      %v1556 = vunpack.c.l.b16 %v1437
      %v1557 = vunpack.c.l.b16 %v1441
      %v1558 = vunpack.c.l.b16 %v1444
      %v1559 = vunpack.c.l.b16 %v1448
      %v1560 = vunpack.c.l.b16 %v1451
      %v1561 = vunpack.c.l.b16 %v1455
      %v1562 = vunpack.c.l.b16 %v1458
      %v1563 = vunpack.c.l.b16 %v1462
      %v1564 = vunpack.c.l.b16 %v1465
      %v1565 = vunpack.c.l.b16 %v1469
      %v1566 = vunpack.c.l.b16 %v1472
      %v1567 = vunpack.c.l.b16 %v1476
      %v1568 = vunpack.c.l.b16 %v1479
      %v1569 = vunpack.c.l.b16 %v1483
      %v1570 = vunpack.c.l.b16 %v1486
      %v1571 = vunpack.c.l.b16 %v1490
      %v1572 = vunpack.c.l.b16 %v1493
      %v1573 = vunpack.c.l.b16 %v1497
      %v1574 = vunpack.c.l.b16 %v1500
      %v1575 = vunpack.c.l.b16 %v1504
      %v1576 = vunpack.c.l.b16 %v1507
      %v1577 = vunpack.c.l.b16 %v1511
      %v1578 = vunpack.c.l.b16 %v1514
      %v1579 = vunpack.c.l.b16 %v1518
      %v1580 = vunpack.c.l.b16 %v1521
      %v1581 = vunpack.c.l.b16 %v1525
      %v1582 = vunpack.c.l.b16 %v1528
      %v1583 = vunpack.c.l.b16 %v1532
      %v1584 = vunpack.c.l.b16 %v1535
      %v1585 = vpack.c.b16 %v1554, %v1553
      %v1586 = vpack.c.b16 %v1556, %v1555
      %v1587 = vpack.c.b16 %v1558, %v1557
      %v1588 = vpack.c.b16 %v1560, %v1559
      %v1589 = vpack.c.b16 %v1562, %v1561
      %v1590 = vpack.c.b16 %v1564, %v1563
      %v1591 = vpack.c.b16 %v1566, %v1565
      %v1592 = vpack.c.b16 %v1568, %v1567
      %v1593 = vpack.c.b16 %v1570, %v1569
      %v1594 = vpack.c.b16 %v1572, %v1571
      %v1595 = vpack.c.b16 %v1574, %v1573
      %v1596 = vpack.c.b16 %v1576, %v1575
      %v1597 = vpack.c.b16 %v1578, %v1577
      %v1598 = vpack.c.b16 %v1580, %v1579
      %v1599 = vpack.c.b16 %v1582, %v1581
      %v1600 = vpack.c.b16 %v1584, %v1583
      %v1633 = vunpack.c.l.b16 %v1537
      %v1634 = vunpack.c.l.b16 %v1538
      %v1635 = vunpack.c.l.b16 %v1539
      %v1636 = vunpack.c.l.b16 %v1540
      %v1637 = vunpack.c.l.b16 %v1541
      %v1638 = vunpack.c.l.b16 %v1542
      %v1639 = vunpack.c.l.b16 %v1543
      %v1640 = vunpack.c.l.b16 %v1544
      %v1641 = vunpack.c.l.b16 %v1545
      %v1642 = vunpack.c.l.b16 %v1546
      %v1643 = vunpack.c.l.b16 %v1547
      %v1644 = vunpack.c.l.b16 %v1548
      %v1645 = vunpack.c.l.b16 %v1549
      %v1646 = vunpack.c.l.b16 %v1550
      %v1647 = vunpack.c.l.b16 %v1551
      %v1648 = vunpack.c.l.b16 %v1552
      %v1649 = vpack.c.b16 %v1634, %v1633
      %v1650 = vpack.c.b16 %v1636, %v1635
      %v1651 = vpack.c.b16 %v1638, %v1637
      %v1652 = vpack.c.b16 %v1640, %v1639
      %v1653 = vpack.c.b16 %v1642, %v1641
      %v1654 = vpack.c.b16 %v1644, %v1643
      %v1655 = vpack.c.b16 %v1646, %v1645
      %v1656 = vpack.c.b16 %v1648, %v1647
      %1665 = vmatprep.subr.bf16.mxu0 0
      %1666 = vmatpush1.bf16.msra.mxu0 %v1656
      %1667 = vmatprep.subr.bf16.mxu0 0
      %1668 = vmatpush1.bf16.msra.mxu0 %v1655
      %1669 = vmatprep.subr.bf16.mxu0 0
      %1670 = vmatpush1.bf16.msra.mxu0 %v1654
      %1671 = vmatprep.subr.bf16.mxu0 0
      %1672 = vmatpush1.bf16.msra.mxu0 %v1653
      %1673 = vmatprep.subr.bf16.mxu0 0
      %1674 = vmatpush1.bf16.msra.mxu0 %v1652
      %1675 = vmatprep.subr.bf16.mxu0 0
      %1676 = vmatpush1.bf16.msra.mxu0 %v1651
      %1677 = vmatprep.subr.bf16.mxu0 0
      %1678 = vmatpush1.bf16.msra.mxu0 %v1650
      %1679 = vmatprep.subr.bf16.mxu0 0
      %1680 = vmatpush1.bf16.msra.mxu0 %v1649
      %1681 = vmatprep.subr.bf16.mxu0 0
      %1682 = vmatpush2.bf16.msra.mxu0 0
      %1683 = vmatprep.subr.bf16.mxu0 0
      %1684 = vmatpush2.bf16.msra.mxu0 0
      %1685 = vmatprep.subr.bf16.mxu0 0
      %1686 = vmatpush2.bf16.msra.mxu0 0
      %1687 = vmatprep.subr.bf16.mxu0 0
      %1688 = vmatpush2.bf16.msra.mxu0 0
      %1689 = vmatprep.subr.bf16.mxu0 0
      %1690 = vmatpush2.bf16.msra.mxu0 0
      %1691 = vmatprep.subr.bf16.mxu0 0
      %1692 = vmatpush2.bf16.msra.mxu0 0
      %1693 = vmatprep.subr.bf16.mxu0 0
      %1694 = vmatpush2.bf16.msra.mxu0 0
      %1695 = vmatprep.subr.bf16.mxu0 0
      %1696 = vmatpush2.bf16.msra.mxu0 0
      %1697 = vmatprep.mubr.bf16.mxu0 0
      %1698 = vmatmul.mubr.bf16.gmra.mxu0 %v1585
      %v1699 = vpop.f32.mrf.mxu0
      %v1700 = vadd.f32 0.0, %v1699
      %v1701 = vpop.f32.mrf.mxu0
      %v1702 = vpop.f32.mrf.mxu0
      %v1703 = vadd.f32 0.0, %v1702
      %v1704 = vpop.f32.mrf.mxu0
      %1705 = vmatprep.mubr.bf16.mxu0 0
      %1706 = vmatmul.mubr.bf16.gmra.mxu0 %v1586
      %v1707 = vpop.f32.mrf.mxu0
      %v1708 = vadd.f32 0.0, %v1707
      %v1709 = vpop.f32.mrf.mxu0
      %v1710 = vpop.f32.mrf.mxu0
      %v1711 = vadd.f32 0.0, %v1710
      %v1712 = vpop.f32.mrf.mxu0
      %1713 = vmatprep.mubr.bf16.mxu0 0
      %1714 = vmatmul.mubr.bf16.gmra.mxu0 %v1587
      %v1715 = vpop.f32.mrf.mxu0
      %v1716 = vadd.f32 0.0, %v1715
      %v1717 = vpop.f32.mrf.mxu0
      %v1718 = vpop.f32.mrf.mxu0
      %v1719 = vadd.f32 0.0, %v1718
      %v1720 = vpop.f32.mrf.mxu0
      %1721 = vmatprep.mubr.bf16.mxu0 0
      %1722 = vmatmul.mubr.bf16.gmra.mxu0 %v1588
      %v1723 = vpop.f32.mrf.mxu0
      %v1724 = vadd.f32 0.0, %v1723
      %v1725 = vpop.f32.mrf.mxu0
      %v1726 = vpop.f32.mrf.mxu0
      %v1727 = vadd.f32 0.0, %v1726
      %v1728 = vpop.f32.mrf.mxu0
      %1729 = vmatprep.mubr.bf16.mxu0 0
      %1730 = vmatmul.mubr.bf16.gmra.mxu0 %v1589
      %v1731 = vpop.f32.mrf.mxu0
      %v1732 = vadd.f32 0.0, %v1731
      %v1733 = vpop.f32.mrf.mxu0
      %v1734 = vpop.f32.mrf.mxu0
      %v1735 = vadd.f32 0.0, %v1734
      %v1736 = vpop.f32.mrf.mxu0
      %1737 = vmatprep.mubr.bf16.mxu0 0
      %1738 = vmatmul.mubr.bf16.gmra.mxu0 %v1590
      %v1739 = vpop.f32.mrf.mxu0
      %v1740 = vadd.f32 0.0, %v1739
      %v1741 = vpop.f32.mrf.mxu0
      %v1742 = vpop.f32.mrf.mxu0
      %v1743 = vadd.f32 0.0, %v1742
      %v1744 = vpop.f32.mrf.mxu0
      %1745 = vmatprep.mubr.bf16.mxu0 0
      %1746 = vmatmul.mubr.bf16.gmra.mxu0 %v1591
      %v1747 = vpop.f32.mrf.mxu0
      %v1748 = vadd.f32 0.0, %v1747
      %v1749 = vpop.f32.mrf.mxu0
      %v1750 = vpop.f32.mrf.mxu0
      %v1751 = vadd.f32 0.0, %v1750
      %v1752 = vpop.f32.mrf.mxu0
      %1753 = vmatprep.mubr.bf16.mxu0 0
      %1754 = vmatmul.mubr.bf16.gmra.mxu0 %v1592
      %v1755 = vpop.f32.mrf.mxu0
      %v1756 = vadd.f32 0.0, %v1755
      %v1757 = vpop.f32.mrf.mxu0
      %v1758 = vpop.f32.mrf.mxu0
      %v1759 = vadd.f32 0.0, %v1758
      %v1760 = vpop.f32.mrf.mxu0
      %1761 = vmatprep.mubr.bf16.mxu0 0
      %1762 = vmatmul.mubr.bf16.gmra.mxu0 %v1593
      %v1763 = vpop.f32.mrf.mxu0
      %v1764 = vadd.f32 0.0, %v1763
      %v1765 = vpop.f32.mrf.mxu0
      %v1766 = vpop.f32.mrf.mxu0
      %v1767 = vadd.f32 0.0, %v1766
      %v1768 = vpop.f32.mrf.mxu0
      %1769 = vmatprep.mubr.bf16.mxu0 0
      %1770 = vmatmul.mubr.bf16.gmra.mxu0 %v1594
      %v1771 = vpop.f32.mrf.mxu0
      %v1772 = vadd.f32 0.0, %v1771
      %v1773 = vpop.f32.mrf.mxu0
      %v1774 = vpop.f32.mrf.mxu0
      %v1775 = vadd.f32 0.0, %v1774
      %v1776 = vpop.f32.mrf.mxu0
      %1777 = vmatprep.mubr.bf16.mxu0 0
      %1778 = vmatmul.mubr.bf16.gmra.mxu0 %v1595
      %v1779 = vpop.f32.mrf.mxu0
      %v1780 = vadd.f32 0.0, %v1779
      %v1781 = vpop.f32.mrf.mxu0
      %v1782 = vpop.f32.mrf.mxu0
      %v1783 = vadd.f32 0.0, %v1782
      %v1784 = vpop.f32.mrf.mxu0
      %1785 = vmatprep.mubr.bf16.mxu0 0
      %1786 = vmatmul.mubr.bf16.gmra.mxu0 %v1596
      %v1787 = vpop.f32.mrf.mxu0
      %v1788 = vadd.f32 0.0, %v1787
      %v1789 = vpop.f32.mrf.mxu0
      %v1790 = vpop.f32.mrf.mxu0
      %v1791 = vadd.f32 0.0, %v1790
      %v1792 = vpop.f32.mrf.mxu0
      %1793 = vmatprep.mubr.bf16.mxu0 0
      %1794 = vmatmul.mubr.bf16.gmra.mxu0 %v1597
      %v1795 = vpop.f32.mrf.mxu0
      %v1796 = vadd.f32 0.0, %v1795
      %v1797 = vpop.f32.mrf.mxu0
      %v1798 = vpop.f32.mrf.mxu0
      %v1799 = vadd.f32 0.0, %v1798
      %v1800 = vpop.f32.mrf.mxu0
      %1801 = vmatprep.mubr.bf16.mxu0 0
      %1802 = vmatmul.mubr.bf16.gmra.mxu0 %v1598
      %v1803 = vpop.f32.mrf.mxu0
      %v1804 = vadd.f32 0.0, %v1803
      %v1805 = vpop.f32.mrf.mxu0
      %v1806 = vpop.f32.mrf.mxu0
      %v1807 = vadd.f32 0.0, %v1806
      %v1808 = vpop.f32.mrf.mxu0
      %1809 = vmatprep.mubr.bf16.mxu0 0
      %1810 = vmatmul.mubr.bf16.gmra.mxu0 %v1599
      %v1811 = vpop.f32.mrf.mxu0
      %v1812 = vadd.f32 0.0, %v1811
      %v1813 = vpop.f32.mrf.mxu0
      %v1814 = vpop.f32.mrf.mxu0
      %v1815 = vadd.f32 0.0, %v1814
      %v1816 = vpop.f32.mrf.mxu0
      %1817 = vmatprep.mubr.bf16.mxu0 0
      %1818 = vmatmul.mubr.bf16.gmra.mxu0 %v1600
      %v1819 = vpop.f32.mrf.mxu0
      %v1820 = vadd.f32 0.0, %v1819
      %v1821 = vpop.f32.mrf.mxu0
      %v1822 = vpop.f32.mrf.mxu0
      %v1823 = vadd.f32 0.0, %v1822
      %v1824 = vpop.f32.mrf.mxu0
      %1825 = vdwg.mxu0
      %v1826 = vadd.f32 %v1247, %v1700
      %v1827 = vadd.f32 %v1250, %v1703
      %v1828 = vadd.f32 %v1255, %v1708
      %v1829 = vadd.f32 %v1258, %v1711
      %v1830 = vadd.f32 %v1263, %v1716
      %v1831 = vadd.f32 %v1266, %v1719
      %v1832 = vadd.f32 %v1271, %v1724
      %v1833 = vadd.f32 %v1274, %v1727
      %v1834 = vadd.f32 %v1279, %v1732
      %v1835 = vadd.f32 %v1282, %v1735
      %v1836 = vadd.f32 %v1287, %v1740
      %v1837 = vadd.f32 %v1290, %v1743
      %v1838 = vadd.f32 %v1295, %v1748
      %v1839 = vadd.f32 %v1298, %v1751
      %v1840 = vadd.f32 %v1303, %v1756
      %v1841 = vadd.f32 %v1306, %v1759
      %v1842 = vadd.f32 %v1311, %v1764
      %v1843 = vadd.f32 %v1314, %v1767
      %v1844 = vadd.f32 %v1319, %v1772
      %v1845 = vadd.f32 %v1322, %v1775
      %v1846 = vadd.f32 %v1327, %v1780
      %v1847 = vadd.f32 %v1330, %v1783
      %v1848 = vadd.f32 %v1335, %v1788
      %v1849 = vadd.f32 %v1338, %v1791
      %v1850 = vadd.f32 %v1343, %v1796
      %v1851 = vadd.f32 %v1346, %v1799
      %v1852 = vadd.f32 %v1351, %v1804
      %v1853 = vadd.f32 %v1354, %v1807
      %v1854 = vadd.f32 %v1359, %v1812
      %v1855 = vadd.f32 %v1362, %v1815
      %v1856 = vadd.f32 %v1367, %v1820
      %v1857 = vadd.f32 %v1370, %v1823
      %s1858 = scalar_lea.vmem %s315, 12
      %v1859 = vld [vmem:[%s1858] sm:$0xf]
      %v1860 = vld [vmem:[%s1858 + $0x4] sm:$0xf]
      %v1861 = vld [vmem:[%s1858 + $0xc] sm:$0xf]
      %v1862 = vld [vmem:[%s1858 + $0x10] sm:$0xf]
      %v1863 = vld [vmem:[%s1858 + $0x18] sm:$0xf]
      %v1864 = vld [vmem:[%s1858 + $0x1c] sm:$0xf]
      %v1865 = vld [vmem:[%s1858 + $0x24] sm:$0xf]
      %v1866 = vld [vmem:[%s1858 + $0x28] sm:$0xf]
      %v1867 = vld [vmem:[%s1858 + $0x30] sm:$0xf]
      %v1868 = vld [vmem:[%s1858 + $0x34] sm:$0xf]
      %v1869 = vld [vmem:[%s1858 + $0x3c] sm:$0xf]
      %v1870 = vld [vmem:[%s1858 + $0x40] sm:$0xf]
      %v1871 = vld [vmem:[%s1858 + $0x48] sm:$0xf]
      %v1872 = vld [vmem:[%s1858 + $0x4c] sm:$0xf]
      %v1873 = vld [vmem:[%s1858 + $0x54] sm:$0xf]
      %v1874 = vld [vmem:[%s1858 + $0x58] sm:$0xf]
      %v1875 = vld [vmem:[%s1858 + $0x60] sm:$0xf]
      %v1876 = vld [vmem:[%s1858 + $0x64] sm:$0xf]
      %v1877 = vld [vmem:[%s1858 + $0x6c] sm:$0xf]
      %v1878 = vld [vmem:[%s1858 + $0x70] sm:$0xf]
      %v1879 = vld [vmem:[%s1858 + $0x78] sm:$0xf]
      %v1880 = vld [vmem:[%s1858 + $0x7c] sm:$0xf]
      %v1881 = vld [vmem:[%s1858 + $0x84] sm:$0xf]
      %v1882 = vld [vmem:[%s1858 + $0x88] sm:$0xf]
      %v1883 = vld [vmem:[%s1858 + $0x90] sm:$0xf]
      %v1884 = vld [vmem:[%s1858 + $0x94] sm:$0xf]
      %v1885 = vld [vmem:[%s1858 + $0x9c] sm:$0xf]
      %v1886 = vld [vmem:[%s1858 + $0xa0] sm:$0xf]
      %v1887 = vld [vmem:[%s1858 + $0xa8] sm:$0xf]
      %v1888 = vld [vmem:[%s1858 + $0xac] sm:$0xf]
      %v1889 = vld [vmem:[%s1858 + $0xb4] sm:$0xf]
      %v1890 = vld [vmem:[%s1858 + $0xb8] sm:$0xf]
      %s1891 = scalar_lea.vmem %s2, 192
      %v1892 = vld [vmem:[%s1891] sm:$0xf]
      %v1893 = vld [vmem:[%s1891 + $0x4] sm:$0xf]
      %v1894 = vld [vmem:[%s1891 + $0x8] sm:$0xf]
      %v1895 = vld [vmem:[%s1891 + $0xc] sm:$0xf]
      %v1896 = vld [vmem:[%s1891 + $0x10] sm:$0xf]
      %v1897 = vld [vmem:[%s1891 + $0x14] sm:$0xf]
      %v1898 = vld [vmem:[%s1891 + $0x18] sm:$0xf]
      %v1899 = vld [vmem:[%s1891 + $0x1c] sm:$0xf]
      %v1900 = vld [vmem:[%s1891 + $0x20] sm:$0xf]
      %v1901 = vld [vmem:[%s1891 + $0x24] sm:$0xf]
      %v1902 = vld [vmem:[%s1891 + $0x28] sm:$0xf]
      %v1903 = vld [vmem:[%s1891 + $0x2c] sm:$0xf]
      %v1904 = vld [vmem:[%s1891 + $0x30] sm:$0xf]
      %v1905 = vld [vmem:[%s1891 + $0x34] sm:$0xf]
      %v1906 = vld [vmem:[%s1891 + $0x38] sm:$0xf]
      %v1907 = vld [vmem:[%s1891 + $0x3c] sm:$0xf]
      %v1940 = vunpack.c.l.b16 %v1859
      %v1941 = vunpack.c.l.b16 %v1860
      %v1942 = vunpack.c.l.b16 %v1861
      %v1943 = vunpack.c.l.b16 %v1862
      %v1944 = vunpack.c.l.b16 %v1863
      %v1945 = vunpack.c.l.b16 %v1864
      %v1946 = vunpack.c.l.b16 %v1865
      %v1947 = vunpack.c.l.b16 %v1866
      %v1948 = vunpack.c.l.b16 %v1867
      %v1949 = vunpack.c.l.b16 %v1868
      %v1950 = vunpack.c.l.b16 %v1869
      %v1951 = vunpack.c.l.b16 %v1870
      %v1952 = vunpack.c.l.b16 %v1871
      %v1953 = vunpack.c.l.b16 %v1872
      %v1954 = vunpack.c.l.b16 %v1873
      %v1955 = vunpack.c.l.b16 %v1874
      %v1956 = vunpack.c.l.b16 %v1875
      %v1957 = vunpack.c.l.b16 %v1876
      %v1958 = vunpack.c.l.b16 %v1877
      %v1959 = vunpack.c.l.b16 %v1878
      %v1960 = vunpack.c.l.b16 %v1879
      %v1961 = vunpack.c.l.b16 %v1880
      %v1962 = vunpack.c.l.b16 %v1881
      %v1963 = vunpack.c.l.b16 %v1882
      %v1964 = vunpack.c.l.b16 %v1883
      %v1965 = vunpack.c.l.b16 %v1884
      %v1966 = vunpack.c.l.b16 %v1885
      %v1967 = vunpack.c.l.b16 %v1886
      %v1968 = vunpack.c.l.b16 %v1887
      %v1969 = vunpack.c.l.b16 %v1888
      %v1970 = vunpack.c.l.b16 %v1889
      %v1971 = vunpack.c.l.b16 %v1890
      %v1972 = vpack.c.b16 %v1941, %v1940
      %v1973 = vpack.c.b16 %v1943, %v1942
      %v1974 = vpack.c.b16 %v1945, %v1944
      %v1975 = vpack.c.b16 %v1947, %v1946
      %v1976 = vpack.c.b16 %v1949, %v1948
      %v1977 = vpack.c.b16 %v1951, %v1950
      %v1978 = vpack.c.b16 %v1953, %v1952
      %v1979 = vpack.c.b16 %v1955, %v1954
      %v1980 = vpack.c.b16 %v1957, %v1956
      %v1981 = vpack.c.b16 %v1959, %v1958
      %v1982 = vpack.c.b16 %v1961, %v1960
      %v1983 = vpack.c.b16 %v1963, %v1962
      %v1984 = vpack.c.b16 %v1965, %v1964
      %v1985 = vpack.c.b16 %v1967, %v1966
      %v1986 = vpack.c.b16 %v1969, %v1968
      %v1987 = vpack.c.b16 %v1971, %v1970
      %v2020 = vunpack.c.l.b16 %v1892
      %v2021 = vunpack.c.l.b16 %v1893
      %v2022 = vunpack.c.l.b16 %v1894
      %v2023 = vunpack.c.l.b16 %v1895
      %v2024 = vunpack.c.l.b16 %v1896
      %v2025 = vunpack.c.l.b16 %v1897
      %v2026 = vunpack.c.l.b16 %v1898
      %v2027 = vunpack.c.l.b16 %v1899
      %v2028 = vunpack.c.l.b16 %v1900
      %v2029 = vunpack.c.l.b16 %v1901
      %v2030 = vunpack.c.l.b16 %v1902
      %v2031 = vunpack.c.l.b16 %v1903
      %v2032 = vunpack.c.l.b16 %v1904
      %v2033 = vunpack.c.l.b16 %v1905
      %v2034 = vunpack.c.l.b16 %v1906
      %v2035 = vunpack.c.l.b16 %v1907
      %v2036 = vpack.c.b16 %v2021, %v2020
      %v2037 = vpack.c.b16 %v2023, %v2022
      %v2038 = vpack.c.b16 %v2025, %v2024
      %v2039 = vpack.c.b16 %v2027, %v2026
      %v2040 = vpack.c.b16 %v2029, %v2028
      %v2041 = vpack.c.b16 %v2031, %v2030
      %v2042 = vpack.c.b16 %v2033, %v2032
      %v2043 = vpack.c.b16 %v2035, %v2034
      %2052 = vmatprep.subr.bf16.mxu0 0
      %2053 = vmatpush1.bf16.msra.mxu0 %v2043
      %2054 = vmatprep.subr.bf16.mxu0 0
      %2055 = vmatpush1.bf16.msra.mxu0 %v2042
      %2056 = vmatprep.subr.bf16.mxu0 0
      %2057 = vmatpush1.bf16.msra.mxu0 %v2041
      %2058 = vmatprep.subr.bf16.mxu0 0
      %2059 = vmatpush1.bf16.msra.mxu0 %v2040
      %2060 = vmatprep.subr.bf16.mxu0 0
      %2061 = vmatpush1.bf16.msra.mxu0 %v2039
      %2062 = vmatprep.subr.bf16.mxu0 0
      %2063 = vmatpush1.bf16.msra.mxu0 %v2038
      %2064 = vmatprep.subr.bf16.mxu0 0
      %2065 = vmatpush1.bf16.msra.mxu0 %v2037
      %2066 = vmatprep.subr.bf16.mxu0 0
      %2067 = vmatpush1.bf16.msra.mxu0 %v2036
      %2068 = vmatprep.subr.bf16.mxu0 0
      %2069 = vmatpush2.bf16.msra.mxu0 0
      %2070 = vmatprep.subr.bf16.mxu0 0
      %2071 = vmatpush2.bf16.msra.mxu0 0
      %2072 = vmatprep.subr.bf16.mxu0 0
      %2073 = vmatpush2.bf16.msra.mxu0 0
      %2074 = vmatprep.subr.bf16.mxu0 0
      %2075 = vmatpush2.bf16.msra.mxu0 0
      %2076 = vmatprep.subr.bf16.mxu0 0
      %2077 = vmatpush2.bf16.msra.mxu0 0
      %2078 = vmatprep.subr.bf16.mxu0 0
      %2079 = vmatpush2.bf16.msra.mxu0 0
      %2080 = vmatprep.subr.bf16.mxu0 0
      %2081 = vmatpush2.bf16.msra.mxu0 0
      %2082 = vmatprep.subr.bf16.mxu0 0
      %2083 = vmatpush2.bf16.msra.mxu0 0
      %2084 = vmatprep.mubr.bf16.mxu0 0
      %2085 = vmatmul.mubr.bf16.gmra.mxu0 %v1972
      %v2086 = vpop.f32.mrf.mxu0
      %v2087 = vadd.f32 0.0, %v2086
      %v2088 = vpop.f32.mrf.mxu0
      %v2089 = vpop.f32.mrf.mxu0
      %v2090 = vadd.f32 0.0, %v2089
      %v2091 = vpop.f32.mrf.mxu0
      %2092 = vmatprep.mubr.bf16.mxu0 0
      %2093 = vmatmul.mubr.bf16.gmra.mxu0 %v1973
      %v2094 = vpop.f32.mrf.mxu0
      %v2095 = vadd.f32 0.0, %v2094
      %v2096 = vpop.f32.mrf.mxu0
      %v2097 = vpop.f32.mrf.mxu0
      %v2098 = vadd.f32 0.0, %v2097
      %v2099 = vpop.f32.mrf.mxu0
      %2100 = vmatprep.mubr.bf16.mxu0 0
      %2101 = vmatmul.mubr.bf16.gmra.mxu0 %v1974
      %v2102 = vpop.f32.mrf.mxu0
      %v2103 = vadd.f32 0.0, %v2102
      %v2104 = vpop.f32.mrf.mxu0
      %v2105 = vpop.f32.mrf.mxu0
      %v2106 = vadd.f32 0.0, %v2105
      %v2107 = vpop.f32.mrf.mxu0
      %2108 = vmatprep.mubr.bf16.mxu0 0
      %2109 = vmatmul.mubr.bf16.gmra.mxu0 %v1975
      %v2110 = vpop.f32.mrf.mxu0
      %v2111 = vadd.f32 0.0, %v2110
      %v2112 = vpop.f32.mrf.mxu0
      %v2113 = vpop.f32.mrf.mxu0
      %v2114 = vadd.f32 0.0, %v2113
      %v2115 = vpop.f32.mrf.mxu0
      %2116 = vmatprep.mubr.bf16.mxu0 0
      %2117 = vmatmul.mubr.bf16.gmra.mxu0 %v1976
      %v2118 = vpop.f32.mrf.mxu0
      %v2119 = vadd.f32 0.0, %v2118
      %v2120 = vpop.f32.mrf.mxu0
      %v2121 = vpop.f32.mrf.mxu0
      %v2122 = vadd.f32 0.0, %v2121
      %v2123 = vpop.f32.mrf.mxu0
      %2124 = vmatprep.mubr.bf16.mxu0 0
      %2125 = vmatmul.mubr.bf16.gmra.mxu0 %v1977
      %v2126 = vpop.f32.mrf.mxu0
      %v2127 = vadd.f32 0.0, %v2126
      %v2128 = vpop.f32.mrf.mxu0
      %v2129 = vpop.f32.mrf.mxu0
      %v2130 = vadd.f32 0.0, %v2129
      %v2131 = vpop.f32.mrf.mxu0
      %2132 = vmatprep.mubr.bf16.mxu0 0
      %2133 = vmatmul.mubr.bf16.gmra.mxu0 %v1978
      %v2134 = vpop.f32.mrf.mxu0
      %v2135 = vadd.f32 0.0, %v2134
      %v2136 = vpop.f32.mrf.mxu0
      %v2137 = vpop.f32.mrf.mxu0
      %v2138 = vadd.f32 0.0, %v2137
      %v2139 = vpop.f32.mrf.mxu0
      %2140 = vmatprep.mubr.bf16.mxu0 0
      %2141 = vmatmul.mubr.bf16.gmra.mxu0 %v1979
      %v2142 = vpop.f32.mrf.mxu0
      %v2143 = vadd.f32 0.0, %v2142
      %v2144 = vpop.f32.mrf.mxu0
      %v2145 = vpop.f32.mrf.mxu0
      %v2146 = vadd.f32 0.0, %v2145
      %v2147 = vpop.f32.mrf.mxu0
      %2148 = vmatprep.mubr.bf16.mxu0 0
      %2149 = vmatmul.mubr.bf16.gmra.mxu0 %v1980
      %v2150 = vpop.f32.mrf.mxu0
      %v2151 = vadd.f32 0.0, %v2150
      %v2152 = vpop.f32.mrf.mxu0
      %v2153 = vpop.f32.mrf.mxu0
      %v2154 = vadd.f32 0.0, %v2153
      %v2155 = vpop.f32.mrf.mxu0
      %2156 = vmatprep.mubr.bf16.mxu0 0
      %2157 = vmatmul.mubr.bf16.gmra.mxu0 %v1981
      %v2158 = vpop.f32.mrf.mxu0
      %v2159 = vadd.f32 0.0, %v2158
      %v2160 = vpop.f32.mrf.mxu0
      %v2161 = vpop.f32.mrf.mxu0
      %v2162 = vadd.f32 0.0, %v2161
      %v2163 = vpop.f32.mrf.mxu0
      %2164 = vmatprep.mubr.bf16.mxu0 0
      %2165 = vmatmul.mubr.bf16.gmra.mxu0 %v1982
      %v2166 = vpop.f32.mrf.mxu0
      %v2167 = vadd.f32 0.0, %v2166
      %v2168 = vpop.f32.mrf.mxu0
      %v2169 = vpop.f32.mrf.mxu0
      %v2170 = vadd.f32 0.0, %v2169
      %v2171 = vpop.f32.mrf.mxu0
      %2172 = vmatprep.mubr.bf16.mxu0 0
      %2173 = vmatmul.mubr.bf16.gmra.mxu0 %v1983
      %v2174 = vpop.f32.mrf.mxu0
      %v2175 = vadd.f32 0.0, %v2174
      %v2176 = vpop.f32.mrf.mxu0
      %v2177 = vpop.f32.mrf.mxu0
      %v2178 = vadd.f32 0.0, %v2177
      %v2179 = vpop.f32.mrf.mxu0
      %2180 = vmatprep.mubr.bf16.mxu0 0
      %2181 = vmatmul.mubr.bf16.gmra.mxu0 %v1984
      %v2182 = vpop.f32.mrf.mxu0
      %v2183 = vadd.f32 0.0, %v2182
      %v2184 = vpop.f32.mrf.mxu0
      %v2185 = vpop.f32.mrf.mxu0
      %v2186 = vadd.f32 0.0, %v2185
      %v2187 = vpop.f32.mrf.mxu0
      %2188 = vmatprep.mubr.bf16.mxu0 0
      %2189 = vmatmul.mubr.bf16.gmra.mxu0 %v1985
      %v2190 = vpop.f32.mrf.mxu0
      %v2191 = vadd.f32 0.0, %v2190
      %v2192 = vpop.f32.mrf.mxu0
      %v2193 = vpop.f32.mrf.mxu0
      %v2194 = vadd.f32 0.0, %v2193
      %v2195 = vpop.f32.mrf.mxu0
      %2196 = vmatprep.mubr.bf16.mxu0 0
      %2197 = vmatmul.mubr.bf16.gmra.mxu0 %v1986
      %v2198 = vpop.f32.mrf.mxu0
      %v2199 = vadd.f32 0.0, %v2198
      %v2200 = vpop.f32.mrf.mxu0
      %v2201 = vpop.f32.mrf.mxu0
      %v2202 = vadd.f32 0.0, %v2201
      %v2203 = vpop.f32.mrf.mxu0
      %2204 = vmatprep.mubr.bf16.mxu0 0
      %2205 = vmatmul.mubr.bf16.gmra.mxu0 %v1987
      %v2206 = vpop.f32.mrf.mxu0
      %v2207 = vadd.f32 0.0, %v2206
      %v2208 = vpop.f32.mrf.mxu0
      %v2209 = vpop.f32.mrf.mxu0
      %v2210 = vadd.f32 0.0, %v2209
      %v2211 = vpop.f32.mrf.mxu0
      %2212 = vdwg.mxu0
      %v2213 = vadd.f32 %v1826, %v2087
      %v2214 = vadd.f32 %v1827, %v2090
      %v2215 = vadd.f32 %v1828, %v2095
      %v2216 = vadd.f32 %v1829, %v2098
      %v2217 = vadd.f32 %v1830, %v2103
      %v2218 = vadd.f32 %v1831, %v2106
      %v2219 = vadd.f32 %v1832, %v2111
      %v2220 = vadd.f32 %v1833, %v2114
      %v2221 = vadd.f32 %v1834, %v2119
      %v2222 = vadd.f32 %v1835, %v2122
      %v2223 = vadd.f32 %v1836, %v2127
      %v2224 = vadd.f32 %v1837, %v2130
      %v2225 = vadd.f32 %v1838, %v2135
      %v2226 = vadd.f32 %v1839, %v2138
      %v2227 = vadd.f32 %v1840, %v2143
      %v2228 = vadd.f32 %v1841, %v2146
      %v2229 = vadd.f32 %v1842, %v2151
      %v2230 = vadd.f32 %v1843, %v2154
      %v2231 = vadd.f32 %v1844, %v2159
      %v2232 = vadd.f32 %v1845, %v2162
      %v2233 = vadd.f32 %v1846, %v2167
      %v2234 = vadd.f32 %v1847, %v2170
      %v2235 = vadd.f32 %v1848, %v2175
      %v2236 = vadd.f32 %v1849, %v2178
      %v2237 = vadd.f32 %v1850, %v2183
      %v2238 = vadd.f32 %v1851, %v2186
      %v2239 = vadd.f32 %v1852, %v2191
      %v2240 = vadd.f32 %v1853, %v2194
      %v2241 = vadd.f32 %v1854, %v2199
      %v2242 = vadd.f32 %v1855, %v2202
      %v2243 = vadd.f32 %v1856, %v2207
      %v2244 = vadd.f32 %v1857, %v2210
      %v2245 = vld [vmem:[%s1858] sm:$0xf]
      %v2246 = vld [vmem:[%s1858 + $0x4] sm:$0xf]
      %v2247 = vld [vmem:[%s1858 + $0x8] sm:$0x1]
      %v2248 = vld [vmem:[%s1858 + $0xc] sm:$0xf]
      %v2249 = vld [vmem:[%s1858 + $0x10] sm:$0xf]
      %v2250 = vld [vmem:[%s1858 + $0x14] sm:$0x1]
      %v2251 = vld [vmem:[%s1858 + $0x18] sm:$0xf]
      %v2252 = vld [vmem:[%s1858 + $0x1c] sm:$0xf]
      %v2253 = vld [vmem:[%s1858 + $0x20] sm:$0x1]
      %v2254 = vld [vmem:[%s1858 + $0x24] sm:$0xf]
      %v2255 = vld [vmem:[%s1858 + $0x28] sm:$0xf]
      %v2256 = vld [vmem:[%s1858 + $0x2c] sm:$0x1]
      %v2257 = vld [vmem:[%s1858 + $0x30] sm:$0xf]
      %v2258 = vld [vmem:[%s1858 + $0x34] sm:$0xf]
      %v2259 = vld [vmem:[%s1858 + $0x38] sm:$0x1]
      %v2260 = vld [vmem:[%s1858 + $0x3c] sm:$0xf]
      %v2261 = vld [vmem:[%s1858 + $0x40] sm:$0xf]
      %v2262 = vld [vmem:[%s1858 + $0x44] sm:$0x1]
      %v2263 = vld [vmem:[%s1858 + $0x48] sm:$0xf]
      %v2264 = vld [vmem:[%s1858 + $0x4c] sm:$0xf]
      %v2265 = vld [vmem:[%s1858 + $0x50] sm:$0x1]
      %v2266 = vld [vmem:[%s1858 + $0x54] sm:$0xf]
      %v2267 = vld [vmem:[%s1858 + $0x58] sm:$0xf]
      %v2268 = vld [vmem:[%s1858 + $0x5c] sm:$0x1]
      %v2269 = vld [vmem:[%s1858 + $0x60] sm:$0xf]
      %v2270 = vld [vmem:[%s1858 + $0x64] sm:$0xf]
      %v2271 = vld [vmem:[%s1858 + $0x68] sm:$0x1]
      %v2272 = vld [vmem:[%s1858 + $0x6c] sm:$0xf]
      %v2273 = vld [vmem:[%s1858 + $0x70] sm:$0xf]
      %v2274 = vld [vmem:[%s1858 + $0x74] sm:$0x1]
      %v2275 = vld [vmem:[%s1858 + $0x78] sm:$0xf]
      %v2276 = vld [vmem:[%s1858 + $0x7c] sm:$0xf]
      %v2277 = vld [vmem:[%s1858 + $0x80] sm:$0x1]
      %v2278 = vld [vmem:[%s1858 + $0x84] sm:$0xf]
      %v2279 = vld [vmem:[%s1858 + $0x88] sm:$0xf]
      %v2280 = vld [vmem:[%s1858 + $0x8c] sm:$0x1]
      %v2281 = vld [vmem:[%s1858 + $0x90] sm:$0xf]
      %v2282 = vld [vmem:[%s1858 + $0x94] sm:$0xf]
      %v2283 = vld [vmem:[%s1858 + $0x98] sm:$0x1]
      %v2284 = vld [vmem:[%s1858 + $0x9c] sm:$0xf]
      %v2285 = vld [vmem:[%s1858 + $0xa0] sm:$0xf]
      %v2286 = vld [vmem:[%s1858 + $0xa4] sm:$0x1]
      %v2287 = vld [vmem:[%s1858 + $0xa8] sm:$0xf]
      %v2288 = vld [vmem:[%s1858 + $0xac] sm:$0xf]
      %v2289 = vld [vmem:[%s1858 + $0xb0] sm:$0x1]
      %v2290 = vld [vmem:[%s1858 + $0xb4] sm:$0xf]
      %v2291 = vld [vmem:[%s1858 + $0xb8] sm:$0xf]
      %v2292 = vld [vmem:[%s1858 + $0xbc] sm:$0x1]
      %v2294 = vshrl.u32 %v2245, 16
      %v2296 = vrot.slane %v2294, 4
      %v2297 = vshll.u32 %v2245, 16
      %v2299 = vrot.slane %v2297, 5
      %v2300 = vor.u32 %v2296, %v2299
      %v2301 = vrot.slane %v2300, 4
      %v2303 = vshll.u32 %v2246, 16
      %v2305 = vrot.slane %v2303, 5
      %v2306 = vsel %vm393, %v2301, %v2305
      %v2307 = vshrl.u32 %v2246, 16
      %v2309 = vrot.slane %v2307, 4
      %v2310 = vor.u32 %v2309, %v2305
      %v2311 = vrot.slane %v2310, 4
      %v2313 = vshll.u32 %v2247, 16
      %v2315 = vrot.slane %v2313, 5
      %v2316 = vsel %vm393, %v2311, %v2315
      %v2318 = vshrl.u32 %v2248, 16
      %v2320 = vrot.slane %v2318, 4
      %v2321 = vshll.u32 %v2248, 16
      %v2323 = vrot.slane %v2321, 5
      %v2324 = vor.u32 %v2320, %v2323
      %v2325 = vrot.slane %v2324, 4
      %v2327 = vshll.u32 %v2249, 16
      %v2329 = vrot.slane %v2327, 5
      %v2330 = vsel %vm393, %v2325, %v2329
      %v2331 = vshrl.u32 %v2249, 16
      %v2333 = vrot.slane %v2331, 4
      %v2334 = vor.u32 %v2333, %v2329
      %v2335 = vrot.slane %v2334, 4
      %v2337 = vshll.u32 %v2250, 16
      %v2339 = vrot.slane %v2337, 5
      %v2340 = vsel %vm393, %v2335, %v2339
      %v2342 = vshrl.u32 %v2251, 16
      %v2344 = vrot.slane %v2342, 4
      %v2345 = vshll.u32 %v2251, 16
      %v2347 = vrot.slane %v2345, 5
      %v2348 = vor.u32 %v2344, %v2347
      %v2349 = vrot.slane %v2348, 4
      %v2351 = vshll.u32 %v2252, 16
      %v2353 = vrot.slane %v2351, 5
      %v2354 = vsel %vm393, %v2349, %v2353
      %v2355 = vshrl.u32 %v2252, 16
      %v2357 = vrot.slane %v2355, 4
      %v2358 = vor.u32 %v2357, %v2353
      %v2359 = vrot.slane %v2358, 4
      %v2361 = vshll.u32 %v2253, 16
      %v2363 = vrot.slane %v2361, 5
      %v2364 = vsel %vm393, %v2359, %v2363
      %v2366 = vshrl.u32 %v2254, 16
      %v2368 = vrot.slane %v2366, 4
      %v2369 = vshll.u32 %v2254, 16
      %v2371 = vrot.slane %v2369, 5
      %v2372 = vor.u32 %v2368, %v2371
      %v2373 = vrot.slane %v2372, 4
      %v2375 = vshll.u32 %v2255, 16
      %v2377 = vrot.slane %v2375, 5
      %v2378 = vsel %vm393, %v2373, %v2377
      %v2379 = vshrl.u32 %v2255, 16
      %v2381 = vrot.slane %v2379, 4
      %v2382 = vor.u32 %v2381, %v2377
      %v2383 = vrot.slane %v2382, 4
      %v2385 = vshll.u32 %v2256, 16
      %v2387 = vrot.slane %v2385, 5
      %v2388 = vsel %vm393, %v2383, %v2387
      %v2390 = vshrl.u32 %v2257, 16
      %v2392 = vrot.slane %v2390, 4
      %v2393 = vshll.u32 %v2257, 16
      %v2395 = vrot.slane %v2393, 5
      %v2396 = vor.u32 %v2392, %v2395
      %v2397 = vrot.slane %v2396, 4
      %v2399 = vshll.u32 %v2258, 16
      %v2401 = vrot.slane %v2399, 5
      %v2402 = vsel %vm393, %v2397, %v2401
      %v2403 = vshrl.u32 %v2258, 16
      %v2405 = vrot.slane %v2403, 4
      %v2406 = vor.u32 %v2405, %v2401
      %v2407 = vrot.slane %v2406, 4
      %v2409 = vshll.u32 %v2259, 16
      %v2411 = vrot.slane %v2409, 5
      %v2412 = vsel %vm393, %v2407, %v2411
      %v2414 = vshrl.u32 %v2260, 16
      %v2416 = vrot.slane %v2414, 4
      %v2417 = vshll.u32 %v2260, 16
      %v2419 = vrot.slane %v2417, 5
      %v2420 = vor.u32 %v2416, %v2419
      %v2421 = vrot.slane %v2420, 4
      %v2423 = vshll.u32 %v2261, 16
      %v2425 = vrot.slane %v2423, 5
      %v2426 = vsel %vm393, %v2421, %v2425
      %v2427 = vshrl.u32 %v2261, 16
      %v2429 = vrot.slane %v2427, 4
      %v2430 = vor.u32 %v2429, %v2425
      %v2431 = vrot.slane %v2430, 4
      %v2433 = vshll.u32 %v2262, 16
      %v2435 = vrot.slane %v2433, 5
      %v2436 = vsel %vm393, %v2431, %v2435
      %v2438 = vshrl.u32 %v2263, 16
      %v2440 = vrot.slane %v2438, 4
      %v2441 = vshll.u32 %v2263, 16
      %v2443 = vrot.slane %v2441, 5
      %v2444 = vor.u32 %v2440, %v2443
      %v2445 = vrot.slane %v2444, 4
      %v2447 = vshll.u32 %v2264, 16
      %v2449 = vrot.slane %v2447, 5
      %v2450 = vsel %vm393, %v2445, %v2449
      %v2451 = vshrl.u32 %v2264, 16
      %v2453 = vrot.slane %v2451, 4
      %v2454 = vor.u32 %v2453, %v2449
      %v2455 = vrot.slane %v2454, 4
      %v2457 = vshll.u32 %v2265, 16
      %v2459 = vrot.slane %v2457, 5
      %v2460 = vsel %vm393, %v2455, %v2459
      %v2462 = vshrl.u32 %v2266, 16
      %v2464 = vrot.slane %v2462, 4
      %v2465 = vshll.u32 %v2266, 16
      %v2467 = vrot.slane %v2465, 5
      %v2468 = vor.u32 %v2464, %v2467
      %v2469 = vrot.slane %v2468, 4
      %v2471 = vshll.u32 %v2267, 16
      %v2473 = vrot.slane %v2471, 5
      %v2474 = vsel %vm393, %v2469, %v2473
      %v2475 = vshrl.u32 %v2267, 16
      %v2477 = vrot.slane %v2475, 4
      %v2478 = vor.u32 %v2477, %v2473
      %v2479 = vrot.slane %v2478, 4
      %v2481 = vshll.u32 %v2268, 16
      %v2483 = vrot.slane %v2481, 5
      %v2484 = vsel %vm393, %v2479, %v2483
      %v2486 = vshrl.u32 %v2269, 16
      %v2488 = vrot.slane %v2486, 4
      %v2489 = vshll.u32 %v2269, 16
      %v2491 = vrot.slane %v2489, 5
      %v2492 = vor.u32 %v2488, %v2491
      %v2493 = vrot.slane %v2492, 4
      %v2495 = vshll.u32 %v2270, 16
      %v2497 = vrot.slane %v2495, 5
      %v2498 = vsel %vm393, %v2493, %v2497
      %v2499 = vshrl.u32 %v2270, 16
      %v2501 = vrot.slane %v2499, 4
      %v2502 = vor.u32 %v2501, %v2497
      %v2503 = vrot.slane %v2502, 4
      %v2505 = vshll.u32 %v2271, 16
      %v2507 = vrot.slane %v2505, 5
      %v2508 = vsel %vm393, %v2503, %v2507
      %v2510 = vshrl.u32 %v2272, 16
      %v2512 = vrot.slane %v2510, 4
      %v2513 = vshll.u32 %v2272, 16
      %v2515 = vrot.slane %v2513, 5
      %v2516 = vor.u32 %v2512, %v2515
      %v2517 = vrot.slane %v2516, 4
      %v2519 = vshll.u32 %v2273, 16
      %v2521 = vrot.slane %v2519, 5
      %v2522 = vsel %vm393, %v2517, %v2521
      %v2523 = vshrl.u32 %v2273, 16
      %v2525 = vrot.slane %v2523, 4
      %v2526 = vor.u32 %v2525, %v2521
      %v2527 = vrot.slane %v2526, 4
      %v2529 = vshll.u32 %v2274, 16
      %v2531 = vrot.slane %v2529, 5
      %v2532 = vsel %vm393, %v2527, %v2531
      %v2534 = vshrl.u32 %v2275, 16
      %v2536 = vrot.slane %v2534, 4
      %v2537 = vshll.u32 %v2275, 16
      %v2539 = vrot.slane %v2537, 5
      %v2540 = vor.u32 %v2536, %v2539
      %v2541 = vrot.slane %v2540, 4
      %v2543 = vshll.u32 %v2276, 16
      %v2545 = vrot.slane %v2543, 5
      %v2546 = vsel %vm393, %v2541, %v2545
      %v2547 = vshrl.u32 %v2276, 16
      %v2549 = vrot.slane %v2547, 4
      %v2550 = vor.u32 %v2549, %v2545
      %v2551 = vrot.slane %v2550, 4
      %v2553 = vshll.u32 %v2277, 16
      %v2555 = vrot.slane %v2553, 5
      %v2556 = vsel %vm393, %v2551, %v2555
      %v2558 = vshrl.u32 %v2278, 16
      %v2560 = vrot.slane %v2558, 4
      %v2561 = vshll.u32 %v2278, 16
      %v2563 = vrot.slane %v2561, 5
      %v2564 = vor.u32 %v2560, %v2563
      %v2565 = vrot.slane %v2564, 4
      %v2567 = vshll.u32 %v2279, 16
      %v2569 = vrot.slane %v2567, 5
      %v2570 = vsel %vm393, %v2565, %v2569
      %v2571 = vshrl.u32 %v2279, 16
      %v2573 = vrot.slane %v2571, 4
      %v2574 = vor.u32 %v2573, %v2569
      %v2575 = vrot.slane %v2574, 4
      %v2577 = vshll.u32 %v2280, 16
      %v2579 = vrot.slane %v2577, 5
      %v2580 = vsel %vm393, %v2575, %v2579
      %v2582 = vshrl.u32 %v2281, 16
      %v2584 = vrot.slane %v2582, 4
      %v2585 = vshll.u32 %v2281, 16
      %v2587 = vrot.slane %v2585, 5
      %v2588 = vor.u32 %v2584, %v2587
      %v2589 = vrot.slane %v2588, 4
      %v2591 = vshll.u32 %v2282, 16
      %v2593 = vrot.slane %v2591, 5
      %v2594 = vsel %vm393, %v2589, %v2593
      %v2595 = vshrl.u32 %v2282, 16
      %v2597 = vrot.slane %v2595, 4
      %v2598 = vor.u32 %v2597, %v2593
      %v2599 = vrot.slane %v2598, 4
      %v2601 = vshll.u32 %v2283, 16
      %v2603 = vrot.slane %v2601, 5
      %v2604 = vsel %vm393, %v2599, %v2603
      %v2606 = vshrl.u32 %v2284, 16
      %v2608 = vrot.slane %v2606, 4
      %v2609 = vshll.u32 %v2284, 16
      %v2611 = vrot.slane %v2609, 5
      %v2612 = vor.u32 %v2608, %v2611
      %v2613 = vrot.slane %v2612, 4
      %v2615 = vshll.u32 %v2285, 16
      %v2617 = vrot.slane %v2615, 5
      %v2618 = vsel %vm393, %v2613, %v2617
      %v2619 = vshrl.u32 %v2285, 16
      %v2621 = vrot.slane %v2619, 4
      %v2622 = vor.u32 %v2621, %v2617
      %v2623 = vrot.slane %v2622, 4
      %v2625 = vshll.u32 %v2286, 16
      %v2627 = vrot.slane %v2625, 5
      %v2628 = vsel %vm393, %v2623, %v2627
      %v2630 = vshrl.u32 %v2287, 16
      %v2632 = vrot.slane %v2630, 4
      %v2633 = vshll.u32 %v2287, 16
      %v2635 = vrot.slane %v2633, 5
      %v2636 = vor.u32 %v2632, %v2635
      %v2637 = vrot.slane %v2636, 4
      %v2639 = vshll.u32 %v2288, 16
      %v2641 = vrot.slane %v2639, 5
      %v2642 = vsel %vm393, %v2637, %v2641
      %v2643 = vshrl.u32 %v2288, 16
      %v2645 = vrot.slane %v2643, 4
      %v2646 = vor.u32 %v2645, %v2641
      %v2647 = vrot.slane %v2646, 4
      %v2649 = vshll.u32 %v2289, 16
      %v2651 = vrot.slane %v2649, 5
      %v2652 = vsel %vm393, %v2647, %v2651
      %v2654 = vshrl.u32 %v2290, 16
      %v2656 = vrot.slane %v2654, 4
      %v2657 = vshll.u32 %v2290, 16
      %v2659 = vrot.slane %v2657, 5
      %v2660 = vor.u32 %v2656, %v2659
      %v2661 = vrot.slane %v2660, 4
      %v2663 = vshll.u32 %v2291, 16
      %v2665 = vrot.slane %v2663, 5
      %v2666 = vsel %vm393, %v2661, %v2665
      %v2667 = vshrl.u32 %v2291, 16
      %v2669 = vrot.slane %v2667, 4
      %v2670 = vor.u32 %v2669, %v2665
      %v2671 = vrot.slane %v2670, 4
      %v2673 = vshll.u32 %v2292, 16
      %v2675 = vrot.slane %v2673, 5
      %v2676 = vsel %vm393, %v2671, %v2675
      %s2677 = scalar_lea.vmem %s2, 256
      %v2678 = vld [vmem:[%s2677] sm:$0xf]
      %v2679 = vld [vmem:[%s2677 + $0x4] sm:$0xf]
      %v2680 = vld [vmem:[%s2677 + $0x8] sm:$0xf]
      %v2681 = vld [vmem:[%s2677 + $0xc] sm:$0xf]
      %v2682 = vld [vmem:[%s2677 + $0x10] sm:$0xf]
      %v2683 = vld [vmem:[%s2677 + $0x14] sm:$0xf]
      %v2684 = vld [vmem:[%s2677 + $0x18] sm:$0xf]
      %v2685 = vld [vmem:[%s2677 + $0x1c] sm:$0xf]
      %v2686 = vld [vmem:[%s2677 + $0x20] sm:$0xf]
      %v2687 = vld [vmem:[%s2677 + $0x24] sm:$0xf]
      %v2688 = vld [vmem:[%s2677 + $0x28] sm:$0xf]
      %v2689 = vld [vmem:[%s2677 + $0x2c] sm:$0xf]
      %v2690 = vld [vmem:[%s2677 + $0x30] sm:$0xf]
      %v2691 = vld [vmem:[%s2677 + $0x34] sm:$0xf]
      %v2692 = vld [vmem:[%s2677 + $0x38] sm:$0xf]
      %v2693 = vld [vmem:[%s2677 + $0x3c] sm:$0xf]
      %v2694 = vunpack.c.l.b16 %v2306
      %v2695 = vunpack.c.l.b16 %v2316
      %v2696 = vunpack.c.l.b16 %v2330
      %v2697 = vunpack.c.l.b16 %v2340
      %v2698 = vunpack.c.l.b16 %v2354
      %v2699 = vunpack.c.l.b16 %v2364
      %v2700 = vunpack.c.l.b16 %v2378
      %v2701 = vunpack.c.l.b16 %v2388
      %v2702 = vunpack.c.l.b16 %v2402
      %v2703 = vunpack.c.l.b16 %v2412
      %v2704 = vunpack.c.l.b16 %v2426
      %v2705 = vunpack.c.l.b16 %v2436
      %v2706 = vunpack.c.l.b16 %v2450
      %v2707 = vunpack.c.l.b16 %v2460
      %v2708 = vunpack.c.l.b16 %v2474
      %v2709 = vunpack.c.l.b16 %v2484
      %v2710 = vunpack.c.l.b16 %v2498
      %v2711 = vunpack.c.l.b16 %v2508
      %v2712 = vunpack.c.l.b16 %v2522
      %v2713 = vunpack.c.l.b16 %v2532
      %v2714 = vunpack.c.l.b16 %v2546
      %v2715 = vunpack.c.l.b16 %v2556
      %v2716 = vunpack.c.l.b16 %v2570
      %v2717 = vunpack.c.l.b16 %v2580
      %v2718 = vunpack.c.l.b16 %v2594
      %v2719 = vunpack.c.l.b16 %v2604
      %v2720 = vunpack.c.l.b16 %v2618
      %v2721 = vunpack.c.l.b16 %v2628
      %v2722 = vunpack.c.l.b16 %v2642
      %v2723 = vunpack.c.l.b16 %v2652
      %v2724 = vunpack.c.l.b16 %v2666
      %v2725 = vunpack.c.l.b16 %v2676
      %v2726 = vpack.c.b16 %v2695, %v2694
      %v2727 = vpack.c.b16 %v2697, %v2696
      %v2728 = vpack.c.b16 %v2699, %v2698
      %v2729 = vpack.c.b16 %v2701, %v2700
      %v2730 = vpack.c.b16 %v2703, %v2702
      %v2731 = vpack.c.b16 %v2705, %v2704
      %v2732 = vpack.c.b16 %v2707, %v2706
      %v2733 = vpack.c.b16 %v2709, %v2708
      %v2734 = vpack.c.b16 %v2711, %v2710
      %v2735 = vpack.c.b16 %v2713, %v2712
      %v2736 = vpack.c.b16 %v2715, %v2714
      %v2737 = vpack.c.b16 %v2717, %v2716
      %v2738 = vpack.c.b16 %v2719, %v2718
      %v2739 = vpack.c.b16 %v2721, %v2720
      %v2740 = vpack.c.b16 %v2723, %v2722
      %v2741 = vpack.c.b16 %v2725, %v2724
      %v2774 = vunpack.c.l.b16 %v2678
      %v2775 = vunpack.c.l.b16 %v2679
      %v2776 = vunpack.c.l.b16 %v2680
      %v2777 = vunpack.c.l.b16 %v2681
      %v2778 = vunpack.c.l.b16 %v2682
      %v2779 = vunpack.c.l.b16 %v2683
      %v2780 = vunpack.c.l.b16 %v2684
      %v2781 = vunpack.c.l.b16 %v2685
      %v2782 = vunpack.c.l.b16 %v2686
      %v2783 = vunpack.c.l.b16 %v2687
      %v2784 = vunpack.c.l.b16 %v2688
      %v2785 = vunpack.c.l.b16 %v2689
      %v2786 = vunpack.c.l.b16 %v2690
      %v2787 = vunpack.c.l.b16 %v2691
      %v2788 = vunpack.c.l.b16 %v2692
      %v2789 = vunpack.c.l.b16 %v2693
      %v2790 = vpack.c.b16 %v2775, %v2774
      %v2791 = vpack.c.b16 %v2777, %v2776
      %v2792 = vpack.c.b16 %v2779, %v2778
      %v2793 = vpack.c.b16 %v2781, %v2780
      %v2794 = vpack.c.b16 %v2783, %v2782
      %v2795 = vpack.c.b16 %v2785, %v2784
      %v2796 = vpack.c.b16 %v2787, %v2786
      %v2797 = vpack.c.b16 %v2789, %v2788
      %2806 = vmatprep.subr.bf16.mxu0 0
      %2807 = vmatpush1.bf16.msra.mxu0 %v2797
      %2808 = vmatprep.subr.bf16.mxu0 0
      %2809 = vmatpush1.bf16.msra.mxu0 %v2796
      %2810 = vmatprep.subr.bf16.mxu0 0
      %2811 = vmatpush1.bf16.msra.mxu0 %v2795
      %2812 = vmatprep.subr.bf16.mxu0 0
      %2813 = vmatpush1.bf16.msra.mxu0 %v2794
      %2814 = vmatprep.subr.bf16.mxu0 0
      %2815 = vmatpush1.bf16.msra.mxu0 %v2793
      %2816 = vmatprep.subr.bf16.mxu0 0
      %2817 = vmatpush1.bf16.msra.mxu0 %v2792
      %2818 = vmatprep.subr.bf16.mxu0 0
      %2819 = vmatpush1.bf16.msra.mxu0 %v2791
      %2820 = vmatprep.subr.bf16.mxu0 0
      %2821 = vmatpush1.bf16.msra.mxu0 %v2790
      %2822 = vmatprep.subr.bf16.mxu0 0
      %2823 = vmatpush2.bf16.msra.mxu0 0
      %2824 = vmatprep.subr.bf16.mxu0 0
      %2825 = vmatpush2.bf16.msra.mxu0 0
      %2826 = vmatprep.subr.bf16.mxu0 0
      %2827 = vmatpush2.bf16.msra.mxu0 0
      %2828 = vmatprep.subr.bf16.mxu0 0
      %2829 = vmatpush2.bf16.msra.mxu0 0
      %2830 = vmatprep.subr.bf16.mxu0 0
      %2831 = vmatpush2.bf16.msra.mxu0 0
      %2832 = vmatprep.subr.bf16.mxu0 0
      %2833 = vmatpush2.bf16.msra.mxu0 0
      %2834 = vmatprep.subr.bf16.mxu0 0
      %2835 = vmatpush2.bf16.msra.mxu0 0
      %2836 = vmatprep.subr.bf16.mxu0 0
      %2837 = vmatpush2.bf16.msra.mxu0 0
      %2838 = vmatprep.mubr.bf16.mxu0 0
      %2839 = vmatmul.mubr.bf16.gmra.mxu0 %v2726
      %v2840 = vpop.f32.mrf.mxu0
      %v2841 = vadd.f32 0.0, %v2840
      %v2842 = vpop.f32.mrf.mxu0
      %v2843 = vpop.f32.mrf.mxu0
      %v2844 = vadd.f32 0.0, %v2843
      %v2845 = vpop.f32.mrf.mxu0
      %2846 = vmatprep.mubr.bf16.mxu0 0
      %2847 = vmatmul.mubr.bf16.gmra.mxu0 %v2727
      %v2848 = vpop.f32.mrf.mxu0
      %v2849 = vadd.f32 0.0, %v2848
      %v2850 = vpop.f32.mrf.mxu0
      %v2851 = vpop.f32.mrf.mxu0
      %v2852 = vadd.f32 0.0, %v2851
      %v2853 = vpop.f32.mrf.mxu0
      %2854 = vmatprep.mubr.bf16.mxu0 0
      %2855 = vmatmul.mubr.bf16.gmra.mxu0 %v2728
      %v2856 = vpop.f32.mrf.mxu0
      %v2857 = vadd.f32 0.0, %v2856
      %v2858 = vpop.f32.mrf.mxu0
      %v2859 = vpop.f32.mrf.mxu0
      %v2860 = vadd.f32 0.0, %v2859
      %v2861 = vpop.f32.mrf.mxu0
      %2862 = vmatprep.mubr.bf16.mxu0 0
      %2863 = vmatmul.mubr.bf16.gmra.mxu0 %v2729
      %v2864 = vpop.f32.mrf.mxu0
      %v2865 = vadd.f32 0.0, %v2864
      %v2866 = vpop.f32.mrf.mxu0
      %v2867 = vpop.f32.mrf.mxu0
      %v2868 = vadd.f32 0.0, %v2867
      %v2869 = vpop.f32.mrf.mxu0
      %2870 = vmatprep.mubr.bf16.mxu0 0
      %2871 = vmatmul.mubr.bf16.gmra.mxu0 %v2730
      %v2872 = vpop.f32.mrf.mxu0
      %v2873 = vadd.f32 0.0, %v2872
      %v2874 = vpop.f32.mrf.mxu0
      %v2875 = vpop.f32.mrf.mxu0
      %v2876 = vadd.f32 0.0, %v2875
      %v2877 = vpop.f32.mrf.mxu0
      %2878 = vmatprep.mubr.bf16.mxu0 0
      %2879 = vmatmul.mubr.bf16.gmra.mxu0 %v2731
      %v2880 = vpop.f32.mrf.mxu0
      %v2881 = vadd.f32 0.0, %v2880
      %v2882 = vpop.f32.mrf.mxu0
      %v2883 = vpop.f32.mrf.mxu0
      %v2884 = vadd.f32 0.0, %v2883
      %v2885 = vpop.f32.mrf.mxu0
      %2886 = vmatprep.mubr.bf16.mxu0 0
      %2887 = vmatmul.mubr.bf16.gmra.mxu0 %v2732
      %v2888 = vpop.f32.mrf.mxu0
      %v2889 = vadd.f32 0.0, %v2888
      %v2890 = vpop.f32.mrf.mxu0
      %v2891 = vpop.f32.mrf.mxu0
      %v2892 = vadd.f32 0.0, %v2891
      %v2893 = vpop.f32.mrf.mxu0
      %2894 = vmatprep.mubr.bf16.mxu0 0
      %2895 = vmatmul.mubr.bf16.gmra.mxu0 %v2733
      %v2896 = vpop.f32.mrf.mxu0
      %v2897 = vadd.f32 0.0, %v2896
      %v2898 = vpop.f32.mrf.mxu0
      %v2899 = vpop.f32.mrf.mxu0
      %v2900 = vadd.f32 0.0, %v2899
      %v2901 = vpop.f32.mrf.mxu0
      %2902 = vmatprep.mubr.bf16.mxu0 0
      %2903 = vmatmul.mubr.bf16.gmra.mxu0 %v2734
      %v2904 = vpop.f32.mrf.mxu0
      %v2905 = vadd.f32 0.0, %v2904
      %v2906 = vpop.f32.mrf.mxu0
      %v2907 = vpop.f32.mrf.mxu0
      %v2908 = vadd.f32 0.0, %v2907
      %v2909 = vpop.f32.mrf.mxu0
      %2910 = vmatprep.mubr.bf16.mxu0 0
      %2911 = vmatmul.mubr.bf16.gmra.mxu0 %v2735
      %v2912 = vpop.f32.mrf.mxu0
      %v2913 = vadd.f32 0.0, %v2912
      %v2914 = vpop.f32.mrf.mxu0
      %v2915 = vpop.f32.mrf.mxu0
      %v2916 = vadd.f32 0.0, %v2915
      %v2917 = vpop.f32.mrf.mxu0
      %2918 = vmatprep.mubr.bf16.mxu0 0
      %2919 = vmatmul.mubr.bf16.gmra.mxu0 %v2736
      %v2920 = vpop.f32.mrf.mxu0
      %v2921 = vadd.f32 0.0, %v2920
      %v2922 = vpop.f32.mrf.mxu0
      %v2923 = vpop.f32.mrf.mxu0
      %v2924 = vadd.f32 0.0, %v2923
      %v2925 = vpop.f32.mrf.mxu0
      %2926 = vmatprep.mubr.bf16.mxu0 0
      %2927 = vmatmul.mubr.bf16.gmra.mxu0 %v2737
      %v2928 = vpop.f32.mrf.mxu0
      %v2929 = vadd.f32 0.0, %v2928
      %v2930 = vpop.f32.mrf.mxu0
      %v2931 = vpop.f32.mrf.mxu0
      %v2932 = vadd.f32 0.0, %v2931
      %v2933 = vpop.f32.mrf.mxu0
      %2934 = vmatprep.mubr.bf16.mxu0 0
      %2935 = vmatmul.mubr.bf16.gmra.mxu0 %v2738
      %v2936 = vpop.f32.mrf.mxu0
      %v2937 = vadd.f32 0.0, %v2936
      %v2938 = vpop.f32.mrf.mxu0
      %v2939 = vpop.f32.mrf.mxu0
      %v2940 = vadd.f32 0.0, %v2939
      %v2941 = vpop.f32.mrf.mxu0
      %2942 = vmatprep.mubr.bf16.mxu0 0
      %2943 = vmatmul.mubr.bf16.gmra.mxu0 %v2739
      %v2944 = vpop.f32.mrf.mxu0
      %v2945 = vadd.f32 0.0, %v2944
      %v2946 = vpop.f32.mrf.mxu0
      %v2947 = vpop.f32.mrf.mxu0
      %v2948 = vadd.f32 0.0, %v2947
      %v2949 = vpop.f32.mrf.mxu0
      %2950 = vmatprep.mubr.bf16.mxu0 0
      %2951 = vmatmul.mubr.bf16.gmra.mxu0 %v2740
      %v2952 = vpop.f32.mrf.mxu0
      %v2953 = vadd.f32 0.0, %v2952
      %v2954 = vpop.f32.mrf.mxu0
      %v2955 = vpop.f32.mrf.mxu0
      %v2956 = vadd.f32 0.0, %v2955
      %v2957 = vpop.f32.mrf.mxu0
      %2958 = vmatprep.mubr.bf16.mxu0 0
      %2959 = vmatmul.mubr.bf16.gmra.mxu0 %v2741
      %v2960 = vpop.f32.mrf.mxu0
      %v2961 = vadd.f32 0.0, %v2960
      %v2962 = vpop.f32.mrf.mxu0
      %v2963 = vpop.f32.mrf.mxu0
      %v2964 = vadd.f32 0.0, %v2963
      %v2965 = vpop.f32.mrf.mxu0
      %2966 = vdwg.mxu0
      %v2967 = vadd.f32 %v2213, %v2841
      %v2968 = vadd.f32 %v2214, %v2844
      %v2969 = vadd.f32 %v2215, %v2849
      %v2970 = vadd.f32 %v2216, %v2852
      %v2971 = vadd.f32 %v2217, %v2857
      %v2972 = vadd.f32 %v2218, %v2860
      %v2973 = vadd.f32 %v2219, %v2865
      %v2974 = vadd.f32 %v2220, %v2868
      %v2975 = vadd.f32 %v2221, %v2873
      %v2976 = vadd.f32 %v2222, %v2876
      %v2977 = vadd.f32 %v2223, %v2881
      %v2978 = vadd.f32 %v2224, %v2884
      %v2979 = vadd.f32 %v2225, %v2889
      %v2980 = vadd.f32 %v2226, %v2892
      %v2981 = vadd.f32 %v2227, %v2897
      %v2982 = vadd.f32 %v2228, %v2900
      %v2983 = vadd.f32 %v2229, %v2905
      %v2984 = vadd.f32 %v2230, %v2908
      %v2985 = vadd.f32 %v2231, %v2913
      %v2986 = vadd.f32 %v2232, %v2916
      %v2987 = vadd.f32 %v2233, %v2921
      %v2988 = vadd.f32 %v2234, %v2924
      %v2989 = vadd.f32 %v2235, %v2929
      %v2990 = vadd.f32 %v2236, %v2932
      %v2991 = vadd.f32 %v2237, %v2937
      %v2992 = vadd.f32 %v2238, %v2940
      %v2993 = vadd.f32 %v2239, %v2945
      %v2994 = vadd.f32 %v2240, %v2948
      %v2995 = vadd.f32 %v2241, %v2953
      %v2996 = vadd.f32 %v2242, %v2956
      %v2997 = vadd.f32 %v2243, %v2961
      %v2998 = vadd.f32 %v2244, %v2964
      %v2999 = vld [vmem:[%s1858] sm:$0xe]
      %v3000 = vld [vmem:[%s1858 + $0xc] sm:$0xe]
      %v3001 = vld [vmem:[%s1858 + $0x18] sm:$0xe]
      %v3002 = vld [vmem:[%s1858 + $0x24] sm:$0xe]
      %v3003 = vld [vmem:[%s1858 + $0x30] sm:$0xe]
      %v3004 = vld [vmem:[%s1858 + $0x3c] sm:$0xe]
      %v3005 = vld [vmem:[%s1858 + $0x48] sm:$0xe]
      %v3006 = vld [vmem:[%s1858 + $0x54] sm:$0xe]
      %v3007 = vld [vmem:[%s1858 + $0x60] sm:$0xe]
      %v3008 = vld [vmem:[%s1858 + $0x6c] sm:$0xe]
      %v3009 = vld [vmem:[%s1858 + $0x78] sm:$0xe]
      %v3010 = vld [vmem:[%s1858 + $0x84] sm:$0xe]
      %v3011 = vld [vmem:[%s1858 + $0x90] sm:$0xe]
      %v3012 = vld [vmem:[%s1858 + $0x9c] sm:$0xe]
      %v3013 = vld [vmem:[%s1858 + $0xa8] sm:$0xe]
      %v3014 = vld [vmem:[%s1858 + $0xb4] sm:$0xe]
      %v3063 = vrot.slane %v2999, 5
      %v3064 = vrot.slane %v3063, 4
      %v3065 = vrot.slane %v2246, 5
      %v3066 = vsel %vm1423, %v3064, %v3065
      %v3067 = vrot.slane %v3065, 4
      %v3068 = vrot.slane %v2247, 5
      %v3069 = vsel %vm1423, %v3067, %v3068
      %v3070 = vrot.slane %v3000, 5
      %v3071 = vrot.slane %v3070, 4
      %v3072 = vrot.slane %v2249, 5
      %v3073 = vsel %vm1423, %v3071, %v3072
      %v3074 = vrot.slane %v3072, 4
      %v3075 = vrot.slane %v2250, 5
      %v3076 = vsel %vm1423, %v3074, %v3075
      %v3077 = vrot.slane %v3001, 5
      %v3078 = vrot.slane %v3077, 4
      %v3079 = vrot.slane %v2252, 5
      %v3080 = vsel %vm1423, %v3078, %v3079
      %v3081 = vrot.slane %v3079, 4
      %v3082 = vrot.slane %v2253, 5
      %v3083 = vsel %vm1423, %v3081, %v3082
      %v3084 = vrot.slane %v3002, 5
      %v3085 = vrot.slane %v3084, 4
      %v3086 = vrot.slane %v2255, 5
      %v3087 = vsel %vm1423, %v3085, %v3086
      %v3088 = vrot.slane %v3086, 4
      %v3089 = vrot.slane %v2256, 5
      %v3090 = vsel %vm1423, %v3088, %v3089
      %v3091 = vrot.slane %v3003, 5
      %v3092 = vrot.slane %v3091, 4
      %v3093 = vrot.slane %v2258, 5
      %v3094 = vsel %vm1423, %v3092, %v3093
      %v3095 = vrot.slane %v3093, 4
      %v3096 = vrot.slane %v2259, 5
      %v3097 = vsel %vm1423, %v3095, %v3096
      %v3098 = vrot.slane %v3004, 5
      %v3099 = vrot.slane %v3098, 4
      %v3100 = vrot.slane %v2261, 5
      %v3101 = vsel %vm1423, %v3099, %v3100
      %v3102 = vrot.slane %v3100, 4
      %v3103 = vrot.slane %v2262, 5
      %v3104 = vsel %vm1423, %v3102, %v3103
      %v3105 = vrot.slane %v3005, 5
      %v3106 = vrot.slane %v3105, 4
      %v3107 = vrot.slane %v2264, 5
      %v3108 = vsel %vm1423, %v3106, %v3107
      %v3109 = vrot.slane %v3107, 4
      %v3110 = vrot.slane %v2265, 5
      %v3111 = vsel %vm1423, %v3109, %v3110
      %v3112 = vrot.slane %v3006, 5
      %v3113 = vrot.slane %v3112, 4
      %v3114 = vrot.slane %v2267, 5
      %v3115 = vsel %vm1423, %v3113, %v3114
      %v3116 = vrot.slane %v3114, 4
      %v3117 = vrot.slane %v2268, 5
      %v3118 = vsel %vm1423, %v3116, %v3117
      %v3119 = vrot.slane %v3007, 5
      %v3120 = vrot.slane %v3119, 4
      %v3121 = vrot.slane %v2270, 5
      %v3122 = vsel %vm1423, %v3120, %v3121
      %v3123 = vrot.slane %v3121, 4
      %v3124 = vrot.slane %v2271, 5
      %v3125 = vsel %vm1423, %v3123, %v3124
      %v3126 = vrot.slane %v3008, 5
      %v3127 = vrot.slane %v3126, 4
      %v3128 = vrot.slane %v2273, 5
      %v3129 = vsel %vm1423, %v3127, %v3128
      %v3130 = vrot.slane %v3128, 4
      %v3131 = vrot.slane %v2274, 5
      %v3132 = vsel %vm1423, %v3130, %v3131
      %v3133 = vrot.slane %v3009, 5
      %v3134 = vrot.slane %v3133, 4
      %v3135 = vrot.slane %v2276, 5
      %v3136 = vsel %vm1423, %v3134, %v3135
      %v3137 = vrot.slane %v3135, 4
      %v3138 = vrot.slane %v2277, 5
      %v3139 = vsel %vm1423, %v3137, %v3138
      %v3140 = vrot.slane %v3010, 5
      %v3141 = vrot.slane %v3140, 4
      %v3142 = vrot.slane %v2279, 5
      %v3143 = vsel %vm1423, %v3141, %v3142
      %v3144 = vrot.slane %v3142, 4
      %v3145 = vrot.slane %v2280, 5
      %v3146 = vsel %vm1423, %v3144, %v3145
      %v3147 = vrot.slane %v3011, 5
      %v3148 = vrot.slane %v3147, 4
      %v3149 = vrot.slane %v2282, 5
      %v3150 = vsel %vm1423, %v3148, %v3149
      %v3151 = vrot.slane %v3149, 4
      %v3152 = vrot.slane %v2283, 5
      %v3153 = vsel %vm1423, %v3151, %v3152
      %v3154 = vrot.slane %v3012, 5
      %v3155 = vrot.slane %v3154, 4
      %v3156 = vrot.slane %v2285, 5
      %v3157 = vsel %vm1423, %v3155, %v3156
      %v3158 = vrot.slane %v3156, 4
      %v3159 = vrot.slane %v2286, 5
      %v3160 = vsel %vm1423, %v3158, %v3159
      %v3161 = vrot.slane %v3013, 5
      %v3162 = vrot.slane %v3161, 4
      %v3163 = vrot.slane %v2288, 5
      %v3164 = vsel %vm1423, %v3162, %v3163
      %v3165 = vrot.slane %v3163, 4
      %v3166 = vrot.slane %v2289, 5
      %v3167 = vsel %vm1423, %v3165, %v3166
      %v3168 = vrot.slane %v3014, 5
      %v3169 = vrot.slane %v3168, 4
      %v3170 = vrot.slane %v2291, 5
      %v3171 = vsel %vm1423, %v3169, %v3170
      %v3172 = vrot.slane %v3170, 4
      %v3173 = vrot.slane %v2292, 5
      %v3174 = vsel %vm1423, %v3172, %v3173
      %s3175 = scalar_lea.vmem %s2, 320
      %v3176 = vld [vmem:[%s3175] sm:$0xf]
      %v3177 = vld [vmem:[%s3175 + $0x4] sm:$0xf]
      %v3178 = vld [vmem:[%s3175 + $0x8] sm:$0xf]
      %v3179 = vld [vmem:[%s3175 + $0xc] sm:$0xf]
      %v3180 = vld [vmem:[%s3175 + $0x10] sm:$0xf]
      %v3181 = vld [vmem:[%s3175 + $0x14] sm:$0xf]
      %v3182 = vld [vmem:[%s3175 + $0x18] sm:$0xf]
      %v3183 = vld [vmem:[%s3175 + $0x1c] sm:$0xf]
      %v3184 = vld [vmem:[%s3175 + $0x20] sm:$0xf]
      %v3185 = vld [vmem:[%s3175 + $0x24] sm:$0xf]
      %v3186 = vld [vmem:[%s3175 + $0x28] sm:$0xf]
      %v3187 = vld [vmem:[%s3175 + $0x2c] sm:$0xf]
      %v3188 = vld [vmem:[%s3175 + $0x30] sm:$0xf]
      %v3189 = vld [vmem:[%s3175 + $0x34] sm:$0xf]
      %v3190 = vld [vmem:[%s3175 + $0x38] sm:$0xf]
      %v3191 = vld [vmem:[%s3175 + $0x3c] sm:$0xf]
      %v3192 = vunpack.c.l.b16 %v3066
      %v3193 = vunpack.c.l.b16 %v3069
      %v3194 = vunpack.c.l.b16 %v3073
      %v3195 = vunpack.c.l.b16 %v3076
      %v3196 = vunpack.c.l.b16 %v3080
      %v3197 = vunpack.c.l.b16 %v3083
      %v3198 = vunpack.c.l.b16 %v3087
      %v3199 = vunpack.c.l.b16 %v3090
      %v3200 = vunpack.c.l.b16 %v3094
      %v3201 = vunpack.c.l.b16 %v3097
      %v3202 = vunpack.c.l.b16 %v3101
      %v3203 = vunpack.c.l.b16 %v3104
      %v3204 = vunpack.c.l.b16 %v3108
      %v3205 = vunpack.c.l.b16 %v3111
      %v3206 = vunpack.c.l.b16 %v3115
      %v3207 = vunpack.c.l.b16 %v3118
      %v3208 = vunpack.c.l.b16 %v3122
      %v3209 = vunpack.c.l.b16 %v3125
      %v3210 = vunpack.c.l.b16 %v3129
      %v3211 = vunpack.c.l.b16 %v3132
      %v3212 = vunpack.c.l.b16 %v3136
      %v3213 = vunpack.c.l.b16 %v3139
      %v3214 = vunpack.c.l.b16 %v3143
      %v3215 = vunpack.c.l.b16 %v3146
      %v3216 = vunpack.c.l.b16 %v3150
      %v3217 = vunpack.c.l.b16 %v3153
      %v3218 = vunpack.c.l.b16 %v3157
      %v3219 = vunpack.c.l.b16 %v3160
      %v3220 = vunpack.c.l.b16 %v3164
      %v3221 = vunpack.c.l.b16 %v3167
      %v3222 = vunpack.c.l.b16 %v3171
      %v3223 = vunpack.c.l.b16 %v3174
      %v3224 = vpack.c.b16 %v3193, %v3192
      %v3225 = vpack.c.b16 %v3195, %v3194
      %v3226 = vpack.c.b16 %v3197, %v3196
      %v3227 = vpack.c.b16 %v3199, %v3198
      %v3228 = vpack.c.b16 %v3201, %v3200
      %v3229 = vpack.c.b16 %v3203, %v3202
      %v3230 = vpack.c.b16 %v3205, %v3204
      %v3231 = vpack.c.b16 %v3207, %v3206
      %v3232 = vpack.c.b16 %v3209, %v3208
      %v3233 = vpack.c.b16 %v3211, %v3210
      %v3234 = vpack.c.b16 %v3213, %v3212
      %v3235 = vpack.c.b16 %v3215, %v3214
      %v3236 = vpack.c.b16 %v3217, %v3216
      %v3237 = vpack.c.b16 %v3219, %v3218
      %v3238 = vpack.c.b16 %v3221, %v3220
      %v3239 = vpack.c.b16 %v3223, %v3222
      %v3272 = vunpack.c.l.b16 %v3176
      %v3273 = vunpack.c.l.b16 %v3177
      %v3274 = vunpack.c.l.b16 %v3178
      %v3275 = vunpack.c.l.b16 %v3179
      %v3276 = vunpack.c.l.b16 %v3180
      %v3277 = vunpack.c.l.b16 %v3181
      %v3278 = vunpack.c.l.b16 %v3182
      %v3279 = vunpack.c.l.b16 %v3183
      %v3280 = vunpack.c.l.b16 %v3184
      %v3281 = vunpack.c.l.b16 %v3185
      %v3282 = vunpack.c.l.b16 %v3186
      %v3283 = vunpack.c.l.b16 %v3187
      %v3284 = vunpack.c.l.b16 %v3188
      %v3285 = vunpack.c.l.b16 %v3189
      %v3286 = vunpack.c.l.b16 %v3190
      %v3287 = vunpack.c.l.b16 %v3191
      %v3288 = vpack.c.b16 %v3273, %v3272
      %v3289 = vpack.c.b16 %v3275, %v3274
      %v3290 = vpack.c.b16 %v3277, %v3276
      %v3291 = vpack.c.b16 %v3279, %v3278
      %v3292 = vpack.c.b16 %v3281, %v3280
      %v3293 = vpack.c.b16 %v3283, %v3282
      %v3294 = vpack.c.b16 %v3285, %v3284
      %v3295 = vpack.c.b16 %v3287, %v3286
      %3304 = vmatprep.subr.bf16.mxu0 0
      %3305 = vmatpush1.bf16.msra.mxu0 %v3295
      %3306 = vmatprep.subr.bf16.mxu0 0
      %3307 = vmatpush1.bf16.msra.mxu0 %v3294
      %3308 = vmatprep.subr.bf16.mxu0 0
      %3309 = vmatpush1.bf16.msra.mxu0 %v3293
      %3310 = vmatprep.subr.bf16.mxu0 0
      %3311 = vmatpush1.bf16.msra.mxu0 %v3292
      %3312 = vmatprep.subr.bf16.mxu0 0
      %3313 = vmatpush1.bf16.msra.mxu0 %v3291
      %3314 = vmatprep.subr.bf16.mxu0 0
      %3315 = vmatpush1.bf16.msra.mxu0 %v3290
      %3316 = vmatprep.subr.bf16.mxu0 0
      %3317 = vmatpush1.bf16.msra.mxu0 %v3289
      %3318 = vmatprep.subr.bf16.mxu0 0
      %3319 = vmatpush1.bf16.msra.mxu0 %v3288
      %3320 = vmatprep.subr.bf16.mxu0 0
      %3321 = vmatpush2.bf16.msra.mxu0 0
      %3322 = vmatprep.subr.bf16.mxu0 0
      %3323 = vmatpush2.bf16.msra.mxu0 0
      %3324 = vmatprep.subr.bf16.mxu0 0
      %3325 = vmatpush2.bf16.msra.mxu0 0
      %3326 = vmatprep.subr.bf16.mxu0 0
      %3327 = vmatpush2.bf16.msra.mxu0 0
      %3328 = vmatprep.subr.bf16.mxu0 0
      %3329 = vmatpush2.bf16.msra.mxu0 0
      %3330 = vmatprep.subr.bf16.mxu0 0
      %3331 = vmatpush2.bf16.msra.mxu0 0
      %3332 = vmatprep.subr.bf16.mxu0 0
      %3333 = vmatpush2.bf16.msra.mxu0 0
      %3334 = vmatprep.subr.bf16.mxu0 0
      %3335 = vmatpush2.bf16.msra.mxu0 0
      %3336 = vmatprep.mubr.bf16.mxu0 0
      %3337 = vmatmul.mubr.bf16.gmra.mxu0 %v3224
      %v3338 = vpop.f32.mrf.mxu0
      %v3339 = vadd.f32 0.0, %v3338
      %v3340 = vpop.f32.mrf.mxu0
      %v3341 = vpop.f32.mrf.mxu0
      %v3342 = vadd.f32 0.0, %v3341
      %v3343 = vpop.f32.mrf.mxu0
      %3344 = vmatprep.mubr.bf16.mxu0 0
      %3345 = vmatmul.mubr.bf16.gmra.mxu0 %v3225
      %v3346 = vpop.f32.mrf.mxu0
      %v3347 = vadd.f32 0.0, %v3346
      %v3348 = vpop.f32.mrf.mxu0
      %v3349 = vpop.f32.mrf.mxu0
      %v3350 = vadd.f32 0.0, %v3349
      %v3351 = vpop.f32.mrf.mxu0
      %3352 = vmatprep.mubr.bf16.mxu0 0
      %3353 = vmatmul.mubr.bf16.gmra.mxu0 %v3226
      %v3354 = vpop.f32.mrf.mxu0
      %v3355 = vadd.f32 0.0, %v3354
      %v3356 = vpop.f32.mrf.mxu0
      %v3357 = vpop.f32.mrf.mxu0
      %v3358 = vadd.f32 0.0, %v3357
      %v3359 = vpop.f32.mrf.mxu0
      %3360 = vmatprep.mubr.bf16.mxu0 0
      %3361 = vmatmul.mubr.bf16.gmra.mxu0 %v3227
      %v3362 = vpop.f32.mrf.mxu0
      %v3363 = vadd.f32 0.0, %v3362
      %v3364 = vpop.f32.mrf.mxu0
      %v3365 = vpop.f32.mrf.mxu0
      %v3366 = vadd.f32 0.0, %v3365
      %v3367 = vpop.f32.mrf.mxu0
      %3368 = vmatprep.mubr.bf16.mxu0 0
      %3369 = vmatmul.mubr.bf16.gmra.mxu0 %v3228
      %v3370 = vpop.f32.mrf.mxu0
      %v3371 = vadd.f32 0.0, %v3370
      %v3372 = vpop.f32.mrf.mxu0
      %v3373 = vpop.f32.mrf.mxu0
      %v3374 = vadd.f32 0.0, %v3373
      %v3375 = vpop.f32.mrf.mxu0
      %3376 = vmatprep.mubr.bf16.mxu0 0
      %3377 = vmatmul.mubr.bf16.gmra.mxu0 %v3229
      %v3378 = vpop.f32.mrf.mxu0
      %v3379 = vadd.f32 0.0, %v3378
      %v3380 = vpop.f32.mrf.mxu0
      %v3381 = vpop.f32.mrf.mxu0
      %v3382 = vadd.f32 0.0, %v3381
      %v3383 = vpop.f32.mrf.mxu0
      %3384 = vmatprep.mubr.bf16.mxu0 0
      %3385 = vmatmul.mubr.bf16.gmra.mxu0 %v3230
      %v3386 = vpop.f32.mrf.mxu0
      %v3387 = vadd.f32 0.0, %v3386
      %v3388 = vpop.f32.mrf.mxu0
      %v3389 = vpop.f32.mrf.mxu0
      %v3390 = vadd.f32 0.0, %v3389
      %v3391 = vpop.f32.mrf.mxu0
      %3392 = vmatprep.mubr.bf16.mxu0 0
      %3393 = vmatmul.mubr.bf16.gmra.mxu0 %v3231
      %v3394 = vpop.f32.mrf.mxu0
      %v3395 = vadd.f32 0.0, %v3394
      %v3396 = vpop.f32.mrf.mxu0
      %v3397 = vpop.f32.mrf.mxu0
      %v3398 = vadd.f32 0.0, %v3397
      %v3399 = vpop.f32.mrf.mxu0
      %3400 = vmatprep.mubr.bf16.mxu0 0
      %3401 = vmatmul.mubr.bf16.gmra.mxu0 %v3232
      %v3402 = vpop.f32.mrf.mxu0
      %v3403 = vadd.f32 0.0, %v3402
      %v3404 = vpop.f32.mrf.mxu0
      %v3405 = vpop.f32.mrf.mxu0
      %v3406 = vadd.f32 0.0, %v3405
      %v3407 = vpop.f32.mrf.mxu0
      %3408 = vmatprep.mubr.bf16.mxu0 0
      %3409 = vmatmul.mubr.bf16.gmra.mxu0 %v3233
      %v3410 = vpop.f32.mrf.mxu0
      %v3411 = vadd.f32 0.0, %v3410
      %v3412 = vpop.f32.mrf.mxu0
      %v3413 = vpop.f32.mrf.mxu0
      %v3414 = vadd.f32 0.0, %v3413
      %v3415 = vpop.f32.mrf.mxu0
      %3416 = vmatprep.mubr.bf16.mxu0 0
      %3417 = vmatmul.mubr.bf16.gmra.mxu0 %v3234
      %v3418 = vpop.f32.mrf.mxu0
      %v3419 = vadd.f32 0.0, %v3418
      %v3420 = vpop.f32.mrf.mxu0
      %v3421 = vpop.f32.mrf.mxu0
      %v3422 = vadd.f32 0.0, %v3421
      %v3423 = vpop.f32.mrf.mxu0
      %3424 = vmatprep.mubr.bf16.mxu0 0
      %3425 = vmatmul.mubr.bf16.gmra.mxu0 %v3235
      %v3426 = vpop.f32.mrf.mxu0
      %v3427 = vadd.f32 0.0, %v3426
      %v3428 = vpop.f32.mrf.mxu0
      %v3429 = vpop.f32.mrf.mxu0
      %v3430 = vadd.f32 0.0, %v3429
      %v3431 = vpop.f32.mrf.mxu0
      %3432 = vmatprep.mubr.bf16.mxu0 0
      %3433 = vmatmul.mubr.bf16.gmra.mxu0 %v3236
      %v3434 = vpop.f32.mrf.mxu0
      %v3435 = vadd.f32 0.0, %v3434
      %v3436 = vpop.f32.mrf.mxu0
      %v3437 = vpop.f32.mrf.mxu0
      %v3438 = vadd.f32 0.0, %v3437
      %v3439 = vpop.f32.mrf.mxu0
      %3440 = vmatprep.mubr.bf16.mxu0 0
      %3441 = vmatmul.mubr.bf16.gmra.mxu0 %v3237
      %v3442 = vpop.f32.mrf.mxu0
      %v3443 = vadd.f32 0.0, %v3442
      %v3444 = vpop.f32.mrf.mxu0
      %v3445 = vpop.f32.mrf.mxu0
      %v3446 = vadd.f32 0.0, %v3445
      %v3447 = vpop.f32.mrf.mxu0
      %3448 = vmatprep.mubr.bf16.mxu0 0
      %3449 = vmatmul.mubr.bf16.gmra.mxu0 %v3238
      %v3450 = vpop.f32.mrf.mxu0
      %v3451 = vadd.f32 0.0, %v3450
      %v3452 = vpop.f32.mrf.mxu0
      %v3453 = vpop.f32.mrf.mxu0
      %v3454 = vadd.f32 0.0, %v3453
      %v3455 = vpop.f32.mrf.mxu0
      %3456 = vmatprep.mubr.bf16.mxu0 0
      %3457 = vmatmul.mubr.bf16.gmra.mxu0 %v3239
      %v3458 = vpop.f32.mrf.mxu0
      %v3459 = vadd.f32 0.0, %v3458
      %v3460 = vpop.f32.mrf.mxu0
      %v3461 = vpop.f32.mrf.mxu0
      %v3462 = vadd.f32 0.0, %v3461
      %v3463 = vpop.f32.mrf.mxu0
      %3464 = vdwg.mxu0
      %v3465 = vadd.f32 %v2967, %v3339
      %v3466 = vadd.f32 %v2968, %v3342
      %v3467 = vadd.f32 %v2969, %v3347
      %v3468 = vadd.f32 %v2970, %v3350
      %v3469 = vadd.f32 %v2971, %v3355
      %v3470 = vadd.f32 %v2972, %v3358
      %v3471 = vadd.f32 %v2973, %v3363
      %v3472 = vadd.f32 %v2974, %v3366
      %v3473 = vadd.f32 %v2975, %v3371
      %v3474 = vadd.f32 %v2976, %v3374
      %v3475 = vadd.f32 %v2977, %v3379
      %v3476 = vadd.f32 %v2978, %v3382
      %v3477 = vadd.f32 %v2979, %v3387
      %v3478 = vadd.f32 %v2980, %v3390
      %v3479 = vadd.f32 %v2981, %v3395
      %v3480 = vadd.f32 %v2982, %v3398
      %v3481 = vadd.f32 %v2983, %v3403
      %v3482 = vadd.f32 %v2984, %v3406
      %v3483 = vadd.f32 %v2985, %v3411
      %v3484 = vadd.f32 %v2986, %v3414
      %v3485 = vadd.f32 %v2987, %v3419
      %v3486 = vadd.f32 %v2988, %v3422
      %v3487 = vadd.f32 %v2989, %v3427
      %v3488 = vadd.f32 %v2990, %v3430
      %v3489 = vadd.f32 %v2991, %v3435
      %v3490 = vadd.f32 %v2992, %v3438
      %v3491 = vadd.f32 %v2993, %v3443
      %v3492 = vadd.f32 %v2994, %v3446
      %v3493 = vadd.f32 %v2995, %v3451
      %v3494 = vadd.f32 %v2996, %v3454
      %v3495 = vadd.f32 %v2997, %v3459
      %v3496 = vadd.f32 %v2998, %v3462
      %s3497 = scalar_lea.vmem %s315, 24
      %v3498 = vld [vmem:[%s3497] sm:$0xf]
      %v3499 = vld [vmem:[%s3497 + $0x4] sm:$0xf]
      %v3500 = vld [vmem:[%s3497 + $0xc] sm:$0xf]
      %v3501 = vld [vmem:[%s3497 + $0x10] sm:$0xf]
      %v3502 = vld [vmem:[%s3497 + $0x18] sm:$0xf]
      %v3503 = vld [vmem:[%s3497 + $0x1c] sm:$0xf]
      %v3504 = vld [vmem:[%s3497 + $0x24] sm:$0xf]
      %v3505 = vld [vmem:[%s3497 + $0x28] sm:$0xf]
      %v3506 = vld [vmem:[%s3497 + $0x30] sm:$0xf]
      %v3507 = vld [vmem:[%s3497 + $0x34] sm:$0xf]
      %v3508 = vld [vmem:[%s3497 + $0x3c] sm:$0xf]
      %v3509 = vld [vmem:[%s3497 + $0x40] sm:$0xf]
      %v3510 = vld [vmem:[%s3497 + $0x48] sm:$0xf]
      %v3511 = vld [vmem:[%s3497 + $0x4c] sm:$0xf]
      %v3512 = vld [vmem:[%s3497 + $0x54] sm:$0xf]
      %v3513 = vld [vmem:[%s3497 + $0x58] sm:$0xf]
      %v3514 = vld [vmem:[%s3497 + $0x60] sm:$0xf]
      %v3515 = vld [vmem:[%s3497 + $0x64] sm:$0xf]
      %v3516 = vld [vmem:[%s3497 + $0x6c] sm:$0xf]
      %v3517 = vld [vmem:[%s3497 + $0x70] sm:$0xf]
      %v3518 = vld [vmem:[%s3497 + $0x78] sm:$0xf]
      %v3519 = vld [vmem:[%s3497 + $0x7c] sm:$0xf]
      %v3520 = vld [vmem:[%s3497 + $0x84] sm:$0xf]
      %v3521 = vld [vmem:[%s3497 + $0x88] sm:$0xf]
      %v3522 = vld [vmem:[%s3497 + $0x90] sm:$0xf]
      %v3523 = vld [vmem:[%s3497 + $0x94] sm:$0xf]
      %v3524 = vld [vmem:[%s3497 + $0x9c] sm:$0xf]
      %v3525 = vld [vmem:[%s3497 + $0xa0] sm:$0xf]
      %v3526 = vld [vmem:[%s3497 + $0xa8] sm:$0xf]
      %v3527 = vld [vmem:[%s3497 + $0xac] sm:$0xf]
      %v3528 = vld [vmem:[%s3497 + $0xb4] sm:$0xf]
      %v3529 = vld [vmem:[%s3497 + $0xb8] sm:$0xf]
      %s3530 = scalar_lea.vmem %s2, 384
      %v3531 = vld [vmem:[%s3530] sm:$0xf]
      %v3532 = vld [vmem:[%s3530 + $0x4] sm:$0xf]
      %v3533 = vld [vmem:[%s3530 + $0x8] sm:$0xf]
      %v3534 = vld [vmem:[%s3530 + $0xc] sm:$0xf]
      %v3535 = vld [vmem:[%s3530 + $0x10] sm:$0xf]
      %v3536 = vld [vmem:[%s3530 + $0x14] sm:$0xf]
      %v3537 = vld [vmem:[%s3530 + $0x18] sm:$0xf]
      %v3538 = vld [vmem:[%s3530 + $0x1c] sm:$0xf]
      %v3539 = vld [vmem:[%s3530 + $0x20] sm:$0xf]
      %v3540 = vld [vmem:[%s3530 + $0x24] sm:$0xf]
      %v3541 = vld [vmem:[%s3530 + $0x28] sm:$0xf]
      %v3542 = vld [vmem:[%s3530 + $0x2c] sm:$0xf]
      %v3543 = vld [vmem:[%s3530 + $0x30] sm:$0xf]
      %v3544 = vld [vmem:[%s3530 + $0x34] sm:$0xf]
      %v3545 = vld [vmem:[%s3530 + $0x38] sm:$0xf]
      %v3546 = vld [vmem:[%s3530 + $0x3c] sm:$0xf]
      %v3579 = vunpack.c.l.b16 %v3498
      %v3580 = vunpack.c.l.b16 %v3499
      %v3581 = vunpack.c.l.b16 %v3500
      %v3582 = vunpack.c.l.b16 %v3501
      %v3583 = vunpack.c.l.b16 %v3502
      %v3584 = vunpack.c.l.b16 %v3503
      %v3585 = vunpack.c.l.b16 %v3504
      %v3586 = vunpack.c.l.b16 %v3505
      %v3587 = vunpack.c.l.b16 %v3506
      %v3588 = vunpack.c.l.b16 %v3507
      %v3589 = vunpack.c.l.b16 %v3508
      %v3590 = vunpack.c.l.b16 %v3509
      %v3591 = vunpack.c.l.b16 %v3510
      %v3592 = vunpack.c.l.b16 %v3511
      %v3593 = vunpack.c.l.b16 %v3512
      %v3594 = vunpack.c.l.b16 %v3513
      %v3595 = vunpack.c.l.b16 %v3514
      %v3596 = vunpack.c.l.b16 %v3515
      %v3597 = vunpack.c.l.b16 %v3516
      %v3598 = vunpack.c.l.b16 %v3517
      %v3599 = vunpack.c.l.b16 %v3518
      %v3600 = vunpack.c.l.b16 %v3519
      %v3601 = vunpack.c.l.b16 %v3520
      %v3602 = vunpack.c.l.b16 %v3521
      %v3603 = vunpack.c.l.b16 %v3522
      %v3604 = vunpack.c.l.b16 %v3523
      %v3605 = vunpack.c.l.b16 %v3524
      %v3606 = vunpack.c.l.b16 %v3525
      %v3607 = vunpack.c.l.b16 %v3526
      %v3608 = vunpack.c.l.b16 %v3527
      %v3609 = vunpack.c.l.b16 %v3528
      %v3610 = vunpack.c.l.b16 %v3529
      %v3611 = vpack.c.b16 %v3580, %v3579
      %v3612 = vpack.c.b16 %v3582, %v3581
      %v3613 = vpack.c.b16 %v3584, %v3583
      %v3614 = vpack.c.b16 %v3586, %v3585
      %v3615 = vpack.c.b16 %v3588, %v3587
      %v3616 = vpack.c.b16 %v3590, %v3589
      %v3617 = vpack.c.b16 %v3592, %v3591
      %v3618 = vpack.c.b16 %v3594, %v3593
      %v3619 = vpack.c.b16 %v3596, %v3595
      %v3620 = vpack.c.b16 %v3598, %v3597
      %v3621 = vpack.c.b16 %v3600, %v3599
      %v3622 = vpack.c.b16 %v3602, %v3601
      %v3623 = vpack.c.b16 %v3604, %v3603
      %v3624 = vpack.c.b16 %v3606, %v3605
      %v3625 = vpack.c.b16 %v3608, %v3607
      %v3626 = vpack.c.b16 %v3610, %v3609
      %v3659 = vunpack.c.l.b16 %v3531
      %v3660 = vunpack.c.l.b16 %v3532
      %v3661 = vunpack.c.l.b16 %v3533
      %v3662 = vunpack.c.l.b16 %v3534
      %v3663 = vunpack.c.l.b16 %v3535
      %v3664 = vunpack.c.l.b16 %v3536
      %v3665 = vunpack.c.l.b16 %v3537
      %v3666 = vunpack.c.l.b16 %v3538
      %v3667 = vunpack.c.l.b16 %v3539
      %v3668 = vunpack.c.l.b16 %v3540
      %v3669 = vunpack.c.l.b16 %v3541
      %v3670 = vunpack.c.l.b16 %v3542
      %v3671 = vunpack.c.l.b16 %v3543
      %v3672 = vunpack.c.l.b16 %v3544
      %v3673 = vunpack.c.l.b16 %v3545
      %v3674 = vunpack.c.l.b16 %v3546
      %v3675 = vpack.c.b16 %v3660, %v3659
      %v3676 = vpack.c.b16 %v3662, %v3661
      %v3677 = vpack.c.b16 %v3664, %v3663
      %v3678 = vpack.c.b16 %v3666, %v3665
      %v3679 = vpack.c.b16 %v3668, %v3667
      %v3680 = vpack.c.b16 %v3670, %v3669
      %v3681 = vpack.c.b16 %v3672, %v3671
      %v3682 = vpack.c.b16 %v3674, %v3673
      %3691 = vmatprep.subr.bf16.mxu0 0
      %3692 = vmatpush1.bf16.msra.mxu0 %v3682
      %3693 = vmatprep.subr.bf16.mxu0 0
      %3694 = vmatpush1.bf16.msra.mxu0 %v3681
      %3695 = vmatprep.subr.bf16.mxu0 0
      %3696 = vmatpush1.bf16.msra.mxu0 %v3680
      %3697 = vmatprep.subr.bf16.mxu0 0
      %3698 = vmatpush1.bf16.msra.mxu0 %v3679
      %3699 = vmatprep.subr.bf16.mxu0 0
      %3700 = vmatpush1.bf16.msra.mxu0 %v3678
      %3701 = vmatprep.subr.bf16.mxu0 0
      %3702 = vmatpush1.bf16.msra.mxu0 %v3677
      %3703 = vmatprep.subr.bf16.mxu0 0
      %3704 = vmatpush1.bf16.msra.mxu0 %v3676
      %3705 = vmatprep.subr.bf16.mxu0 0
      %3706 = vmatpush1.bf16.msra.mxu0 %v3675
      %3707 = vmatprep.subr.bf16.mxu0 0
      %3708 = vmatpush2.bf16.msra.mxu0 0
      %3709 = vmatprep.subr.bf16.mxu0 0
      %3710 = vmatpush2.bf16.msra.mxu0 0
      %3711 = vmatprep.subr.bf16.mxu0 0
      %3712 = vmatpush2.bf16.msra.mxu0 0
      %3713 = vmatprep.subr.bf16.mxu0 0
      %3714 = vmatpush2.bf16.msra.mxu0 0
      %3715 = vmatprep.subr.bf16.mxu0 0
      %3716 = vmatpush2.bf16.msra.mxu0 0
      %3717 = vmatprep.subr.bf16.mxu0 0
      %3718 = vmatpush2.bf16.msra.mxu0 0
      %3719 = vmatprep.subr.bf16.mxu0 0
      %3720 = vmatpush2.bf16.msra.mxu0 0
      %3721 = vmatprep.subr.bf16.mxu0 0
      %3722 = vmatpush2.bf16.msra.mxu0 0
      %3723 = vmatprep.mubr.bf16.mxu0 0
      %3724 = vmatmul.mubr.bf16.gmra.mxu0 %v3611
      %v3725 = vpop.f32.mrf.mxu0
      %v3726 = vadd.f32 0.0, %v3725
      %v3727 = vpop.f32.mrf.mxu0
      %v3728 = vpop.f32.mrf.mxu0
      %v3729 = vadd.f32 0.0, %v3728
      %v3730 = vpop.f32.mrf.mxu0
      %3731 = vmatprep.mubr.bf16.mxu0 0
      %3732 = vmatmul.mubr.bf16.gmra.mxu0 %v3612
      %v3733 = vpop.f32.mrf.mxu0
      %v3734 = vadd.f32 0.0, %v3733
      %v3735 = vpop.f32.mrf.mxu0
      %v3736 = vpop.f32.mrf.mxu0
      %v3737 = vadd.f32 0.0, %v3736
      %v3738 = vpop.f32.mrf.mxu0
      %3739 = vmatprep.mubr.bf16.mxu0 0
      %3740 = vmatmul.mubr.bf16.gmra.mxu0 %v3613
      %v3741 = vpop.f32.mrf.mxu0
      %v3742 = vadd.f32 0.0, %v3741
      %v3743 = vpop.f32.mrf.mxu0
      %v3744 = vpop.f32.mrf.mxu0
      %v3745 = vadd.f32 0.0, %v3744
      %v3746 = vpop.f32.mrf.mxu0
      %3747 = vmatprep.mubr.bf16.mxu0 0
      %3748 = vmatmul.mubr.bf16.gmra.mxu0 %v3614
      %v3749 = vpop.f32.mrf.mxu0
      %v3750 = vadd.f32 0.0, %v3749
      %v3751 = vpop.f32.mrf.mxu0
      %v3752 = vpop.f32.mrf.mxu0
      %v3753 = vadd.f32 0.0, %v3752
      %v3754 = vpop.f32.mrf.mxu0
      %3755 = vmatprep.mubr.bf16.mxu0 0
      %3756 = vmatmul.mubr.bf16.gmra.mxu0 %v3615
      %v3757 = vpop.f32.mrf.mxu0
      %v3758 = vadd.f32 0.0, %v3757
      %v3759 = vpop.f32.mrf.mxu0
      %v3760 = vpop.f32.mrf.mxu0
      %v3761 = vadd.f32 0.0, %v3760
      %v3762 = vpop.f32.mrf.mxu0
      %3763 = vmatprep.mubr.bf16.mxu0 0
      %3764 = vmatmul.mubr.bf16.gmra.mxu0 %v3616
      %v3765 = vpop.f32.mrf.mxu0
      %v3766 = vadd.f32 0.0, %v3765
      %v3767 = vpop.f32.mrf.mxu0
      %v3768 = vpop.f32.mrf.mxu0
      %v3769 = vadd.f32 0.0, %v3768
      %v3770 = vpop.f32.mrf.mxu0
      %3771 = vmatprep.mubr.bf16.mxu0 0
      %3772 = vmatmul.mubr.bf16.gmra.mxu0 %v3617
      %v3773 = vpop.f32.mrf.mxu0
      %v3774 = vadd.f32 0.0, %v3773
      %v3775 = vpop.f32.mrf.mxu0
      %v3776 = vpop.f32.mrf.mxu0
      %v3777 = vadd.f32 0.0, %v3776
      %v3778 = vpop.f32.mrf.mxu0
      %3779 = vmatprep.mubr.bf16.mxu0 0
      %3780 = vmatmul.mubr.bf16.gmra.mxu0 %v3618
      %v3781 = vpop.f32.mrf.mxu0
      %v3782 = vadd.f32 0.0, %v3781
      %v3783 = vpop.f32.mrf.mxu0
      %v3784 = vpop.f32.mrf.mxu0
      %v3785 = vadd.f32 0.0, %v3784
      %v3786 = vpop.f32.mrf.mxu0
      %3787 = vmatprep.mubr.bf16.mxu0 0
      %3788 = vmatmul.mubr.bf16.gmra.mxu0 %v3619
      %v3789 = vpop.f32.mrf.mxu0
      %v3790 = vadd.f32 0.0, %v3789
      %v3791 = vpop.f32.mrf.mxu0
      %v3792 = vpop.f32.mrf.mxu0
      %v3793 = vadd.f32 0.0, %v3792
      %v3794 = vpop.f32.mrf.mxu0
      %3795 = vmatprep.mubr.bf16.mxu0 0
      %3796 = vmatmul.mubr.bf16.gmra.mxu0 %v3620
      %v3797 = vpop.f32.mrf.mxu0
      %v3798 = vadd.f32 0.0, %v3797
      %v3799 = vpop.f32.mrf.mxu0
      %v3800 = vpop.f32.mrf.mxu0
      %v3801 = vadd.f32 0.0, %v3800
      %v3802 = vpop.f32.mrf.mxu0
      %3803 = vmatprep.mubr.bf16.mxu0 0
      %3804 = vmatmul.mubr.bf16.gmra.mxu0 %v3621
      %v3805 = vpop.f32.mrf.mxu0
      %v3806 = vadd.f32 0.0, %v3805
      %v3807 = vpop.f32.mrf.mxu0
      %v3808 = vpop.f32.mrf.mxu0
      %v3809 = vadd.f32 0.0, %v3808
      %v3810 = vpop.f32.mrf.mxu0
      %3811 = vmatprep.mubr.bf16.mxu0 0
      %3812 = vmatmul.mubr.bf16.gmra.mxu0 %v3622
      %v3813 = vpop.f32.mrf.mxu0
      %v3814 = vadd.f32 0.0, %v3813
      %v3815 = vpop.f32.mrf.mxu0
      %v3816 = vpop.f32.mrf.mxu0
      %v3817 = vadd.f32 0.0, %v3816
      %v3818 = vpop.f32.mrf.mxu0
      %3819 = vmatprep.mubr.bf16.mxu0 0
      %3820 = vmatmul.mubr.bf16.gmra.mxu0 %v3623
      %v3821 = vpop.f32.mrf.mxu0
      %v3822 = vadd.f32 0.0, %v3821
      %v3823 = vpop.f32.mrf.mxu0
      %v3824 = vpop.f32.mrf.mxu0
      %v3825 = vadd.f32 0.0, %v3824
      %v3826 = vpop.f32.mrf.mxu0
      %3827 = vmatprep.mubr.bf16.mxu0 0
      %3828 = vmatmul.mubr.bf16.gmra.mxu0 %v3624
      %v3829 = vpop.f32.mrf.mxu0
      %v3830 = vadd.f32 0.0, %v3829
      %v3831 = vpop.f32.mrf.mxu0
      %v3832 = vpop.f32.mrf.mxu0
      %v3833 = vadd.f32 0.0, %v3832
      %v3834 = vpop.f32.mrf.mxu0
      %3835 = vmatprep.mubr.bf16.mxu0 0
      %3836 = vmatmul.mubr.bf16.gmra.mxu0 %v3625
      %v3837 = vpop.f32.mrf.mxu0
      %v3838 = vadd.f32 0.0, %v3837
      %v3839 = vpop.f32.mrf.mxu0
      %v3840 = vpop.f32.mrf.mxu0
      %v3841 = vadd.f32 0.0, %v3840
      %v3842 = vpop.f32.mrf.mxu0
      %3843 = vmatprep.mubr.bf16.mxu0 0
      %3844 = vmatmul.mubr.bf16.gmra.mxu0 %v3626
      %v3845 = vpop.f32.mrf.mxu0
      %v3846 = vadd.f32 0.0, %v3845
      %v3847 = vpop.f32.mrf.mxu0
      %v3848 = vpop.f32.mrf.mxu0
      %v3849 = vadd.f32 0.0, %v3848
      %v3850 = vpop.f32.mrf.mxu0
      %3851 = vdwg.mxu0
      %v3852 = vadd.f32 %v3465, %v3726
      %v3853 = vadd.f32 %v3466, %v3729
      %v3854 = vadd.f32 %v3467, %v3734
      %v3855 = vadd.f32 %v3468, %v3737
      %v3856 = vadd.f32 %v3469, %v3742
      %v3857 = vadd.f32 %v3470, %v3745
      %v3858 = vadd.f32 %v3471, %v3750
      %v3859 = vadd.f32 %v3472, %v3753
      %v3860 = vadd.f32 %v3473, %v3758
      %v3861 = vadd.f32 %v3474, %v3761
      %v3862 = vadd.f32 %v3475, %v3766
      %v3863 = vadd.f32 %v3476, %v3769
      %v3864 = vadd.f32 %v3477, %v3774
      %v3865 = vadd.f32 %v3478, %v3777
      %v3866 = vadd.f32 %v3479, %v3782
      %v3867 = vadd.f32 %v3480, %v3785
      %v3868 = vadd.f32 %v3481, %v3790
      %v3869 = vadd.f32 %v3482, %v3793
      %v3870 = vadd.f32 %v3483, %v3798
      %v3871 = vadd.f32 %v3484, %v3801
      %v3872 = vadd.f32 %v3485, %v3806
      %v3873 = vadd.f32 %v3486, %v3809
      %v3874 = vadd.f32 %v3487, %v3814
      %v3875 = vadd.f32 %v3488, %v3817
      %v3876 = vadd.f32 %v3489, %v3822
      %v3877 = vadd.f32 %v3490, %v3825
      %v3878 = vadd.f32 %v3491, %v3830
      %v3879 = vadd.f32 %v3492, %v3833
      %v3880 = vadd.f32 %v3493, %v3838
      %v3881 = vadd.f32 %v3494, %v3841
      %v3882 = vadd.f32 %v3495, %v3846
      %v3883 = vadd.f32 %v3496, %v3849
      %v3884 = vld [vmem:[%s3497] sm:$0xf]
      %v3885 = vld [vmem:[%s3497 + $0x4] sm:$0xf]
      %v3886 = vld [vmem:[%s3497 + $0x8] sm:$0x1]
      %v3887 = vld [vmem:[%s3497 + $0xc] sm:$0xf]
      %v3888 = vld [vmem:[%s3497 + $0x10] sm:$0xf]
      %v3889 = vld [vmem:[%s3497 + $0x14] sm:$0x1]
      %v3890 = vld [vmem:[%s3497 + $0x18] sm:$0xf]
      %v3891 = vld [vmem:[%s3497 + $0x1c] sm:$0xf]
      %v3892 = vld [vmem:[%s3497 + $0x20] sm:$0x1]
      %v3893 = vld [vmem:[%s3497 + $0x24] sm:$0xf]
      %v3894 = vld [vmem:[%s3497 + $0x28] sm:$0xf]
      %v3895 = vld [vmem:[%s3497 + $0x2c] sm:$0x1]
      %v3896 = vld [vmem:[%s3497 + $0x30] sm:$0xf]
      %v3897 = vld [vmem:[%s3497 + $0x34] sm:$0xf]
      %v3898 = vld [vmem:[%s3497 + $0x38] sm:$0x1]
      %v3899 = vld [vmem:[%s3497 + $0x3c] sm:$0xf]
      %v3900 = vld [vmem:[%s3497 + $0x40] sm:$0xf]
      %v3901 = vld [vmem:[%s3497 + $0x44] sm:$0x1]
      %v3902 = vld [vmem:[%s3497 + $0x48] sm:$0xf]
      %v3903 = vld [vmem:[%s3497 + $0x4c] sm:$0xf]
      %v3904 = vld [vmem:[%s3497 + $0x50] sm:$0x1]
      %v3905 = vld [vmem:[%s3497 + $0x54] sm:$0xf]
      %v3906 = vld [vmem:[%s3497 + $0x58] sm:$0xf]
      %v3907 = vld [vmem:[%s3497 + $0x5c] sm:$0x1]
      %v3908 = vld [vmem:[%s3497 + $0x60] sm:$0xf]
      %v3909 = vld [vmem:[%s3497 + $0x64] sm:$0xf]
      %v3910 = vld [vmem:[%s3497 + $0x68] sm:$0x1]
      %v3911 = vld [vmem:[%s3497 + $0x6c] sm:$0xf]
      %v3912 = vld [vmem:[%s3497 + $0x70] sm:$0xf]
      %v3913 = vld [vmem:[%s3497 + $0x74] sm:$0x1]
      %v3914 = vld [vmem:[%s3497 + $0x78] sm:$0xf]
      %v3915 = vld [vmem:[%s3497 + $0x7c] sm:$0xf]
      %v3916 = vld [vmem:[%s3497 + $0x80] sm:$0x1]
      %v3917 = vld [vmem:[%s3497 + $0x84] sm:$0xf]
      %v3918 = vld [vmem:[%s3497 + $0x88] sm:$0xf]
      %v3919 = vld [vmem:[%s3497 + $0x8c] sm:$0x1]
      %v3920 = vld [vmem:[%s3497 + $0x90] sm:$0xf]
      %v3921 = vld [vmem:[%s3497 + $0x94] sm:$0xf]
      %v3922 = vld [vmem:[%s3497 + $0x98] sm:$0x1]
      %v3923 = vld [vmem:[%s3497 + $0x9c] sm:$0xf]
      %v3924 = vld [vmem:[%s3497 + $0xa0] sm:$0xf]
      %v3925 = vld [vmem:[%s3497 + $0xa4] sm:$0x1]
      %v3926 = vld [vmem:[%s3497 + $0xa8] sm:$0xf]
      %v3927 = vld [vmem:[%s3497 + $0xac] sm:$0xf]
      %v3928 = vld [vmem:[%s3497 + $0xb0] sm:$0x1]
      %v3929 = vld [vmem:[%s3497 + $0xb4] sm:$0xf]
      %v3930 = vld [vmem:[%s3497 + $0xb8] sm:$0xf]
      %v3931 = vld [vmem:[%s3497 + $0xbc] sm:$0x1]
      %v3933 = vshrl.u32 %v3884, 16
      %v3935 = vrot.slane %v3933, 4
      %v3936 = vshll.u32 %v3884, 16
      %v3938 = vrot.slane %v3936, 5
      %v3939 = vor.u32 %v3935, %v3938
      %v3940 = vrot.slane %v3939, 4
      %v3942 = vshll.u32 %v3885, 16
      %v3944 = vrot.slane %v3942, 5
      %v3945 = vsel %vm393, %v3940, %v3944
      %v3946 = vshrl.u32 %v3885, 16
      %v3948 = vrot.slane %v3946, 4
      %v3949 = vor.u32 %v3948, %v3944
      %v3950 = vrot.slane %v3949, 4
      %v3952 = vshll.u32 %v3886, 16
      %v3954 = vrot.slane %v3952, 5
      %v3955 = vsel %vm393, %v3950, %v3954
      %v3957 = vshrl.u32 %v3887, 16
      %v3959 = vrot.slane %v3957, 4
      %v3960 = vshll.u32 %v3887, 16
      %v3962 = vrot.slane %v3960, 5
      %v3963 = vor.u32 %v3959, %v3962
      %v3964 = vrot.slane %v3963, 4
      %v3966 = vshll.u32 %v3888, 16
      %v3968 = vrot.slane %v3966, 5
      %v3969 = vsel %vm393, %v3964, %v3968
      %v3970 = vshrl.u32 %v3888, 16
      %v3972 = vrot.slane %v3970, 4
      %v3973 = vor.u32 %v3972, %v3968
      %v3974 = vrot.slane %v3973, 4
      %v3976 = vshll.u32 %v3889, 16
      %v3978 = vrot.slane %v3976, 5
      %v3979 = vsel %vm393, %v3974, %v3978
      %v3981 = vshrl.u32 %v3890, 16
      %v3983 = vrot.slane %v3981, 4
      %v3984 = vshll.u32 %v3890, 16
      %v3986 = vrot.slane %v3984, 5
      %v3987 = vor.u32 %v3983, %v3986
      %v3988 = vrot.slane %v3987, 4
      %v3990 = vshll.u32 %v3891, 16
      %v3992 = vrot.slane %v3990, 5
      %v3993 = vsel %vm393, %v3988, %v3992
      %v3994 = vshrl.u32 %v3891, 16
      %v3996 = vrot.slane %v3994, 4
      %v3997 = vor.u32 %v3996, %v3992
      %v3998 = vrot.slane %v3997, 4
      %v4000 = vshll.u32 %v3892, 16
      %v4002 = vrot.slane %v4000, 5
      %v4003 = vsel %vm393, %v3998, %v4002
      %v4005 = vshrl.u32 %v3893, 16
      %v4007 = vrot.slane %v4005, 4
      %v4008 = vshll.u32 %v3893, 16
      %v4010 = vrot.slane %v4008, 5
      %v4011 = vor.u32 %v4007, %v4010
      %v4012 = vrot.slane %v4011, 4
      %v4014 = vshll.u32 %v3894, 16
      %v4016 = vrot.slane %v4014, 5
      %v4017 = vsel %vm393, %v4012, %v4016
      %v4018 = vshrl.u32 %v3894, 16
      %v4020 = vrot.slane %v4018, 4
      %v4021 = vor.u32 %v4020, %v4016
      %v4022 = vrot.slane %v4021, 4
      %v4024 = vshll.u32 %v3895, 16
      %v4026 = vrot.slane %v4024, 5
      %v4027 = vsel %vm393, %v4022, %v4026
      %v4029 = vshrl.u32 %v3896, 16
      %v4031 = vrot.slane %v4029, 4
      %v4032 = vshll.u32 %v3896, 16
      %v4034 = vrot.slane %v4032, 5
      %v4035 = vor.u32 %v4031, %v4034
      %v4036 = vrot.slane %v4035, 4
      %v4038 = vshll.u32 %v3897, 16
      %v4040 = vrot.slane %v4038, 5
      %v4041 = vsel %vm393, %v4036, %v4040
      %v4042 = vshrl.u32 %v3897, 16
      %v4044 = vrot.slane %v4042, 4
      %v4045 = vor.u32 %v4044, %v4040
      %v4046 = vrot.slane %v4045, 4
      %v4048 = vshll.u32 %v3898, 16
      %v4050 = vrot.slane %v4048, 5
      %v4051 = vsel %vm393, %v4046, %v4050
      %v4053 = vshrl.u32 %v3899, 16
      %v4055 = vrot.slane %v4053, 4
      %v4056 = vshll.u32 %v3899, 16
      %v4058 = vrot.slane %v4056, 5
      %v4059 = vor.u32 %v4055, %v4058
      %v4060 = vrot.slane %v4059, 4
      %v4062 = vshll.u32 %v3900, 16
      %v4064 = vrot.slane %v4062, 5
      %v4065 = vsel %vm393, %v4060, %v4064
      %v4066 = vshrl.u32 %v3900, 16
      %v4068 = vrot.slane %v4066, 4
      %v4069 = vor.u32 %v4068, %v4064
      %v4070 = vrot.slane %v4069, 4
      %v4072 = vshll.u32 %v3901, 16
      %v4074 = vrot.slane %v4072, 5
      %v4075 = vsel %vm393, %v4070, %v4074
      %v4077 = vshrl.u32 %v3902, 16
      %v4079 = vrot.slane %v4077, 4
      %v4080 = vshll.u32 %v3902, 16
      %v4082 = vrot.slane %v4080, 5
      %v4083 = vor.u32 %v4079, %v4082
      %v4084 = vrot.slane %v4083, 4
      %v4086 = vshll.u32 %v3903, 16
      %v4088 = vrot.slane %v4086, 5
      %v4089 = vsel %vm393, %v4084, %v4088
      %v4090 = vshrl.u32 %v3903, 16
      %v4092 = vrot.slane %v4090, 4
      %v4093 = vor.u32 %v4092, %v4088
      %v4094 = vrot.slane %v4093, 4
      %v4096 = vshll.u32 %v3904, 16
      %v4098 = vrot.slane %v4096, 5
      %v4099 = vsel %vm393, %v4094, %v4098
      %v4101 = vshrl.u32 %v3905, 16
      %v4103 = vrot.slane %v4101, 4
      %v4104 = vshll.u32 %v3905, 16
      %v4106 = vrot.slane %v4104, 5
      %v4107 = vor.u32 %v4103, %v4106
      %v4108 = vrot.slane %v4107, 4
      %v4110 = vshll.u32 %v3906, 16
      %v4112 = vrot.slane %v4110, 5
      %v4113 = vsel %vm393, %v4108, %v4112
      %v4114 = vshrl.u32 %v3906, 16
      %v4116 = vrot.slane %v4114, 4
      %v4117 = vor.u32 %v4116, %v4112
      %v4118 = vrot.slane %v4117, 4
      %v4120 = vshll.u32 %v3907, 16
      %v4122 = vrot.slane %v4120, 5
      %v4123 = vsel %vm393, %v4118, %v4122
      %v4125 = vshrl.u32 %v3908, 16
      %v4127 = vrot.slane %v4125, 4
      %v4128 = vshll.u32 %v3908, 16
      %v4130 = vrot.slane %v4128, 5
      %v4131 = vor.u32 %v4127, %v4130
      %v4132 = vrot.slane %v4131, 4
      %v4134 = vshll.u32 %v3909, 16
      %v4136 = vrot.slane %v4134, 5
      %v4137 = vsel %vm393, %v4132, %v4136
      %v4138 = vshrl.u32 %v3909, 16
      %v4140 = vrot.slane %v4138, 4
      %v4141 = vor.u32 %v4140, %v4136
      %v4142 = vrot.slane %v4141, 4
      %v4144 = vshll.u32 %v3910, 16
      %v4146 = vrot.slane %v4144, 5
      %v4147 = vsel %vm393, %v4142, %v4146
      %v4149 = vshrl.u32 %v3911, 16
      %v4151 = vrot.slane %v4149, 4
      %v4152 = vshll.u32 %v3911, 16
      %v4154 = vrot.slane %v4152, 5
      %v4155 = vor.u32 %v4151, %v4154
      %v4156 = vrot.slane %v4155, 4
      %v4158 = vshll.u32 %v3912, 16
      %v4160 = vrot.slane %v4158, 5
      %v4161 = vsel %vm393, %v4156, %v4160
      %v4162 = vshrl.u32 %v3912, 16
      %v4164 = vrot.slane %v4162, 4
      %v4165 = vor.u32 %v4164, %v4160
      %v4166 = vrot.slane %v4165, 4
      %v4168 = vshll.u32 %v3913, 16
      %v4170 = vrot.slane %v4168, 5
      %v4171 = vsel %vm393, %v4166, %v4170
      %v4173 = vshrl.u32 %v3914, 16
      %v4175 = vrot.slane %v4173, 4
      %v4176 = vshll.u32 %v3914, 16
      %v4178 = vrot.slane %v4176, 5
      %v4179 = vor.u32 %v4175, %v4178
      %v4180 = vrot.slane %v4179, 4
      %v4182 = vshll.u32 %v3915, 16
      %v4184 = vrot.slane %v4182, 5
      %v4185 = vsel %vm393, %v4180, %v4184
      %v4186 = vshrl.u32 %v3915, 16
      %v4188 = vrot.slane %v4186, 4
      %v4189 = vor.u32 %v4188, %v4184
      %v4190 = vrot.slane %v4189, 4
      %v4192 = vshll.u32 %v3916, 16
      %v4194 = vrot.slane %v4192, 5
      %v4195 = vsel %vm393, %v4190, %v4194
      %v4197 = vshrl.u32 %v3917, 16
      %v4199 = vrot.slane %v4197, 4
      %v4200 = vshll.u32 %v3917, 16
      %v4202 = vrot.slane %v4200, 5
      %v4203 = vor.u32 %v4199, %v4202
      %v4204 = vrot.slane %v4203, 4
      %v4206 = vshll.u32 %v3918, 16
      %v4208 = vrot.slane %v4206, 5
      %v4209 = vsel %vm393, %v4204, %v4208
      %v4210 = vshrl.u32 %v3918, 16
      %v4212 = vrot.slane %v4210, 4
      %v4213 = vor.u32 %v4212, %v4208
      %v4214 = vrot.slane %v4213, 4
      %v4216 = vshll.u32 %v3919, 16
      %v4218 = vrot.slane %v4216, 5
      %v4219 = vsel %vm393, %v4214, %v4218
      %v4221 = vshrl.u32 %v3920, 16
      %v4223 = vrot.slane %v4221, 4
      %v4224 = vshll.u32 %v3920, 16
      %v4226 = vrot.slane %v4224, 5
      %v4227 = vor.u32 %v4223, %v4226
      %v4228 = vrot.slane %v4227, 4
      %v4230 = vshll.u32 %v3921, 16
      %v4232 = vrot.slane %v4230, 5
      %v4233 = vsel %vm393, %v4228, %v4232
      %v4234 = vshrl.u32 %v3921, 16
      %v4236 = vrot.slane %v4234, 4
      %v4237 = vor.u32 %v4236, %v4232
      %v4238 = vrot.slane %v4237, 4
      %v4240 = vshll.u32 %v3922, 16
      %v4242 = vrot.slane %v4240, 5
      %v4243 = vsel %vm393, %v4238, %v4242
      %v4245 = vshrl.u32 %v3923, 16
      %v4247 = vrot.slane %v4245, 4
      %v4248 = vshll.u32 %v3923, 16
      %v4250 = vrot.slane %v4248, 5
      %v4251 = vor.u32 %v4247, %v4250
      %v4252 = vrot.slane %v4251, 4
      %v4254 = vshll.u32 %v3924, 16
      %v4256 = vrot.slane %v4254, 5
      %v4257 = vsel %vm393, %v4252, %v4256
      %v4258 = vshrl.u32 %v3924, 16
      %v4260 = vrot.slane %v4258, 4
      %v4261 = vor.u32 %v4260, %v4256
      %v4262 = vrot.slane %v4261, 4
      %v4264 = vshll.u32 %v3925, 16
      %v4266 = vrot.slane %v4264, 5
      %v4267 = vsel %vm393, %v4262, %v4266
      %v4269 = vshrl.u32 %v3926, 16
      %v4271 = vrot.slane %v4269, 4
      %v4272 = vshll.u32 %v3926, 16
      %v4274 = vrot.slane %v4272, 5
      %v4275 = vor.u32 %v4271, %v4274
      %v4276 = vrot.slane %v4275, 4
      %v4278 = vshll.u32 %v3927, 16
      %v4280 = vrot.slane %v4278, 5
      %v4281 = vsel %vm393, %v4276, %v4280
      %v4282 = vshrl.u32 %v3927, 16
      %v4284 = vrot.slane %v4282, 4
      %v4285 = vor.u32 %v4284, %v4280
      %v4286 = vrot.slane %v4285, 4
      %v4288 = vshll.u32 %v3928, 16
      %v4290 = vrot.slane %v4288, 5
      %v4291 = vsel %vm393, %v4286, %v4290
      %v4293 = vshrl.u32 %v3929, 16
      %v4295 = vrot.slane %v4293, 4
      %v4296 = vshll.u32 %v3929, 16
      %v4298 = vrot.slane %v4296, 5
      %v4299 = vor.u32 %v4295, %v4298
      %v4300 = vrot.slane %v4299, 4
      %v4302 = vshll.u32 %v3930, 16
      %v4304 = vrot.slane %v4302, 5
      %v4305 = vsel %vm393, %v4300, %v4304
      %v4306 = vshrl.u32 %v3930, 16
      %v4308 = vrot.slane %v4306, 4
      %v4309 = vor.u32 %v4308, %v4304
      %v4310 = vrot.slane %v4309, 4
      %v4312 = vshll.u32 %v3931, 16
      %v4314 = vrot.slane %v4312, 5
      %v4315 = vsel %vm393, %v4310, %v4314
      %s4316 = scalar_lea.vmem %s2, 448
      %v4317 = vld [vmem:[%s4316] sm:$0xf]
      %v4318 = vld [vmem:[%s4316 + $0x4] sm:$0xf]
      %v4319 = vld [vmem:[%s4316 + $0x8] sm:$0xf]
      %v4320 = vld [vmem:[%s4316 + $0xc] sm:$0xf]
      %v4321 = vld [vmem:[%s4316 + $0x10] sm:$0xf]
      %v4322 = vld [vmem:[%s4316 + $0x14] sm:$0xf]
      %v4323 = vld [vmem:[%s4316 + $0x18] sm:$0xf]
      %v4324 = vld [vmem:[%s4316 + $0x1c] sm:$0xf]
      %v4325 = vld [vmem:[%s4316 + $0x20] sm:$0xf]
      %v4326 = vld [vmem:[%s4316 + $0x24] sm:$0xf]
      %v4327 = vld [vmem:[%s4316 + $0x28] sm:$0xf]
      %v4328 = vld [vmem:[%s4316 + $0x2c] sm:$0xf]
      %v4329 = vld [vmem:[%s4316 + $0x30] sm:$0xf]
      %v4330 = vld [vmem:[%s4316 + $0x34] sm:$0xf]
      %v4331 = vld [vmem:[%s4316 + $0x38] sm:$0xf]
      %v4332 = vld [vmem:[%s4316 + $0x3c] sm:$0xf]
      %v4333 = vunpack.c.l.b16 %v3945
      %v4334 = vunpack.c.l.b16 %v3955
      %v4335 = vunpack.c.l.b16 %v3969
      %v4336 = vunpack.c.l.b16 %v3979
      %v4337 = vunpack.c.l.b16 %v3993
      %v4338 = vunpack.c.l.b16 %v4003
      %v4339 = vunpack.c.l.b16 %v4017
      %v4340 = vunpack.c.l.b16 %v4027
      %v4341 = vunpack.c.l.b16 %v4041
      %v4342 = vunpack.c.l.b16 %v4051
      %v4343 = vunpack.c.l.b16 %v4065
      %v4344 = vunpack.c.l.b16 %v4075
      %v4345 = vunpack.c.l.b16 %v4089
      %v4346 = vunpack.c.l.b16 %v4099
      %v4347 = vunpack.c.l.b16 %v4113
      %v4348 = vunpack.c.l.b16 %v4123
      %v4349 = vunpack.c.l.b16 %v4137
      %v4350 = vunpack.c.l.b16 %v4147
      %v4351 = vunpack.c.l.b16 %v4161
      %v4352 = vunpack.c.l.b16 %v4171
      %v4353 = vunpack.c.l.b16 %v4185
      %v4354 = vunpack.c.l.b16 %v4195
      %v4355 = vunpack.c.l.b16 %v4209
      %v4356 = vunpack.c.l.b16 %v4219
      %v4357 = vunpack.c.l.b16 %v4233
      %v4358 = vunpack.c.l.b16 %v4243
      %v4359 = vunpack.c.l.b16 %v4257
      %v4360 = vunpack.c.l.b16 %v4267
      %v4361 = vunpack.c.l.b16 %v4281
      %v4362 = vunpack.c.l.b16 %v4291
      %v4363 = vunpack.c.l.b16 %v4305
      %v4364 = vunpack.c.l.b16 %v4315
      %v4365 = vpack.c.b16 %v4334, %v4333
      %v4366 = vpack.c.b16 %v4336, %v4335
      %v4367 = vpack.c.b16 %v4338, %v4337
      %v4368 = vpack.c.b16 %v4340, %v4339
      %v4369 = vpack.c.b16 %v4342, %v4341
      %v4370 = vpack.c.b16 %v4344, %v4343
      %v4371 = vpack.c.b16 %v4346, %v4345
      %v4372 = vpack.c.b16 %v4348, %v4347
      %v4373 = vpack.c.b16 %v4350, %v4349
      %v4374 = vpack.c.b16 %v4352, %v4351
      %v4375 = vpack.c.b16 %v4354, %v4353
      %v4376 = vpack.c.b16 %v4356, %v4355
      %v4377 = vpack.c.b16 %v4358, %v4357
      %v4378 = vpack.c.b16 %v4360, %v4359
      %v4379 = vpack.c.b16 %v4362, %v4361
      %v4380 = vpack.c.b16 %v4364, %v4363
      %v4413 = vunpack.c.l.b16 %v4317
      %v4414 = vunpack.c.l.b16 %v4318
      %v4415 = vunpack.c.l.b16 %v4319
      %v4416 = vunpack.c.l.b16 %v4320
      %v4417 = vunpack.c.l.b16 %v4321
      %v4418 = vunpack.c.l.b16 %v4322
      %v4419 = vunpack.c.l.b16 %v4323
      %v4420 = vunpack.c.l.b16 %v4324
      %v4421 = vunpack.c.l.b16 %v4325
      %v4422 = vunpack.c.l.b16 %v4326
      %v4423 = vunpack.c.l.b16 %v4327
      %v4424 = vunpack.c.l.b16 %v4328
      %v4425 = vunpack.c.l.b16 %v4329
      %v4426 = vunpack.c.l.b16 %v4330
      %v4427 = vunpack.c.l.b16 %v4331
      %v4428 = vunpack.c.l.b16 %v4332
      %v4429 = vpack.c.b16 %v4414, %v4413
      %v4430 = vpack.c.b16 %v4416, %v4415
      %v4431 = vpack.c.b16 %v4418, %v4417
      %v4432 = vpack.c.b16 %v4420, %v4419
      %v4433 = vpack.c.b16 %v4422, %v4421
      %v4434 = vpack.c.b16 %v4424, %v4423
      %v4435 = vpack.c.b16 %v4426, %v4425
      %v4436 = vpack.c.b16 %v4428, %v4427
      %4445 = vmatprep.subr.bf16.mxu0 0
      %4446 = vmatpush1.bf16.msra.mxu0 %v4436
      %4447 = vmatprep.subr.bf16.mxu0 0
      %4448 = vmatpush1.bf16.msra.mxu0 %v4435
      %4449 = vmatprep.subr.bf16.mxu0 0
      %4450 = vmatpush1.bf16.msra.mxu0 %v4434
      %4451 = vmatprep.subr.bf16.mxu0 0
      %4452 = vmatpush1.bf16.msra.mxu0 %v4433
      %4453 = vmatprep.subr.bf16.mxu0 0
      %4454 = vmatpush1.bf16.msra.mxu0 %v4432
      %4455 = vmatprep.subr.bf16.mxu0 0
      %4456 = vmatpush1.bf16.msra.mxu0 %v4431
      %4457 = vmatprep.subr.bf16.mxu0 0
      %4458 = vmatpush1.bf16.msra.mxu0 %v4430
      %4459 = vmatprep.subr.bf16.mxu0 0
      %4460 = vmatpush1.bf16.msra.mxu0 %v4429
      %4461 = vmatprep.subr.bf16.mxu0 0
      %4462 = vmatpush2.bf16.msra.mxu0 0
      %4463 = vmatprep.subr.bf16.mxu0 0
      %4464 = vmatpush2.bf16.msra.mxu0 0
      %4465 = vmatprep.subr.bf16.mxu0 0
      %4466 = vmatpush2.bf16.msra.mxu0 0
      %4467 = vmatprep.subr.bf16.mxu0 0
      %4468 = vmatpush2.bf16.msra.mxu0 0
      %4469 = vmatprep.subr.bf16.mxu0 0
      %4470 = vmatpush2.bf16.msra.mxu0 0
      %4471 = vmatprep.subr.bf16.mxu0 0
      %4472 = vmatpush2.bf16.msra.mxu0 0
      %4473 = vmatprep.subr.bf16.mxu0 0
      %4474 = vmatpush2.bf16.msra.mxu0 0
      %4475 = vmatprep.subr.bf16.mxu0 0
      %4476 = vmatpush2.bf16.msra.mxu0 0
      %4477 = vmatprep.mubr.bf16.mxu0 0
      %4478 = vmatmul.mubr.bf16.gmra.mxu0 %v4365
      %v4479 = vpop.f32.mrf.mxu0
      %v4480 = vadd.f32 0.0, %v4479
      %v4481 = vpop.f32.mrf.mxu0
      %v4482 = vpop.f32.mrf.mxu0
      %v4483 = vadd.f32 0.0, %v4482
      %v4484 = vpop.f32.mrf.mxu0
      %4485 = vmatprep.mubr.bf16.mxu0 0
      %4486 = vmatmul.mubr.bf16.gmra.mxu0 %v4366
      %v4487 = vpop.f32.mrf.mxu0
      %v4488 = vadd.f32 0.0, %v4487
      %v4489 = vpop.f32.mrf.mxu0
      %v4490 = vpop.f32.mrf.mxu0
      %v4491 = vadd.f32 0.0, %v4490
      %v4492 = vpop.f32.mrf.mxu0
      %4493 = vmatprep.mubr.bf16.mxu0 0
      %4494 = vmatmul.mubr.bf16.gmra.mxu0 %v4367
      %v4495 = vpop.f32.mrf.mxu0
      %v4496 = vadd.f32 0.0, %v4495
      %v4497 = vpop.f32.mrf.mxu0
      %v4498 = vpop.f32.mrf.mxu0
      %v4499 = vadd.f32 0.0, %v4498
      %v4500 = vpop.f32.mrf.mxu0
      %4501 = vmatprep.mubr.bf16.mxu0 0
      %4502 = vmatmul.mubr.bf16.gmra.mxu0 %v4368
      %v4503 = vpop.f32.mrf.mxu0
      %v4504 = vadd.f32 0.0, %v4503
      %v4505 = vpop.f32.mrf.mxu0
      %v4506 = vpop.f32.mrf.mxu0
      %v4507 = vadd.f32 0.0, %v4506
      %v4508 = vpop.f32.mrf.mxu0
      %4509 = vmatprep.mubr.bf16.mxu0 0
      %4510 = vmatmul.mubr.bf16.gmra.mxu0 %v4369
      %v4511 = vpop.f32.mrf.mxu0
      %v4512 = vadd.f32 0.0, %v4511
      %v4513 = vpop.f32.mrf.mxu0
      %v4514 = vpop.f32.mrf.mxu0
      %v4515 = vadd.f32 0.0, %v4514
      %v4516 = vpop.f32.mrf.mxu0
      %4517 = vmatprep.mubr.bf16.mxu0 0
      %4518 = vmatmul.mubr.bf16.gmra.mxu0 %v4370
      %v4519 = vpop.f32.mrf.mxu0
      %v4520 = vadd.f32 0.0, %v4519
      %v4521 = vpop.f32.mrf.mxu0
      %v4522 = vpop.f32.mrf.mxu0
      %v4523 = vadd.f32 0.0, %v4522
      %v4524 = vpop.f32.mrf.mxu0
      %4525 = vmatprep.mubr.bf16.mxu0 0
      %4526 = vmatmul.mubr.bf16.gmra.mxu0 %v4371
      %v4527 = vpop.f32.mrf.mxu0
      %v4528 = vadd.f32 0.0, %v4527
      %v4529 = vpop.f32.mrf.mxu0
      %v4530 = vpop.f32.mrf.mxu0
      %v4531 = vadd.f32 0.0, %v4530
      %v4532 = vpop.f32.mrf.mxu0
      %4533 = vmatprep.mubr.bf16.mxu0 0
      %4534 = vmatmul.mubr.bf16.gmra.mxu0 %v4372
      %v4535 = vpop.f32.mrf.mxu0
      %v4536 = vadd.f32 0.0, %v4535
      %v4537 = vpop.f32.mrf.mxu0
      %v4538 = vpop.f32.mrf.mxu0
      %v4539 = vadd.f32 0.0, %v4538
      %v4540 = vpop.f32.mrf.mxu0
      %4541 = vmatprep.mubr.bf16.mxu0 0
      %4542 = vmatmul.mubr.bf16.gmra.mxu0 %v4373
      %v4543 = vpop.f32.mrf.mxu0
      %v4544 = vadd.f32 0.0, %v4543
      %v4545 = vpop.f32.mrf.mxu0
      %v4546 = vpop.f32.mrf.mxu0
      %v4547 = vadd.f32 0.0, %v4546
      %v4548 = vpop.f32.mrf.mxu0
      %4549 = vmatprep.mubr.bf16.mxu0 0
      %4550 = vmatmul.mubr.bf16.gmra.mxu0 %v4374
      %v4551 = vpop.f32.mrf.mxu0
      %v4552 = vadd.f32 0.0, %v4551
      %v4553 = vpop.f32.mrf.mxu0
      %v4554 = vpop.f32.mrf.mxu0
      %v4555 = vadd.f32 0.0, %v4554
      %v4556 = vpop.f32.mrf.mxu0
      %4557 = vmatprep.mubr.bf16.mxu0 0
      %4558 = vmatmul.mubr.bf16.gmra.mxu0 %v4375
      %v4559 = vpop.f32.mrf.mxu0
      %v4560 = vadd.f32 0.0, %v4559
      %v4561 = vpop.f32.mrf.mxu0
      %v4562 = vpop.f32.mrf.mxu0
      %v4563 = vadd.f32 0.0, %v4562
      %v4564 = vpop.f32.mrf.mxu0
      %4565 = vmatprep.mubr.bf16.mxu0 0
      %4566 = vmatmul.mubr.bf16.gmra.mxu0 %v4376
      %v4567 = vpop.f32.mrf.mxu0
      %v4568 = vadd.f32 0.0, %v4567
      %v4569 = vpop.f32.mrf.mxu0
      %v4570 = vpop.f32.mrf.mxu0
      %v4571 = vadd.f32 0.0, %v4570
      %v4572 = vpop.f32.mrf.mxu0
      %4573 = vmatprep.mubr.bf16.mxu0 0
      %4574 = vmatmul.mubr.bf16.gmra.mxu0 %v4377
      %v4575 = vpop.f32.mrf.mxu0
      %v4576 = vadd.f32 0.0, %v4575
      %v4577 = vpop.f32.mrf.mxu0
      %v4578 = vpop.f32.mrf.mxu0
      %v4579 = vadd.f32 0.0, %v4578
      %v4580 = vpop.f32.mrf.mxu0
      %4581 = vmatprep.mubr.bf16.mxu0 0
      %4582 = vmatmul.mubr.bf16.gmra.mxu0 %v4378
      %v4583 = vpop.f32.mrf.mxu0
      %v4584 = vadd.f32 0.0, %v4583
      %v4585 = vpop.f32.mrf.mxu0
      %v4586 = vpop.f32.mrf.mxu0
      %v4587 = vadd.f32 0.0, %v4586
      %v4588 = vpop.f32.mrf.mxu0
      %4589 = vmatprep.mubr.bf16.mxu0 0
      %4590 = vmatmul.mubr.bf16.gmra.mxu0 %v4379
      %v4591 = vpop.f32.mrf.mxu0
      %v4592 = vadd.f32 0.0, %v4591
      %v4593 = vpop.f32.mrf.mxu0
      %v4594 = vpop.f32.mrf.mxu0
      %v4595 = vadd.f32 0.0, %v4594
      %v4596 = vpop.f32.mrf.mxu0
      %4597 = vmatprep.mubr.bf16.mxu0 0
      %4598 = vmatmul.mubr.bf16.gmra.mxu0 %v4380
      %v4599 = vpop.f32.mrf.mxu0
      %v4600 = vadd.f32 0.0, %v4599
      %v4601 = vpop.f32.mrf.mxu0
      %v4602 = vpop.f32.mrf.mxu0
      %v4603 = vadd.f32 0.0, %v4602
      %v4604 = vpop.f32.mrf.mxu0
      %4605 = vdwg.mxu0
      %v4606 = vadd.f32 %v3852, %v4480
      %v4607 = vadd.f32 %v3853, %v4483
      %v4608 = vadd.f32 %v3854, %v4488
      %v4609 = vadd.f32 %v3855, %v4491
      %v4610 = vadd.f32 %v3856, %v4496
      %v4611 = vadd.f32 %v3857, %v4499
      %v4612 = vadd.f32 %v3858, %v4504
      %v4613 = vadd.f32 %v3859, %v4507
      %v4614 = vadd.f32 %v3860, %v4512
      %v4615 = vadd.f32 %v3861, %v4515
      %v4616 = vadd.f32 %v3862, %v4520
      %v4617 = vadd.f32 %v3863, %v4523
      %v4618 = vadd.f32 %v3864, %v4528
      %v4619 = vadd.f32 %v3865, %v4531
      %v4620 = vadd.f32 %v3866, %v4536
      %v4621 = vadd.f32 %v3867, %v4539
      %v4622 = vadd.f32 %v3868, %v4544
      %v4623 = vadd.f32 %v3869, %v4547
      %v4624 = vadd.f32 %v3870, %v4552
      %v4625 = vadd.f32 %v3871, %v4555
      %v4626 = vadd.f32 %v3872, %v4560
      %v4627 = vadd.f32 %v3873, %v4563
      %v4628 = vadd.f32 %v3874, %v4568
      %v4629 = vadd.f32 %v3875, %v4571
      %v4630 = vadd.f32 %v3876, %v4576
      %v4631 = vadd.f32 %v3877, %v4579
      %v4632 = vadd.f32 %v3878, %v4584
      %v4633 = vadd.f32 %v3879, %v4587
      %v4634 = vadd.f32 %v3880, %v4592
      %v4635 = vadd.f32 %v3881, %v4595
      %v4636 = vadd.f32 %v3882, %v4600
      %v4637 = vadd.f32 %v3883, %v4603
      %v4638 = vld [vmem:[%s3497] sm:$0xe]
      %v4639 = vld [vmem:[%s3497 + $0xc] sm:$0xe]
      %v4640 = vld [vmem:[%s3497 + $0x18] sm:$0xe]
      %v4641 = vld [vmem:[%s3497 + $0x24] sm:$0xe]
      %v4642 = vld [vmem:[%s3497 + $0x30] sm:$0xe]
      %v4643 = vld [vmem:[%s3497 + $0x3c] sm:$0xe]
      %v4644 = vld [vmem:[%s3497 + $0x48] sm:$0xe]
      %v4645 = vld [vmem:[%s3497 + $0x54] sm:$0xe]
      %v4646 = vld [vmem:[%s3497 + $0x60] sm:$0xe]
      %v4647 = vld [vmem:[%s3497 + $0x6c] sm:$0xe]
      %v4648 = vld [vmem:[%s3497 + $0x78] sm:$0xe]
      %v4649 = vld [vmem:[%s3497 + $0x84] sm:$0xe]
      %v4650 = vld [vmem:[%s3497 + $0x90] sm:$0xe]
      %v4651 = vld [vmem:[%s3497 + $0x9c] sm:$0xe]
      %v4652 = vld [vmem:[%s3497 + $0xa8] sm:$0xe]
      %v4653 = vld [vmem:[%s3497 + $0xb4] sm:$0xe]
      %v4702 = vrot.slane %v4638, 5
      %v4703 = vrot.slane %v4702, 4
      %v4704 = vrot.slane %v3885, 5
      %v4705 = vsel %vm1423, %v4703, %v4704
      %v4706 = vrot.slane %v4704, 4
      %v4707 = vrot.slane %v3886, 5
      %v4708 = vsel %vm1423, %v4706, %v4707
      %v4709 = vrot.slane %v4639, 5
      %v4710 = vrot.slane %v4709, 4
      %v4711 = vrot.slane %v3888, 5
      %v4712 = vsel %vm1423, %v4710, %v4711
      %v4713 = vrot.slane %v4711, 4
      %v4714 = vrot.slane %v3889, 5
      %v4715 = vsel %vm1423, %v4713, %v4714
      %v4716 = vrot.slane %v4640, 5
      %v4717 = vrot.slane %v4716, 4
      %v4718 = vrot.slane %v3891, 5
      %v4719 = vsel %vm1423, %v4717, %v4718
      %v4720 = vrot.slane %v4718, 4
      %v4721 = vrot.slane %v3892, 5
      %v4722 = vsel %vm1423, %v4720, %v4721
      %v4723 = vrot.slane %v4641, 5
      %v4724 = vrot.slane %v4723, 4
      %v4725 = vrot.slane %v3894, 5
      %v4726 = vsel %vm1423, %v4724, %v4725
      %v4727 = vrot.slane %v4725, 4
      %v4728 = vrot.slane %v3895, 5
      %v4729 = vsel %vm1423, %v4727, %v4728
      %v4730 = vrot.slane %v4642, 5
      %v4731 = vrot.slane %v4730, 4
      %v4732 = vrot.slane %v3897, 5
      %v4733 = vsel %vm1423, %v4731, %v4732
      %v4734 = vrot.slane %v4732, 4
      %v4735 = vrot.slane %v3898, 5
      %v4736 = vsel %vm1423, %v4734, %v4735
      %v4737 = vrot.slane %v4643, 5
      %v4738 = vrot.slane %v4737, 4
      %v4739 = vrot.slane %v3900, 5
      %v4740 = vsel %vm1423, %v4738, %v4739
      %v4741 = vrot.slane %v4739, 4
      %v4742 = vrot.slane %v3901, 5
      %v4743 = vsel %vm1423, %v4741, %v4742
      %v4744 = vrot.slane %v4644, 5
      %v4745 = vrot.slane %v4744, 4
      %v4746 = vrot.slane %v3903, 5
      %v4747 = vsel %vm1423, %v4745, %v4746
      %v4748 = vrot.slane %v4746, 4
      %v4749 = vrot.slane %v3904, 5
      %v4750 = vsel %vm1423, %v4748, %v4749
      %v4751 = vrot.slane %v4645, 5
      %v4752 = vrot.slane %v4751, 4
      %v4753 = vrot.slane %v3906, 5
      %v4754 = vsel %vm1423, %v4752, %v4753
      %v4755 = vrot.slane %v4753, 4
      %v4756 = vrot.slane %v3907, 5
      %v4757 = vsel %vm1423, %v4755, %v4756
      %v4758 = vrot.slane %v4646, 5
      %v4759 = vrot.slane %v4758, 4
      %v4760 = vrot.slane %v3909, 5
      %v4761 = vsel %vm1423, %v4759, %v4760
      %v4762 = vrot.slane %v4760, 4
      %v4763 = vrot.slane %v3910, 5
      %v4764 = vsel %vm1423, %v4762, %v4763
      %v4765 = vrot.slane %v4647, 5
      %v4766 = vrot.slane %v4765, 4
      %v4767 = vrot.slane %v3912, 5
      %v4768 = vsel %vm1423, %v4766, %v4767
      %v4769 = vrot.slane %v4767, 4
      %v4770 = vrot.slane %v3913, 5
      %v4771 = vsel %vm1423, %v4769, %v4770
      %v4772 = vrot.slane %v4648, 5
      %v4773 = vrot.slane %v4772, 4
      %v4774 = vrot.slane %v3915, 5
      %v4775 = vsel %vm1423, %v4773, %v4774
      %v4776 = vrot.slane %v4774, 4
      %v4777 = vrot.slane %v3916, 5
      %v4778 = vsel %vm1423, %v4776, %v4777
      %v4779 = vrot.slane %v4649, 5
      %v4780 = vrot.slane %v4779, 4
      %v4781 = vrot.slane %v3918, 5
      %v4782 = vsel %vm1423, %v4780, %v4781
      %v4783 = vrot.slane %v4781, 4
      %v4784 = vrot.slane %v3919, 5
      %v4785 = vsel %vm1423, %v4783, %v4784
      %v4786 = vrot.slane %v4650, 5
      %v4787 = vrot.slane %v4786, 4
      %v4788 = vrot.slane %v3921, 5
      %v4789 = vsel %vm1423, %v4787, %v4788
      %v4790 = vrot.slane %v4788, 4
      %v4791 = vrot.slane %v3922, 5
      %v4792 = vsel %vm1423, %v4790, %v4791
      %v4793 = vrot.slane %v4651, 5
      %v4794 = vrot.slane %v4793, 4
      %v4795 = vrot.slane %v3924, 5
      %v4796 = vsel %vm1423, %v4794, %v4795
      %v4797 = vrot.slane %v4795, 4
      %v4798 = vrot.slane %v3925, 5
      %v4799 = vsel %vm1423, %v4797, %v4798
      %v4800 = vrot.slane %v4652, 5
      %v4801 = vrot.slane %v4800, 4
      %v4802 = vrot.slane %v3927, 5
      %v4803 = vsel %vm1423, %v4801, %v4802
      %v4804 = vrot.slane %v4802, 4
      %v4805 = vrot.slane %v3928, 5
      %v4806 = vsel %vm1423, %v4804, %v4805
      %v4807 = vrot.slane %v4653, 5
      %v4808 = vrot.slane %v4807, 4
      %v4809 = vrot.slane %v3930, 5
      %v4810 = vsel %vm1423, %v4808, %v4809
      %v4811 = vrot.slane %v4809, 4
      %v4812 = vrot.slane %v3931, 5
      %v4813 = vsel %vm1423, %v4811, %v4812
      %s4814 = scalar_lea.vmem %s2, 512
      %v4815 = vld [vmem:[%s4814] sm:$0xf]
      %v4816 = vld [vmem:[%s4814 + $0x4] sm:$0xf]
      %v4817 = vld [vmem:[%s4814 + $0x8] sm:$0xf]
      %v4818 = vld [vmem:[%s4814 + $0xc] sm:$0xf]
      %v4819 = vld [vmem:[%s4814 + $0x10] sm:$0xf]
      %v4820 = vld [vmem:[%s4814 + $0x14] sm:$0xf]
      %v4821 = vld [vmem:[%s4814 + $0x18] sm:$0xf]
      %v4822 = vld [vmem:[%s4814 + $0x1c] sm:$0xf]
      %v4823 = vld [vmem:[%s4814 + $0x20] sm:$0xf]
      %v4824 = vld [vmem:[%s4814 + $0x24] sm:$0xf]
      %v4825 = vld [vmem:[%s4814 + $0x28] sm:$0xf]
      %v4826 = vld [vmem:[%s4814 + $0x2c] sm:$0xf]
      %v4827 = vld [vmem:[%s4814 + $0x30] sm:$0xf]
      %v4828 = vld [vmem:[%s4814 + $0x34] sm:$0xf]
      %v4829 = vld [vmem:[%s4814 + $0x38] sm:$0xf]
      %v4830 = vld [vmem:[%s4814 + $0x3c] sm:$0xf]
      %v4831 = vunpack.c.l.b16 %v4705
      %v4832 = vunpack.c.l.b16 %v4708
      %v4833 = vunpack.c.l.b16 %v4712
      %v4834 = vunpack.c.l.b16 %v4715
      %v4835 = vunpack.c.l.b16 %v4719
      %v4836 = vunpack.c.l.b16 %v4722
      %v4837 = vunpack.c.l.b16 %v4726
      %v4838 = vunpack.c.l.b16 %v4729
      %v4839 = vunpack.c.l.b16 %v4733
      %v4840 = vunpack.c.l.b16 %v4736
      %v4841 = vunpack.c.l.b16 %v4740
      %v4842 = vunpack.c.l.b16 %v4743
      %v4843 = vunpack.c.l.b16 %v4747
      %v4844 = vunpack.c.l.b16 %v4750
      %v4845 = vunpack.c.l.b16 %v4754
      %v4846 = vunpack.c.l.b16 %v4757
      %v4847 = vunpack.c.l.b16 %v4761
      %v4848 = vunpack.c.l.b16 %v4764
      %v4849 = vunpack.c.l.b16 %v4768
      %v4850 = vunpack.c.l.b16 %v4771
      %v4851 = vunpack.c.l.b16 %v4775
      %v4852 = vunpack.c.l.b16 %v4778
      %v4853 = vunpack.c.l.b16 %v4782
      %v4854 = vunpack.c.l.b16 %v4785
      %v4855 = vunpack.c.l.b16 %v4789
      %v4856 = vunpack.c.l.b16 %v4792
      %v4857 = vunpack.c.l.b16 %v4796
      %v4858 = vunpack.c.l.b16 %v4799
      %v4859 = vunpack.c.l.b16 %v4803
      %v4860 = vunpack.c.l.b16 %v4806
      %v4861 = vunpack.c.l.b16 %v4810
      %v4862 = vunpack.c.l.b16 %v4813
      %v4863 = vpack.c.b16 %v4832, %v4831
      %v4864 = vpack.c.b16 %v4834, %v4833
      %v4865 = vpack.c.b16 %v4836, %v4835
      %v4866 = vpack.c.b16 %v4838, %v4837
      %v4867 = vpack.c.b16 %v4840, %v4839
      %v4868 = vpack.c.b16 %v4842, %v4841
      %v4869 = vpack.c.b16 %v4844, %v4843
      %v4870 = vpack.c.b16 %v4846, %v4845
      %v4871 = vpack.c.b16 %v4848, %v4847
      %v4872 = vpack.c.b16 %v4850, %v4849
      %v4873 = vpack.c.b16 %v4852, %v4851
      %v4874 = vpack.c.b16 %v4854, %v4853
      %v4875 = vpack.c.b16 %v4856, %v4855
      %v4876 = vpack.c.b16 %v4858, %v4857
      %v4877 = vpack.c.b16 %v4860, %v4859
      %v4878 = vpack.c.b16 %v4862, %v4861
      %v4911 = vunpack.c.l.b16 %v4815
      %v4912 = vunpack.c.l.b16 %v4816
      %v4913 = vunpack.c.l.b16 %v4817
      %v4914 = vunpack.c.l.b16 %v4818
      %v4915 = vunpack.c.l.b16 %v4819
      %v4916 = vunpack.c.l.b16 %v4820
      %v4917 = vunpack.c.l.b16 %v4821
      %v4918 = vunpack.c.l.b16 %v4822
      %v4919 = vunpack.c.l.b16 %v4823
      %v4920 = vunpack.c.l.b16 %v4824
      %v4921 = vunpack.c.l.b16 %v4825
      %v4922 = vunpack.c.l.b16 %v4826
      %v4923 = vunpack.c.l.b16 %v4827
      %v4924 = vunpack.c.l.b16 %v4828
      %v4925 = vunpack.c.l.b16 %v4829
      %v4926 = vunpack.c.l.b16 %v4830
      %v4927 = vpack.c.b16 %v4912, %v4911
      %v4928 = vpack.c.b16 %v4914, %v4913
      %v4929 = vpack.c.b16 %v4916, %v4915
      %v4930 = vpack.c.b16 %v4918, %v4917
      %v4931 = vpack.c.b16 %v4920, %v4919
      %v4932 = vpack.c.b16 %v4922, %v4921
      %v4933 = vpack.c.b16 %v4924, %v4923
      %v4934 = vpack.c.b16 %v4926, %v4925
      %4943 = vmatprep.subr.bf16.mxu0 0
      %4944 = vmatpush1.bf16.msra.mxu0 %v4934
      %4945 = vmatprep.subr.bf16.mxu0 0
      %4946 = vmatpush1.bf16.msra.mxu0 %v4933
      %4947 = vmatprep.subr.bf16.mxu0 0
      %4948 = vmatpush1.bf16.msra.mxu0 %v4932
      %4949 = vmatprep.subr.bf16.mxu0 0
      %4950 = vmatpush1.bf16.msra.mxu0 %v4931
      %4951 = vmatprep.subr.bf16.mxu0 0
      %4952 = vmatpush1.bf16.msra.mxu0 %v4930
      %4953 = vmatprep.subr.bf16.mxu0 0
      %4954 = vmatpush1.bf16.msra.mxu0 %v4929
      %4955 = vmatprep.subr.bf16.mxu0 0
      %4956 = vmatpush1.bf16.msra.mxu0 %v4928
      %4957 = vmatprep.subr.bf16.mxu0 0
      %4958 = vmatpush1.bf16.msra.mxu0 %v4927
      %4959 = vmatprep.subr.bf16.mxu0 0
      %4960 = vmatpush2.bf16.msra.mxu0 0
      %4961 = vmatprep.subr.bf16.mxu0 0
      %4962 = vmatpush2.bf16.msra.mxu0 0
      %4963 = vmatprep.subr.bf16.mxu0 0
      %4964 = vmatpush2.bf16.msra.mxu0 0
      %4965 = vmatprep.subr.bf16.mxu0 0
      %4966 = vmatpush2.bf16.msra.mxu0 0
      %4967 = vmatprep.subr.bf16.mxu0 0
      %4968 = vmatpush2.bf16.msra.mxu0 0
      %4969 = vmatprep.subr.bf16.mxu0 0
      %4970 = vmatpush2.bf16.msra.mxu0 0
      %4971 = vmatprep.subr.bf16.mxu0 0
      %4972 = vmatpush2.bf16.msra.mxu0 0
      %4973 = vmatprep.subr.bf16.mxu0 0
      %4974 = vmatpush2.bf16.msra.mxu0 0
      %4975 = vmatprep.mubr.bf16.mxu0 0
      %4976 = vmatmul.mubr.bf16.gmra.mxu0 %v4863
      %v4977 = vpop.f32.mrf.mxu0
      %v4978 = vadd.f32 0.0, %v4977
      %v4979 = vpop.f32.mrf.mxu0
      %v4980 = vpop.f32.mrf.mxu0
      %v4981 = vadd.f32 0.0, %v4980
      %v4982 = vpop.f32.mrf.mxu0
      %4983 = vmatprep.mubr.bf16.mxu0 0
      %4984 = vmatmul.mubr.bf16.gmra.mxu0 %v4864
      %v4985 = vpop.f32.mrf.mxu0
      %v4986 = vadd.f32 0.0, %v4985
      %v4987 = vpop.f32.mrf.mxu0
      %v4988 = vpop.f32.mrf.mxu0
      %v4989 = vadd.f32 0.0, %v4988
      %v4990 = vpop.f32.mrf.mxu0
      %4991 = vmatprep.mubr.bf16.mxu0 0
      %4992 = vmatmul.mubr.bf16.gmra.mxu0 %v4865
      %v4993 = vpop.f32.mrf.mxu0
      %v4994 = vadd.f32 0.0, %v4993
      %v4995 = vpop.f32.mrf.mxu0
      %v4996 = vpop.f32.mrf.mxu0
      %v4997 = vadd.f32 0.0, %v4996
      %v4998 = vpop.f32.mrf.mxu0
      %4999 = vmatprep.mubr.bf16.mxu0 0
      %5000 = vmatmul.mubr.bf16.gmra.mxu0 %v4866
      %v5001 = vpop.f32.mrf.mxu0
      %v5002 = vadd.f32 0.0, %v5001
      %v5003 = vpop.f32.mrf.mxu0
      %v5004 = vpop.f32.mrf.mxu0
      %v5005 = vadd.f32 0.0, %v5004
      %v5006 = vpop.f32.mrf.mxu0
      %5007 = vmatprep.mubr.bf16.mxu0 0
      %5008 = vmatmul.mubr.bf16.gmra.mxu0 %v4867
      %v5009 = vpop.f32.mrf.mxu0
      %v5010 = vadd.f32 0.0, %v5009
      %v5011 = vpop.f32.mrf.mxu0
      %v5012 = vpop.f32.mrf.mxu0
      %v5013 = vadd.f32 0.0, %v5012
      %v5014 = vpop.f32.mrf.mxu0
      %5015 = vmatprep.mubr.bf16.mxu0 0
      %5016 = vmatmul.mubr.bf16.gmra.mxu0 %v4868
      %v5017 = vpop.f32.mrf.mxu0
      %v5018 = vadd.f32 0.0, %v5017
      %v5019 = vpop.f32.mrf.mxu0
      %v5020 = vpop.f32.mrf.mxu0
      %v5021 = vadd.f32 0.0, %v5020
      %v5022 = vpop.f32.mrf.mxu0
      %5023 = vmatprep.mubr.bf16.mxu0 0
      %5024 = vmatmul.mubr.bf16.gmra.mxu0 %v4869
      %v5025 = vpop.f32.mrf.mxu0
      %v5026 = vadd.f32 0.0, %v5025
      %v5027 = vpop.f32.mrf.mxu0
      %v5028 = vpop.f32.mrf.mxu0
      %v5029 = vadd.f32 0.0, %v5028
      %v5030 = vpop.f32.mrf.mxu0
      %5031 = vmatprep.mubr.bf16.mxu0 0
      %5032 = vmatmul.mubr.bf16.gmra.mxu0 %v4870
      %v5033 = vpop.f32.mrf.mxu0
      %v5034 = vadd.f32 0.0, %v5033
      %v5035 = vpop.f32.mrf.mxu0
      %v5036 = vpop.f32.mrf.mxu0
      %v5037 = vadd.f32 0.0, %v5036
      %v5038 = vpop.f32.mrf.mxu0
      %5039 = vmatprep.mubr.bf16.mxu0 0
      %5040 = vmatmul.mubr.bf16.gmra.mxu0 %v4871
      %v5041 = vpop.f32.mrf.mxu0
      %v5042 = vadd.f32 0.0, %v5041
      %v5043 = vpop.f32.mrf.mxu0
      %v5044 = vpop.f32.mrf.mxu0
      %v5045 = vadd.f32 0.0, %v5044
      %v5046 = vpop.f32.mrf.mxu0
      %5047 = vmatprep.mubr.bf16.mxu0 0
      %5048 = vmatmul.mubr.bf16.gmra.mxu0 %v4872
      %v5049 = vpop.f32.mrf.mxu0
      %v5050 = vadd.f32 0.0, %v5049
      %v5051 = vpop.f32.mrf.mxu0
      %v5052 = vpop.f32.mrf.mxu0
      %v5053 = vadd.f32 0.0, %v5052
      %v5054 = vpop.f32.mrf.mxu0
      %5055 = vmatprep.mubr.bf16.mxu0 0
      %5056 = vmatmul.mubr.bf16.gmra.mxu0 %v4873
      %v5057 = vpop.f32.mrf.mxu0
      %v5058 = vadd.f32 0.0, %v5057
      %v5059 = vpop.f32.mrf.mxu0
      %v5060 = vpop.f32.mrf.mxu0
      %v5061 = vadd.f32 0.0, %v5060
      %v5062 = vpop.f32.mrf.mxu0
      %5063 = vmatprep.mubr.bf16.mxu0 0
      %5064 = vmatmul.mubr.bf16.gmra.mxu0 %v4874
      %v5065 = vpop.f32.mrf.mxu0
      %v5066 = vadd.f32 0.0, %v5065
      %v5067 = vpop.f32.mrf.mxu0
      %v5068 = vpop.f32.mrf.mxu0
      %v5069 = vadd.f32 0.0, %v5068
      %v5070 = vpop.f32.mrf.mxu0
      %5071 = vmatprep.mubr.bf16.mxu0 0
      %5072 = vmatmul.mubr.bf16.gmra.mxu0 %v4875
      %v5073 = vpop.f32.mrf.mxu0
      %v5074 = vadd.f32 0.0, %v5073
      %v5075 = vpop.f32.mrf.mxu0
      %v5076 = vpop.f32.mrf.mxu0
      %v5077 = vadd.f32 0.0, %v5076
      %v5078 = vpop.f32.mrf.mxu0
      %5079 = vmatprep.mubr.bf16.mxu0 0
      %5080 = vmatmul.mubr.bf16.gmra.mxu0 %v4876
      %v5081 = vpop.f32.mrf.mxu0
      %v5082 = vadd.f32 0.0, %v5081
      %v5083 = vpop.f32.mrf.mxu0
      %v5084 = vpop.f32.mrf.mxu0
      %v5085 = vadd.f32 0.0, %v5084
      %v5086 = vpop.f32.mrf.mxu0
      %5087 = vmatprep.mubr.bf16.mxu0 0
      %5088 = vmatmul.mubr.bf16.gmra.mxu0 %v4877
      %v5089 = vpop.f32.mrf.mxu0
      %v5090 = vadd.f32 0.0, %v5089
      %v5091 = vpop.f32.mrf.mxu0
      %v5092 = vpop.f32.mrf.mxu0
      %v5093 = vadd.f32 0.0, %v5092
      %v5094 = vpop.f32.mrf.mxu0
      %5095 = vmatprep.mubr.bf16.mxu0 0
      %5096 = vmatmul.mubr.bf16.gmra.mxu0 %v4878
      %v5097 = vpop.f32.mrf.mxu0
      %v5098 = vadd.f32 0.0, %v5097
      %v5099 = vpop.f32.mrf.mxu0
      %v5100 = vpop.f32.mrf.mxu0
      %v5101 = vadd.f32 0.0, %v5100
      %v5102 = vpop.f32.mrf.mxu0
      %5103 = vdwg.mxu0
      %v5104 = vadd.f32 %v4606, %v4978
      %v5105 = vadd.f32 %v4607, %v4981
      %v5106 = vadd.f32 %v4608, %v4986
      %v5107 = vadd.f32 %v4609, %v4989
      %v5108 = vadd.f32 %v4610, %v4994
      %v5109 = vadd.f32 %v4611, %v4997
      %v5110 = vadd.f32 %v4612, %v5002
      %v5111 = vadd.f32 %v4613, %v5005
      %v5112 = vadd.f32 %v4614, %v5010
      %v5113 = vadd.f32 %v4615, %v5013
      %v5114 = vadd.f32 %v4616, %v5018
      %v5115 = vadd.f32 %v4617, %v5021
      %v5116 = vadd.f32 %v4618, %v5026
      %v5117 = vadd.f32 %v4619, %v5029
      %v5118 = vadd.f32 %v4620, %v5034
      %v5119 = vadd.f32 %v4621, %v5037
      %v5120 = vadd.f32 %v4622, %v5042
      %v5121 = vadd.f32 %v4623, %v5045
      %v5122 = vadd.f32 %v4624, %v5050
      %v5123 = vadd.f32 %v4625, %v5053
      %v5124 = vadd.f32 %v4626, %v5058
      %v5125 = vadd.f32 %v4627, %v5061
      %v5126 = vadd.f32 %v4628, %v5066
      %v5127 = vadd.f32 %v4629, %v5069
      %v5128 = vadd.f32 %v4630, %v5074
      %v5129 = vadd.f32 %v4631, %v5077
      %v5130 = vadd.f32 %v4632, %v5082
      %v5131 = vadd.f32 %v4633, %v5085
      %v5132 = vadd.f32 %v4634, %v5090
      %v5133 = vadd.f32 %v4635, %v5093
      %v5134 = vadd.f32 %v4636, %v5098
      %v5135 = vadd.f32 %v4637, %v5101
      %v5136 = vld [vmem:[%s3] sm:$0x1]
      %v5138 = vlaneseq
      %v5139 = vshrl.u32 %v5138, 7
      %v5140 = vsub.s32 0, %v5139
      %v5141 = vrot.slane %v5136, %v5140
      %v5143 = vadd.f32 %v5104, %v5141
      %v5144 = vadd.f32 %v5105, %v5141
      %v5145 = vadd.f32 %v5106, %v5141
      %v5146 = vadd.f32 %v5107, %v5141
      %v5147 = vadd.f32 %v5108, %v5141
      %v5148 = vadd.f32 %v5109, %v5141
      %v5149 = vadd.f32 %v5110, %v5141
      %v5150 = vadd.f32 %v5111, %v5141
      %v5151 = vadd.f32 %v5112, %v5141
      %v5152 = vadd.f32 %v5113, %v5141
      %v5153 = vadd.f32 %v5114, %v5141
      %v5154 = vadd.f32 %v5115, %v5141
      %v5155 = vadd.f32 %v5116, %v5141
      %v5156 = vadd.f32 %v5117, %v5141
      %v5157 = vadd.f32 %v5118, %v5141
      %v5158 = vadd.f32 %v5119, %v5141
      %v5159 = vadd.f32 %v5120, %v5141
      %v5160 = vadd.f32 %v5121, %v5141
      %v5161 = vadd.f32 %v5122, %v5141
      %v5162 = vadd.f32 %v5123, %v5141
      %v5163 = vadd.f32 %v5124, %v5141
      %v5164 = vadd.f32 %v5125, %v5141
      %v5165 = vadd.f32 %v5126, %v5141
      %v5166 = vadd.f32 %v5127, %v5141
      %v5167 = vadd.f32 %v5128, %v5141
      %v5168 = vadd.f32 %v5129, %v5141
      %v5169 = vadd.f32 %v5130, %v5141
      %v5170 = vadd.f32 %v5131, %v5141
      %v5171 = vadd.f32 %v5132, %v5141
      %v5172 = vadd.f32 %v5133, %v5141
      %v5173 = vadd.f32 %v5134, %v5141
      %v5174 = vadd.f32 %v5135, %v5141
      %v5175 = vadd.f32 %v5143, %v5144
      %v5176 = vadd.f32 %v5175, %v5145
      %v5177 = vadd.f32 %v5176, %v5146
      %v5178 = vadd.f32 %v5177, %v5147
      %v5179 = vadd.f32 %v5178, %v5148
      %v5180 = vadd.f32 %v5179, %v5149
      %v5181 = vadd.f32 %v5180, %v5150
      %v5182 = vadd.f32 %v5181, %v5151
      %v5183 = vadd.f32 %v5182, %v5152
      %v5184 = vadd.f32 %v5183, %v5153
      %v5185 = vadd.f32 %v5184, %v5154
      %v5186 = vadd.f32 %v5185, %v5155
      %v5187 = vadd.f32 %v5186, %v5156
      %v5188 = vadd.f32 %v5187, %v5157
      %v5189 = vadd.f32 %v5188, %v5158
      %v5190 = vadd.f32 %v5189, %v5159
      %v5191 = vadd.f32 %v5190, %v5160
      %v5192 = vadd.f32 %v5191, %v5161
      %v5193 = vadd.f32 %v5192, %v5162
      %v5194 = vadd.f32 %v5193, %v5163
      %v5195 = vadd.f32 %v5194, %v5164
      %v5196 = vadd.f32 %v5195, %v5165
      %v5197 = vadd.f32 %v5196, %v5166
      %v5198 = vadd.f32 %v5197, %v5167
      %v5199 = vadd.f32 %v5198, %v5168
      %v5200 = vadd.f32 %v5199, %v5169
      %v5201 = vadd.f32 %v5200, %v5170
      %v5202 = vadd.f32 %v5201, %v5171
      %v5203 = vadd.f32 %v5202, %v5172
      %v5204 = vadd.f32 %v5203, %v5173
      %v5205 = vadd.f32 %v5204, %v5174
      %v5206 = vrot.slane %v5205, 4
      %v5207 = vadd.f32 %v5205, %v5206
      %v5208 = vrot.slane %v5207, 2
      %v5209 = vadd.f32 %v5207, %v5208
      %v5210 = vrot.slane %v5209, 1
      %v5211 = vadd.f32 %v5209, %v5210
      %v5212 = vmul.f32 %v5211, 0.00390625
      %v5213 = vld [vmem:[%s4] sm:$0xff]
      %v5214 = vld [vmem:[%s4 + $0x8] sm:$0xff]
      %v5215 = vld [vmem:[%s4 + $0x10] sm:$0xff]
      %v5216 = vld [vmem:[%s4 + $0x18] sm:$0xff]
      %v5217 = vld [vmem:[%s4 + $0x20] sm:$0xff]
      %v5218 = vld [vmem:[%s4 + $0x28] sm:$0xff]
      %v5219 = vld [vmem:[%s4 + $0x30] sm:$0xff]
      %v5220 = vld [vmem:[%s4 + $0x38] sm:$0xff]
      %v5221 = vld [vmem:[%s4 + $0x40] sm:$0xff]
      %v5222 = vld [vmem:[%s4 + $0x48] sm:$0xff]
      %v5223 = vld [vmem:[%s4 + $0x50] sm:$0xff]
      %v5224 = vld [vmem:[%s4 + $0x58] sm:$0xff]
      %v5225 = vld [vmem:[%s4 + $0x60] sm:$0xff]
      %v5226 = vld [vmem:[%s4 + $0x68] sm:$0xff]
      %v5227 = vld [vmem:[%s4 + $0x70] sm:$0xff]
      %v5228 = vld [vmem:[%s4 + $0x78] sm:$0xff]
      %v5229 = vld [vmem:[%s5] sm:$0x1]
      %5230 = vmatprep.subr.mxu0 0.0
      %5231 = vmatpush1.msra.mxu0 %v5228
      %5232 = vmatprep.subr.mxu0 0.0
      %5233 = vmatpush1.msra.mxu0 %v5227
      %5234 = vmatprep.subr.mxu0 0.0
      %5235 = vmatpush1.msra.mxu0 %v5226
      %5236 = vmatprep.subr.mxu0 0.0
      %5237 = vmatpush1.msra.mxu0 %v5225
      %5238 = vmatprep.subr.mxu0 0.0
      %5239 = vmatpush1.msra.mxu0 %v5224
      %5240 = vmatprep.subr.mxu0 0.0
      %5241 = vmatpush1.msra.mxu0 %v5223
      %5242 = vmatprep.subr.mxu0 0.0
      %5243 = vmatpush1.msra.mxu0 %v5222
      %5244 = vmatprep.subr.mxu0 0.0
      %5245 = vmatpush1.msra.mxu0 %v5221
      %5246 = vmatprep.subr.mxu0 0.0
      %5247 = vmatpush1.msra.mxu0 %v5220
      %5248 = vmatprep.subr.mxu0 0.0
      %5249 = vmatpush1.msra.mxu0 %v5219
      %5250 = vmatprep.subr.mxu0 0.0
      %5251 = vmatpush1.msra.mxu0 %v5218
      %5252 = vmatprep.subr.mxu0 0.0
      %5253 = vmatpush1.msra.mxu0 %v5217
      %5254 = vmatprep.subr.mxu0 0.0
      %5255 = vmatpush1.msra.mxu0 %v5216
      %5256 = vmatprep.subr.mxu0 0.0
      %5257 = vmatpush1.msra.mxu0 %v5215
      %5258 = vmatprep.subr.mxu0 0.0
      %5259 = vmatpush1.msra.mxu0 %v5214
      %5260 = vmatprep.subr.mxu0 0.0
      %5261 = vmatpush1.msra.mxu0 %v5213
      %5262 = vmatprep.subr.mxu0 0.0
      %5263 = vmatpush2.msra.mxu0 0.0
      %5264 = vmatprep.subr.mxu0 0.0
      %5265 = vmatpush2.msra.mxu0 0.0
      %5266 = vmatprep.subr.mxu0 0.0
      %5267 = vmatpush2.msra.mxu0 0.0
      %5268 = vmatprep.subr.mxu0 0.0
      %5269 = vmatpush2.msra.mxu0 0.0
      %5270 = vmatprep.subr.mxu0 0.0
      %5271 = vmatpush2.msra.mxu0 0.0
      %5272 = vmatprep.subr.mxu0 0.0
      %5273 = vmatpush2.msra.mxu0 0.0
      %5274 = vmatprep.subr.mxu0 0.0
      %5275 = vmatpush2.msra.mxu0 0.0
      %5276 = vmatprep.subr.mxu0 0.0
      %5277 = vmatpush2.msra.mxu0 0.0
      %5278 = vmatprep.subr.mxu0 0.0
      %5279 = vmatpush2.msra.mxu0 0.0
      %5280 = vmatprep.subr.mxu0 0.0
      %5281 = vmatpush2.msra.mxu0 0.0
      %5282 = vmatprep.subr.mxu0 0.0
      %5283 = vmatpush2.msra.mxu0 0.0
      %5284 = vmatprep.subr.mxu0 0.0
      %5285 = vmatpush2.msra.mxu0 0.0
      %5286 = vmatprep.subr.mxu0 0.0
      %5287 = vmatpush2.msra.mxu0 0.0
      %5288 = vmatprep.subr.mxu0 0.0
      %5289 = vmatpush2.msra.mxu0 0.0
      %5290 = vmatprep.subr.mxu0 0.0
      %5291 = vmatpush2.msra.mxu0 0.0
      %5292 = vmatprep.subr.mxu0 0.0
      %5293 = vmatpush2.msra.mxu0 0.0
      %5294 = vmatprep.mubr.f32.mxu0 0.0
      %5295 = vmatmul.mubr.f32.gmra.mxu0 %v5212
      %v5296 = vpop.f32.mrf.mxu0
      %v5297 = vadd.f32 %v5229, %v5296
      %v5298 = vpop.f32.mrf.mxu0
      %5299 = vdwg.mxu0
      %v5300 = vmax.f32 %v5297, 0.0
      %v5301 = vld [vmem:[%s6] sm:$0xff]
      %v5302 = vld [vmem:[%s6 + $0x8] sm:$0xff]
      %v5303 = vld [vmem:[%s6 + $0x10] sm:$0xff]
      %v5304 = vld [vmem:[%s6 + $0x18] sm:$0xff]
      %v5305 = vld [vmem:[%s6 + $0x20] sm:$0xff]
      %v5306 = vld [vmem:[%s6 + $0x28] sm:$0xff]
      %v5307 = vld [vmem:[%s6 + $0x30] sm:$0xff]
      %v5308 = vld [vmem:[%s6 + $0x38] sm:$0xff]
      %v5309 = vld [vmem:[%s6 + $0x40] sm:$0xff]
      %v5310 = vld [vmem:[%s6 + $0x48] sm:$0xff]
      %v5311 = vld [vmem:[%s6 + $0x50] sm:$0xff]
      %v5312 = vld [vmem:[%s6 + $0x58] sm:$0xff]
      %v5313 = vld [vmem:[%s6 + $0x60] sm:$0xff]
      %v5314 = vld [vmem:[%s6 + $0x68] sm:$0xff]
      %v5315 = vld [vmem:[%s6 + $0x70] sm:$0xff]
      %v5316 = vld [vmem:[%s6 + $0x78] sm:$0xff]
      %v5317 = vld [vmem:[%s7] sm:$0x1]
      %5318 = vmatprep.subr.mxu0 0.0
      %5319 = vmatpush1.msra.mxu0 %v5316
      %5320 = vmatprep.subr.mxu0 0.0
      %5321 = vmatpush1.msra.mxu0 %v5315
      %5322 = vmatprep.subr.mxu0 0.0
      %5323 = vmatpush1.msra.mxu0 %v5314
      %5324 = vmatprep.subr.mxu0 0.0
      %5325 = vmatpush1.msra.mxu0 %v5313
      %5326 = vmatprep.subr.mxu0 0.0
      %5327 = vmatpush1.msra.mxu0 %v5312
      %5328 = vmatprep.subr.mxu0 0.0
      %5329 = vmatpush1.msra.mxu0 %v5311
      %5330 = vmatprep.subr.mxu0 0.0
      %5331 = vmatpush1.msra.mxu0 %v5310
      %5332 = vmatprep.subr.mxu0 0.0
      %5333 = vmatpush1.msra.mxu0 %v5309
      %5334 = vmatprep.subr.mxu0 0.0
      %5335 = vmatpush1.msra.mxu0 %v5308
      %5336 = vmatprep.subr.mxu0 0.0
      %5337 = vmatpush1.msra.mxu0 %v5307
      %5338 = vmatprep.subr.mxu0 0.0
      %5339 = vmatpush1.msra.mxu0 %v5306
      %5340 = vmatprep.subr.mxu0 0.0
      %5341 = vmatpush1.msra.mxu0 %v5305
      %5342 = vmatprep.subr.mxu0 0.0
      %5343 = vmatpush1.msra.mxu0 %v5304
      %5344 = vmatprep.subr.mxu0 0.0
      %5345 = vmatpush1.msra.mxu0 %v5303
      %5346 = vmatprep.subr.mxu0 0.0
      %5347 = vmatpush1.msra.mxu0 %v5302
      %5348 = vmatprep.subr.mxu0 0.0
      %5349 = vmatpush1.msra.mxu0 %v5301
      %5350 = vmatprep.subr.mxu0 0.0
      %5351 = vmatpush2.msra.mxu0 0.0
      %5352 = vmatprep.subr.mxu0 0.0
      %5353 = vmatpush2.msra.mxu0 0.0
      %5354 = vmatprep.subr.mxu0 0.0
      %5355 = vmatpush2.msra.mxu0 0.0
      %5356 = vmatprep.subr.mxu0 0.0
      %5357 = vmatpush2.msra.mxu0 0.0
      %5358 = vmatprep.subr.mxu0 0.0
      %5359 = vmatpush2.msra.mxu0 0.0
      %5360 = vmatprep.subr.mxu0 0.0
      %5361 = vmatpush2.msra.mxu0 0.0
      %5362 = vmatprep.subr.mxu0 0.0
      %5363 = vmatpush2.msra.mxu0 0.0
      %5364 = vmatprep.subr.mxu0 0.0
      %5365 = vmatpush2.msra.mxu0 0.0
      %5366 = vmatprep.subr.mxu0 0.0
      %5367 = vmatpush2.msra.mxu0 0.0
      %5368 = vmatprep.subr.mxu0 0.0
      %5369 = vmatpush2.msra.mxu0 0.0
      %5370 = vmatprep.subr.mxu0 0.0
      %5371 = vmatpush2.msra.mxu0 0.0
      %5372 = vmatprep.subr.mxu0 0.0
      %5373 = vmatpush2.msra.mxu0 0.0
      %5374 = vmatprep.subr.mxu0 0.0
      %5375 = vmatpush2.msra.mxu0 0.0
      %5376 = vmatprep.subr.mxu0 0.0
      %5377 = vmatpush2.msra.mxu0 0.0
      %5378 = vmatprep.subr.mxu0 0.0
      %5379 = vmatpush2.msra.mxu0 0.0
      %5380 = vmatprep.subr.mxu0 0.0
      %5381 = vmatpush2.msra.mxu0 0.0
      %5382 = vmatprep.mubr.f32.mxu0 0.0
      %5383 = vmatmul.mubr.f32.gmra.mxu0 %v5300
      %v5384 = vpop.f32.mrf.mxu0
      %v5385 = vadd.f32 %v5317, %v5384
      %v5386 = vpop.f32.mrf.mxu0
      %5387 = vdwg.mxu0
      %v5388 = vsub.f32 0.0, %v5385
      %v5389 = vmul.f32 %v5388, 1.442695
      %v5390 = vpow.pop %v5389
      %v5391 = vadd.f32 %v5390, 1.0
      %v5392 = vrcp.pop %v5391
      %v5393 = vmul.f32 1.0, %v5392
      %v5394 = vld [vmem:[%s320] sm:$0xff]
      %v5395 = vld [vmem:[%s320 + $0x8] sm:$0xff]
      %v5396 = vld [vmem:[%s320 + $0x10] sm:$0xff]
      %v5397 = vld [vmem:[%s320 + $0x18] sm:$0xff]
      %v5398 = vld [vmem:[%s320 + $0x20] sm:$0xff]
      %v5399 = vld [vmem:[%s320 + $0x28] sm:$0xff]
      %v5400 = vld [vmem:[%s320 + $0x30] sm:$0xff]
      %v5401 = vld [vmem:[%s320 + $0x38] sm:$0xff]
      %v5402 = vld [vmem:[%s320 + $0x40] sm:$0xff]
      %v5403 = vld [vmem:[%s320 + $0x48] sm:$0xff]
      %v5404 = vld [vmem:[%s320 + $0x50] sm:$0xff]
      %v5405 = vld [vmem:[%s320 + $0x58] sm:$0xff]
      %v5406 = vld [vmem:[%s320 + $0x60] sm:$0xff]
      %v5407 = vld [vmem:[%s320 + $0x68] sm:$0xff]
      %v5408 = vld [vmem:[%s320 + $0x70] sm:$0xff]
      %v5409 = vld [vmem:[%s320 + $0x78] sm:$0xff]
      %v5410 = vld [vmem:[%s320 + $0x80] sm:$0xff]
      %v5411 = vld [vmem:[%s320 + $0x88] sm:$0xff]
      %v5412 = vld [vmem:[%s320 + $0x90] sm:$0xff]
      %v5413 = vld [vmem:[%s320 + $0x98] sm:$0xff]
      %v5414 = vld [vmem:[%s320 + $0xa0] sm:$0xff]
      %v5415 = vld [vmem:[%s320 + $0xa8] sm:$0xff]
      %v5416 = vld [vmem:[%s320 + $0xb0] sm:$0xff]
      %v5417 = vld [vmem:[%s320 + $0xb8] sm:$0xff]
      %v5418 = vld [vmem:[%s320 + $0xc0] sm:$0xff]
      %v5419 = vld [vmem:[%s320 + $0xc8] sm:$0xff]
      %v5420 = vld [vmem:[%s320 + $0xd0] sm:$0xff]
      %v5421 = vld [vmem:[%s320 + $0xd8] sm:$0xff]
      %v5422 = vld [vmem:[%s320 + $0xe0] sm:$0xff]
      %v5423 = vld [vmem:[%s320 + $0xe8] sm:$0xff]
      %v5424 = vld [vmem:[%s320 + $0xf0] sm:$0xff]
      %v5425 = vld [vmem:[%s320 + $0xf8] sm:$0xff]
      %v5426 = vlaneseq
      %v5427 = vshrl.u32 %v5426, 7
      %v5428 = vsub.s32 0, %v5427
      %v5429 = vrot.slane %v5393, %v5428
      %v5430 = vmul.f32 %v5143, %v5429
      %v5431 = vmul.f32 %v5144, %v5429
      %v5432 = vmul.f32 %v5145, %v5429
      %v5433 = vmul.f32 %v5146, %v5429
      %v5434 = vmul.f32 %v5147, %v5429
      %v5435 = vmul.f32 %v5148, %v5429
      %v5436 = vmul.f32 %v5149, %v5429
      %v5437 = vmul.f32 %v5150, %v5429
      %v5438 = vmul.f32 %v5151, %v5429
      %v5439 = vmul.f32 %v5152, %v5429
      %v5440 = vmul.f32 %v5153, %v5429
      %v5441 = vmul.f32 %v5154, %v5429
      %v5442 = vmul.f32 %v5155, %v5429
      %v5443 = vmul.f32 %v5156, %v5429
      %v5444 = vmul.f32 %v5157, %v5429
      %v5445 = vmul.f32 %v5158, %v5429
      %v5446 = vmul.f32 %v5159, %v5429
      %v5447 = vmul.f32 %v5160, %v5429
      %v5448 = vmul.f32 %v5161, %v5429
      %v5449 = vmul.f32 %v5162, %v5429
      %v5450 = vmul.f32 %v5163, %v5429
      %v5451 = vmul.f32 %v5164, %v5429
      %v5452 = vmul.f32 %v5165, %v5429
      %v5453 = vmul.f32 %v5166, %v5429
      %v5454 = vmul.f32 %v5167, %v5429
      %v5455 = vmul.f32 %v5168, %v5429
      %v5456 = vmul.f32 %v5169, %v5429
      %v5457 = vmul.f32 %v5170, %v5429
      %v5458 = vmul.f32 %v5171, %v5429
      %v5459 = vmul.f32 %v5172, %v5429
      %v5460 = vmul.f32 %v5173, %v5429
      %v5461 = vmul.f32 %v5174, %v5429
      %v5462 = vadd.f32 %v5394, %v5430
      %v5463 = vadd.f32 %v5395, %v5431
      %v5464 = vadd.f32 %v5396, %v5432
      %v5465 = vadd.f32 %v5397, %v5433
      %v5466 = vadd.f32 %v5398, %v5434
      %v5467 = vadd.f32 %v5399, %v5435
      %v5468 = vadd.f32 %v5400, %v5436
      %v5469 = vadd.f32 %v5401, %v5437
      %v5470 = vadd.f32 %v5402, %v5438
      %v5471 = vadd.f32 %v5403, %v5439
      %v5472 = vadd.f32 %v5404, %v5440
      %v5473 = vadd.f32 %v5405, %v5441
      %v5474 = vadd.f32 %v5406, %v5442
      %v5475 = vadd.f32 %v5407, %v5443
      %v5476 = vadd.f32 %v5408, %v5444
      %v5477 = vadd.f32 %v5409, %v5445
      %v5478 = vadd.f32 %v5410, %v5446
      %v5479 = vadd.f32 %v5411, %v5447
      %v5480 = vadd.f32 %v5412, %v5448
      %v5481 = vadd.f32 %v5413, %v5449
      %v5482 = vadd.f32 %v5414, %v5450
      %v5483 = vadd.f32 %v5415, %v5451
      %v5484 = vadd.f32 %v5416, %v5452
      %v5485 = vadd.f32 %v5417, %v5453
      %v5486 = vadd.f32 %v5418, %v5454
      %v5487 = vadd.f32 %v5419, %v5455
      %v5488 = vadd.f32 %v5420, %v5456
      %v5489 = vadd.f32 %v5421, %v5457
      %v5490 = vadd.f32 %v5422, %v5458
      %v5491 = vadd.f32 %v5423, %v5459
      %v5492 = vadd.f32 %v5424, %v5460
      %v5493 = vadd.f32 %v5425, %v5461
      %5494 = vst [vmem:[%s325] sm:$0xff] %v5462
      %5495 = vst [vmem:[%s325 + $0x8] sm:$0xff] %v5463
      %5496 = vst [vmem:[%s325 + $0x10] sm:$0xff] %v5464
      %5497 = vst [vmem:[%s325 + $0x18] sm:$0xff] %v5465
      %5498 = vst [vmem:[%s325 + $0x20] sm:$0xff] %v5466
      %5499 = vst [vmem:[%s325 + $0x28] sm:$0xff] %v5467
      %5500 = vst [vmem:[%s325 + $0x30] sm:$0xff] %v5468
      %5501 = vst [vmem:[%s325 + $0x38] sm:$0xff] %v5469
      %5502 = vst [vmem:[%s325 + $0x40] sm:$0xff] %v5470
      %5503 = vst [vmem:[%s325 + $0x48] sm:$0xff] %v5471
      %5504 = vst [vmem:[%s325 + $0x50] sm:$0xff] %v5472
      %5505 = vst [vmem:[%s325 + $0x58] sm:$0xff] %v5473
      %5506 = vst [vmem:[%s325 + $0x60] sm:$0xff] %v5474
      %5507 = vst [vmem:[%s325 + $0x68] sm:$0xff] %v5475
      %5508 = vst [vmem:[%s325 + $0x70] sm:$0xff] %v5476
      %5509 = vst [vmem:[%s325 + $0x78] sm:$0xff] %v5477
      %5510 = vst [vmem:[%s325 + $0x80] sm:$0xff] %v5478
      %5511 = vst [vmem:[%s325 + $0x88] sm:$0xff] %v5479
      %5512 = vst [vmem:[%s325 + $0x90] sm:$0xff] %v5480
      %5513 = vst [vmem:[%s325 + $0x98] sm:$0xff] %v5481
      %5514 = vst [vmem:[%s325 + $0xa0] sm:$0xff] %v5482
      %5515 = vst [vmem:[%s325 + $0xa8] sm:$0xff] %v5483
      %5516 = vst [vmem:[%s325 + $0xb0] sm:$0xff] %v5484
      %5517 = vst [vmem:[%s325 + $0xb8] sm:$0xff] %v5485
      %5518 = vst [vmem:[%s325 + $0xc0] sm:$0xff] %v5486
      %5519 = vst [vmem:[%s325 + $0xc8] sm:$0xff] %v5487
      %5520 = vst [vmem:[%s325 + $0xd0] sm:$0xff] %v5488
      %5521 = vst [vmem:[%s325 + $0xd8] sm:$0xff] %v5489
      %5522 = vst [vmem:[%s325 + $0xe0] sm:$0xff] %v5490
      %5523 = vst [vmem:[%s325 + $0xe8] sm:$0xff] %v5491
      %5524 = vst [vmem:[%s325 + $0xf0] sm:$0xff] %v5492
      %5525 = vst [vmem:[%s325 + $0xf8] sm:$0xff] %v5493
      %p5526 = scmp.lt.s32.totalorder %s19, 1
      %s5527 = scalar_select %p5526, %s19, 1
      %s5528 = smul.addr %s5527, 32
      %s5529 = smul.addr %s5528, 8
      %s5530 = scalar_lea.vmem %s8, %s5529
      // Predicated region
      $region53: #{rcan_block_forward.3} parent=51 // pred_check
        %p5531 = pneg %p215
      $region54: #{rcan_block_forward.3} parent=51 // pred_check_branch
        %5533 = sbr.rel (%p5531) target = $region56
      $region55: #{rcan_block_forward.3} parent=51 // pred_region
        _
      $region56: #{rcan_block_forward.3} parent=51 // pred_fallthru
        _
    $region52: #{rcan_block_forward.3} parent=5 // pred_fallthru
      _
    %p5534 = scmp.le.s32.totalorder 2, %s14
    // Predicated region
    $region57: #{rcan_block_forward.3} parent=5 // pred_check
      %p5535 = pneg %p5534
    $region58: #{rcan_block_forward.3} parent=5 // pred_check_branch
      %5537 = sbr.rel (%p5535) target = $region60
    $region59: #{rcan_block_forward.3} parent=5 // pred_region
      %s5538 = ssub.s32 %s14, 2
      // Predicated region
      $region61: #{rcan_block_forward.3} parent=59 // pred_check
        %p5539 = pneg %p221
      $region62: #{rcan_block_forward.3} parent=59 // pred_check_branch
        %5541 = sbr.rel (%p5539) target = $region64
      $region63: #{rcan_block_forward.3} parent=59 // pred_region
        %p5542 = scmp.lt.s32.totalorder %s20, 1
        %s5543 = scalar_select %p5542, %s20, 1
        %s5544 = smul.addr %s5543, 32
        %s5545 = smul.addr %s5544, 8
        %s5546 = scalar_lea.vmem %s8, %s5545
      $region64: #{rcan_block_forward.3} parent=59 // pred_fallthru
        _
    $region60: #{rcan_block_forward.3} parent=5 // pred_fallthru
      _
  $region6: #{rcan_block_forward.3} parent=0 // loop_footer
    %s18 = sadd.s32 1, %s14
  $region7: #{rcan_block_forward.3} parent=0 // loop_footer_branch
    %13 = sbr.rel target = $region3
  $region8: #{rcan_block_forward.3} parent=0 // loop_exit
    _

</llo_original>
